<compile_context>
chip_gen: v7x
topology: tpu7x:2x2x1
jax: 0.10.0
libtpu: 0.0.40
codegen_flags: <defaults>
</compile_context>

<pallas_src>
import functools
import math

import jax
import jax.numpy as jnp
from jax.experimental import pallas as pl
from jax.experimental.pallas import tpu as pltpu

# ------------------------- small (scaled-down) config -------------------------
B = 2
SAMPLES = 800
CONV_LAYERS = [(16, 10, 5), (16, 8, 4)]   # (channels, kernel, stride)  (real WavLM: 7 layers, 512 ch)
C_CONV = CONV_LAYERS[-1][0]
D = 32                                     # encoder dim (real: 768)
NUM_HEADS = 4
HEAD_DIM = D // NUM_HEADS
FFN = 64
NUM_LAYERS = 12                            # output_layer=13 -> 13 layer reps (input + 12 layers)
L_REPS = NUM_LAYERS + 1
POS_K = 8                                  # positional conv kernel (real: 128), even -> SamePad drop
POS_GROUPS = 4                             # real: 16
MHFA_HEADS = 8
MHFA_CMP = 16                              # MHFA compression dim (real: 128)
EMBED_DIM = 32                             # speaker embedding dim
LN_EPS = 1e-5

_BF16 = jnp.bfloat16


# ------------------------------ in-kernel helpers ------------------------------
def _layernorm_rows(x, g, b, eps):
    mu = jnp.mean(x, axis=-1, keepdims=True)
    var = jnp.mean((x - mu) ** 2, axis=-1, keepdims=True)
    return (x - mu) * jax.lax.rsqrt(var + eps) * g + b


def _gelu_exact(x):
    # torch nn.GELU() (erf form); erf lowers to the VPU/EUP inside Mosaic.
    return 0.5 * x * (1.0 + jax.lax.erf(x * 0.7071067811865476))


# ---------------------------------- linear ------------------------------------
def _linear_kernel(x_ref, w_ref, b_ref, o_ref):
    o_ref[...] = (jnp.dot(x_ref[...].astype(_BF16), w_ref[...],
                          preferred_element_type=jnp.float32) + b_ref[...])


def linear_pallas(x, w, b):
    """x: [N, Din] @ w: [Din, Dout] (bf16 MXU operands) + b: [Dout]."""
    # TODO(synk): tile the N row axis (~512-row blocks) at real scale for HBM<->VMEM pipelining.
    N, Din = x.shape
    Dout = w.shape[1]
    return pl.pallas_call(
        _linear_kernel,
        out_shape=jax.ShapeDtypeStruct((N, Dout), jnp.float32),
        grid=(1,),
        in_specs=[pl.BlockSpec((N, Din), lambda i: (0, 0)),
                  pl.BlockSpec((Din, Dout), lambda i: (0, 0)),
                  pl.BlockSpec((1, Dout), lambda i: (0, 0))],
        out_specs=pl.BlockSpec((N, Dout), lambda i: (0, 0)),
    )(x, w.astype(_BF16), b.reshape(1, Dout))


# --------------------- GroupNorm(C, C) over time (+ fused GELU) -----------------
def _rownorm_affine_kernel(x_ref, g_ref, b_ref, o_ref, *, eps, apply_gelu):
    x = x_ref[...]
    mu = jnp.mean(x, axis=-1, keepdims=True)
    var = jnp.mean((x - mu) ** 2, axis=-1, keepdims=True)
    y = (x - mu) * jax.lax.rsqrt(var + eps) * g_ref[...] + b_ref[...]
    if apply_gelu:
        y = _gelu_exact(y)
    o_ref[...] = y


def groupnorm_per_channel_pallas(x, gamma, beta, eps=LN_EPS, apply_gelu=False):
    """GroupNorm(num_groups=C, C): normalize each (b, c) over time, per-channel affine. x: [B, C, T]."""
    Bb, Cc, T = x.shape
    g_col = jnp.tile(gamma, (Bb,)).reshape(Bb * Cc, 1)
    b_col = jnp.tile(beta, (Bb,)).reshape(Bb * Cc, 1)
    out = pl.pallas_call(
        functools.partial(_rownorm_affine_kernel, eps=eps, apply_gelu=apply_gelu),
        out_shape=jax.ShapeDtypeStruct((Bb * Cc, T), jnp.float32),
        grid=(1,),
        in_specs=[pl.BlockSpec((Bb * Cc, T), lambda i: (0, 0)),
                  pl.BlockSpec((Bb * Cc, 1), lambda i: (0, 0)),
                  pl.BlockSpec((Bb * Cc, 1), lambda i: (0, 0))],
        out_specs=pl.BlockSpec((Bb * Cc, T), lambda i: (0, 0)),
    )(x.reshape(Bb * Cc, T), g_col, b_col)
    return out.reshape(Bb, Cc, T)


# --------------------------- fused LayerNorm -> Linear --------------------------
def _ln_linear_kernel(x_ref, g_ref, b_ref, w_ref, wb_ref, o_ref, *, eps):
    xn = _layernorm_rows(x_ref[...], g_ref[...], b_ref[...], eps)
    o_ref[...] = (jnp.dot(xn.astype(_BF16), w_ref[...],
                          preferred_element_type=jnp.float32) + wb_ref[...])


def ln_linear_pallas(x, g, b, w, wb, eps=LN_EPS):
    N, Din = x.shape
    Dout = w.shape[1]
    return pl.pallas_call(
        functools.partial(_ln_linear_kernel, eps=eps),
        out_shape=jax.ShapeDtypeStruct((N, Dout), jnp.float32),
        grid=(1,),
        in_specs=[pl.BlockSpec((N, Din), lambda i: (0, 0)),
                  pl.BlockSpec((1, Din), lambda i: (0, 0)),
                  pl.BlockSpec((1, Din), lambda i: (0, 0)),
                  pl.BlockSpec((Din, Dout), lambda i: (0, 0)),
                  pl.BlockSpec((1, Dout), lambda i: (0, 0))],
        out_specs=pl.BlockSpec((N, Dout), lambda i: (0, 0)),
    )(x, g.reshape(1, Din), b.reshape(1, Din), w.astype(_BF16), wb.reshape(1, Dout))


# ----------------------------- residual add + LayerNorm --------------------------
def _add_ln_kernel(x_ref, r_ref, g_ref, b_ref, o_ref, *, eps):
    o_ref[...] = _layernorm_rows(x_ref[...] + r_ref[...], g_ref[...], b_ref[...], eps)


def add_layernorm_pallas(x, r, g, b, eps=LN_EPS):
    N, Dd = x.shape
    return pl.pallas_call(
        functools.partial(_add_ln_kernel, eps=eps),
        out_shape=jax.ShapeDtypeStruct((N, Dd), jnp.float32),
        grid=(1,),
        in_specs=[pl.BlockSpec((N, Dd), lambda i: (0, 0)),
                  pl.BlockSpec((N, Dd), lambda i: (0, 0)),
                  pl.BlockSpec((1, Dd), lambda i: (0, 0)),
                  pl.BlockSpec((1, Dd), lambda i: (0, 0))],
        out_specs=pl.BlockSpec((N, Dd), lambda i: (0, 0)),
    )(x, r, g.reshape(1, Dd), b.reshape(1, Dd))


# ------------------- fully fused transformer layer (ONE pallas_call) -------------
def _encoder_layer_kernel(x_ref, wqkv_ref, bqkv_ref, wo_ref, bo_ref,
                          g1_ref, be1_ref, w1_ref, b1_ref, w2_ref, b2_ref,
                          g2_ref, be2_ref, o_ref,
                          *, batch, seq, num_heads, head_dim, eps):
    """Post-LN (layer_norm_first=False) WavLM encoder layer, eval mode, fully fused.

    Row-wise matmuls / LN run on [B*T, D] rows (full MXU M dim, no per-batch grid steps);
    only the per-(batch, head) [T, T] score / context matmuls are batched. Heads are re-merged
    and the output projection is ONE full-D-deep matmul.

    TODO(synk): WavLM's gated relative position bias has no clean port; plain scaled-dot-product
                multi-head attention is used instead.
    TODO(synk): at real WavLM scale (T~500, D=768, FFN=3072) tile over T (online softmax) and
                single-buffer (pl.Buffered(1)) the grid-invariant weight specs.
    """
    d = num_heads * head_dim
    scale = 1.0 / math.sqrt(head_dim)

    x = x_ref[...].reshape(batch * seq, d)                                   # [BT, D] f32
    qkv = (jnp.dot(x.astype(_BF16), wqkv_ref[...],
                   preferred_element_type=jnp.float32) + bqkv_ref[...])      # [BT, 3D] f32

    ctx_heads = []
    for h in range(num_heads):                                               # unrolled
        lo = h * head_dim
        q = (qkv[:, lo:lo + head_dim] * scale).reshape(batch, seq, head_dim)
        k = qkv[:, d + lo:d + lo + head_dim].reshape(batch, seq, head_dim)
        v = qkv[:, 2 * d + lo:2 * d + lo + head_dim].reshape(batch, seq, head_dim)
        s = jax.lax.dot_general(q.astype(_BF16), k.astype(_BF16),
                                (((2,), (2,)), ((0,), (0,))),
                                preferred_element_type=jnp.float32)          # [B, T, T]
        s = s - jnp.max(s, axis=-1, keepdims=True)
        p = jnp.exp(s)
        # approx reciprocal on the EUP slot; slight deviation from exact softmax (inference ok)
        p = p * pl.reciprocal(jnp.sum(p, axis=-1, keepdims=True), approx=True)
        ctx_heads.append(jax.lax.dot_general(p.astype(_BF16), v.astype(_BF16),
                                             (((2,), (1,)), ((0,), (0,))),
                                             preferred_element_type=jnp.float32))   # [B, T, hd]
    ctx = jnp.concatenate(ctx_heads, axis=-1).reshape(batch * seq, d)        # [BT, D]

    attn = (jnp.dot(ctx.astype(_BF16), wo_ref[...],
                    preferred_element_type=jnp.float32) + bo_ref[...])       # full-D contraction
    y = _layernorm_rows(x + attn, g1_ref[...], be1_ref[...], eps)            # post-LN

    h1 = (jnp.dot(y.astype(_BF16), w1_ref[...],
                  preferred_element_type=jnp.float32) + b1_ref[...])
    h1 = _gelu_exact(h1)                                                     # exact erf GELU
    ffn = (jnp.dot(h1.astype(_BF16), w2_ref[...],
                   preferred_element_type=jnp.float32) + b2_ref[...])
    out = _layernorm_rows(y + ffn, g2_ref[...], be2_ref[...], eps)
    o_ref[...] = out.reshape(batch, seq, d)


def transformer_layer(x, lp):
    Bb, T, Dd = x.shape
    return pl.pallas_call(
        functools.partial(_encoder_layer_kernel, batch=Bb, seq=T,
                          num_heads=NUM_HEADS, head_dim=HEAD_DIM, eps=LN_EPS),
        out_shape=jax.ShapeDtypeStruct((Bb, T, Dd), jnp.float32),
        grid=(1,),
        in_specs=[
            pl.BlockSpec((Bb, T, Dd), lambda i: (0, 0, 0)),     # x
            pl.BlockSpec((Dd, 3 * Dd), lambda i: (0, 0)),       # fused QKV weight (bf16)
            pl.BlockSpec((1, 3 * Dd), lambda i: (0, 0)),        # fused QKV bias
            pl.BlockSpec((Dd, Dd), lambda i: (0, 0)),           # out proj W (bf16)
            pl.BlockSpec((1, Dd), lambda i: (0, 0)),            # out proj b
            pl.BlockSpec((1, Dd), lambda i: (0, 0)),            # LN1 gamma
            pl.BlockSpec((1, Dd), lambda i: (0, 0)),            # LN1 beta
            pl.BlockSpec((Dd, FFN), lambda i: (0, 0)),          # FFN up W (bf16)
            pl.BlockSpec((1, FFN), lambda i: (0, 0)),           # FFN up b
            pl.BlockSpec((FFN, Dd), lambda i: (0, 0)),          # FFN down W (bf16)
            pl.BlockSpec((1, Dd), lambda i: (0, 0)),            # FFN down b
            pl.BlockSpec((1, Dd), lambda i: (0, 0)),            # LN2 gamma
            pl.BlockSpec((1, Dd), lambda i: (0, 0)),            # LN2 beta
        ],
        out_specs=pl.BlockSpec((Bb, T, Dd), lambda i: (0, 0, 0)),
    )(x, lp['wqkv'], lp['bqkv'].reshape(1, 3 * Dd), lp['wo'], lp['bo'].reshape(1, Dd),
      lp['ln1_g'].reshape(1, Dd), lp['ln1_b'].reshape(1, Dd),
      lp['w1'], lp['b1'].reshape(1, FFN),
      lp['w2'], lp['b2'].reshape(1, Dd),
      lp['ln2_g'].reshape(1, Dd), lp['ln2_b'].reshape(1, Dd))


# --------------------- Conv1d: single call, group = grid axis, fused GELU --------
def _group_matmul_kernel(p_ref, w_ref, b_ref, o_ref, *, apply_gelu):
    y = jnp.dot(p_ref[0], w_ref[0], preferred_element_type=jnp.float32) + b_ref[0]
    if apply_gelu:
        y = _gelu_exact(y)
    o_ref[0] = y


def conv1d_pallas(x, w, b, stride, padding=0, groups=1, apply_gelu=False):
    """Conv1d in PyTorch NCW layout. x: [B, Cin, T], w: [Cout, Cin//groups, K], b: [Cout].

    im2col in the XLA wrapper, then ONE pallas_call doing the per-group matmul (bf16 MXU
    operands) with the group index as a parallel grid axis; GELU optionally fused in.

    TODO(synk): at real WavLM scale move im2col inside the kernel (K shifted matmuls over a
                tiled out_T axis) to avoid materializing the K-x blown-up patch tensor in HBM.
    """
    Bb, Cin, T = x.shape
    Cout, Cin_g, K = w.shape
    if padding > 0:
        x = jnp.pad(x, ((0, 0), (0, 0), (padding, padding)))
        T = T + 2 * padding
    out_T = (T - K) // stride + 1
    cg_out = Cout // groups
    N, CK = Bb * out_T, Cin_g * K

    idx = jnp.arange(out_T)[:, None] * stride + jnp.arange(K)[None, :]          # [out_T, K]
    xg = x.reshape(Bb, groups, Cin_g, T)
    patches = xg[:, :, :, idx]                                                  # [B, G, Cin_g, out_T, K]
    patches = jnp.transpose(patches, (1, 0, 3, 2, 4)).reshape(groups, N, CK)    # [G, B*out_T, Cin_g*K]
    wg = jnp.transpose(w.reshape(groups, cg_out, CK), (0, 2, 1))                # [G, CK, cg_out]
    bg = b.reshape(groups, 1, cg_out)

    out = pl.pallas_call(
        functools.partial(_group_matmul_kernel, apply_gelu=apply_gelu),
        out_shape=jax.ShapeDtypeStruct((groups, N, cg_out), jnp.float32),
        grid=(groups,),
        in_specs=[pl.BlockSpec((1, N, CK), lambda g: (g, 0, 0)),
                  pl.BlockSpec((1, CK, cg_out), lambda g: (g, 0, 0)),
                  pl.BlockSpec((1, 1, cg_out), lambda g: (g, 0, 0))],
        out_specs=pl.BlockSpec((1, N, cg_out), lambda g: (g, 0, 0)),
        compiler_params=pltpu.CompilerParams(dimension_semantics=("parallel",)),
    )(patches.astype(_BF16), wg.astype(_BF16), bg)

    out = out.reshape(groups, Bb, out_T, cg_out)
    out = jnp.transpose(out, (1, 0, 3, 2)).reshape(Bb, Cout, out_T)             # [B, Cout, out_T]
    return out


# -------------------------------- MHFA back-end --------------------------------
def _mhfa_kernel(x_ref, wv_ref, wa_ref, bv_ref, ba_ref, o_ref, v_acc, a_acc, *, batch, seq):
    """MHFA pooling with the 13-layer weighted sum as a reduction grid axis (L).

    By linearity:   v   = sum_l x_l @ (wv_l * Wv) + bv
                    att = sum_l x_l @ (wk_l * Wk @ Watt) + (bk @ Watt + batt)   (k-proj folded)
    Each grid step accumulates two [B*T, D] @ [D, .] matmuls into VMEM scratch; softmax over
    time + attention-weighted pooling happen once at the last step.

    TODO(synk): at real scale additionally tile over T (two-pass softmax) if blocks grow large.
    """
    l = pl.program_id(0)

    @pl.when(l == 0)
    def _():
        v_acc[...] = jnp.zeros_like(v_acc)
        a_acc[...] = jnp.zeros_like(a_acc)

    d = x_ref.shape[3]
    x = x_ref[0].reshape(batch * seq, d)                                     # [BT, D] bf16
    v_acc[...] += jnp.dot(x, wv_ref[0],
                          preferred_element_type=jnp.float32).reshape(batch, seq, -1)
    a_acc[...] += jnp.dot(x, wa_ref[0],
                          preferred_element_type=jnp.float32).reshape(batch, seq, -1)

    @pl.when(l == pl.num_programs(0) - 1)
    def _():
        v = v_acc[...] + bv_ref[...]                                         # [B, T, C]
        att = a_acc[...] + ba_ref[...]                                       # [B, T, H]
        att = att - jnp.max(att, axis=1, keepdims=True)                      # softmax over time
        p = jnp.exp(att)
        p = p * pl.reciprocal(jnp.sum(p, axis=1, keepdims=True), approx=True)
        o_ref[...] = jax.lax.dot_general(p.astype(_BF16), v.astype(_BF16),
                                         (((1,), (1,)), ((0,), (0,))),
                                         preferred_element_type=jnp.float32)  # [B, H, C]


def mhfa_pallas(layer_reps, wv_eff, wa_eff, bv, ba_eff):
    """layer_reps: [L, B, T, D] (bf16, natural scan layout -> no XLA transpose needed)."""
    L, Bb, T, Dd = layer_reps.shape
    H, C = MHFA_HEADS, MHFA_CMP
    return pl.pallas_call(
        functools.partial(_mhfa_kernel, batch=Bb, seq=T),
        out_shape=jax.ShapeDtypeStruct((Bb, H, C), jnp.float32),
        grid=(L,),
        in_specs=[
            pl.BlockSpec((1, Bb, T, Dd), lambda l: (l, 0, 0, 0)),
            pl.BlockSpec((1, Dd, C), lambda l: (l, 0, 0)),
            pl.BlockSpec((1, Dd, H), lambda l: (l, 0, 0)),
            pl.BlockSpec((1, C), lambda l: (0, 0)),
            pl.BlockSpec((1, H), lambda l: (0, 0)),
        ],
        out_specs=pl.BlockSpec((Bb, H, C), lambda l: (0, 0, 0)),
        scratch_shapes=[pltpu.VMEM((Bb, T, C), jnp.float32),
                        pltpu.VMEM((Bb, T, H), jnp.float32)],
        compiler_params=pltpu.CompilerParams(dimension_semantics=("arbitrary",)),
    )(layer_reps, wv_eff, wa_eff, bv, ba_eff)


# ================================ model forward =================================
def forward(params, wav):
    Bb = wav.shape[0]

    # ---------------- CNN feature extractor (conv_bias=False, GroupNorm on layer 0, GELU) --------
    x = wav[:, None, :]                                                     # [B, 1, S]
    for i, (c, k, s) in enumerate(CONV_LAYERS):
        x = conv1d_pallas(x, params['conv'][i]['w'], jnp.zeros((c,), jnp.float32),
                          stride=s, apply_gelu=(i != 0))
        if i == 0:
            x = groupnorm_per_channel_pallas(x, params['gn_g'], params['gn_b'], apply_gelu=True)
    feats = jnp.transpose(x, (0, 2, 1))                                     # [B, T, C_conv]
    Bb, T, Cc = feats.shape

    # ---------------- WavLM: layer_norm + post_extract_proj (fused LN->Linear kernel) ------------
    x = ln_linear_pallas(feats.reshape(Bb * T, Cc),
                         params['feat_ln_g'], params['feat_ln_b'],
                         params['proj_w'], params['proj_b']).reshape(Bb, T, D)

    # ---------------- encoder: positional grouped conv + SamePad + GELU, then residual+LN --------
    # TODO(synk): torch weight_norm on pos_conv is a reparameterization only; eval-mode effective
    #             weight is used directly here.
    xc = conv1d_pallas(jnp.transpose(x, (0, 2, 1)), params['pos_w'], params['pos_b'],
                       stride=1, padding=POS_K // 2, groups=POS_GROUPS, apply_gelu=True)
    xc = xc[:, :, :-1]                                  # SamePad: even kernel -> drop last frame
    pos = jnp.transpose(xc, (0, 2, 1))
    x = add_layernorm_pallas(x.reshape(Bb * T, D), pos.reshape(Bb * T, D),
                             params['enc_ln_g'], params['enc_ln_b']).reshape(Bb, T, D)

    # ---------------- transformer layers: ONE fused pallas_call per layer ------------------------
    layers = dict(params['layers'])
    for name in ('wqkv', 'wo', 'w1', 'w2'):
        layers[name] = layers[name].astype(_BF16)       # bf16 MXU operands, converted once

    def body(carry, lp):
        y = transformer_layer(carry, lp)
        return y, y

    _, xs = jax.lax.scan(body, x, layers)                                    # [NL, B, T, D]
    layer_reps = jnp.concatenate([x[None], xs], axis=0)                      # [L=13, B, T, D]
    # GradMultiply is identity in the forward pass; layer_reps are consumed in their natural
    # [L, B, T, D] scan layout (no XLA transpose), with L as the MHFA reduction grid axis.

    # ---------------- MHFA back-end (layer weighting + k-proj folded into per-layer matmuls) -----
    mp = params['mhfa']
    wk_soft = jax.nn.softmax(mp['weights_k'])            # tiny (13,) transforms, XLA glue
    wv_soft = jax.nn.softmax(mp['weights_v'])
    wa_base = mp['wk_c'] @ mp['w_att']                                        # [D, H]
    wa_eff = (wk_soft[:, None, None] * wa_base[None]).astype(_BF16)           # [L, D, H]
    wv_eff = (wv_soft[:, None, None] * mp['wv_c'][None]).astype(_BF16)        # [L, D, C]
    ba_eff = (mp['bk_c'] @ mp['w_att'] + mp['b_att']).reshape(1, MHFA_HEADS)
    pooled = mhfa_pallas(layer_reps.astype(_BF16), wv_eff, wa_eff,
                         mp['bv_c'].reshape(1, MHFA_CMP), ba_eff)             # [B, H, C]
    emb = linear_pallas(pooled.reshape(Bb, MHFA_HEADS * MHFA_CMP), mp['w_fc'], mp['b_fc'])
    return emb                                                               # [B, EMBED_DIM]


# ------------------------------ parameter init -----------------------------------
def init_params(key):
    keys = iter(jax.random.split(key, 64))

    def nrm(shape, scale=0.02):
        return (scale * jax.random.normal(next(keys), shape)).astype(jnp.float32)

    p = {}
    conv, in_c = [], 1
    for (c, k, s) in CONV_LAYERS:
        conv.append({'w': nrm((c, in_c, k))})
        in_c = c
    p['conv'] = conv
    c0 = CONV_LAYERS[0][0]
    p['gn_g'] = jnp.ones((c0,), jnp.float32)
    p['gn_b'] = jnp.zeros((c0,), jnp.float32)
    p['feat_ln_g'] = jnp.ones((C_CONV,), jnp.float32)
    p['feat_ln_b'] = jnp.zeros((C_CONV,), jnp.float32)
    p['proj_w'] = nrm((C_CONV, D))
    p['proj_b'] = jnp.zeros((D,), jnp.float32)
    p['pos_w'] = nrm((D, D // POS_GROUPS, POS_K))
    p['pos_b'] = jnp.zeros((D,), jnp.float32)
    p['enc_ln_g'] = jnp.ones((D,), jnp.float32)
    p['enc_ln_b'] = jnp.zeros((D,), jnp.float32)
    NL = NUM_LAYERS
    p['layers'] = {
        # Q/K/V fused into a single [D, 3D] weight (column order: q | k | v, head-major).
        'wqkv': nrm((NL, D, 3 * D)), 'bqkv': jnp.zeros((NL, 3 * D), jnp.float32),
        'wo': nrm((NL, D, D)), 'bo': jnp.zeros((NL, D), jnp.float32),
        'ln1_g': jnp.ones((NL, D), jnp.float32), 'ln1_b': jnp.zeros((NL, D), jnp.float32),
        'w1': nrm((NL, D, FFN)), 'b1': jnp.zeros((NL, FFN), jnp.float32),
        'w2': nrm((NL, FFN, D)), 'b2': jnp.zeros((NL, D), jnp.float32),
        'ln2_g': jnp.ones((NL, D), jnp.float32), 'ln2_b': jnp.zeros((NL, D), jnp.float32),
    }
    p['mhfa'] = {
        'weights_k': jnp.ones((L_REPS,), jnp.float32),   # torch: nn.Parameter(torch.ones(13))
        'weights_v': jnp.ones((L_REPS,), jnp.float32),
        'wk_c': nrm((D, MHFA_CMP)), 'bk_c': jnp.zeros((MHFA_CMP,), jnp.float32),
        'wv_c': nrm((D, MHFA_CMP)), 'bv_c': jnp.zeros((MHFA_CMP,), jnp.float32),
        'w_att': nrm((MHFA_CMP, MHFA_HEADS)), 'b_att': jnp.zeros((MHFA_HEADS,), jnp.float32),
        'w_fc': nrm((MHFA_HEADS * MHFA_CMP, EMBED_DIM)), 'b_fc': jnp.zeros((EMBED_DIM,), jnp.float32),
    }
    return p


if __name__ == "__main__":
    key = jax.random.PRNGKey(0)
    pkey, wkey = jax.random.split(key)
    params = init_params(pkey)
    wav = jax.random.normal(wkey, (B, SAMPLES), dtype=jnp.float32)

    fwd = jax.jit(forward)
    emb = fwd(params, wav)
    emb = jax.block_until_ready(emb)

    assert emb.shape == (B, EMBED_DIM), emb.shape
    assert bool(jnp.all(jnp.isfinite(emb)))
    print("KERNEL_OK")
</pallas_src>

<mosaic_0001>
module attributes {stable_mosaic.version = 11 : i64} {
  func.func @_group_matmul_kernel(%arg0: i32, %arg1: memref<1x318x10xbf16, #tpu.memory_space<vmem>>, %arg2: memref<1x10x16xbf16, #tpu.memory_space<vmem>>, %arg3: memref<1x1x16xf32, #tpu.memory_space<vmem>>, %arg4: memref<1x318x16xf32, #tpu.memory_space<vmem>>) attributes {dimension_semantics = [#tpu.dimension_semantics<parallel>], iteration_bounds = array<i64: 1>, scalar_prefetch = 0 : i64, scratch_operands = 0 : i64, tpu.core_type = #tpu.core_type<tc>, window_params = [{transform_indices = @transform_0, window_bounds = array<i64: 1, 318, 10>}, {transform_indices = @transform_1, window_bounds = array<i64: 1, 10, 16>}, {transform_indices = @transform_2, window_bounds = array<i64: 1, 1, 16>}, {transform_indices = @transform_3, window_bounds = array<i64: 1, 318, 16>}]} {
    %c0 = arith.constant 0 : index
    %c0_0 = arith.constant 0 : index
    %c0_1 = arith.constant 0 : index
    %0 = vector.load %arg1[%c0, %c0_0, %c0_1] : memref<1x318x10xbf16, #tpu.memory_space<vmem>>, vector<1x318x10xbf16>
    %1 = vector.shape_cast %0 : vector<1x318x10xbf16> to vector<318x10xbf16>
    %c0_2 = arith.constant 0 : index
    %c0_3 = arith.constant 0 : index
    %c0_4 = arith.constant 0 : index
    %2 = vector.load %arg2[%c0_2, %c0_3, %c0_4] : memref<1x10x16xbf16, #tpu.memory_space<vmem>>, vector<1x10x16xbf16>
    %3 = vector.shape_cast %2 : vector<1x10x16xbf16> to vector<10x16xbf16>
    %cst = arith.constant dense<0.000000e+00> : vector<318x16xf32>
    %4 = tpu.matmul %1, %3, %cst {dimension_numbers = #tpu.dot_dimension_numbers<[1], [0], [0], [1], [0, 0, 1, 1], [], []>} : vector<318x10xbf16>, vector<10x16xbf16>, vector<318x16xf32> -> vector<318x16xf32>
    %c0_5 = arith.constant 0 : index
    %c0_6 = arith.constant 0 : index
    %c0_7 = arith.constant 0 : index
    %5 = vector.load %arg3[%c0_5, %c0_6, %c0_7] : memref<1x1x16xf32, #tpu.memory_space<vmem>>, vector<1x1x16xf32>
    %6 = vector.shape_cast %5 : vector<1x1x16xf32> to vector<1x16xf32>
    %7 = vector.broadcast %6 : vector<1x16xf32> to vector<318x16xf32>
    %8 = arith.addf %4, %7 : vector<318x16xf32>
    %c0_8 = arith.constant 0 : index
    %c0_9 = arith.constant 0 : index
    %c0_10 = arith.constant 0 : index
    %9 = vector.load %arg4[%c0_8, %c0_9, %c0_10] : memref<1x318x16xf32, #tpu.memory_space<vmem>>, vector<1x318x16xf32>
    %10 = vector.shape_cast %9 : vector<1x318x16xf32> to vector<318x16xf32>
    %11 = vector.shape_cast %8 : vector<318x16xf32> to vector<1x318x16xf32>
    tpu.vector_store %arg4[%c0_8, %c0_9, %c0_10], %11 {strides = array<i32>} : memref<1x318x16xf32, #tpu.memory_space<vmem>>, vector<1x318x16xf32>,
    return
  }
  func.func @transform_0(%arg0: i32) -> (i32, i32, i32) {
    %c0_i32 = arith.constant 0 : i32
    %c0_i32_0 = arith.constant 0 : i32
    %c0_i32_1 = arith.constant 0 : i32
    return %arg0, %c0_i32, %c0_i32_0 : i32, i32, i32
  }
  func.func @transform_1(%arg0: i32) -> (i32, i32, i32) {
    %c0_i32 = arith.constant 0 : i32
    %c0_i32_0 = arith.constant 0 : i32
    %c0_i32_1 = arith.constant 0 : i32
    return %arg0, %c0_i32, %c0_i32_0 : i32, i32, i32
  }
  func.func @transform_2(%arg0: i32) -> (i32, i32, i32) {
    %c0_i32 = arith.constant 0 : i32
    %c0_i32_0 = arith.constant 0 : i32
    %c0_i32_1 = arith.constant 0 : i32
    return %arg0, %c0_i32, %c0_i32_0 : i32, i32, i32
  }
  func.func @transform_3(%arg0: i32) -> (i32, i32, i32) {
    %c0_i32 = arith.constant 0 : i32
    %c0_i32_0 = arith.constant 0 : i32
    %c0_i32_1 = arith.constant 0 : i32
    return %arg0, %c0_i32, %c0_i32_0 : i32, i32, i32
  }
}

module attributes {stable_mosaic.version = 11 : i64} {
  func.func @_rownorm_affine_kernel(%arg0: i32, %arg1: memref<32x159xf32, #tpu.memory_space<vmem>>, %arg2: memref<32x1xf32, #tpu.memory_space<vmem>>, %arg3: memref<32x1xf32, #tpu.memory_space<vmem>>, %arg4: memref<32x159xf32, #tpu.memory_space<vmem>>) attributes {dimension_semantics = [#tpu.dimension_semantics<arbitrary>], iteration_bounds = array<i64: 1>, scalar_prefetch = 0 : i64, scratch_operands = 0 : i64, tpu.core_type = #tpu.core_type<tc>, window_params = [{pipeline_mode = #tpu.pipeline_mode<synchronous>, transform_indices = @transform_0, window_bounds = array<i64: 32, 159>}, {pipeline_mode = #tpu.pipeline_mode<synchronous>, transform_indices = @transform_1, window_bounds = array<i64: 32, 1>}, {pipeline_mode = #tpu.pipeline_mode<synchronous>, transform_indices = @transform_2, window_bounds = array<i64: 32, 1>}, {pipeline_mode = #tpu.pipeline_mode<synchronous>, transform_indices = @transform_3, window_bounds = array<i64: 32, 159>}]} {
    %c0 = arith.constant 0 : index
    %c0_0 = arith.constant 0 : index
    %0 = vector.load %arg1[%c0, %c0_0] : memref<32x159xf32, #tpu.memory_space<vmem>>, vector<32x159xf32>
    %cst = arith.constant dense<0.000000e+00> : vector<32xf32>
    %1 = vector.multi_reduction <add>, %0, %cst [1] : vector<32x159xf32> to vector<32xf32>
    %2 = vector.shape_cast %1 : vector<32xf32> to vector<32x1xf32>
    %cst_1 = arith.constant 1.590000e+02 : f32
    %3 = vector.broadcast %cst_1 : f32 to vector<32x1xf32>
    %4 = arith.divf %2, %3 : vector<32x1xf32>
    %5 = vector.broadcast %4 : vector<32x1xf32> to vector<32x159xf32>
    %6 = arith.subf %0, %5 : vector<32x159xf32>
    %7 = arith.mulf %6, %6 : vector<32x159xf32>
    %cst_2 = arith.constant dense<0.000000e+00> : vector<32xf32>
    %8 = vector.multi_reduction <add>, %7, %cst_2 [1] : vector<32x159xf32> to vector<32xf32>
    %9 = vector.shape_cast %8 : vector<32xf32> to vector<32x1xf32>
    %cst_3 = arith.constant 1.590000e+02 : f32
    %10 = vector.broadcast %cst_3 : f32 to vector<32x1xf32>
    %11 = arith.divf %9, %10 : vector<32x1xf32>
    %12 = vector.broadcast %4 : vector<32x1xf32> to vector<32x159xf32>
    %13 = arith.subf %0, %12 : vector<32x159xf32>
    %cst_4 = arith.constant 9.99999974E-6 : f32
    %14 = vector.broadcast %cst_4 : f32 to vector<32x1xf32>
    %15 = arith.addf %11, %14 : vector<32x1xf32>
    %16 = math.rsqrt %15 : vector<32x1xf32>
    %17 = vector.broadcast %16 : vector<32x1xf32> to vector<32x159xf32>
    %18 = arith.mulf %13, %17 : vector<32x159xf32>
    %c0_5 = arith.constant 0 : index
    %c0_6 = arith.constant 0 : index
    %19 = vector.load %arg2[%c0_5, %c0_6] : memref<32x1xf32, #tpu.memory_space<vmem>>, vector<32x1xf32>
    %20 = vector.broadcast %19 : vector<32x1xf32> to vector<32x159xf32>
    %21 = arith.mulf %18, %20 : vector<32x159xf32>
    %c0_7 = arith.constant 0 : index
    %c0_8 = arith.constant 0 : index
    %22 = vector.load %arg3[%c0_7, %c0_8] : memref<32x1xf32, #tpu.memory_space<vmem>>, vector<32x1xf32>
    %23 = vector.broadcast %22 : vector<32x1xf32> to vector<32x159xf32>
    %24 = arith.addf %21, %23 : vector<32x159xf32>
    %cst_9 = arith.constant 5.000000e-01 : f32
    %25 = vector.broadcast %cst_9 : f32 to vector<32x159xf32>
    %26 = arith.mulf %25, %24 : vector<32x159xf32>
    %cst_10 = arith.constant 0.707106769 : f32
    %27 = vector.broadcast %cst_10 : f32 to vector<32x159xf32>
    %28 = arith.mulf %24, %27 : vector<32x159xf32>
    %29 = math.erf %28 : vector<32x159xf32>
    %cst_11 = arith.constant 1.000000e+00 : f32
    %30 = vector.broadcast %cst_11 : f32 to vector<32x159xf32>
    %31 = arith.addf %30, %29 : vector<32x159xf32>
    %32 = arith.mulf %26, %31 : vector<32x159xf32>
    %c0_12 = arith.constant 0 : index
    %c0_13 = arith.constant 0 : index
    %33 = vector.load %arg4[%c0_12, %c0_13] : memref<32x159xf32, #tpu.memory_space<vmem>>, vector<32x159xf32>
    tpu.vector_store %arg4[%c0_12, %c0_13], %32 {strides = array<i32>} : memref<32x159xf32, #tpu.memory_space<vmem>>, vector<32x159xf32>,
    return
  }
  func.func @transform_0(%arg0: i32) -> (i32, i32) {
    %c0_i32 = arith.constant 0 : i32
    %c0_i32_0 = arith.constant 0 : i32
    %c0_i32_1 = arith.constant 0 : i32
    return %c0_i32, %c0_i32_0 : i32, i32
  }
  func.func @transform_1(%arg0: i32) -> (i32, i32) {
    %c0_i32 = arith.constant 0 : i32
    %c0_i32_0 = arith.constant 0 : i32
    %c0_i32_1 = arith.constant 0 : i32
    return %c0_i32, %c0_i32_0 : i32, i32
  }
  func.func @transform_2(%arg0: i32) -> (i32, i32) {
    %c0_i32 = arith.constant 0 : i32
    %c0_i32_0 = arith.constant 0 : i32
    %c0_i32_1 = arith.constant 0 : i32
    return %c0_i32, %c0_i32_0 : i32, i32
  }
  func.func @transform_3(%arg0: i32) -> (i32, i32) {
    %c0_i32 = arith.constant 0 : i32
    %c0_i32_0 = arith.constant 0 : i32
    %c0_i32_1 = arith.constant 0 : i32
    return %c0_i32, %c0_i32_0 : i32, i32
  }
}

module attributes {stable_mosaic.version = 11 : i64} {
  func.func @_group_matmul_kernel(%arg0: i32, %arg1: memref<1x76x128xbf16, #tpu.memory_space<vmem>>, %arg2: memref<1x128x16xbf16, #tpu.memory_space<vmem>>, %arg3: memref<1x1x16xf32, #tpu.memory_space<vmem>>, %arg4: memref<1x76x16xf32, #tpu.memory_space<vmem>>) attributes {dimension_semantics = [#tpu.dimension_semantics<parallel>], iteration_bounds = array<i64: 1>, scalar_prefetch = 0 : i64, scratch_operands = 0 : i64, tpu.core_type = #tpu.core_type<tc>, window_params = [{transform_indices = @transform_0, window_bounds = array<i64: 1, 76, 128>}, {transform_indices = @transform_1, window_bounds = array<i64: 1, 128, 16>}, {transform_indices = @transform_2, window_bounds = array<i64: 1, 1, 16>}, {transform_indices = @transform_3, window_bounds = array<i64: 1, 76, 16>}]} {
    %c0 = arith.constant 0 : index
    %c0_0 = arith.constant 0 : index
    %c0_1 = arith.constant 0 : index
    %0 = vector.load %arg1[%c0, %c0_0, %c0_1] : memref<1x76x128xbf16, #tpu.memory_space<vmem>>, vector<1x76x128xbf16>
    %1 = vector.shape_cast %0 : vector<1x76x128xbf16> to vector<76x128xbf16>
    %c0_2 = arith.constant 0 : index
    %c0_3 = arith.constant 0 : index
    %c0_4 = arith.constant 0 : index
    %2 = vector.load %arg2[%c0_2, %c0_3, %c0_4] : memref<1x128x16xbf16, #tpu.memory_space<vmem>>, vector<1x128x16xbf16>
    %3 = vector.shape_cast %2 : vector<1x128x16xbf16> to vector<128x16xbf16>
    %cst = arith.constant dense<0.000000e+00> : vector<76x16xf32>
    %4 = tpu.matmul %1, %3, %cst {dimension_numbers = #tpu.dot_dimension_numbers<[1], [0], [0], [1], [0, 0, 1, 1], [], []>} : vector<76x128xbf16>, vector<128x16xbf16>, vector<76x16xf32> -> vector<76x16xf32>
    %c0_5 = arith.constant 0 : index
    %c0_6 = arith.constant 0 : index
    %c0_7 = arith.constant 0 : index
    %5 = vector.load %arg3[%c0_5, %c0_6, %c0_7] : memref<1x1x16xf32, #tpu.memory_space<vmem>>, vector<1x1x16xf32>
    %6 = vector.shape_cast %5 : vector<1x1x16xf32> to vector<1x16xf32>
    %7 = vector.broadcast %6 : vector<1x16xf32> to vector<76x16xf32>
    %8 = arith.addf %4, %7 : vector<76x16xf32>
    %cst_8 = arith.constant 5.000000e-01 : f32
    %9 = vector.broadcast %cst_8 : f32 to vector<76x16xf32>
    %10 = arith.mulf %9, %8 : vector<76x16xf32>
    %cst_9 = arith.constant 0.707106769 : f32
    %11 = vector.broadcast %cst_9 : f32 to vector<76x16xf32>
    %12 = arith.mulf %8, %11 : vector<76x16xf32>
    %13 = math.erf %12 : vector<76x16xf32>
    %cst_10 = arith.constant 1.000000e+00 : f32
    %14 = vector.broadcast %cst_10 : f32 to vector<76x16xf32>
    %15 = arith.addf %14, %13 : vector<76x16xf32>
    %16 = arith.mulf %10, %15 : vector<76x16xf32>
    %c0_11 = arith.constant 0 : index
    %c0_12 = arith.constant 0 : index
    %c0_13 = arith.constant 0 : index
    %17 = vector.load %arg4[%c0_11, %c0_12, %c0_13] : memref<1x76x16xf32, #tpu.memory_space<vmem>>, vector<1x76x16xf32>
    %18 = vector.shape_cast %17 : vector<1x76x16xf32> to vector<76x16xf32>
    %19 = vector.shape_cast %16 : vector<76x16xf32> to vector<1x76x16xf32>
    tpu.vector_store %arg4[%c0_11, %c0_12, %c0_13], %19 {strides = array<i32>} : memref<1x76x16xf32, #tpu.memory_space<vmem>>, vector<1x76x16xf32>,
    return
  }
  func.func @transform_0(%arg0: i32) -> (i32, i32, i32) {
    %c0_i32 = arith.constant 0 : i32
    %c0_i32_0 = arith.constant 0 : i32
    %c0_i32_1 = arith.constant 0 : i32
    return %arg0, %c0_i32, %c0_i32_0 : i32, i32, i32
  }
  func.func @transform_1(%arg0: i32) -> (i32, i32, i32) {
    %c0_i32 = arith.constant 0 : i32
    %c0_i32_0 = arith.constant 0 : i32
    %c0_i32_1 = arith.constant 0 : i32
    return %arg0, %c0_i32, %c0_i32_0 : i32, i32, i32
  }
  func.func @transform_2(%arg0: i32) -> (i32, i32, i32) {
    %c0_i32 = arith.constant 0 : i32
    %c0_i32_0 = arith.constant 0 : i32
    %c0_i32_1 = arith.constant 0 : i32
    return %arg0, %c0_i32, %c0_i32_0 : i32, i32, i32
  }
  func.func @transform_3(%arg0: i32) -> (i32, i32, i32) {
    %c0_i32 = arith.constant 0 : i32
    %c0_i32_0 = arith.constant 0 : i32
    %c0_i32_1 = arith.constant 0 : i32
    return %arg0, %c0_i32, %c0_i32_0 : i32, i32, i32
  }
}

module attributes {stable_mosaic.version = 11 : i64} {
  func.func @_ln_linear_kernel(%arg0: i32, %arg1: memref<76x16xf32, #tpu.memory_space<vmem>>, %arg2: memref<1x16xf32, #tpu.memory_space<vmem>>, %arg3: memref<1x16xf32, #tpu.memory_space<vmem>>, %arg4: memref<16x32xbf16, #tpu.memory_space<vmem>>, %arg5: memref<1x32xf32, #tpu.memory_space<vmem>>, %arg6: memref<76x32xf32, #tpu.memory_space<vmem>>) attributes {dimension_semantics = [#tpu.dimension_semantics<arbitrary>], iteration_bounds = array<i64: 1>, scalar_prefetch = 0 : i64, scratch_operands = 0 : i64, tpu.core_type = #tpu.core_type<tc>, window_params = [{pipeline_mode = #tpu.pipeline_mode<synchronous>, transform_indices = @transform_0, window_bounds = array<i64: 76, 16>}, {pipeline_mode = #tpu.pipeline_mode<synchronous>, transform_indices = @transform_1, window_bounds = array<i64: 1, 16>}, {pipeline_mode = #tpu.pipeline_mode<synchronous>, transform_indices = @transform_2, window_bounds = array<i64: 1, 16>}, {pipeline_mode = #tpu.pipeline_mode<synchronous>, transform_indices = @transform_3, window_bounds = array<i64: 16, 32>}, {pipeline_mode = #tpu.pipeline_mode<synchronous>, transform_indices = @transform_4, window_bounds = array<i64: 1, 32>}, {pipeline_mode = #tpu.pipeline_mode<synchronous>, transform_indices = @transform_5, window_bounds = array<i64: 76, 32>}]} {
    %c0 = arith.constant 0 : index
    %c0_0 = arith.constant 0 : index
    %0 = vector.load %arg1[%c0, %c0_0] : memref<76x16xf32, #tpu.memory_space<vmem>>, vector<76x16xf32>
    %c0_1 = arith.constant 0 : index
    %c0_2 = arith.constant 0 : index
    %1 = vector.load %arg2[%c0_1, %c0_2] : memref<1x16xf32, #tpu.memory_space<vmem>>, vector<1x16xf32>
    %c0_3 = arith.constant 0 : index
    %c0_4 = arith.constant 0 : index
    %2 = vector.load %arg3[%c0_3, %c0_4] : memref<1x16xf32, #tpu.memory_space<vmem>>, vector<1x16xf32>
    %cst = arith.constant dense<0.000000e+00> : vector<76xf32>
    %3 = vector.multi_reduction <add>, %0, %cst [1] : vector<76x16xf32> to vector<76xf32>
    %4 = vector.shape_cast %3 : vector<76xf32> to vector<76x1xf32>
    %cst_5 = arith.constant 1.600000e+01 : f32
    %5 = vector.broadcast %cst_5 : f32 to vector<76x1xf32>
    %6 = arith.divf %4, %5 : vector<76x1xf32>
    %7 = vector.broadcast %6 : vector<76x1xf32> to vector<76x16xf32>
    %8 = arith.subf %0, %7 : vector<76x16xf32>
    %9 = arith.mulf %8, %8 : vector<76x16xf32>
    %cst_6 = arith.constant dense<0.000000e+00> : vector<76xf32>
    %10 = vector.multi_reduction <add>, %9, %cst_6 [1] : vector<76x16xf32> to vector<76xf32>
    %11 = vector.shape_cast %10 : vector<76xf32> to vector<76x1xf32>
    %cst_7 = arith.constant 1.600000e+01 : f32
    %12 = vector.broadcast %cst_7 : f32 to vector<76x1xf32>
    %13 = arith.divf %11, %12 : vector<76x1xf32>
    %14 = vector.broadcast %6 : vector<76x1xf32> to vector<76x16xf32>
    %15 = arith.subf %0, %14 : vector<76x16xf32>
    %cst_8 = arith.constant 9.99999974E-6 : f32
    %16 = vector.broadcast %cst_8 : f32 to vector<76x1xf32>
    %17 = arith.addf %13, %16 : vector<76x1xf32>
    %18 = math.rsqrt %17 : vector<76x1xf32>
    %19 = vector.broadcast %18 : vector<76x1xf32> to vector<76x16xf32>
    %20 = arith.mulf %15, %19 : vector<76x16xf32>
    %21 = vector.broadcast %1 : vector<1x16xf32> to vector<76x16xf32>
    %22 = arith.mulf %20, %21 : vector<76x16xf32>
    %23 = vector.broadcast %2 : vector<1x16xf32> to vector<76x16xf32>
    %24 = arith.addf %22, %23 : vector<76x16xf32>
    %25 = arith.truncf %24 : vector<76x16xf32> to vector<76x16xbf16>
    %c0_9 = arith.constant 0 : index
    %c0_10 = arith.constant 0 : index
    %26 = vector.load %arg4[%c0_9, %c0_10] : memref<16x32xbf16, #tpu.memory_space<vmem>>, vector<16x32xbf16>
    %cst_11 = arith.constant dense<0.000000e+00> : vector<76x32xf32>
    %27 = tpu.matmul %25, %26, %cst_11 {dimension_numbers = #tpu.dot_dimension_numbers<[1], [0], [0], [1], [0, 0, 1, 1], [], []>} : vector<76x16xbf16>, vector<16x32xbf16>, vector<76x32xf32> -> vector<76x32xf32>
    %c0_12 = arith.constant 0 : index
    %c0_13 = arith.constant 0 : index
    %28 = vector.load %arg5[%c0_12, %c0_13] : memref<1x32xf32, #tpu.memory_space<vmem>>, vector<1x32xf32>
    %29 = vector.broadcast %28 : vector<1x32xf32> to vector<76x32xf32>
    %30 = arith.addf %27, %29 : vector<76x32xf32>
    %c0_14 = arith.constant 0 : index
    %c0_15 = arith.constant 0 : index
    %31 = vector.load %arg6[%c0_14, %c0_15] : memref<76x32xf32, #tpu.memory_space<vmem>>, vector<76x32xf32>
    tpu.vector_store %arg6[%c0_14, %c0_15], %30 {strides = array<i32>} : memref<76x32xf32, #tpu.memory_space<vmem>>, vector<76x32xf32>,
    return
  }
  func.func @transform_0(%arg0: i32) -> (i32, i32) {
    %c0_i32 = arith.constant 0 : i32
    %c0_i32_0 = arith.constant 0 : i32
    %c0_i32_1 = arith.constant 0 : i32
    return %c0_i32, %c0_i32_0 : i32, i32
  }
  func.func @transform_1(%arg0: i32) -> (i32, i32) {
    %c0_i32 = arith.constant 0 : i32
    %c0_i32_0 = arith.constant 0 : i32
    %c0_i32_1 = arith.constant 0 : i32
    return %c0_i32, %c0_i32_0 : i32, i32
  }
  func.func @transform_2(%arg0: i32) -> (i32, i32) {
    %c0_i32 = arith.constant 0 : i32
    %c0_i32_0 = arith.constant 0 : i32
    %c0_i32_1 = arith.constant 0 : i32
    return %c0_i32, %c0_i32_0 : i32, i32
  }
  func.func @transform_3(%arg0: i32) -> (i32, i32) {
    %c0_i32 = arith.constant 0 : i32
    %c0_i32_0 = arith.constant 0 : i32
    %c0_i32_1 = arith.constant 0 : i32
    return %c0_i32, %c0_i32_0 : i32, i32
  }
  func.func @transform_4(%arg0: i32) -> (i32, i32) {
    %c0_i32 = arith.constant 0 : i32
    %c0_i32_0 = arith.constant 0 : i32
    %c0_i32_1 = arith.constant 0 : i32
    return %c0_i32, %c0_i32_0 : i32, i32
  }
  func.func @transform_5(%arg0: i32) -> (i32, i32) {
    %c0_i32 = arith.constant 0 : i32
    %c0_i32_0 = arith.constant 0 : i32
    %c0_i32_1 = arith.constant 0 : i32
    return %c0_i32, %c0_i32_0 : i32, i32
  }
}

module attributes {stable_mosaic.version = 11 : i64} {
  func.func @_group_matmul_kernel(%arg0: i32, %arg1: memref<1x78x64xbf16, #tpu.memory_space<vmem>>, %arg2: memref<1x64x8xbf16, #tpu.memory_space<vmem>>, %arg3: memref<1x1x8xf32, #tpu.memory_space<vmem>>, %arg4: memref<1x78x8xf32, #tpu.memory_space<vmem>>) attributes {dimension_semantics = [#tpu.dimension_semantics<parallel>], iteration_bounds = array<i64: 4>, scalar_prefetch = 0 : i64, scratch_operands = 0 : i64, tpu.core_type = #tpu.core_type<tc>, window_params = [{transform_indices = @transform_0, window_bounds = array<i64: 1, 78, 64>}, {transform_indices = @transform_1, window_bounds = array<i64: 1, 64, 8>}, {transform_indices = @transform_2, window_bounds = array<i64: 1, 1, 8>}, {transform_indices = @transform_3, window_bounds = array<i64: 1, 78, 8>}]} {
    %c0 = arith.constant 0 : index
    %c0_0 = arith.constant 0 : index
    %c0_1 = arith.constant 0 : index
    %0 = vector.load %arg1[%c0, %c0_0, %c0_1] : memref<1x78x64xbf16, #tpu.memory_space<vmem>>, vector<1x78x64xbf16>
    %1 = vector.shape_cast %0 : vector<1x78x64xbf16> to vector<78x64xbf16>
    %c0_2 = arith.constant 0 : index
    %c0_3 = arith.constant 0 : index
    %c0_4 = arith.constant 0 : index
    %2 = vector.load %arg2[%c0_2, %c0_3, %c0_4] : memref<1x64x8xbf16, #tpu.memory_space<vmem>>, vector<1x64x8xbf16>
    %3 = vector.shape_cast %2 : vector<1x64x8xbf16> to vector<64x8xbf16>
    %cst = arith.constant dense<0.000000e+00> : vector<78x8xf32>
    %4 = tpu.matmul %1, %3, %cst {dimension_numbers = #tpu.dot_dimension_numbers<[1], [0], [0], [1], [0, 0, 1, 1], [], []>} : vector<78x64xbf16>, vector<64x8xbf16>, vector<78x8xf32> -> vector<78x8xf32>
    %c0_5 = arith.constant 0 : index
    %c0_6 = arith.constant 0 : index
    %c0_7 = arith.constant 0 : index
    %5 = vector.load %arg3[%c0_5, %c0_6, %c0_7] : memref<1x1x8xf32, #tpu.memory_space<vmem>>, vector<1x1x8xf32>
    %6 = vector.shape_cast %5 : vector<1x1x8xf32> to vector<1x8xf32>
    %7 = vector.broadcast %6 : vector<1x8xf32> to vector<78x8xf32>
    %8 = arith.addf %4, %7 : vector<78x8xf32>
    %cst_8 = arith.constant 5.000000e-01 : f32
    %9 = vector.broadcast %cst_8 : f32 to vector<78x8xf32>
    %10 = arith.mulf %9, %8 : vector<78x8xf32>
    %cst_9 = arith.constant 0.707106769 : f32
    %11 = vector.broadcast %cst_9 : f32 to vector<78x8xf32>
    %12 = arith.mulf %8, %11 : vector<78x8xf32>
    %13 = math.erf %12 : vector<78x8xf32>
    %cst_10 = arith.constant 1.000000e+00 : f32
    %14 = vector.broadcast %cst_10 : f32 to vector<78x8xf32>
    %15 = arith.addf %14, %13 : vector<78x8xf32>
    %16 = arith.mulf %10, %15 : vector<78x8xf32>
    %c0_11 = arith.constant 0 : index
    %c0_12 = arith.constant 0 : index
    %c0_13 = arith.constant 0 : index
    %17 = vector.load %arg4[%c0_11, %c0_12, %c0_13] : memref<1x78x8xf32, #tpu.memory_space<vmem>>, vector<1x78x8xf32>
    %18 = vector.shape_cast %17 : vector<1x78x8xf32> to vector<78x8xf32>
    %19 = vector.shape_cast %16 : vector<78x8xf32> to vector<1x78x8xf32>
    tpu.vector_store %arg4[%c0_11, %c0_12, %c0_13], %19 {strides = array<i32>} : memref<1x78x8xf32, #tpu.memory_space<vmem>>, vector<1x78x8xf32>,
    return
  }
  func.func @transform_0(%arg0: i32) -> (i32, i32, i32) {
    %c0_i32 = arith.constant 0 : i32
    %c0_i32_0 = arith.constant 0 : i32
    %c0_i32_1 = arith.constant 0 : i32
    return %arg0, %c0_i32, %c0_i32_0 : i32, i32, i32
  }
  func.func @transform_1(%arg0: i32) -> (i32, i32, i32) {
    %c0_i32 = arith.constant 0 : i32
    %c0_i32_0 = arith.constant 0 : i32
    %c0_i32_1 = arith.constant 0 : i32
    return %arg0, %c0_i32, %c0_i32_0 : i32, i32, i32
  }
  func.func @transform_2(%arg0: i32) -> (i32, i32, i32) {
    %c0_i32 = arith.constant 0 : i32
    %c0_i32_0 = arith.constant 0 : i32
    %c0_i32_1 = arith.constant 0 : i32
    return %arg0, %c0_i32, %c0_i32_0 : i32, i32, i32
  }
  func.func @transform_3(%arg0: i32) -> (i32, i32, i32) {
    %c0_i32 = arith.constant 0 : i32
    %c0_i32_0 = arith.constant 0 : i32
    %c0_i32_1 = arith.constant 0 : i32
    return %arg0, %c0_i32, %c0_i32_0 : i32, i32, i32
  }
}

module attributes {stable_mosaic.version = 11 : i64} {
  func.func @_add_ln_kernel(%arg0: i32, %arg1: memref<76x32xf32, #tpu.memory_space<vmem>>, %arg2: memref<76x32xf32, #tpu.memory_space<vmem>>, %arg3: memref<1x32xf32, #tpu.memory_space<vmem>>, %arg4: memref<1x32xf32, #tpu.memory_space<vmem>>, %arg5: memref<76x32xf32, #tpu.memory_space<vmem>>) attributes {dimension_semantics = [#tpu.dimension_semantics<arbitrary>], iteration_bounds = array<i64: 1>, scalar_prefetch = 0 : i64, scratch_operands = 0 : i64, tpu.core_type = #tpu.core_type<tc>, window_params = [{pipeline_mode = #tpu.pipeline_mode<synchronous>, transform_indices = @transform_0, window_bounds = array<i64: 76, 32>}, {pipeline_mode = #tpu.pipeline_mode<synchronous>, transform_indices = @transform_1, window_bounds = array<i64: 76, 32>}, {pipeline_mode = #tpu.pipeline_mode<synchronous>, transform_indices = @transform_2, window_bounds = array<i64: 1, 32>}, {pipeline_mode = #tpu.pipeline_mode<synchronous>, transform_indices = @transform_3, window_bounds = array<i64: 1, 32>}, {pipeline_mode = #tpu.pipeline_mode<synchronous>, transform_indices = @transform_4, window_bounds = array<i64: 76, 32>}]} {
    %c0 = arith.constant 0 : index
    %c0_0 = arith.constant 0 : index
    %0 = vector.load %arg1[%c0, %c0_0] : memref<76x32xf32, #tpu.memory_space<vmem>>, vector<76x32xf32>
    %c0_1 = arith.constant 0 : index
    %c0_2 = arith.constant 0 : index
    %1 = vector.load %arg2[%c0_1, %c0_2] : memref<76x32xf32, #tpu.memory_space<vmem>>, vector<76x32xf32>
    %2 = arith.addf %0, %1 : vector<76x32xf32>
    %c0_3 = arith.constant 0 : index
    %c0_4 = arith.constant 0 : index
    %3 = vector.load %arg3[%c0_3, %c0_4] : memref<1x32xf32, #tpu.memory_space<vmem>>, vector<1x32xf32>
    %c0_5 = arith.constant 0 : index
    %c0_6 = arith.constant 0 : index
    %4 = vector.load %arg4[%c0_5, %c0_6] : memref<1x32xf32, #tpu.memory_space<vmem>>, vector<1x32xf32>
    %cst = arith.constant dense<0.000000e+00> : vector<76xf32>
    %5 = vector.multi_reduction <add>, %2, %cst [1] : vector<76x32xf32> to vector<76xf32>
    %6 = vector.shape_cast %5 : vector<76xf32> to vector<76x1xf32>
    %cst_7 = arith.constant 3.200000e+01 : f32
    %7 = vector.broadcast %cst_7 : f32 to vector<76x1xf32>
    %8 = arith.divf %6, %7 : vector<76x1xf32>
    %9 = vector.broadcast %8 : vector<76x1xf32> to vector<76x32xf32>
    %10 = arith.subf %2, %9 : vector<76x32xf32>
    %11 = arith.mulf %10, %10 : vector<76x32xf32>
    %cst_8 = arith.constant dense<0.000000e+00> : vector<76xf32>
    %12 = vector.multi_reduction <add>, %11, %cst_8 [1] : vector<76x32xf32> to vector<76xf32>
    %13 = vector.shape_cast %12 : vector<76xf32> to vector<76x1xf32>
    %cst_9 = arith.constant 3.200000e+01 : f32
    %14 = vector.broadcast %cst_9 : f32 to vector<76x1xf32>
    %15 = arith.divf %13, %14 : vector<76x1xf32>
    %16 = vector.broadcast %8 : vector<76x1xf32> to vector<76x32xf32>
    %17 = arith.subf %2, %16 : vector<76x32xf32>
    %cst_10 = arith.constant 9.99999974E-6 : f32
    %18 = vector.broadcast %cst_10 : f32 to vector<76x1xf32>
    %19 = arith.addf %15, %18 : vector<76x1xf32>
    %20 = math.rsqrt %19 : vector<76x1xf32>
    %21 = vector.broadcast %20 : vector<76x1xf32> to vector<76x32xf32>
    %22 = arith.mulf %17, %21 : vector<76x32xf32>
    %23 = vector.broadcast %3 : vector<1x32xf32> to vector<76x32xf32>
    %24 = arith.mulf %22, %23 : vector<76x32xf32>
    %25 = vector.broadcast %4 : vector<1x32xf32> to vector<76x32xf32>
    %26 = arith.addf %24, %25 : vector<76x32xf32>
    %c0_11 = arith.constant 0 : index
    %c0_12 = arith.constant 0 : index
    %27 = vector.load %arg5[%c0_11, %c0_12] : memref<76x32xf32, #tpu.memory_space<vmem>>, vector<76x32xf32>
    tpu.vector_store %arg5[%c0_11, %c0_12], %26 {strides = array<i32>} : memref<76x32xf32, #tpu.memory_space<vmem>>, vector<76x32xf32>,
    return
  }
  func.func @transform_0(%arg0: i32) -> (i32, i32) {
    %c0_i32 = arith.constant 0 : i32
    %c0_i32_0 = arith.constant 0 : i32
    %c0_i32_1 = arith.constant 0 : i32
    return %c0_i32, %c0_i32_0 : i32, i32
  }
  func.func @transform_1(%arg0: i32) -> (i32, i32) {
    %c0_i32 = arith.constant 0 : i32
    %c0_i32_0 = arith.constant 0 : i32
    %c0_i32_1 = arith.constant 0 : i32
    return %c0_i32, %c0_i32_0 : i32, i32
  }
  func.func @transform_2(%arg0: i32) -> (i32, i32) {
    %c0_i32 = arith.constant 0 : i32
    %c0_i32_0 = arith.constant 0 : i32
    %c0_i32_1 = arith.constant 0 : i32
    return %c0_i32, %c0_i32_0 : i32, i32
  }
  func.func @transform_3(%arg0: i32) -> (i32, i32) {
    %c0_i32 = arith.constant 0 : i32
    %c0_i32_0 = arith.constant 0 : i32
    %c0_i32_1 = arith.constant 0 : i32
    return %c0_i32, %c0_i32_0 : i32, i32
  }
  func.func @transform_4(%arg0: i32) -> (i32, i32) {
    %c0_i32 = arith.constant 0 : i32
    %c0_i32_0 = arith.constant 0 : i32
    %c0_i32_1 = arith.constant 0 : i32
    return %c0_i32, %c0_i32_0 : i32, i32
  }
}

module attributes {stable_mosaic.version = 11 : i64} {
  func.func @_encoder_layer_kernel(%arg0: i32, %arg1: memref<2x38x32xf32, #tpu.memory_space<vmem>>, %arg2: memref<32x96xbf16, #tpu.memory_space<vmem>>, %arg3: memref<1x96xf32, #tpu.memory_space<vmem>>, %arg4: memref<32x32xbf16, #tpu.memory_space<vmem>>, %arg5: memref<1x32xf32, #tpu.memory_space<vmem>>, %arg6: memref<1x32xf32, #tpu.memory_space<vmem>>, %arg7: memref<1x32xf32, #tpu.memory_space<vmem>>, %arg8: memref<32x64xbf16, #tpu.memory_space<vmem>>, %arg9: memref<1x64xf32, #tpu.memory_space<vmem>>, %arg10: memref<64x32xbf16, #tpu.memory_space<vmem>>, %arg11: memref<1x32xf32, #tpu.memory_space<vmem>>, %arg12: memref<1x32xf32, #tpu.memory_space<vmem>>, %arg13: memref<1x32xf32, #tpu.memory_space<vmem>>, %arg14: memref<2x38x32xf32, #tpu.memory_space<vmem>>) attributes {dimension_semantics = [#tpu.dimension_semantics<arbitrary>], iteration_bounds = array<i64: 1>, scalar_prefetch = 0 : i64, scratch_operands = 0 : i64, tpu.core_type = #tpu.core_type<tc>, window_params = [{pipeline_mode = #tpu.pipeline_mode<synchronous>, transform_indices = @transform_0, window_bounds = array<i64: 2, 38, 32>}, {pipeline_mode = #tpu.pipeline_mode<synchronous>, transform_indices = @transform_1, window_bounds = array<i64: 32, 96>}, {pipeline_mode = #tpu.pipeline_mode<synchronous>, transform_indices = @transform_2, window_bounds = array<i64: 1, 96>}, {pipeline_mode = #tpu.pipeline_mode<synchronous>, transform_indices = @transform_3, window_bounds = array<i64: 32, 32>}, {pipeline_mode = #tpu.pipeline_mode<synchronous>, transform_indices = @transform_4, window_bounds = array<i64: 1, 32>}, {pipeline_mode = #tpu.pipeline_mode<synchronous>, transform_indices = @transform_5, window_bounds = array<i64: 1, 32>}, {pipeline_mode = #tpu.pipeline_mode<synchronous>, transform_indices = @transform_6, window_bounds = array<i64: 1, 32>}, {pipeline_mode = #tpu.pipeline_mode<synchronous>, transform_indices = @transform_7, window_bounds = array<i64: 32, 64>}, {pipeline_mode = #tpu.pipeline_mode<synchronous>, transform_indices = @transform_8, window_bounds = array<i64: 1, 64>}, {pipeline_mode = #tpu.pipeline_mode<synchronous>, transform_indices = @transform_9, window_bounds = array<i64: 64, 32>}, {pipeline_mode = #tpu.pipeline_mode<synchronous>, transform_indices = @transform_10, window_bounds = array<i64: 1, 32>}, {pipeline_mode = #tpu.pipeline_mode<synchronous>, transform_indices = @transform_11, window_bounds = array<i64: 1, 32>}, {pipeline_mode = #tpu.pipeline_mode<synchronous>, transform_indices = @transform_12, window_bounds = array<i64: 1, 32>}, {pipeline_mode = #tpu.pipeline_mode<synchronous>, transform_indices = @transform_13, window_bounds = array<i64: 2, 38, 32>}]} {
    %c0 = arith.constant 0 : index
    %c0_0 = arith.constant 0 : index
    %c0_1 = arith.constant 0 : index
    %0 = vector.load %arg1[%c0, %c0_0, %c0_1] : memref<2x38x32xf32, #tpu.memory_space<vmem>>, vector<2x38x32xf32>
    %1 = vector.shape_cast %0 : vector<2x38x32xf32> to vector<76x32xf32>
    %2 = arith.truncf %1 : vector<76x32xf32> to vector<76x32xbf16>
    %c0_2 = arith.constant 0 : index
    %c0_3 = arith.constant 0 : index
    %3 = vector.load %arg2[%c0_2, %c0_3] : memref<32x96xbf16, #tpu.memory_space<vmem>>, vector<32x96xbf16>
    %cst = arith.constant dense<0.000000e+00> : vector<76x96xf32>
    %4 = tpu.matmul %2, %3, %cst {dimension_numbers = #tpu.dot_dimension_numbers<[1], [0], [0], [1], [0, 0, 1, 1], [], []>} : vector<76x32xbf16>, vector<32x96xbf16>, vector<76x96xf32> -> vector<76x96xf32>
    %c0_4 = arith.constant 0 : index
    %c0_5 = arith.constant 0 : index
    %5 = vector.load %arg3[%c0_4, %c0_5] : memref<1x96xf32, #tpu.memory_space<vmem>>, vector<1x96xf32>
    %6 = vector.broadcast %5 : vector<1x96xf32> to vector<76x96xf32>
    %7 = arith.addf %4, %6 : vector<76x96xf32>
    %8 = vector.extract_strided_slice %7 {offsets = [0, 0], sizes = [76, 8], strides = [1, 1]} : vector<76x96xf32> to vector<76x8xf32>
    %cst_6 = arith.constant 0.353553385 : f32
    %9 = vector.broadcast %cst_6 : f32 to vector<76x8xf32>
    %10 = arith.mulf %8, %9 : vector<76x8xf32>
    %11 = vector.shape_cast %10 : vector<76x8xf32> to vector<2x38x8xf32>
    %12 = vector.extract_strided_slice %7 {offsets = [0, 32], sizes = [76, 8], strides = [1, 1]} : vector<76x96xf32> to vector<76x8xf32>
    %13 = vector.shape_cast %12 : vector<76x8xf32> to vector<2x38x8xf32>
    %14 = vector.extract_strided_slice %7 {offsets = [0, 64], sizes = [76, 8], strides = [1, 1]} : vector<76x96xf32> to vector<76x8xf32>
    %15 = vector.shape_cast %14 : vector<76x8xf32> to vector<2x38x8xf32>
    %16 = arith.truncf %11 : vector<2x38x8xf32> to vector<2x38x8xbf16>
    %17 = arith.truncf %13 : vector<2x38x8xf32> to vector<2x38x8xbf16>
    %cst_7 = arith.constant dense<0.000000e+00> : vector<2x38x38xf32>
    %18 = tpu.matmul %16, %17, %cst_7 {dimension_numbers = #tpu.dot_dimension_numbers<[2], [2], [1], [1], [0, 0, 0, 1, 1, 1], [0], [0]>} : vector<2x38x8xbf16>, vector<2x38x8xbf16>, vector<2x38x38xf32> -> vector<2x38x38xf32>
    %cst_8 = arith.constant dense<0xFF800000> : vector<2x38xf32>
    %19 = vector.multi_reduction <maximumf>, %18, %cst_8 [2] : vector<2x38x38xf32> to vector<2x38xf32>
    %20 = vector.shape_cast %19 : vector<2x38xf32> to vector<2x38x1xf32>
    %21 = vector.broadcast %20 : vector<2x38x1xf32> to vector<2x38x38xf32>
    %22 = arith.subf %18, %21 : vector<2x38x38xf32>
    %23 = math.exp %22 : vector<2x38x38xf32>
    %cst_9 = arith.constant dense<0.000000e+00> : vector<2x38xf32>
    %24 = vector.multi_reduction <add>, %23, %cst_9 [2] : vector<2x38x38xf32> to vector<2x38xf32>
    %25 = vector.shape_cast %24 : vector<2x38xf32> to vector<2x38x1xf32>
    %26 = tpu.reciprocal %25 {approx = true} : vector<2x38x1xf32> -> vector<2x38x1xf32>
    %27 = vector.broadcast %26 : vector<2x38x1xf32> to vector<2x38x38xf32>
    %28 = arith.mulf %23, %27 : vector<2x38x38xf32>
    %29 = arith.truncf %28 : vector<2x38x38xf32> to vector<2x38x38xbf16>
    %30 = arith.truncf %15 : vector<2x38x8xf32> to vector<2x38x8xbf16>
    %cst_10 = arith.constant dense<0.000000e+00> : vector<2x38x8xf32>
    %31 = tpu.matmul %29, %30, %cst_10 {dimension_numbers = #tpu.dot_dimension_numbers<[2], [1], [1], [2], [0, 0, 0, 1, 1, 2], [0], [0]>} : vector<2x38x38xbf16>, vector<2x38x8xbf16>, vector<2x38x8xf32> -> vector<2x38x8xf32>
    %32 = vector.extract_strided_slice %7 {offsets = [0, 8], sizes = [76, 8], strides = [1, 1]} : vector<76x96xf32> to vector<76x8xf32>
    %cst_11 = arith.constant 0.353553385 : f32
    %33 = vector.broadcast %cst_11 : f32 to vector<76x8xf32>
    %34 = arith.mulf %32, %33 : vector<76x8xf32>
    %35 = vector.shape_cast %34 : vector<76x8xf32> to vector<2x38x8xf32>
    %36 = vector.extract_strided_slice %7 {offsets = [0, 40], sizes = [76, 8], strides = [1, 1]} : vector<76x96xf32> to vector<76x8xf32>
    %37 = vector.shape_cast %36 : vector<76x8xf32> to vector<2x38x8xf32>
    %38 = vector.extract_strided_slice %7 {offsets = [0, 72], sizes = [76, 8], strides = [1, 1]} : vector<76x96xf32> to vector<76x8xf32>
    %39 = vector.shape_cast %38 : vector<76x8xf32> to vector<2x38x8xf32>
    %40 = arith.truncf %35 : vector<2x38x8xf32> to vector<2x38x8xbf16>
    %41 = arith.truncf %37 : vector<2x38x8xf32> to vector<2x38x8xbf16>
    %cst_12 = arith.constant dense<0.000000e+00> : vector<2x38x38xf32>
    %42 = tpu.matmul %40, %41, %cst_12 {dimension_numbers = #tpu.dot_dimension_numbers<[2], [2], [1], [1], [0, 0, 0, 1, 1, 1], [0], [0]>} : vector<2x38x8xbf16>, vector<2x38x8xbf16>, vector<2x38x38xf32> -> vector<2x38x38xf32>
    %cst_13 = arith.constant dense<0xFF800000> : vector<2x38xf32>
    %43 = vector.multi_reduction <maximumf>, %42, %cst_13 [2] : vector<2x38x38xf32> to vector<2x38xf32>
    %44 = vector.shape_cast %43 : vector<2x38xf32> to vector<2x38x1xf32>
    %45 = vector.broadcast %44 : vector<2x38x1xf32> to vector<2x38x38xf32>
    %46 = arith.subf %42, %45 : vector<2x38x38xf32>
    %47 = math.exp %46 : vector<2x38x38xf32>
    %cst_14 = arith.constant dense<0.000000e+00> : vector<2x38xf32>
    %48 = vector.multi_reduction <add>, %47, %cst_14 [2] : vector<2x38x38xf32> to vector<2x38xf32>
    %49 = vector.shape_cast %48 : vector<2x38xf32> to vector<2x38x1xf32>
    %50 = tpu.reciprocal %49 {approx = true} : vector<2x38x1xf32> -> vector<2x38x1xf32>
    %51 = vector.broadcast %50 : vector<2x38x1xf32> to vector<2x38x38xf32>
    %52 = arith.mulf %47, %51 : vector<2x38x38xf32>
    %53 = arith.truncf %52 : vector<2x38x38xf32> to vector<2x38x38xbf16>
    %54 = arith.truncf %39 : vector<2x38x8xf32> to vector<2x38x8xbf16>
    %cst_15 = arith.constant dense<0.000000e+00> : vector<2x38x8xf32>
    %55 = tpu.matmul %53, %54, %cst_15 {dimension_numbers = #tpu.dot_dimension_numbers<[2], [1], [1], [2], [0, 0, 0, 1, 1, 2], [0], [0]>} : vector<2x38x38xbf16>, vector<2x38x8xbf16>, vector<2x38x8xf32> -> vector<2x38x8xf32>
    %56 = vector.extract_strided_slice %7 {offsets = [0, 16], sizes = [76, 8], strides = [1, 1]} : vector<76x96xf32> to vector<76x8xf32>
    %cst_16 = arith.constant 0.353553385 : f32
    %57 = vector.broadcast %cst_16 : f32 to vector<76x8xf32>
    %58 = arith.mulf %56, %57 : vector<76x8xf32>
    %59 = vector.shape_cast %58 : vector<76x8xf32> to vector<2x38x8xf32>
    %60 = vector.extract_strided_slice %7 {offsets = [0, 48], sizes = [76, 8], strides = [1, 1]} : vector<76x96xf32> to vector<76x8xf32>
    %61 = vector.shape_cast %60 : vector<76x8xf32> to vector<2x38x8xf32>
    %62 = vector.extract_strided_slice %7 {offsets = [0, 80], sizes = [76, 8], strides = [1, 1]} : vector<76x96xf32> to vector<76x8xf32>
    %63 = vector.shape_cast %62 : vector<76x8xf32> to vector<2x38x8xf32>
    %64 = arith.truncf %59 : vector<2x38x8xf32> to vector<2x38x8xbf16>
    %65 = arith.truncf %61 : vector<2x38x8xf32> to vector<2x38x8xbf16>
    %cst_17 = arith.constant dense<0.000000e+00> : vector<2x38x38xf32>
    %66 = tpu.matmul %64, %65, %cst_17 {dimension_numbers = #tpu.dot_dimension_numbers<[2], [2], [1], [1], [0, 0, 0, 1, 1, 1], [0], [0]>} : vector<2x38x8xbf16>, vector<2x38x8xbf16>, vector<2x38x38xf32> -> vector<2x38x38xf32>
    %cst_18 = arith.constant dense<0xFF800000> : vector<2x38xf32>
    %67 = vector.multi_reduction <maximumf>, %66, %cst_18 [2] : vector<2x38x38xf32> to vector<2x38xf32>
    %68 = vector.shape_cast %67 : vector<2x38xf32> to vector<2x38x1xf32>
    %69 = vector.broadcast %68 : vector<2x38x1xf32> to vector<2x38x38xf32>
    %70 = arith.subf %66, %69 : vector<2x38x38xf32>
    %71 = math.exp %70 : vector<2x38x38xf32>
    %cst_19 = arith.constant dense<0.000000e+00> : vector<2x38xf32>
    %72 = vector.multi_reduction <add>, %71, %cst_19 [2] : vector<2x38x38xf32> to vector<2x38xf32>
    %73 = vector.shape_cast %72 : vector<2x38xf32> to vector<2x38x1xf32>
    %74 = tpu.reciprocal %73 {approx = true} : vector<2x38x1xf32> -> vector<2x38x1xf32>
    %75 = vector.broadcast %74 : vector<2x38x1xf32> to vector<2x38x38xf32>
    %76 = arith.mulf %71, %75 : vector<2x38x38xf32>
    %77 = arith.truncf %76 : vector<2x38x38xf32> to vector<2x38x38xbf16>
    %78 = arith.truncf %63 : vector<2x38x8xf32> to vector<2x38x8xbf16>
    %cst_20 = arith.constant dense<0.000000e+00> : vector<2x38x8xf32>
    %79 = tpu.matmul %77, %78, %cst_20 {dimension_numbers = #tpu.dot_dimension_numbers<[2], [1], [1], [2], [0, 0, 0, 1, 1, 2], [0], [0]>} : vector<2x38x38xbf16>, vector<2x38x8xbf16>, vector<2x38x8xf32> -> vector<2x38x8xf32>
    %80 = vector.extract_strided_slice %7 {offsets = [0, 24], sizes = [76, 8], strides = [1, 1]} : vector<76x96xf32> to vector<76x8xf32>
    %cst_21 = arith.constant 0.353553385 : f32
    %81 = vector.broadcast %cst_21 : f32 to vector<76x8xf32>
    %82 = arith.mulf %80, %81 : vector<76x8xf32>
    %83 = vector.shape_cast %82 : vector<76x8xf32> to vector<2x38x8xf32>
    %84 = vector.extract_strided_slice %7 {offsets = [0, 56], sizes = [76, 8], strides = [1, 1]} : vector<76x96xf32> to vector<76x8xf32>
    %85 = vector.shape_cast %84 : vector<76x8xf32> to vector<2x38x8xf32>
    %86 = vector.extract_strided_slice %7 {offsets = [0, 88], sizes = [76, 8], strides = [1, 1]} : vector<76x96xf32> to vector<76x8xf32>
    %87 = vector.shape_cast %86 : vector<76x8xf32> to vector<2x38x8xf32>
    %88 = arith.truncf %83 : vector<2x38x8xf32> to vector<2x38x8xbf16>
    %89 = arith.truncf %85 : vector<2x38x8xf32> to vector<2x38x8xbf16>
    %cst_22 = arith.constant dense<0.000000e+00> : vector<2x38x38xf32>
    %90 = tpu.matmul %88, %89, %cst_22 {dimension_numbers = #tpu.dot_dimension_numbers<[2], [2], [1], [1], [0, 0, 0, 1, 1, 1], [0], [0]>} : vector<2x38x8xbf16>, vector<2x38x8xbf16>, vector<2x38x38xf32> -> vector<2x38x38xf32>
    %cst_23 = arith.constant dense<0xFF800000> : vector<2x38xf32>
    %91 = vector.multi_reduction <maximumf>, %90, %cst_23 [2] : vector<2x38x38xf32> to vector<2x38xf32>
    %92 = vector.shape_cast %91 : vector<2x38xf32> to vector<2x38x1xf32>
    %93 = vector.broadcast %92 : vector<2x38x1xf32> to vector<2x38x38xf32>
    %94 = arith.subf %90, %93 : vector<2x38x38xf32>
    %95 = math.exp %94 : vector<2x38x38xf32>
    %cst_24 = arith.constant dense<0.000000e+00> : vector<2x38xf32>
    %96 = vector.multi_reduction <add>, %95, %cst_24 [2] : vector<2x38x38xf32> to vector<2x38xf32>
    %97 = vector.shape_cast %96 : vector<2x38xf32> to vector<2x38x1xf32>
    %98 = tpu.reciprocal %97 {approx = true} : vector<2x38x1xf32> -> vector<2x38x1xf32>
    %99 = vector.broadcast %98 : vector<2x38x1xf32> to vector<2x38x38xf32>
    %100 = arith.mulf %95, %99 : vector<2x38x38xf32>
    %101 = arith.truncf %100 : vector<2x38x38xf32> to vector<2x38x38xbf16>
    %102 = arith.truncf %87 : vector<2x38x8xf32> to vector<2x38x8xbf16>
    %cst_25 = arith.constant dense<0.000000e+00> : vector<2x38x8xf32>
    %103 = tpu.matmul %101, %102, %cst_25 {dimension_numbers = #tpu.dot_dimension_numbers<[2], [1], [1], [2], [0, 0, 0, 1, 1, 2], [0], [0]>} : vector<2x38x38xbf16>, vector<2x38x8xbf16>, vector<2x38x8xf32> -> vector<2x38x8xf32>
    %104 = tpu.concatenate %31, %55, %79, %103 in 2 : vector<2x38x8xf32>, vector<2x38x8xf32>, vector<2x38x8xf32>, vector<2x38x8xf32> -> vector<2x38x32xf32>
    %105 = vector.shape_cast %104 : vector<2x38x32xf32> to vector<76x32xf32>
    %106 = arith.truncf %105 : vector<76x32xf32> to vector<76x32xbf16>
    %c0_26 = arith.constant 0 : index
    %c0_27 = arith.constant 0 : index
    %107 = vector.load %arg4[%c0_26, %c0_27] : memref<32x32xbf16, #tpu.memory_space<vmem>>, vector<32x32xbf16>
    %cst_28 = arith.constant dense<0.000000e+00> : vector<76x32xf32>
    %108 = tpu.matmul %106, %107, %cst_28 {dimension_numbers = #tpu.dot_dimension_numbers<[1], [0], [0], [1], [0, 0, 1, 1], [], []>} : vector<76x32xbf16>, vector<32x32xbf16>, vector<76x32xf32> -> vector<76x32xf32>
    %c0_29 = arith.constant 0 : index
    %c0_30 = arith.constant 0 : index
    %109 = vector.load %arg5[%c0_29, %c0_30] : memref<1x32xf32, #tpu.memory_space<vmem>>, vector<1x32xf32>
    %110 = vector.broadcast %109 : vector<1x32xf32> to vector<76x32xf32>
    %111 = arith.addf %108, %110 : vector<76x32xf32>
    %112 = arith.addf %1, %111 : vector<76x32xf32>
    %c0_31 = arith.constant 0 : index
    %c0_32 = arith.constant 0 : index
    %113 = vector.load %arg6[%c0_31, %c0_32] : memref<1x32xf32, #tpu.memory_space<vmem>>, vector<1x32xf32>
    %c0_33 = arith.constant 0 : index
    %c0_34 = arith.constant 0 : index
    %114 = vector.load %arg7[%c0_33, %c0_34] : memref<1x32xf32, #tpu.memory_space<vmem>>, vector<1x32xf32>
    %cst_35 = arith.constant dense<0.000000e+00> : vector<76xf32>
    %115 = vector.multi_reduction <add>, %112, %cst_35 [1] : vector<76x32xf32> to vector<76xf32>
    %116 = vector.shape_cast %115 : vector<76xf32> to vector<76x1xf32>
    %cst_36 = arith.constant 3.200000e+01 : f32
    %117 = vector.broadcast %cst_36 : f32 to vector<76x1xf32>
    %118 = arith.divf %116, %117 : vector<76x1xf32>
    %119 = vector.broadcast %118 : vector<76x1xf32> to vector<76x32xf32>
    %120 = arith.subf %112, %119 : vector<76x32xf32>
    %121 = arith.mulf %120, %120 : vector<76x32xf32>
    %cst_37 = arith.constant dense<0.000000e+00> : vector<76xf32>
    %122 = vector.multi_reduction <add>, %121, %cst_37 [1] : vector<76x32xf32> to vector<76xf32>
    %123 = vector.shape_cast %122 : vector<76xf32> to vector<76x1xf32>
    %cst_38 = arith.constant 3.200000e+01 : f32
    %124 = vector.broadcast %cst_38 : f32 to vector<76x1xf32>
    %125 = arith.divf %123, %124 : vector<76x1xf32>
    %126 = vector.broadcast %118 : vector<76x1xf32> to vector<76x32xf32>
    %127 = arith.subf %112, %126 : vector<76x32xf32>
    %cst_39 = arith.constant 9.99999974E-6 : f32
    %128 = vector.broadcast %cst_39 : f32 to vector<76x1xf32>
    %129 = arith.addf %125, %128 : vector<76x1xf32>
    %130 = math.rsqrt %129 : vector<76x1xf32>
    %131 = vector.broadcast %130 : vector<76x1xf32> to vector<76x32xf32>
    %132 = arith.mulf %127, %131 : vector<76x32xf32>
    %133 = vector.broadcast %113 : vector<1x32xf32> to vector<76x32xf32>
    %134 = arith.mulf %132, %133 : vector<76x32xf32>
    %135 = vector.broadcast %114 : vector<1x32xf32> to vector<76x32xf32>
    %136 = arith.addf %134, %135 : vector<76x32xf32>
    %137 = arith.truncf %136 : vector<76x32xf32> to vector<76x32xbf16>
    %c0_40 = arith.constant 0 : index
    %c0_41 = arith.constant 0 : index
    %138 = vector.load %arg8[%c0_40, %c0_41] : memref<32x64xbf16, #tpu.memory_space<vmem>>, vector<32x64xbf16>
    %cst_42 = arith.constant dense<0.000000e+00> : vector<76x64xf32>
    %139 = tpu.matmul %137, %138, %cst_42 {dimension_numbers = #tpu.dot_dimension_numbers<[1], [0], [0], [1], [0, 0, 1, 1], [], []>} : vector<76x32xbf16>, vector<32x64xbf16>, vector<76x64xf32> -> vector<76x64xf32>
    %c0_43 = arith.constant 0 : index
    %c0_44 = arith.constant 0 : index
    %140 = vector.load %arg9[%c0_43, %c0_44] : memref<1x64xf32, #tpu.memory_space<vmem>>, vector<1x64xf32>
    %141 = vector.broadcast %140 : vector<1x64xf32> to vector<76x64xf32>
    %142 = arith.addf %139, %141 : vector<76x64xf32>
    %cst_45 = arith.constant 5.000000e-01 : f32
    %143 = vector.broadcast %cst_45 : f32 to vector<76x64xf32>
    %144 = arith.mulf %143, %142 : vector<76x64xf32>
    %cst_46 = arith.constant 0.707106769 : f32
    %145 = vector.broadcast %cst_46 : f32 to vector<76x64xf32>
    %146 = arith.mulf %142, %145 : vector<76x64xf32>
    %147 = math.erf %146 : vector<76x64xf32>
    %cst_47 = arith.constant 1.000000e+00 : f32
    %148 = vector.broadcast %cst_47 : f32 to vector<76x64xf32>
    %149 = arith.addf %148, %147 : vector<76x64xf32>
    %150 = arith.mulf %144, %149 : vector<76x64xf32>
    %151 = arith.truncf %150 : vector<76x64xf32> to vector<76x64xbf16>
    %c0_48 = arith.constant 0 : index
    %c0_49 = arith.constant 0 : index
    %152 = vector.load %arg10[%c0_48, %c0_49] : memref<64x32xbf16, #tpu.memory_space<vmem>>, vector<64x32xbf16>
    %cst_50 = arith.constant dense<0.000000e+00> : vector<76x32xf32>
    %153 = tpu.matmul %151, %152, %cst_50 {dimension_numbers = #tpu.dot_dimension_numbers<[1], [0], [0], [1], [0, 0, 1, 1], [], []>} : vector<76x64xbf16>, vector<64x32xbf16>, vector<76x32xf32> -> vector<76x32xf32>
    %c0_51 = arith.constant 0 : index
    %c0_52 = arith.constant 0 : index
    %154 = vector.load %arg11[%c0_51, %c0_52] : memref<1x32xf32, #tpu.memory_space<vmem>>, vector<1x32xf32>
    %155 = vector.broadcast %154 : vector<1x32xf32> to vector<76x32xf32>
    %156 = arith.addf %153, %155 : vector<76x32xf32>
    %157 = arith.addf %136, %156 : vector<76x32xf32>
    %c0_53 = arith.constant 0 : index
    %c0_54 = arith.constant 0 : index
    %158 = vector.load %arg12[%c0_53, %c0_54] : memref<1x32xf32, #tpu.memory_space<vmem>>, vector<1x32xf32>
    %c0_55 = arith.constant 0 : index
    %c0_56 = arith.constant 0 : index
    %159 = vector.load %arg13[%c0_55, %c0_56] : memref<1x32xf32, #tpu.memory_space<vmem>>, vector<1x32xf32>
    %cst_57 = arith.constant dense<0.000000e+00> : vector<76xf32>
    %160 = vector.multi_reduction <add>, %157, %cst_57 [1] : vector<76x32xf32> to vector<76xf32>
    %161 = vector.shape_cast %160 : vector<76xf32> to vector<76x1xf32>
    %cst_58 = arith.constant 3.200000e+01 : f32
    %162 = vector.broadcast %cst_58 : f32 to vector<76x1xf32>
    %163 = arith.divf %161, %162 : vector<76x1xf32>
    %164 = vector.broadcast %163 : vector<76x1xf32> to vector<76x32xf32>
    %165 = arith.subf %157, %164 : vector<76x32xf32>
    %166 = arith.mulf %165, %165 : vector<76x32xf32>
    %cst_59 = arith.constant dense<0.000000e+00> : vector<76xf32>
    %167 = vector.multi_reduction <add>, %166, %cst_59 [1] : vector<76x32xf32> to vector<76xf32>
    %168 = vector.shape_cast %167 : vector<76xf32> to vector<76x1xf32>
    %cst_60 = arith.constant 3.200000e+01 : f32
    %169 = vector.broadcast %cst_60 : f32 to vector<76x1xf32>
    %170 = arith.divf %168, %169 : vector<76x1xf32>
    %171 = vector.broadcast %163 : vector<76x1xf32> to vector<76x32xf32>
    %172 = arith.subf %157, %171 : vector<76x32xf32>
    %cst_61 = arith.constant 9.99999974E-6 : f32
    %173 = vector.broadcast %cst_61 : f32 to vector<76x1xf32>
    %174 = arith.addf %170, %173 : vector<76x1xf32>
    %175 = math.rsqrt %174 : vector<76x1xf32>
    %176 = vector.broadcast %175 : vector<76x1xf32> to vector<76x32xf32>
    %177 = arith.mulf %172, %176 : vector<76x32xf32>
    %178 = vector.broadcast %158 : vector<1x32xf32> to vector<76x32xf32>
    %179 = arith.mulf %177, %178 : vector<76x32xf32>
    %180 = vector.broadcast %159 : vector<1x32xf32> to vector<76x32xf32>
    %181 = arith.addf %179, %180 : vector<76x32xf32>
    %182 = vector.shape_cast %181 : vector<76x32xf32> to vector<2x38x32xf32>
    %c0_62 = arith.constant 0 : index
    %c0_63 = arith.constant 0 : index
    %c0_64 = arith.constant 0 : index
    %183 = vector.load %arg14[%c0_62, %c0_63, %c0_64] : memref<2x38x32xf32, #tpu.memory_space<vmem>>, vector<2x38x32xf32>
    tpu.vector_store %arg14[%c0_62, %c0_63, %c0_64], %182 {strides = array<i32>} : memref<2x38x32xf32, #tpu.memory_space<vmem>>, vector<2x38x32xf32>,
    return
  }
  func.func @transform_0(%arg0: i32) -> (i32, i32, i32) {
    %c0_i32 = arith.constant 0 : i32
    %c0_i32_0 = arith.constant 0 : i32
    %c0_i32_1 = arith.constant 0 : i32
    %c0_i32_2 = arith.constant 0 : i32
    return %c0_i32, %c0_i32_0, %c0_i32_1 : i32, i32, i32
  }
  func.func @transform_1(%arg0: i32) -> (i32, i32) {
    %c0_i32 = arith.constant 0 : i32
    %c0_i32_0 = arith.constant 0 : i32
    %c0_i32_1 = arith.constant 0 : i32
    return %c0_i32, %c0_i32_0 : i32, i32
  }
  func.func @transform_2(%arg0: i32) -> (i32, i32) {
    %c0_i32 = arith.constant 0 : i32
    %c0_i32_0 = arith.constant 0 : i32
    %c0_i32_1 = arith.constant 0 : i32
    return %c0_i32, %c0_i32_0 : i32, i32
  }
  func.func @transform_3(%arg0: i32) -> (i32, i32) {
    %c0_i32 = arith.constant 0 : i32
    %c0_i32_0 = arith.constant 0 : i32
    %c0_i32_1 = arith.constant 0 : i32
    return %c0_i32, %c0_i32_0 : i32, i32
  }
  func.func @transform_4(%arg0: i32) -> (i32, i32) {
    %c0_i32 = arith.constant 0 : i32
    %c0_i32_0 = arith.constant 0 : i32
    %c0_i32_1 = arith.constant 0 : i32
    return %c0_i32, %c0_i32_0 : i32, i32
  }
  func.func @transform_5(%arg0: i32) -> (i32, i32) {
    %c0_i32 = arith.constant 0 : i32
    %c0_i32_0 = arith.constant 0 : i32
    %c0_i32_1 = arith.constant 0 : i32
    return %c0_i32, %c0_i32_0 : i32, i32
  }
  func.func @transform_6(%arg0: i32) -> (i32, i32) {
    %c0_i32 = arith.constant 0 : i32
    %c0_i32_0 = arith.constant 0 : i32
    %c0_i32_1 = arith.constant 0 : i32
    return %c0_i32, %c0_i32_0 : i32, i32
  }
  func.func @transform_7(%arg0: i32) -> (i32, i32) {
    %c0_i32 = arith.constant 0 : i32
    %c0_i32_0 = arith.constant 0 : i32
    %c0_i32_1 = arith.constant 0 : i32
    return %c0_i32, %c0_i32_0 : i32, i32
  }
  func.func @transform_8(%arg0: i32) -> (i32, i32) {
    %c0_i32 = arith.constant 0 : i32
    %c0_i32_0 = arith.constant 0 : i32
    %c0_i32_1 = arith.constant 0 : i32
    return %c0_i32, %c0_i32_0 : i32, i32
  }
  func.func @transform_9(%arg0: i32) -> (i32, i32) {
    %c0_i32 = arith.constant 0 : i32
    %c0_i32_0 = arith.constant 0 : i32
    %c0_i32_1 = arith.constant 0 : i32
    return %c0_i32, %c0_i32_0 : i32, i32
  }
  func.func @transform_10(%arg0: i32) -> (i32, i32) {
    %c0_i32 = arith.constant 0 : i32
    %c0_i32_0 = arith.constant 0 : i32
    %c0_i32_1 = arith.constant 0 : i32
    return %c0_i32, %c0_i32_0 : i32, i32
  }
  func.func @transform_11(%arg0: i32) -> (i32, i32) {
    %c0_i32 = arith.constant 0 : i32
    %c0_i32_0 = arith.constant 0 : i32
    %c0_i32_1 = arith.constant 0 : i32
    return %c0_i32, %c0_i32_0 : i32, i32
  }
  func.func @transform_12(%arg0: i32) -> (i32, i32) {
    %c0_i32 = arith.constant 0 : i32
    %c0_i32_0 = arith.constant 0 : i32
    %c0_i32_1 = arith.constant 0 : i32
    return %c0_i32, %c0_i32_0 : i32, i32
  }
  func.func @transform_13(%arg0: i32) -> (i32, i32, i32) {
    %c0_i32 = arith.constant 0 : i32
    %c0_i32_0 = arith.constant 0 : i32
    %c0_i32_1 = arith.constant 0 : i32
    %c0_i32_2 = arith.constant 0 : i32
    return %c0_i32, %c0_i32_0, %c0_i32_1 : i32, i32, i32
  }
}

module attributes {stable_mosaic.version = 11 : i64} {
  func.func @_mhfa_kernel(%arg0: i32, %arg1: memref<1x2x38x32xbf16, #tpu.memory_space<vmem>>, %arg2: memref<1x32x16xbf16, #tpu.memory_space<vmem>>, %arg3: memref<1x32x8xbf16, #tpu.memory_space<vmem>>, %arg4: memref<1x16xf32, #tpu.memory_space<vmem>>, %arg5: memref<1x8xf32, #tpu.memory_space<vmem>>, %arg6: memref<2x8x16xf32, #tpu.memory_space<vmem>>, %arg7: memref<2x38x16xf32, #tpu.memory_space<vmem>>, %arg8: memref<2x38x8xf32, #tpu.memory_space<vmem>>) attributes {dimension_semantics = [#tpu.dimension_semantics<arbitrary>], iteration_bounds = array<i64: 13>, scalar_prefetch = 0 : i64, scratch_operands = 2 : i64, tpu.core_type = #tpu.core_type<tc>, window_params = [{transform_indices = @transform_0, window_bounds = array<i64: 1, 2, 38, 32>}, {transform_indices = @transform_1, window_bounds = array<i64: 1, 32, 16>}, {transform_indices = @transform_2, window_bounds = array<i64: 1, 32, 8>}, {pipeline_mode = #tpu.pipeline_mode<synchronous>, transform_indices = @transform_3, window_bounds = array<i64: 1, 16>}, {pipeline_mode = #tpu.pipeline_mode<synchronous>, transform_indices = @transform_4, window_bounds = array<i64: 1, 8>}, {pipeline_mode = #tpu.pipeline_mode<synchronous>, transform_indices = @transform_5, window_bounds = array<i64: 2, 8, 16>}]} {
    %c0_i32 = arith.constant 0 : i32
    %0 = arith.cmpi eq, %arg0, %c0_i32 : i32
    %1 = arith.extui %0 : i1 to i32
    %c0_i32_0 = arith.constant 0 : i32
    %2 = arith.cmpi ne, %1, %c0_i32_0 : i32
    scf.if %2 {
      %cst_24 = arith.constant 0.000000e+00 : f32
      %23 = vector.broadcast %cst_24 : f32 to vector<2x38x16xf32>
      %c0_25 = arith.constant 0 : index
      %c0_26 = arith.constant 0 : index
      %c0_27 = arith.constant 0 : index
      %24 = vector.load %arg7[%c0_25, %c0_26, %c0_27] : memref<2x38x16xf32, #tpu.memory_space<vmem>>, vector<2x38x16xf32>
      tpu.vector_store %arg7[%c0_25, %c0_26, %c0_27], %23 {strides = array<i32>} : memref<2x38x16xf32, #tpu.memory_space<vmem>>, vector<2x38x16xf32>,
      %cst_28 = arith.constant 0.000000e+00 : f32
      %25 = vector.broadcast %cst_28 : f32 to vector<2x38x8xf32>
      %c0_29 = arith.constant 0 : index
      %c0_30 = arith.constant 0 : index
      %c0_31 = arith.constant 0 : index
      %26 = vector.load %arg8[%c0_29, %c0_30, %c0_31] : memref<2x38x8xf32, #tpu.memory_space<vmem>>, vector<2x38x8xf32>
      tpu.vector_store %arg8[%c0_29, %c0_30, %c0_31], %25 {strides = array<i32>} : memref<2x38x8xf32, #tpu.memory_space<vmem>>, vector<2x38x8xf32>,
    } else {
    }
    %c0 = arith.constant 0 : index
    %c0_1 = arith.constant 0 : index
    %c0_2 = arith.constant 0 : index
    %c0_3 = arith.constant 0 : index
    %3 = vector.load %arg1[%c0, %c0_1, %c0_2, %c0_3] : memref<1x2x38x32xbf16, #tpu.memory_space<vmem>>, vector<1x2x38x32xbf16>
    %4 = vector.shape_cast %3 : vector<1x2x38x32xbf16> to vector<2x38x32xbf16>
    %5 = vector.shape_cast %4 : vector<2x38x32xbf16> to vector<76x32xbf16>
    %c0_4 = arith.constant 0 : index
    %c0_5 = arith.constant 0 : index
    %c0_6 = arith.constant 0 : index
    %6 = vector.load %arg7[%c0_4, %c0_5, %c0_6] : memref<2x38x16xf32, #tpu.memory_space<vmem>>, vector<2x38x16xf32>
    %c0_7 = arith.constant 0 : index
    %c0_8 = arith.constant 0 : index
    %c0_9 = arith.constant 0 : index
    %7 = vector.load %arg2[%c0_7, %c0_8, %c0_9] : memref<1x32x16xbf16, #tpu.memory_space<vmem>>, vector<1x32x16xbf16>
    %8 = vector.shape_cast %7 : vector<1x32x16xbf16> to vector<32x16xbf16>
    %cst = arith.constant dense<0.000000e+00> : vector<76x16xf32>
    %9 = tpu.matmul %5, %8, %cst {dimension_numbers = #tpu.dot_dimension_numbers<[1], [0], [0], [1], [0, 0, 1, 1], [], []>} : vector<76x32xbf16>, vector<32x16xbf16>, vector<76x16xf32> -> vector<76x16xf32>
    %10 = vector.shape_cast %9 : vector<76x16xf32> to vector<2x38x16xf32>
    %11 = arith.addf %6, %10 : vector<2x38x16xf32>
    %c0_10 = arith.constant 0 : index
    %c0_11 = arith.constant 0 : index
    %c0_12 = arith.constant 0 : index
    %12 = vector.load %arg7[%c0_10, %c0_11, %c0_12] : memref<2x38x16xf32, #tpu.memory_space<vmem>>, vector<2x38x16xf32>
    tpu.vector_store %arg7[%c0_10, %c0_11, %c0_12], %11 {strides = array<i32>} : memref<2x38x16xf32, #tpu.memory_space<vmem>>, vector<2x38x16xf32>,
    %c0_13 = arith.constant 0 : index
    %c0_14 = arith.constant 0 : index
    %c0_15 = arith.constant 0 : index
    %13 = vector.load %arg8[%c0_13, %c0_14, %c0_15] : memref<2x38x8xf32, #tpu.memory_space<vmem>>, vector<2x38x8xf32>
    %c0_16 = arith.constant 0 : index
    %c0_17 = arith.constant 0 : index
    %c0_18 = arith.constant 0 : index
    %14 = vector.load %arg3[%c0_16, %c0_17, %c0_18] : memref<1x32x8xbf16, #tpu.memory_space<vmem>>, vector<1x32x8xbf16>
    %15 = vector.shape_cast %14 : vector<1x32x8xbf16> to vector<32x8xbf16>
    %cst_19 = arith.constant dense<0.000000e+00> : vector<76x8xf32>
    %16 = tpu.matmul %5, %15, %cst_19 {dimension_numbers = #tpu.dot_dimension_numbers<[1], [0], [0], [1], [0, 0, 1, 1], [], []>} : vector<76x32xbf16>, vector<32x8xbf16>, vector<76x8xf32> -> vector<76x8xf32>
    %17 = vector.shape_cast %16 : vector<76x8xf32> to vector<2x38x8xf32>
    %18 = arith.addf %13, %17 : vector<2x38x8xf32>
    %c0_20 = arith.constant 0 : index
    %c0_21 = arith.constant 0 : index
    %c0_22 = arith.constant 0 : index
    %19 = vector.load %arg8[%c0_20, %c0_21, %c0_22] : memref<2x38x8xf32, #tpu.memory_space<vmem>>, vector<2x38x8xf32>
    tpu.vector_store %arg8[%c0_20, %c0_21, %c0_22], %18 {strides = array<i32>} : memref<2x38x8xf32, #tpu.memory_space<vmem>>, vector<2x38x8xf32>,
    %c12_i32 = arith.constant 12 : i32
    %20 = arith.cmpi eq, %arg0, %c12_i32 : i32
    %21 = arith.extui %20 : i1 to i32
    %c0_i32_23 = arith.constant 0 : i32
    %22 = arith.cmpi ne, %21, %c0_i32_23 : i32
    scf.if %22 {
      %c0_24 = arith.constant 0 : index
      %c0_25 = arith.constant 0 : index
      %c0_26 = arith.constant 0 : index
      %23 = vector.load %arg7[%c0_24, %c0_25, %c0_26] : memref<2x38x16xf32, #tpu.memory_space<vmem>>, vector<2x38x16xf32>
      %c0_27 = arith.constant 0 : index
      %c0_28 = arith.constant 0 : index
      %24 = vector.load %arg4[%c0_27, %c0_28] : memref<1x16xf32, #tpu.memory_space<vmem>>, vector<1x16xf32>
      %25 = vector.shape_cast %24 : vector<1x16xf32> to vector<1x1x16xf32>
      %26 = vector.broadcast %25 : vector<1x1x16xf32> to vector<2x38x16xf32>
      %27 = arith.addf %23, %26 : vector<2x38x16xf32>
      %c0_29 = arith.constant 0 : index
      %c0_30 = arith.constant 0 : index
      %c0_31 = arith.constant 0 : index
      %28 = vector.load %arg8[%c0_29, %c0_30, %c0_31] : memref<2x38x8xf32, #tpu.memory_space<vmem>>, vector<2x38x8xf32>
      %c0_32 = arith.constant 0 : index
      %c0_33 = arith.constant 0 : index
      %29 = vector.load %arg5[%c0_32, %c0_33] : memref<1x8xf32, #tpu.memory_space<vmem>>, vector<1x8xf32>
      %30 = vector.shape_cast %29 : vector<1x8xf32> to vector<1x1x8xf32>
      %31 = vector.broadcast %30 : vector<1x1x8xf32> to vector<2x38x8xf32>
      %32 = arith.addf %28, %31 : vector<2x38x8xf32>
      %cst_34 = arith.constant dense<0xFF800000> : vector<2x8xf32>
      %33 = vector.multi_reduction <maximumf>, %32, %cst_34 [1] : vector<2x38x8xf32> to vector<2x8xf32>
      %34 = vector.shape_cast %33 : vector<2x8xf32> to vector<2x1x8xf32>
      %35 = vector.broadcast %34 : vector<2x1x8xf32> to vector<2x38x8xf32>
      %36 = arith.subf %32, %35 : vector<2x38x8xf32>
      %37 = math.exp %36 : vector<2x38x8xf32>
      %cst_35 = arith.constant dense<0.000000e+00> : vector<2x8xf32>
      %38 = vector.multi_reduction <add>, %37, %cst_35 [1] : vector<2x38x8xf32> to vector<2x8xf32>
      %39 = vector.shape_cast %38 : vector<2x8xf32> to vector<2x1x8xf32>
      %40 = tpu.reciprocal %39 {approx = true} : vector<2x1x8xf32> -> vector<2x1x8xf32>
      %41 = vector.broadcast %40 : vector<2x1x8xf32> to vector<2x38x8xf32>
      %42 = arith.mulf %37, %41 : vector<2x38x8xf32>
      %43 = arith.truncf %42 : vector<2x38x8xf32> to vector<2x38x8xbf16>
      %44 = arith.truncf %27 : vector<2x38x16xf32> to vector<2x38x16xbf16>
      %cst_36 = arith.constant dense<0.000000e+00> : vector<2x8x16xf32>
      %45 = tpu.matmul %43, %44, %cst_36 {dimension_numbers = #tpu.dot_dimension_numbers<[1], [1], [2], [2], [0, 0, 0, 2, 1, 2], [0], [0]>} : vector<2x38x8xbf16>, vector<2x38x16xbf16>, vector<2x8x16xf32> -> vector<2x8x16xf32>
      %c0_37 = arith.constant 0 : index
      %c0_38 = arith.constant 0 : index
      %c0_39 = arith.constant 0 : index
      %46 = vector.load %arg6[%c0_37, %c0_38, %c0_39] : memref<2x8x16xf32, #tpu.memory_space<vmem>>, vector<2x8x16xf32>
      tpu.vector_store %arg6[%c0_37, %c0_38, %c0_39], %45 {strides = array<i32>} : memref<2x8x16xf32, #tpu.memory_space<vmem>>, vector<2x8x16xf32>,
    } else {
    }
    return
  }
  func.func @transform_0(%arg0: i32) -> (i32, i32, i32, i32) {
    %c0_i32 = arith.constant 0 : i32
    %c0_i32_0 = arith.constant 0 : i32
    %c0_i32_1 = arith.constant 0 : i32
    %c0_i32_2 = arith.constant 0 : i32
    return %arg0, %c0_i32, %c0_i32_0, %c0_i32_1 : i32, i32, i32, i32
  }
  func.func @transform_1(%arg0: i32) -> (i32, i32, i32) {
    %c0_i32 = arith.constant 0 : i32
    %c0_i32_0 = arith.constant 0 : i32
    %c0_i32_1 = arith.constant 0 : i32
    return %arg0, %c0_i32, %c0_i32_0 : i32, i32, i32
  }
  func.func @transform_2(%arg0: i32) -> (i32, i32, i32) {
    %c0_i32 = arith.constant 0 : i32
    %c0_i32_0 = arith.constant 0 : i32
    %c0_i32_1 = arith.constant 0 : i32
    return %arg0, %c0_i32, %c0_i32_0 : i32, i32, i32
  }
  func.func @transform_3(%arg0: i32) -> (i32, i32) {
    %c0_i32 = arith.constant 0 : i32
    %c0_i32_0 = arith.constant 0 : i32
    %c0_i32_1 = arith.constant 0 : i32
    return %c0_i32, %c0_i32_0 : i32, i32
  }
  func.func @transform_4(%arg0: i32) -> (i32, i32) {
    %c0_i32 = arith.constant 0 : i32
    %c0_i32_0 = arith.constant 0 : i32
    %c0_i32_1 = arith.constant 0 : i32
    return %c0_i32, %c0_i32_0 : i32, i32
  }
  func.func @transform_5(%arg0: i32) -> (i32, i32, i32) {
    %c0_i32 = arith.constant 0 : i32
    %c0_i32_0 = arith.constant 0 : i32
    %c0_i32_1 = arith.constant 0 : i32
    %c0_i32_2 = arith.constant 0 : i32
    return %c0_i32, %c0_i32_0, %c0_i32_1 : i32, i32, i32
  }
}

module attributes {stable_mosaic.version = 11 : i64} {
  func.func @_linear_kernel(%arg0: i32, %arg1: memref<2x128xf32, #tpu.memory_space<vmem>>, %arg2: memref<128x32xbf16, #tpu.memory_space<vmem>>, %arg3: memref<1x32xf32, #tpu.memory_space<vmem>>, %arg4: memref<2x32xf32, #tpu.memory_space<vmem>>) attributes {dimension_semantics = [#tpu.dimension_semantics<arbitrary>], iteration_bounds = array<i64: 1>, scalar_prefetch = 0 : i64, scratch_operands = 0 : i64, tpu.core_type = #tpu.core_type<tc>, window_params = [{pipeline_mode = #tpu.pipeline_mode<synchronous>, transform_indices = @transform_0, window_bounds = array<i64: 2, 128>}, {pipeline_mode = #tpu.pipeline_mode<synchronous>, transform_indices = @transform_1, window_bounds = array<i64: 128, 32>}, {pipeline_mode = #tpu.pipeline_mode<synchronous>, transform_indices = @transform_2, window_bounds = array<i64: 1, 32>}, {pipeline_mode = #tpu.pipeline_mode<synchronous>, transform_indices = @transform_3, window_bounds = array<i64: 2, 32>}]} {
    %c0 = arith.constant 0 : index
    %c0_0 = arith.constant 0 : index
    %0 = vector.load %arg1[%c0, %c0_0] : memref<2x128xf32, #tpu.memory_space<vmem>>, vector<2x128xf32>
    %1 = arith.truncf %0 : vector<2x128xf32> to vector<2x128xbf16>
    %c0_1 = arith.constant 0 : index
    %c0_2 = arith.constant 0 : index
    %2 = vector.load %arg2[%c0_1, %c0_2] : memref<128x32xbf16, #tpu.memory_space<vmem>>, vector<128x32xbf16>
    %cst = arith.constant dense<0.000000e+00> : vector<2x32xf32>
    %3 = tpu.matmul %1, %2, %cst {dimension_numbers = #tpu.dot_dimension_numbers<[1], [0], [0], [1], [0, 0, 1, 1], [], []>} : vector<2x128xbf16>, vector<128x32xbf16>, vector<2x32xf32> -> vector<2x32xf32>
    %c0_3 = arith.constant 0 : index
    %c0_4 = arith.constant 0 : index
    %4 = vector.load %arg3[%c0_3, %c0_4] : memref<1x32xf32, #tpu.memory_space<vmem>>, vector<1x32xf32>
    %5 = vector.broadcast %4 : vector<1x32xf32> to vector<2x32xf32>
    %6 = arith.addf %3, %5 : vector<2x32xf32>
    %c0_5 = arith.constant 0 : index
    %c0_6 = arith.constant 0 : index
    %7 = vector.load %arg4[%c0_5, %c0_6] : memref<2x32xf32, #tpu.memory_space<vmem>>, vector<2x32xf32>
    tpu.vector_store %arg4[%c0_5, %c0_6], %6 {strides = array<i32>} : memref<2x32xf32, #tpu.memory_space<vmem>>, vector<2x32xf32>,
    return
  }
  func.func @transform_0(%arg0: i32) -> (i32, i32) {
    %c0_i32 = arith.constant 0 : i32
    %c0_i32_0 = arith.constant 0 : i32
    %c0_i32_1 = arith.constant 0 : i32
    return %c0_i32, %c0_i32_0 : i32, i32
  }
  func.func @transform_1(%arg0: i32) -> (i32, i32) {
    %c0_i32 = arith.constant 0 : i32
    %c0_i32_0 = arith.constant 0 : i32
    %c0_i32_1 = arith.constant 0 : i32
    return %c0_i32, %c0_i32_0 : i32, i32
  }
  func.func @transform_2(%arg0: i32) -> (i32, i32) {
    %c0_i32 = arith.constant 0 : i32
    %c0_i32_0 = arith.constant 0 : i32
    %c0_i32_1 = arith.constant 0 : i32
    return %c0_i32, %c0_i32_0 : i32, i32
  }
  func.func @transform_3(%arg0: i32) -> (i32, i32) {
    %c0_i32 = arith.constant 0 : i32
    %c0_i32_0 = arith.constant 0 : i32
    %c0_i32_1 = arith.constant 0 : i32
    return %c0_i32, %c0_i32_0 : i32, i32
  }
}

</mosaic_0001>

<llo_original>
// kernel: tile.13
$region0: #{tile.13}
  #allocation0 [shape = 's32[1]{0}', space=sflag, size = 0x4, scoped, tag = 'scoped memory for tile.13']
  %s0 = inlined_call_operand.vmem [shape: f32[16], index: 0, kind: input, shape index: {}]
  %s1 = inlined_call_operand.vmem [shape: f32[2,16], index: 1, kind: output, shape index: {}]
  // Predicated region
  $region2: #{tile.13} parent=0 // pred_check
    _
  $region3: #{tile.13} parent=0 // pred_check_branch
    %3 = sbr.rel (0) target = $region5
  $region4: #{tile.13} parent=0 // pred_region
    _
  $region5: #{tile.13} parent=0 // pred_fallthru
    _
  %v4 = vld [vmem:[%s0] ss:$0 sm:$0xff]
  %5 = vst [vmem:[%s1] sm:$0x3] %v4

// kernel: tile.0
$region0: #{tile.0}
  %s0 = inlined_call_operand.vmem [shape: f32[2,16], index: 0, kind: input, shape index: {}]
  %s1 = inlined_call_operand.vmem [shape: f32[32,1], index: 1, kind: output, shape index: {}]
  $region1: #{tile.0} parent=0
    #allocation0 [shape = 'u8[4096]{0}', space=vmem, size = 0x1000, scoped, tag = 'scoped mem for input reshape']
    %s3 = sshllo.u32 0, 2
    %v4 = vld [vmem:[%s0] sm:%s3]
    %5 = vst [vmem:[#allocation0] sm:%s3] %v4
    %v6 = vld [vmem:[#allocation0] sm:$0x3]
    %vm7 = vcmask 7168
    %8 = vst.msk [vmem:[%s1] ss:$16 sm:$0x3] %vm7, %v6
    %v9 = vld [vmem:[#allocation0] sm:$0x3]
    %10 = vrot.lane.b32.xlu0 %v9, 127
    %v11 = vpop.permute.xlu0 %10
    %vm12 = vcmask 7168
    %s13 = scalar_lea.vmem %s1, 1
    %14 = vst.msk [vmem:[%s13] ss:$16 sm:$0x3] %vm12, %v11
    %v15 = vld [vmem:[#allocation0] sm:$0x3]
    %16 = vrot.lane.b32.xlu0 %v15, 126
    %v17 = vpop.permute.xlu0 %16
    %vm18 = vcmask 7168
    %s19 = scalar_lea.vmem %s1, 2
    %20 = vst.msk [vmem:[%s19] ss:$16 sm:$0x3] %vm18, %v17
    %v21 = vld [vmem:[#allocation0] sm:$0x3]
    %22 = vrot.lane.b32.xlu0 %v21, 125
    %v23 = vpop.permute.xlu0 %22
    %vm24 = vcmask 7168
    %s25 = scalar_lea.vmem %s1, 3
    %26 = vst.msk [vmem:[%s25] ss:$16 sm:$0x3] %vm24, %v23
    %v27 = vld [vmem:[#allocation0] sm:$0x3]
    %28 = vrot.lane.b32.xlu0 %v27, 124
    %v29 = vpop.permute.xlu0 %28
    %vm30 = vcmask 7168
    %s31 = scalar_lea.vmem %s1, 4
    %32 = vst.msk [vmem:[%s31] ss:$16 sm:$0x3] %vm30, %v29
    %v33 = vld [vmem:[#allocation0] sm:$0x3]
    %34 = vrot.lane.b32.xlu0 %v33, 123
    %v35 = vpop.permute.xlu0 %34
    %vm36 = vcmask 7168
    %s37 = scalar_lea.vmem %s1, 5
    %38 = vst.msk [vmem:[%s37] ss:$16 sm:$0x3] %vm36, %v35
    %v39 = vld [vmem:[#allocation0] sm:$0x3]
    %40 = vrot.lane.b32.xlu0 %v39, 122
    %v41 = vpop.permute.xlu0 %40
    %vm42 = vcmask 7168
    %s43 = scalar_lea.vmem %s1, 6
    %44 = vst.msk [vmem:[%s43] ss:$16 sm:$0x3] %vm42, %v41
    %v45 = vld [vmem:[#allocation0] sm:$0x3]
    %46 = vrot.lane.b32.xlu0 %v45, 121
    %v47 = vpop.permute.xlu0 %46
    %vm48 = vcmask 7168
    %s49 = scalar_lea.vmem %s1, 7
    %50 = vst.msk [vmem:[%s49] ss:$16 sm:$0x3] %vm48, %v47
    %v51 = vld [vmem:[#allocation0] sm:$0x3]
    %52 = vrot.lane.b32.xlu0 %v51, 120
    %v53 = vpop.permute.xlu0 %52
    %vm54 = vcmask 7168
    %s55 = scalar_lea.vmem %s1, 8
    %56 = vst.msk [vmem:[%s55] ss:$16 sm:$0x3] %vm54, %v53
    %v57 = vld [vmem:[#allocation0] sm:$0x3]
    %58 = vrot.lane.b32.xlu0 %v57, 119
    %v59 = vpop.permute.xlu0 %58
    %vm60 = vcmask 7168
    %s61 = scalar_lea.vmem %s1, 9
    %62 = vst.msk [vmem:[%s61] ss:$16 sm:$0x3] %vm60, %v59
    %v63 = vld [vmem:[#allocation0] sm:$0x3]
    %64 = vrot.lane.b32.xlu0 %v63, 118
    %v65 = vpop.permute.xlu0 %64
    %vm66 = vcmask 7168
    %s67 = scalar_lea.vmem %s1, 10
    %68 = vst.msk [vmem:[%s67] ss:$16 sm:$0x3] %vm66, %v65
    %v69 = vld [vmem:[#allocation0] sm:$0x3]
    %70 = vrot.lane.b32.xlu0 %v69, 117
    %v71 = vpop.permute.xlu0 %70
    %vm72 = vcmask 7168
    %s73 = scalar_lea.vmem %s1, 11
    %74 = vst.msk [vmem:[%s73] ss:$16 sm:$0x3] %vm72, %v71
    %v75 = vld [vmem:[#allocation0] sm:$0x3]
    %76 = vrot.lane.b32.xlu0 %v75, 116
    %v77 = vpop.permute.xlu0 %76
    %vm78 = vcmask 7168
    %s79 = scalar_lea.vmem %s1, 12
    %80 = vst.msk [vmem:[%s79] ss:$16 sm:$0x3] %vm78, %v77
    %v81 = vld [vmem:[#allocation0] sm:$0x3]
    %82 = vrot.lane.b32.xlu0 %v81, 115
    %v83 = vpop.permute.xlu0 %82
    %vm84 = vcmask 7168
    %s85 = scalar_lea.vmem %s1, 13
    %86 = vst.msk [vmem:[%s85] ss:$16 sm:$0x3] %vm84, %v83
    %v87 = vld [vmem:[#allocation0] sm:$0x3]
    %88 = vrot.lane.b32.xlu0 %v87, 114
    %v89 = vpop.permute.xlu0 %88
    %vm90 = vcmask 7168
    %s91 = scalar_lea.vmem %s1, 14
    %92 = vst.msk [vmem:[%s91] ss:$16 sm:$0x3] %vm90, %v89
    %v93 = vld [vmem:[#allocation0] sm:$0x3]
    %94 = vrot.lane.b32.xlu0 %v93, 113
    %v95 = vpop.permute.xlu0 %94
    %vm96 = vcmask 7168
    %s97 = scalar_lea.vmem %s1, 15
    %98 = vst.msk [vmem:[%s97] ss:$16 sm:$0x3] %vm96, %v95

// kernel: forward.8
$region0: #{forward.8}
  #allocation0 [shape = 'u32[]', space=smem, size = 0x4, offset = 0x4, fixed_abs, tag = 'smem constant byte address 0x4 - core index']
  #allocation1 [shape = 'u32[144,128]{1,0:T(1,128)}', space=vmem, size = 0x12000, scoped, tag = 'internal scratch']
  %s0 = inlined_call_operand.vmem [shape: bf16[1,318,10], index: 0, kind: input, shape index: {}]
  %s1 = inlined_call_operand.vmem [shape: bf16[1,10,16], index: 1, kind: input, shape index: {}]
  %s2 = inlined_call_operand.vmem [shape: f32[1,1,16], index: 2, kind: input, shape index: {}]
  %s3 = inlined_call_operand.vmem [shape: f32[1,318,16], index: 3, kind: output, shape index: {}]
  %s4 = sld [smem:[#allocation0]]
  $region22: #{forward.8} parent=0
    _
  %s6 = ssub.s32 1, %s4
  %s7 = scalar_select 0, %s6, %s4
  // Predicated region
  $region2: #{forward.8} parent=0 // pred_check
    _
  $region3: #{forward.8} parent=0 // pred_check_branch
    %9 = sbr.rel (0) target = $region5
  $region4: #{forward.8} parent=0 // pred_region
    _
  $region5: #{forward.8} parent=0 // pred_fallthru
    _
  // Predicated region
  $region6: #{forward.8} parent=0 // pred_check
    _
  $region7: #{forward.8} parent=0 // pred_check_branch
    %11 = sbr.rel (0) target = $region9
  $region8: #{forward.8} parent=0 // pred_region
    _
  $region9: #{forward.8} parent=0 // pred_fallthru
    _
  // Predicated region
  $region10: #{forward.8} parent=0 // pred_check
    _
  $region11: #{forward.8} parent=0 // pred_check_branch
    %13 = sbr.rel (0) target = $region13
  $region12: #{forward.8} parent=0 // pred_region
    _
  $region13: #{forward.8} parent=0 // pred_fallthru
    _
  %v15 = vld [vmem:[%s0] sm:$0xf]
  %v16 = vld [vmem:[%s0 + $0x4] sm:$0xf]
  %v17 = vld [vmem:[%s0 + $0x8] sm:$0xf]
  %v18 = vld [vmem:[%s0 + $0xc] sm:$0xf]
  %v19 = vld [vmem:[%s0 + $0x10] sm:$0xf]
  %v20 = vld [vmem:[%s0 + $0x14] sm:$0xf]
  %v21 = vld [vmem:[%s0 + $0x18] sm:$0xf]
  %v22 = vld [vmem:[%s0 + $0x1c] sm:$0xf]
  %v23 = vld [vmem:[%s0 + $0x20] sm:$0xf]
  %v24 = vld [vmem:[%s0 + $0x24] sm:$0xf]
  %v25 = vld [vmem:[%s0 + $0x28] sm:$0xf]
  %v26 = vld [vmem:[%s0 + $0x2c] sm:$0xf]
  %v27 = vld [vmem:[%s0 + $0x30] sm:$0xf]
  %v28 = vld [vmem:[%s0 + $0x34] sm:$0xf]
  %v29 = vld [vmem:[%s0 + $0x38] sm:$0xf]
  %v30 = vld [vmem:[%s0 + $0x3c] sm:$0xf]
  %v31 = vld [vmem:[%s0 + $0x40] sm:$0xf]
  %v32 = vld [vmem:[%s0 + $0x44] sm:$0xf]
  %v33 = vld [vmem:[%s0 + $0x48] sm:$0xf]
  %v34 = vld [vmem:[%s0 + $0x4c] sm:$0xf]
  %v35 = vld [vmem:[%s0 + $0x50] sm:$0xf]
  %v36 = vld [vmem:[%s0 + $0x54] sm:$0xf]
  %v37 = vld [vmem:[%s0 + $0x58] sm:$0xf]
  %v38 = vld [vmem:[%s0 + $0x5c] sm:$0xf]
  %v39 = vld [vmem:[%s0 + $0x60] sm:$0xf]
  %v40 = vld [vmem:[%s0 + $0x64] sm:$0xf]
  %v41 = vld [vmem:[%s0 + $0x68] sm:$0xf]
  %v42 = vld [vmem:[%s0 + $0x6c] sm:$0xf]
  %v43 = vld [vmem:[%s0 + $0x70] sm:$0xf]
  %v44 = vld [vmem:[%s0 + $0x74] sm:$0xf]
  %v45 = vld [vmem:[%s0 + $0x78] sm:$0xf]
  %v46 = vld [vmem:[%s0 + $0x7c] sm:$0xf]
  %v47 = vld [vmem:[%s0 + $0x80] sm:$0xf]
  %v48 = vld [vmem:[%s0 + $0x84] sm:$0xf]
  %v49 = vld [vmem:[%s0 + $0x88] sm:$0xf]
  %v50 = vld [vmem:[%s0 + $0x8c] sm:$0xf]
  %v51 = vld [vmem:[%s0 + $0x90] sm:$0xf]
  %v52 = vld [vmem:[%s0 + $0x94] sm:$0xf]
  %v53 = vld [vmem:[%s0 + $0x98] sm:$0xf]
  %v54 = vld [vmem:[%s0 + $0x9c] sm:$0x7]
  %v55 = vld [vmem:[%s1] sm:$0xf]
  %v56 = vld [vmem:[%s1 + $0x4] sm:$0x1]
  %v57 = vld [vmem:[%s2] sm:$0x1]
  %v59 = vlaneseq
  %v60 = vshrl.u32 %v59, 7
  %v61 = vsub.s32 0, %v60
  %v62 = vrot.slane %v57, %v61
  %v104 = vunpack.c.l.b16 %v15
  %v105 = vunpack.c.l.b16 %v16
  %v106 = vunpack.c.l.b16 %v17
  %v107 = vunpack.c.l.b16 %v18
  %v108 = vunpack.c.l.b16 %v19
  %v109 = vunpack.c.l.b16 %v20
  %v110 = vunpack.c.l.b16 %v21
  %v111 = vunpack.c.l.b16 %v22
  %v112 = vunpack.c.l.b16 %v23
  %v113 = vunpack.c.l.b16 %v24
  %v114 = vunpack.c.l.b16 %v25
  %v115 = vunpack.c.l.b16 %v26
  %v116 = vunpack.c.l.b16 %v27
  %v117 = vunpack.c.l.b16 %v28
  %v118 = vunpack.c.l.b16 %v29
  %v119 = vunpack.c.l.b16 %v30
  %v120 = vunpack.c.l.b16 %v31
  %v121 = vunpack.c.l.b16 %v32
  %v122 = vunpack.c.l.b16 %v33
  %v123 = vunpack.c.l.b16 %v34
  %v124 = vunpack.c.l.b16 %v35
  %v125 = vunpack.c.l.b16 %v36
  %v126 = vunpack.c.l.b16 %v37
  %v127 = vunpack.c.l.b16 %v38
  %v128 = vunpack.c.l.b16 %v39
  %v129 = vunpack.c.l.b16 %v40
  %v130 = vunpack.c.l.b16 %v41
  %v131 = vunpack.c.l.b16 %v42
  %v132 = vunpack.c.l.b16 %v43
  %v133 = vunpack.c.l.b16 %v44
  %v134 = vunpack.c.l.b16 %v45
  %v135 = vunpack.c.l.b16 %v46
  %v136 = vunpack.c.l.b16 %v47
  %v137 = vunpack.c.l.b16 %v48
  %v138 = vunpack.c.l.b16 %v49
  %v139 = vunpack.c.l.b16 %v50
  %v140 = vunpack.c.l.b16 %v51
  %v141 = vunpack.c.l.b16 %v52
  %v142 = vunpack.c.l.b16 %v53
  %v143 = vunpack.c.l.b16 %v54
  %v144 = vpack.c.b16 %v105, %v104
  %v145 = vpack.c.b16 %v107, %v106
  %v146 = vpack.c.b16 %v109, %v108
  %v147 = vpack.c.b16 %v111, %v110
  %v148 = vpack.c.b16 %v113, %v112
  %v149 = vpack.c.b16 %v115, %v114
  %v150 = vpack.c.b16 %v117, %v116
  %v151 = vpack.c.b16 %v119, %v118
  %v152 = vpack.c.b16 %v121, %v120
  %v153 = vpack.c.b16 %v123, %v122
  %v154 = vpack.c.b16 %v125, %v124
  %v155 = vpack.c.b16 %v127, %v126
  %v156 = vpack.c.b16 %v129, %v128
  %v157 = vpack.c.b16 %v131, %v130
  %v158 = vpack.c.b16 %v133, %v132
  %v159 = vpack.c.b16 %v135, %v134
  %v160 = vpack.c.b16 %v137, %v136
  %v161 = vpack.c.b16 %v139, %v138
  %v162 = vpack.c.b16 %v141, %v140
  %v163 = vpack.c.b16 %v143, %v142
  %v166 = vunpack.c.l.b16 %v55
  %v167 = vunpack.c.l.b16 %v56
  %v168 = vpack.c.b16 %v167, %v166
  %vm169 = vcmask 80896
  %v171 = vsel %vm169, %v144, 0
  %v174 = vsel %vm169, %v145, 0
  %v177 = vsel %vm169, %v146, 0
  %v180 = vsel %vm169, %v147, 0
  %v183 = vsel %vm169, %v148, 0
  %v186 = vsel %vm169, %v149, 0
  %v189 = vsel %vm169, %v150, 0
  %v192 = vsel %vm169, %v151, 0
  %v195 = vsel %vm169, %v152, 0
  %v198 = vsel %vm169, %v153, 0
  %v201 = vsel %vm169, %v154, 0
  %v204 = vsel %vm169, %v155, 0
  %v207 = vsel %vm169, %v156, 0
  %v210 = vsel %vm169, %v157, 0
  %v213 = vsel %vm169, %v158, 0
  %v216 = vsel %vm169, %v159, 0
  %v219 = vsel %vm169, %v160, 0
  %v222 = vsel %vm169, %v161, 0
  %v225 = vsel %vm169, %v162, 0
  %v228 = vsel %vm169, %v163, 0
  %vm230 = vcmask 1044480
  %v232 = vsel %vm230, %v168, 0
  %234 = vmatprep.subr.bf16.mxu0 0
  %235 = vmatpush1.bf16.msra.mxu0 %v232
  %236 = vmatprep.subr.bf16.mxu0 0
  %237 = vmatpush1.bf16.msra.mxu0 0
  %238 = vmatprep.subr.bf16.mxu0 0
  %239 = vmatpush1.bf16.msra.mxu0 0
  %240 = vmatprep.subr.bf16.mxu0 0
  %241 = vmatpush1.bf16.msra.mxu0 0
  %242 = vmatprep.subr.bf16.mxu0 0
  %243 = vmatpush1.bf16.msra.mxu0 0
  %244 = vmatprep.subr.bf16.mxu0 0
  %245 = vmatpush1.bf16.msra.mxu0 0
  %246 = vmatprep.subr.bf16.mxu0 0
  %247 = vmatpush1.bf16.msra.mxu0 0
  %248 = vmatprep.subr.bf16.mxu0 0
  %249 = vmatpush1.bf16.msra.mxu0 0
  %250 = vmatprep.subr.bf16.mxu0 0
  %251 = vmatpush1.bf16.msra.mxu0 0
  %252 = vmatprep.subr.bf16.mxu0 0
  %253 = vmatpush1.bf16.msra.mxu0 0
  %254 = vmatprep.subr.bf16.mxu0 0
  %255 = vmatpush1.bf16.msra.mxu0 0
  %256 = vmatprep.subr.bf16.mxu0 0
  %257 = vmatpush1.bf16.msra.mxu0 0
  %258 = vmatprep.subr.bf16.mxu0 0
  %259 = vmatpush1.bf16.msra.mxu0 0
  %260 = vmatprep.subr.bf16.mxu0 0
  %261 = vmatpush1.bf16.msra.mxu0 0
  %262 = vmatprep.subr.bf16.mxu0 0
  %263 = vmatpush1.bf16.msra.mxu0 0
  %264 = vmatprep.subr.bf16.mxu0 0
  %265 = vmatpush1.bf16.msra.mxu0 0
  %266 = vmatprep.mubr.bf16.mxu0 0
  %267 = vmatmul.mubr.bf16.gmra.mrb[0].mxu0 %v171
  %v268 = vpop.f32.mrb[0].mxu0
  %v269 = vadd.f32 %v62, %v268
  %v270 = vpop.f32.mrb[0].mxu0
  %v271 = vpop.f32.mrb[0].mxu0
  %v272 = vadd.f32 %v62, %v271
  %v273 = vpop.f32.mrb[0].mxu0
  %274 = vmatprep.mubr.bf16.mxu0 0
  %275 = vmatmul.mubr.bf16.gmra.mrb[0].mxu0 %v174
  %v276 = vpop.f32.mrb[0].mxu0
  %v277 = vadd.f32 %v62, %v276
  %v278 = vpop.f32.mrb[0].mxu0
  %v279 = vpop.f32.mrb[0].mxu0
  %v280 = vadd.f32 %v62, %v279
  %v281 = vpop.f32.mrb[0].mxu0
  %282 = vmatprep.mubr.bf16.mxu0 0
  %283 = vmatmul.mubr.bf16.gmra.mrb[0].mxu0 %v177
  %v284 = vpop.f32.mrb[0].mxu0
  %v285 = vadd.f32 %v62, %v284
  %v286 = vpop.f32.mrb[0].mxu0
  %v287 = vpop.f32.mrb[0].mxu0
  %v288 = vadd.f32 %v62, %v287
  %v289 = vpop.f32.mrb[0].mxu0
  %290 = vmatprep.mubr.bf16.mxu0 0
  %291 = vmatmul.mubr.bf16.gmra.mrb[0].mxu0 %v180
  %v292 = vpop.f32.mrb[0].mxu0
  %v293 = vadd.f32 %v62, %v292
  %v294 = vpop.f32.mrb[0].mxu0
  %v295 = vpop.f32.mrb[0].mxu0
  %v296 = vadd.f32 %v62, %v295
  %v297 = vpop.f32.mrb[0].mxu0
  %298 = vmatprep.mubr.bf16.mxu0 0
  %299 = vmatmul.mubr.bf16.gmra.mrb[0].mxu0 %v183
  %v300 = vpop.f32.mrb[0].mxu0
  %v301 = vadd.f32 %v62, %v300
  %v302 = vpop.f32.mrb[0].mxu0
  %v303 = vpop.f32.mrb[0].mxu0
  %v304 = vadd.f32 %v62, %v303
  %v305 = vpop.f32.mrb[0].mxu0
  %306 = vmatprep.mubr.bf16.mxu0 0
  %307 = vmatmul.mubr.bf16.gmra.mrb[0].mxu0 %v186
  %v308 = vpop.f32.mrb[0].mxu0
  %v309 = vadd.f32 %v62, %v308
  %v310 = vpop.f32.mrb[0].mxu0
  %v311 = vpop.f32.mrb[0].mxu0
  %v312 = vadd.f32 %v62, %v311
  %v313 = vpop.f32.mrb[0].mxu0
  %314 = vmatprep.mubr.bf16.mxu0 0
  %315 = vmatmul.mubr.bf16.gmra.mrb[0].mxu0 %v189
  %v316 = vpop.f32.mrb[0].mxu0
  %v317 = vadd.f32 %v62, %v316
  %v318 = vpop.f32.mrb[0].mxu0
  %v319 = vpop.f32.mrb[0].mxu0
  %v320 = vadd.f32 %v62, %v319
  %v321 = vpop.f32.mrb[0].mxu0
  %322 = vmatprep.mubr.bf16.mxu0 0
  %323 = vmatmul.mubr.bf16.gmra.mrb[0].mxu0 %v192
  %v324 = vpop.f32.mrb[0].mxu0
  %v325 = vadd.f32 %v62, %v324
  %v326 = vpop.f32.mrb[0].mxu0
  %v327 = vpop.f32.mrb[0].mxu0
  %v328 = vadd.f32 %v62, %v327
  %v329 = vpop.f32.mrb[0].mxu0
  %330 = vmatprep.mubr.bf16.mxu0 0
  %331 = vmatmul.mubr.bf16.gmra.mrb[0].mxu0 %v195
  %v332 = vpop.f32.mrb[0].mxu0
  %v333 = vadd.f32 %v62, %v332
  %v334 = vpop.f32.mrb[0].mxu0
  %v335 = vpop.f32.mrb[0].mxu0
  %v336 = vadd.f32 %v62, %v335
  %v337 = vpop.f32.mrb[0].mxu0
  %338 = vmatprep.mubr.bf16.mxu0 0
  %339 = vmatmul.mubr.bf16.gmra.mrb[0].mxu0 %v198
  %v340 = vpop.f32.mrb[0].mxu0
  %v341 = vadd.f32 %v62, %v340
  %v342 = vpop.f32.mrb[0].mxu0
  %v343 = vpop.f32.mrb[0].mxu0
  %v344 = vadd.f32 %v62, %v343
  %v345 = vpop.f32.mrb[0].mxu0
  %346 = vmatprep.mubr.bf16.mxu0 0
  %347 = vmatmul.mubr.bf16.gmra.mrb[0].mxu0 %v201
  %v348 = vpop.f32.mrb[0].mxu0
  %v349 = vadd.f32 %v62, %v348
  %v350 = vpop.f32.mrb[0].mxu0
  %v351 = vpop.f32.mrb[0].mxu0
  %v352 = vadd.f32 %v62, %v351
  %v353 = vpop.f32.mrb[0].mxu0
  %354 = vmatprep.mubr.bf16.mxu0 0
  %355 = vmatmul.mubr.bf16.gmra.mrb[0].mxu0 %v204
  %v356 = vpop.f32.mrb[0].mxu0
  %v357 = vadd.f32 %v62, %v356
  %v358 = vpop.f32.mrb[0].mxu0
  %v359 = vpop.f32.mrb[0].mxu0
  %v360 = vadd.f32 %v62, %v359
  %v361 = vpop.f32.mrb[0].mxu0
  %362 = vmatprep.mubr.bf16.mxu0 0
  %363 = vmatmul.mubr.bf16.gmra.mrb[0].mxu0 %v207
  %v364 = vpop.f32.mrb[0].mxu0
  %v365 = vadd.f32 %v62, %v364
  %v366 = vpop.f32.mrb[0].mxu0
  %v367 = vpop.f32.mrb[0].mxu0
  %v368 = vadd.f32 %v62, %v367
  %v369 = vpop.f32.mrb[0].mxu0
  %370 = vmatprep.mubr.bf16.mxu0 0
  %371 = vmatmul.mubr.bf16.gmra.mrb[0].mxu0 %v210
  %v372 = vpop.f32.mrb[0].mxu0
  %v373 = vadd.f32 %v62, %v372
  %v374 = vpop.f32.mrb[0].mxu0
  %v375 = vpop.f32.mrb[0].mxu0
  %v376 = vadd.f32 %v62, %v375
  %v377 = vpop.f32.mrb[0].mxu0
  %378 = vmatprep.mubr.bf16.mxu0 0
  %379 = vmatmul.mubr.bf16.gmra.mrb[0].mxu0 %v213
  %v380 = vpop.f32.mrb[0].mxu0
  %v381 = vadd.f32 %v62, %v380
  %v382 = vpop.f32.mrb[0].mxu0
  %v383 = vpop.f32.mrb[0].mxu0
  %v384 = vadd.f32 %v62, %v383
  %v385 = vpop.f32.mrb[0].mxu0
  %386 = vmatprep.mubr.bf16.mxu0 0
  %387 = vmatmul.mubr.bf16.gmra.mrb[0].mxu0 %v216
  %v388 = vpop.f32.mrb[0].mxu0
  %v389 = vadd.f32 %v62, %v388
  %v390 = vpop.f32.mrb[0].mxu0
  %v391 = vpop.f32.mrb[0].mxu0
  %v392 = vadd.f32 %v62, %v391
  %v393 = vpop.f32.mrb[0].mxu0
  %394 = vmatprep.mubr.bf16.mxu0 0
  %395 = vmatmul.mubr.bf16.gmra.mrb[0].mxu0 %v219
  %v396 = vpop.f32.mrb[0].mxu0
  %v397 = vadd.f32 %v62, %v396
  %v398 = vpop.f32.mrb[0].mxu0
  %v399 = vpop.f32.mrb[0].mxu0
  %v400 = vadd.f32 %v62, %v399
  %v401 = vpop.f32.mrb[0].mxu0
  %402 = vmatprep.mubr.bf16.mxu0 0
  %403 = vmatmul.mubr.bf16.gmra.mrb[0].mxu0 %v222
  %v404 = vpop.f32.mrb[0].mxu0
  %v405 = vadd.f32 %v62, %v404
  %v406 = vpop.f32.mrb[0].mxu0
  %v407 = vpop.f32.mrb[0].mxu0
  %v408 = vadd.f32 %v62, %v407
  %v409 = vpop.f32.mrb[0].mxu0
  %410 = vmatprep.mubr.bf16.mxu0 0
  %411 = vmatmul.mubr.bf16.gmra.mrb[0].mxu0 %v225
  %v412 = vpop.f32.mrb[0].mxu0
  %v413 = vadd.f32 %v62, %v412
  %v414 = vpop.f32.mrb[0].mxu0
  %v415 = vpop.f32.mrb[0].mxu0
  %v416 = vadd.f32 %v62, %v415
  %v417 = vpop.f32.mrb[0].mxu0
  %418 = vmatprep.mubr.bf16.mxu0 0
  %419 = vmatmul.mubr.bf16.gmra.mrb[0].mxu0 %v228
  %v420 = vpop.f32.mrb[0].mxu0
  %v421 = vadd.f32 %v62, %v420
  %v422 = vpop.f32.mrb[0].mxu0
  %v423 = vpop.f32.mrb[0].mxu0
  %v424 = vadd.f32 %v62, %v423
  %v425 = vpop.f32.mrb[0].mxu0
  %426 = vdwg.mxu0
  %vm427 = vcmask 130048
  %428 = vst.msk [vmem:[%s3] sm:$0xff] %vm427, %v269
  %429 = vst.msk [vmem:[%s3 + $0x8] sm:$0xff] %vm427, %v272
  %430 = vst.msk [vmem:[%s3 + $0x10] sm:$0xff] %vm427, %v277
  %431 = vst.msk [vmem:[%s3 + $0x18] sm:$0xff] %vm427, %v280
  %432 = vst.msk [vmem:[%s3 + $0x20] sm:$0xff] %vm427, %v285
  %433 = vst.msk [vmem:[%s3 + $0x28] sm:$0xff] %vm427, %v288
  %434 = vst.msk [vmem:[%s3 + $0x30] sm:$0xff] %vm427, %v293
  %435 = vst.msk [vmem:[%s3 + $0x38] sm:$0xff] %vm427, %v296
  %436 = vst.msk [vmem:[%s3 + $0x40] sm:$0xff] %vm427, %v301
  %437 = vst.msk [vmem:[%s3 + $0x48] sm:$0xff] %vm427, %v304
  %438 = vst.msk [vmem:[%s3 + $0x50] sm:$0xff] %vm427, %v309
  %439 = vst.msk [vmem:[%s3 + $0x58] sm:$0xff] %vm427, %v312
  %440 = vst.msk [vmem:[%s3 + $0x60] sm:$0xff] %vm427, %v317
  %441 = vst.msk [vmem:[%s3 + $0x68] sm:$0xff] %vm427, %v320
  %442 = vst.msk [vmem:[%s3 + $0x70] sm:$0xff] %vm427, %v325
  %443 = vst.msk [vmem:[%s3 + $0x78] sm:$0xff] %vm427, %v328
  %444 = vst.msk [vmem:[%s3 + $0x80] sm:$0xff] %vm427, %v333
  %445 = vst.msk [vmem:[%s3 + $0x88] sm:$0xff] %vm427, %v336
  %446 = vst.msk [vmem:[%s3 + $0x90] sm:$0xff] %vm427, %v341
  %447 = vst.msk [vmem:[%s3 + $0x98] sm:$0xff] %vm427, %v344
  %448 = vst.msk [vmem:[%s3 + $0xa0] sm:$0xff] %vm427, %v349
  %449 = vst.msk [vmem:[%s3 + $0xa8] sm:$0xff] %vm427, %v352
  %450 = vst.msk [vmem:[%s3 + $0xb0] sm:$0xff] %vm427, %v357
  %451 = vst.msk [vmem:[%s3 + $0xb8] sm:$0xff] %vm427, %v360
  %452 = vst.msk [vmem:[%s3 + $0xc0] sm:$0xff] %vm427, %v365
  %453 = vst.msk [vmem:[%s3 + $0xc8] sm:$0xff] %vm427, %v368
  %454 = vst.msk [vmem:[%s3 + $0xd0] sm:$0xff] %vm427, %v373
  %455 = vst.msk [vmem:[%s3 + $0xd8] sm:$0xff] %vm427, %v376
  %456 = vst.msk [vmem:[%s3 + $0xe0] sm:$0xff] %vm427, %v381
  %457 = vst.msk [vmem:[%s3 + $0xe8] sm:$0xff] %vm427, %v384
  %458 = vst.msk [vmem:[%s3 + $0xf0] sm:$0xff] %vm427, %v389
  %459 = vst.msk [vmem:[%s3 + $0xf8] sm:$0xff] %vm427, %v392
  %460 = vst.msk [vmem:[%s3 + $0x100] sm:$0xff] %vm427, %v397
  %461 = vst.msk [vmem:[%s3 + $0x108] sm:$0xff] %vm427, %v400
  %462 = vst.msk [vmem:[%s3 + $0x110] sm:$0xff] %vm427, %v405
  %463 = vst.msk [vmem:[%s3 + $0x118] sm:$0xff] %vm427, %v408
  %464 = vst.msk [vmem:[%s3 + $0x120] sm:$0xff] %vm427, %v413
  %465 = vst.msk [vmem:[%s3 + $0x128] sm:$0xff] %vm427, %v416
  %466 = vst.msk [vmem:[%s3 + $0x130] sm:$0xff] %vm427, %v421
  %vm467 = vcmask 128000
  %468 = vst.msk [vmem:[%s3 + $0x138] sm:$0x3f] %vm467, %v424
  // Predicated region
  $region14: #{forward.8} parent=0 // pred_check
    _
  $region15: #{forward.8} parent=0 // pred_check_branch
    %470 = sbr.rel (0) target = $region17
  $region16: #{forward.8} parent=0 // pred_region
    _
  $region17: #{forward.8} parent=0 // pred_fallthru
    _
  // Predicated region
  $region18: #{forward.8} parent=0 // pred_check
    _
  $region19: #{forward.8} parent=0 // pred_check_branch
    %472 = sbr.rel (0) target = $region21
  $region20: #{forward.8} parent=0 // pred_region
    _
  $region21: #{forward.8} parent=0 // pred_fallthru
    _

// kernel: forward.9
$region0: #{forward.9}
  #allocation0 [shape = 'u32[]', space=smem, size = 0x4, offset = 0x4, fixed_abs, tag = 'smem constant byte address 0x4 - core index']
  #allocation1 [shape = 'u32[144,128]{1,0:T(1,128)}', space=vmem, size = 0x12000, scoped, tag = 'internal scratch']
  %s0 = inlined_call_operand.vmem [shape: f32[32,159], index: 0, kind: input, shape index: {}]
  %s1 = inlined_call_operand.vmem [shape: f32[32,1], index: 1, kind: input, shape index: {}]
  %s2 = inlined_call_operand.vmem [shape: f32[32,1], index: 2, kind: input, shape index: {}]
  %s3 = inlined_call_operand.vmem [shape: f32[32,159], index: 3, kind: output, shape index: {}]
  %s4 = sld [smem:[#allocation0]]
  $region22: #{forward.9} parent=0
    _
  %s6 = ssub.s32 1, %s4
  %s7 = scalar_select 0, %s6, %s4
  // Predicated region
  $region2: #{forward.9} parent=0 // pred_check
    _
  $region3: #{forward.9} parent=0 // pred_check_branch
    %9 = sbr.rel (0) target = $region5
  $region4: #{forward.9} parent=0 // pred_region
    _
  $region5: #{forward.9} parent=0 // pred_fallthru
    _
  // Predicated region
  $region6: #{forward.9} parent=0 // pred_check
    _
  $region7: #{forward.9} parent=0 // pred_check_branch
    %11 = sbr.rel (0) target = $region9
  $region8: #{forward.9} parent=0 // pred_region
    _
  $region9: #{forward.9} parent=0 // pred_fallthru
    _
  // Predicated region
  $region10: #{forward.9} parent=0 // pred_check
    _
  $region11: #{forward.9} parent=0 // pred_check_branch
    %13 = sbr.rel (0) target = $region13
  $region12: #{forward.9} parent=0 // pred_region
    _
  $region13: #{forward.9} parent=0 // pred_fallthru
    _
  %v14 = vld [vmem:[%s0] sm:$0xff]
  %v15 = vld [vmem:[%s0 + $0x8] sm:$0xff]
  %v16 = vld [vmem:[%s0 + $0x10] sm:$0xff]
  %v17 = vld [vmem:[%s0 + $0x18] sm:$0xff]
  %v18 = vld [vmem:[%s0 + $0x20] sm:$0xff]
  %v19 = vld [vmem:[%s0 + $0x28] sm:$0xff]
  %v20 = vld [vmem:[%s0 + $0x30] sm:$0xff]
  %v21 = vld [vmem:[%s0 + $0x38] sm:$0xff]
  %vm22 = vcmask 252928
  %v23 = vsel %vm22, %v15, 0.0
  %v24 = vadd.f32 %v14, %v23
  %25 = vadd.xlane.f32.xlu0 %v24
  %v26 = vpop.xlane.xlu0 %25
  %v27 = vsel %vm22, %v17, 0.0
  %v28 = vadd.f32 %v16, %v27
  %29 = vadd.xlane.f32.xlu0 %v28
  %v30 = vpop.xlane.xlu0 %29
  %v31 = vsel %vm22, %v19, 0.0
  %v32 = vadd.f32 %v18, %v31
  %33 = vadd.xlane.f32.xlu0 %v32
  %v34 = vpop.xlane.xlu0 %33
  %v35 = vsel %vm22, %v21, 0.0
  %v36 = vadd.f32 %v20, %v35
  %37 = vadd.xlane.f32.xlu0 %v36
  %v38 = vpop.xlane.xlu0 %37
  %v39 = vrcp.pop 159.0
  %v40 = vmul.f32 %v26, %v39
  %v41 = vmul.f32 %v30, %v39
  %v42 = vmul.f32 %v34, %v39
  %v43 = vmul.f32 %v38, %v39
  %v44 = vsub.f32 %v14, %v40
  %v45 = vsub.f32 %v15, %v40
  %v46 = vsub.f32 %v16, %v41
  %v47 = vsub.f32 %v17, %v41
  %v48 = vsub.f32 %v18, %v42
  %v49 = vsub.f32 %v19, %v42
  %v50 = vsub.f32 %v20, %v43
  %v51 = vsub.f32 %v21, %v43
  %v52 = vmul.f32 %v44, %v44
  %v53 = vmul.f32 %v45, %v45
  %v54 = vmul.f32 %v46, %v46
  %v55 = vmul.f32 %v47, %v47
  %v56 = vmul.f32 %v48, %v48
  %v57 = vmul.f32 %v49, %v49
  %v58 = vmul.f32 %v50, %v50
  %v59 = vmul.f32 %v51, %v51
  %v60 = vsel %vm22, %v53, 0.0
  %v61 = vadd.f32 %v52, %v60
  %62 = vadd.xlane.f32.xlu0 %v61
  %v63 = vpop.xlane.xlu0 %62
  %v64 = vsel %vm22, %v55, 0.0
  %v65 = vadd.f32 %v54, %v64
  %66 = vadd.xlane.f32.xlu0 %v65
  %v67 = vpop.xlane.xlu0 %66
  %v68 = vsel %vm22, %v57, 0.0
  %v69 = vadd.f32 %v56, %v68
  %70 = vadd.xlane.f32.xlu0 %v69
  %v71 = vpop.xlane.xlu0 %70
  %v72 = vsel %vm22, %v59, 0.0
  %v73 = vadd.f32 %v58, %v72
  %74 = vadd.xlane.f32.xlu0 %v73
  %v75 = vpop.xlane.xlu0 %74
  %v76 = vmul.f32 %v63, %v39
  %v77 = vmul.f32 %v67, %v39
  %v78 = vmul.f32 %v71, %v39
  %v79 = vmul.f32 %v75, %v39
  %v80 = vadd.f32 %v76, 1e-05
  %v81 = vadd.f32 %v77, 1e-05
  %v82 = vadd.f32 %v78, 1e-05
  %v83 = vadd.f32 %v79, 1e-05
  %v84 = vrsqrt.pop %v80
  %v85 = vrsqrt.pop %v81
  %v86 = vrsqrt.pop %v82
  %v87 = vrsqrt.pop %v83
  %v88 = vmul.f32 %v44, %v84
  %v89 = vmul.f32 %v45, %v84
  %v90 = vmul.f32 %v46, %v85
  %v91 = vmul.f32 %v47, %v85
  %v92 = vmul.f32 %v48, %v86
  %v93 = vmul.f32 %v49, %v86
  %v94 = vmul.f32 %v50, %v87
  %v95 = vmul.f32 %v51, %v87
  %v96 = vld [vmem:[%s1] sm:$0xff]
  %v97 = vld [vmem:[%s1 + $0x8] sm:$0xff]
  %v98 = vld [vmem:[%s1 + $0x10] sm:$0xff]
  %v99 = vld [vmem:[%s1 + $0x18] sm:$0xff]
  %101 = vset.pattern.permute.xlu0 0
  %102 = vperm.xlu0 %101, %v96
  %v103 = vpop.permute.xlu0 %102
  %106 = vset.pattern.permute.xlu0 0
  %107 = vperm.xlu0 %106, %v97
  %v108 = vpop.permute.xlu0 %107
  %111 = vset.pattern.permute.xlu0 0
  %112 = vperm.xlu0 %111, %v98
  %v113 = vpop.permute.xlu0 %112
  %116 = vset.pattern.permute.xlu0 0
  %117 = vperm.xlu0 %116, %v99
  %v118 = vpop.permute.xlu0 %117
  %v120 = vmul.f32 %v88, %v103
  %v121 = vmul.f32 %v89, %v103
  %v122 = vmul.f32 %v90, %v108
  %v123 = vmul.f32 %v91, %v108
  %v124 = vmul.f32 %v92, %v113
  %v125 = vmul.f32 %v93, %v113
  %v126 = vmul.f32 %v94, %v118
  %v127 = vmul.f32 %v95, %v118
  %v128 = vld [vmem:[%s2] sm:$0xff]
  %v129 = vld [vmem:[%s2 + $0x8] sm:$0xff]
  %v130 = vld [vmem:[%s2 + $0x10] sm:$0xff]
  %v131 = vld [vmem:[%s2 + $0x18] sm:$0xff]
  %133 = vset.pattern.permute.xlu0 0
  %134 = vperm.xlu0 %133, %v128
  %v135 = vpop.permute.xlu0 %134
  %138 = vset.pattern.permute.xlu0 0
  %139 = vperm.xlu0 %138, %v129
  %v140 = vpop.permute.xlu0 %139
  %143 = vset.pattern.permute.xlu0 0
  %144 = vperm.xlu0 %143, %v130
  %v145 = vpop.permute.xlu0 %144
  %148 = vset.pattern.permute.xlu0 0
  %149 = vperm.xlu0 %148, %v131
  %v150 = vpop.permute.xlu0 %149
  %v152 = vadd.f32 %v120, %v135
  %v153 = vadd.f32 %v121, %v135
  %v154 = vadd.f32 %v122, %v140
  %v155 = vadd.f32 %v123, %v140
  %v156 = vadd.f32 %v124, %v145
  %v157 = vadd.f32 %v125, %v145
  %v158 = vadd.f32 %v126, %v150
  %v159 = vadd.f32 %v127, %v150
  %v160 = vmul.f32 %v152, 0.5
  %v161 = vmul.f32 %v153, 0.5
  %v162 = vmul.f32 %v154, 0.5
  %v163 = vmul.f32 %v155, 0.5
  %v164 = vmul.f32 %v156, 0.5
  %v165 = vmul.f32 %v157, 0.5
  %v166 = vmul.f32 %v158, 0.5
  %v167 = vmul.f32 %v159, 0.5
  %v168 = vmul.f32 %v152, 0.70710677
  %v169 = vmul.f32 %v153, 0.70710677
  %v170 = vmul.f32 %v154, 0.70710677
  %v171 = vmul.f32 %v155, 0.70710677
  %v172 = vmul.f32 %v156, 0.70710677
  %v173 = vmul.f32 %v157, 0.70710677
  %v174 = vmul.f32 %v158, 0.70710677
  %v175 = vmul.f32 %v159, 0.70710677
  %v176 = verf.f32.pop %v168
  %v177 = verf.f32.pop %v169
  %v178 = verf.f32.pop %v170
  %v179 = verf.f32.pop %v171
  %v180 = verf.f32.pop %v172
  %v181 = verf.f32.pop %v173
  %v182 = verf.f32.pop %v174
  %v183 = verf.f32.pop %v175
  %v184 = vadd.f32 %v176, 1.0
  %v185 = vadd.f32 %v177, 1.0
  %v186 = vadd.f32 %v178, 1.0
  %v187 = vadd.f32 %v179, 1.0
  %v188 = vadd.f32 %v180, 1.0
  %v189 = vadd.f32 %v181, 1.0
  %v190 = vadd.f32 %v182, 1.0
  %v191 = vadd.f32 %v183, 1.0
  %v192 = vmul.f32 %v160, %v184
  %v193 = vmul.f32 %v161, %v185
  %v194 = vmul.f32 %v162, %v186
  %v195 = vmul.f32 %v163, %v187
  %v196 = vmul.f32 %v164, %v188
  %v197 = vmul.f32 %v165, %v189
  %v198 = vmul.f32 %v166, %v190
  %v199 = vmul.f32 %v167, %v191
  %200 = vst [vmem:[%s3] sm:$0xff] %v192
  %201 = vst.msk [vmem:[%s3 + $0x8] sm:$0xff] %vm22, %v193
  %202 = vst [vmem:[%s3 + $0x10] sm:$0xff] %v194
  %203 = vst.msk [vmem:[%s3 + $0x18] sm:$0xff] %vm22, %v195
  %204 = vst [vmem:[%s3 + $0x20] sm:$0xff] %v196
  %205 = vst.msk [vmem:[%s3 + $0x28] sm:$0xff] %vm22, %v197
  %206 = vst [vmem:[%s3 + $0x30] sm:$0xff] %v198
  %207 = vst.msk [vmem:[%s3 + $0x38] sm:$0xff] %vm22, %v199
  // Predicated region
  $region14: #{forward.9} parent=0 // pred_check
    _
  $region15: #{forward.9} parent=0 // pred_check_branch
    %209 = sbr.rel (0) target = $region17
  $region16: #{forward.9} parent=0 // pred_region
    _
  $region17: #{forward.9} parent=0 // pred_fallthru
    _
  // Predicated region
  $region18: #{forward.9} parent=0 // pred_check
    _
  $region19: #{forward.9} parent=0 // pred_check_branch
    %211 = sbr.rel (0) target = $region21
  $region20: #{forward.9} parent=0 // pred_region
    _
  $region21: #{forward.9} parent=0 // pred_fallthru
    _

// kernel: forward.10
$region0: #{forward.10}
  #allocation0 [shape = 'u32[]', space=smem, size = 0x4, offset = 0x4, fixed_abs, tag = 'smem constant byte address 0x4 - core index']
  #allocation1 [shape = 'u32[144,128]{1,0:T(1,128)}', space=vmem, size = 0x12000, scoped, tag = 'internal scratch']
  %s0 = inlined_call_operand.vmem [shape: bf16[1,76,128], index: 0, kind: input, shape index: {}]
  %s1 = inlined_call_operand.vmem [shape: bf16[1,128,16], index: 1, kind: input, shape index: {}]
  %s2 = inlined_call_operand.vmem [shape: f32[1,1,16], index: 2, kind: input, shape index: {}]
  %s3 = inlined_call_operand.vmem [shape: f32[1,76,16], index: 3, kind: output, shape index: {}]
  %s4 = sld [smem:[#allocation0]]
  $region22: #{forward.10} parent=0
    _
  %s6 = ssub.s32 1, %s4
  %s7 = scalar_select 0, %s6, %s4
  // Predicated region
  $region2: #{forward.10} parent=0 // pred_check
    _
  $region3: #{forward.10} parent=0 // pred_check_branch
    %9 = sbr.rel (0) target = $region5
  $region4: #{forward.10} parent=0 // pred_region
    _
  $region5: #{forward.10} parent=0 // pred_fallthru
    _
  // Predicated region
  $region6: #{forward.10} parent=0 // pred_check
    _
  $region7: #{forward.10} parent=0 // pred_check_branch
    %11 = sbr.rel (0) target = $region9
  $region8: #{forward.10} parent=0 // pred_region
    _
  $region9: #{forward.10} parent=0 // pred_fallthru
    _
  // Predicated region
  $region10: #{forward.10} parent=0 // pred_check
    _
  $region11: #{forward.10} parent=0 // pred_check_branch
    %13 = sbr.rel (0) target = $region13
  $region12: #{forward.10} parent=0 // pred_region
    _
  $region13: #{forward.10} parent=0 // pred_fallthru
    _
  %v15 = vld [vmem:[%s0] sm:$0xf]
  %v16 = vld [vmem:[%s0 + $0x4] sm:$0xf]
  %v17 = vld [vmem:[%s0 + $0x8] sm:$0xf]
  %v18 = vld [vmem:[%s0 + $0xc] sm:$0xf]
  %v19 = vld [vmem:[%s0 + $0x10] sm:$0xf]
  %v20 = vld [vmem:[%s0 + $0x14] sm:$0xf]
  %v21 = vld [vmem:[%s0 + $0x18] sm:$0xf]
  %v22 = vld [vmem:[%s0 + $0x1c] sm:$0xf]
  %v23 = vld [vmem:[%s0 + $0x20] sm:$0xf]
  %v24 = vld [vmem:[%s0 + $0x24] sm:$0x3]
  %v25 = vld [vmem:[%s1] sm:$0xf]
  %v26 = vld [vmem:[%s1 + $0x4] sm:$0xf]
  %v27 = vld [vmem:[%s1 + $0x8] sm:$0xf]
  %v28 = vld [vmem:[%s1 + $0xc] sm:$0xf]
  %v29 = vld [vmem:[%s1 + $0x10] sm:$0xf]
  %v30 = vld [vmem:[%s1 + $0x14] sm:$0xf]
  %v31 = vld [vmem:[%s1 + $0x18] sm:$0xf]
  %v32 = vld [vmem:[%s1 + $0x1c] sm:$0xf]
  %v33 = vld [vmem:[%s1 + $0x20] sm:$0xf]
  %v34 = vld [vmem:[%s1 + $0x24] sm:$0xf]
  %v35 = vld [vmem:[%s1 + $0x28] sm:$0xf]
  %v36 = vld [vmem:[%s1 + $0x2c] sm:$0xf]
  %v37 = vld [vmem:[%s1 + $0x30] sm:$0xf]
  %v38 = vld [vmem:[%s1 + $0x34] sm:$0xf]
  %v39 = vld [vmem:[%s1 + $0x38] sm:$0xf]
  %v40 = vld [vmem:[%s1 + $0x3c] sm:$0xf]
  %v41 = vld [vmem:[%s2] sm:$0x1]
  %v43 = vlaneseq
  %v44 = vshrl.u32 %v43, 7
  %v45 = vsub.s32 0, %v44
  %v46 = vrot.slane %v41, %v45
  %v58 = vunpack.c.l.b16 %v15
  %v59 = vunpack.c.l.b16 %v16
  %v60 = vunpack.c.l.b16 %v17
  %v61 = vunpack.c.l.b16 %v18
  %v62 = vunpack.c.l.b16 %v19
  %v63 = vunpack.c.l.b16 %v20
  %v64 = vunpack.c.l.b16 %v21
  %v65 = vunpack.c.l.b16 %v22
  %v66 = vunpack.c.l.b16 %v23
  %v67 = vunpack.c.l.b16 %v24
  %v68 = vpack.c.b16 %v59, %v58
  %v69 = vpack.c.b16 %v61, %v60
  %v70 = vpack.c.b16 %v63, %v62
  %v71 = vpack.c.b16 %v65, %v64
  %v72 = vpack.c.b16 %v67, %v66
  %v94 = vunpack.c.l.b16 %v25
  %v95 = vunpack.c.l.b16 %v26
  %v96 = vunpack.c.l.b16 %v27
  %v97 = vunpack.c.l.b16 %v28
  %v98 = vunpack.c.l.b16 %v29
  %v99 = vunpack.c.l.b16 %v30
  %v100 = vunpack.c.l.b16 %v31
  %v101 = vunpack.c.l.b16 %v32
  %v102 = vunpack.c.l.b16 %v33
  %v103 = vunpack.c.l.b16 %v34
  %v104 = vunpack.c.l.b16 %v35
  %v105 = vunpack.c.l.b16 %v36
  %v106 = vunpack.c.l.b16 %v37
  %v107 = vunpack.c.l.b16 %v38
  %v108 = vunpack.c.l.b16 %v39
  %v109 = vunpack.c.l.b16 %v40
  %v110 = vpack.c.b16 %v95, %v94
  %v111 = vpack.c.b16 %v97, %v96
  %v112 = vpack.c.b16 %v99, %v98
  %v113 = vpack.c.b16 %v101, %v100
  %v114 = vpack.c.b16 %v103, %v102
  %v115 = vpack.c.b16 %v105, %v104
  %v116 = vpack.c.b16 %v107, %v106
  %v117 = vpack.c.b16 %v109, %v108
  %126 = vmatprep.subr.bf16.mxu0 0
  %127 = vmatpush1.bf16.msra.mxu0 %v110
  %128 = vmatprep.subr.bf16.mxu0 0
  %129 = vmatpush1.bf16.msra.mxu0 %v111
  %130 = vmatprep.subr.bf16.mxu0 0
  %131 = vmatpush1.bf16.msra.mxu0 %v112
  %132 = vmatprep.subr.bf16.mxu0 0
  %133 = vmatpush1.bf16.msra.mxu0 %v113
  %134 = vmatprep.subr.bf16.mxu0 0
  %135 = vmatpush1.bf16.msra.mxu0 %v114
  %136 = vmatprep.subr.bf16.mxu0 0
  %137 = vmatpush1.bf16.msra.mxu0 %v115
  %138 = vmatprep.subr.bf16.mxu0 0
  %139 = vmatpush1.bf16.msra.mxu0 %v116
  %140 = vmatprep.subr.bf16.mxu0 0
  %141 = vmatpush1.bf16.msra.mxu0 %v117
  %142 = vmatprep.subr.bf16.mxu0 0
  %143 = vmatpush1.bf16.msra.mxu0 0
  %144 = vmatprep.subr.bf16.mxu0 0
  %145 = vmatpush1.bf16.msra.mxu0 0
  %146 = vmatprep.subr.bf16.mxu0 0
  %147 = vmatpush1.bf16.msra.mxu0 0
  %148 = vmatprep.subr.bf16.mxu0 0
  %149 = vmatpush1.bf16.msra.mxu0 0
  %150 = vmatprep.subr.bf16.mxu0 0
  %151 = vmatpush1.bf16.msra.mxu0 0
  %152 = vmatprep.subr.bf16.mxu0 0
  %153 = vmatpush1.bf16.msra.mxu0 0
  %154 = vmatprep.subr.bf16.mxu0 0
  %155 = vmatpush1.bf16.msra.mxu0 0
  %156 = vmatprep.subr.bf16.mxu0 0
  %157 = vmatpush1.bf16.msra.mxu0 0
  %158 = vmatprep.mubr.bf16.mxu0 0
  %159 = vmatmul.mubr.bf16.gmra.mrb[0].mxu0 %v68
  %v160 = vpop.f32.mrb[0].mxu0
  %v161 = vadd.f32 %v46, %v160
  %v162 = vpop.f32.mrb[0].mxu0
  %v163 = vpop.f32.mrb[0].mxu0
  %v164 = vadd.f32 %v46, %v163
  %v165 = vpop.f32.mrb[0].mxu0
  %166 = vmatprep.mubr.bf16.mxu0 0
  %167 = vmatmul.mubr.bf16.gmra.mrb[0].mxu0 %v69
  %v168 = vpop.f32.mrb[0].mxu0
  %v169 = vadd.f32 %v46, %v168
  %v170 = vpop.f32.mrb[0].mxu0
  %v171 = vpop.f32.mrb[0].mxu0
  %v172 = vadd.f32 %v46, %v171
  %v173 = vpop.f32.mrb[0].mxu0
  %174 = vmatprep.mubr.bf16.mxu0 0
  %175 = vmatmul.mubr.bf16.gmra.mrb[0].mxu0 %v70
  %v176 = vpop.f32.mrb[0].mxu0
  %v177 = vadd.f32 %v46, %v176
  %v178 = vpop.f32.mrb[0].mxu0
  %v179 = vpop.f32.mrb[0].mxu0
  %v180 = vadd.f32 %v46, %v179
  %v181 = vpop.f32.mrb[0].mxu0
  %182 = vmatprep.mubr.bf16.mxu0 0
  %183 = vmatmul.mubr.bf16.gmra.mrb[0].mxu0 %v71
  %v184 = vpop.f32.mrb[0].mxu0
  %v185 = vadd.f32 %v46, %v184
  %v186 = vpop.f32.mrb[0].mxu0
  %v187 = vpop.f32.mrb[0].mxu0
  %v188 = vadd.f32 %v46, %v187
  %v189 = vpop.f32.mrb[0].mxu0
  %190 = vmatprep.mubr.bf16.mxu0 0
  %191 = vmatmul.mubr.bf16.gmra.mrb[0].mxu0 %v72
  %v192 = vpop.f32.mrb[0].mxu0
  %v193 = vadd.f32 %v46, %v192
  %v194 = vpop.f32.mrb[0].mxu0
  %v195 = vpop.f32.mrb[0].mxu0
  %v196 = vadd.f32 %v46, %v195
  %v197 = vpop.f32.mrb[0].mxu0
  %198 = vdwg.mxu0
  %v199 = vmul.f32 %v161, 0.5
  %v200 = vmul.f32 %v164, 0.5
  %v201 = vmul.f32 %v169, 0.5
  %v202 = vmul.f32 %v172, 0.5
  %v203 = vmul.f32 %v177, 0.5
  %v204 = vmul.f32 %v180, 0.5
  %v205 = vmul.f32 %v185, 0.5
  %v206 = vmul.f32 %v188, 0.5
  %v207 = vmul.f32 %v193, 0.5
  %v208 = vmul.f32 %v196, 0.5
  %v209 = vmul.f32 %v161, 0.70710677
  %v210 = vmul.f32 %v164, 0.70710677
  %v211 = vmul.f32 %v169, 0.70710677
  %v212 = vmul.f32 %v172, 0.70710677
  %v213 = vmul.f32 %v177, 0.70710677
  %v214 = vmul.f32 %v180, 0.70710677
  %v215 = vmul.f32 %v185, 0.70710677
  %v216 = vmul.f32 %v188, 0.70710677
  %v217 = vmul.f32 %v193, 0.70710677
  %v218 = vmul.f32 %v196, 0.70710677
  %v219 = verf.f32.pop %v209
  %v220 = verf.f32.pop %v210
  %v221 = verf.f32.pop %v211
  %v222 = verf.f32.pop %v212
  %v223 = verf.f32.pop %v213
  %v224 = verf.f32.pop %v214
  %v225 = verf.f32.pop %v215
  %v226 = verf.f32.pop %v216
  %v227 = verf.f32.pop %v217
  %v228 = verf.f32.pop %v218
  %v229 = vadd.f32 %v219, 1.0
  %v230 = vadd.f32 %v220, 1.0
  %v231 = vadd.f32 %v221, 1.0
  %v232 = vadd.f32 %v222, 1.0
  %v233 = vadd.f32 %v223, 1.0
  %v234 = vadd.f32 %v224, 1.0
  %v235 = vadd.f32 %v225, 1.0
  %v236 = vadd.f32 %v226, 1.0
  %v237 = vadd.f32 %v227, 1.0
  %v238 = vadd.f32 %v228, 1.0
  %v239 = vmul.f32 %v199, %v229
  %v240 = vmul.f32 %v200, %v230
  %v241 = vmul.f32 %v201, %v231
  %v242 = vmul.f32 %v202, %v232
  %v243 = vmul.f32 %v203, %v233
  %v244 = vmul.f32 %v204, %v234
  %v245 = vmul.f32 %v205, %v235
  %v246 = vmul.f32 %v206, %v236
  %v247 = vmul.f32 %v207, %v237
  %v248 = vmul.f32 %v208, %v238
  %vm249 = vcmask 130048
  %250 = vst.msk [vmem:[%s3] sm:$0xff] %vm249, %v239
  %251 = vst.msk [vmem:[%s3 + $0x8] sm:$0xff] %vm249, %v240
  %252 = vst.msk [vmem:[%s3 + $0x10] sm:$0xff] %vm249, %v241
  %253 = vst.msk [vmem:[%s3 + $0x18] sm:$0xff] %vm249, %v242
  %254 = vst.msk [vmem:[%s3 + $0x20] sm:$0xff] %vm249, %v243
  %255 = vst.msk [vmem:[%s3 + $0x28] sm:$0xff] %vm249, %v244
  %256 = vst.msk [vmem:[%s3 + $0x30] sm:$0xff] %vm249, %v245
  %257 = vst.msk [vmem:[%s3 + $0x38] sm:$0xff] %vm249, %v246
  %258 = vst.msk [vmem:[%s3 + $0x40] sm:$0xff] %vm249, %v247
  %vm259 = vcmask 125952
  %260 = vst.msk [vmem:[%s3 + $0x48] sm:$0xf] %vm259, %v248
  // Predicated region
  $region14: #{forward.10} parent=0 // pred_check
    _
  $region15: #{forward.10} parent=0 // pred_check_branch
    %262 = sbr.rel (0) target = $region17
  $region16: #{forward.10} parent=0 // pred_region
    _
  $region17: #{forward.10} parent=0 // pred_fallthru
    _
  // Predicated region
  $region18: #{forward.10} parent=0 // pred_check
    _
  $region19: #{forward.10} parent=0 // pred_check_branch
    %264 = sbr.rel (0) target = $region21
  $region20: #{forward.10} parent=0 // pred_region
    _
  $region21: #{forward.10} parent=0 // pred_fallthru
    _

// kernel: forward.11
$region0: #{forward.11}
  #allocation0 [shape = 'u32[]', space=smem, size = 0x4, offset = 0x4, fixed_abs, tag = 'smem constant byte address 0x4 - core index']
  #allocation1 [shape = 'u32[144,128]{1,0:T(1,128)}', space=vmem, size = 0x12000, scoped, tag = 'internal scratch']
  %s0 = inlined_call_operand.vmem [shape: f32[76,16], index: 0, kind: input, shape index: {}]
  %s1 = inlined_call_operand.vmem [shape: f32[1,16], index: 1, kind: input, shape index: {}]
  %s2 = inlined_call_operand.vmem [shape: f32[1,16], index: 2, kind: input, shape index: {}]
  %s3 = inlined_call_operand.vmem [shape: bf16[16,32], index: 3, kind: input, shape index: {}]
  %s4 = inlined_call_operand.vmem [shape: f32[1,32], index: 4, kind: input, shape index: {}]
  %s5 = inlined_call_operand.vmem [shape: f32[76,32], index: 5, kind: output, shape index: {}]
  %s6 = sld [smem:[#allocation0]]
  $region30: #{forward.11} parent=0
    _
  %s8 = ssub.s32 1, %s6
  %s9 = scalar_select 0, %s8, %s6
  // Predicated region
  $region2: #{forward.11} parent=0 // pred_check
    _
  $region3: #{forward.11} parent=0 // pred_check_branch
    %11 = sbr.rel (0) target = $region5
  $region4: #{forward.11} parent=0 // pred_region
    _
  $region5: #{forward.11} parent=0 // pred_fallthru
    _
  // Predicated region
  $region6: #{forward.11} parent=0 // pred_check
    _
  $region7: #{forward.11} parent=0 // pred_check_branch
    %13 = sbr.rel (0) target = $region9
  $region8: #{forward.11} parent=0 // pred_region
    _
  $region9: #{forward.11} parent=0 // pred_fallthru
    _
  // Predicated region
  $region10: #{forward.11} parent=0 // pred_check
    _
  $region11: #{forward.11} parent=0 // pred_check_branch
    %15 = sbr.rel (0) target = $region13
  $region12: #{forward.11} parent=0 // pred_region
    _
  $region13: #{forward.11} parent=0 // pred_fallthru
    _
  // Predicated region
  $region14: #{forward.11} parent=0 // pred_check
    _
  $region15: #{forward.11} parent=0 // pred_check_branch
    %17 = sbr.rel (0) target = $region17
  $region16: #{forward.11} parent=0 // pred_region
    _
  $region17: #{forward.11} parent=0 // pred_fallthru
    _
  // Predicated region
  $region18: #{forward.11} parent=0 // pred_check
    _
  $region19: #{forward.11} parent=0 // pred_check_branch
    %19 = sbr.rel (0) target = $region21
  $region20: #{forward.11} parent=0 // pred_region
    _
  $region21: #{forward.11} parent=0 // pred_fallthru
    _
  %v21 = vld [vmem:[%s0] sm:$0xff]
  %v22 = vld [vmem:[%s0 + $0x8] sm:$0xff]
  %v23 = vld [vmem:[%s0 + $0x10] sm:$0xff]
  %v24 = vld [vmem:[%s0 + $0x18] sm:$0xff]
  %v25 = vld [vmem:[%s0 + $0x20] sm:$0xff]
  %v26 = vld [vmem:[%s0 + $0x28] sm:$0xff]
  %v27 = vld [vmem:[%s0 + $0x30] sm:$0xff]
  %v28 = vld [vmem:[%s0 + $0x38] sm:$0xff]
  %v29 = vld [vmem:[%s0 + $0x40] sm:$0xff]
  %v30 = vld [vmem:[%s0 + $0x48] sm:$0xf]
  %v31 = vld [vmem:[%s1] sm:$0x1]
  %v32 = vld [vmem:[%s2] sm:$0x1]
  %vm33 = vcmask 130048
  %v34 = vsel %vm33, %v21, 0.0
  %35 = vadd.xlane.f32.xlu0 %v34
  %v36 = vpop.xlane.xlu0 %35
  %v37 = vsel %vm33, %v22, 0.0
  %38 = vadd.xlane.f32.xlu0 %v37
  %v39 = vpop.xlane.xlu0 %38
  %v40 = vsel %vm33, %v23, 0.0
  %41 = vadd.xlane.f32.xlu0 %v40
  %v42 = vpop.xlane.xlu0 %41
  %v43 = vsel %vm33, %v24, 0.0
  %44 = vadd.xlane.f32.xlu0 %v43
  %v45 = vpop.xlane.xlu0 %44
  %v46 = vsel %vm33, %v25, 0.0
  %47 = vadd.xlane.f32.xlu0 %v46
  %v48 = vpop.xlane.xlu0 %47
  %v49 = vsel %vm33, %v26, 0.0
  %50 = vadd.xlane.f32.xlu0 %v49
  %v51 = vpop.xlane.xlu0 %50
  %v52 = vsel %vm33, %v27, 0.0
  %53 = vadd.xlane.f32.xlu0 %v52
  %v54 = vpop.xlane.xlu0 %53
  %v55 = vsel %vm33, %v28, 0.0
  %56 = vadd.xlane.f32.xlu0 %v55
  %v57 = vpop.xlane.xlu0 %56
  %v58 = vsel %vm33, %v29, 0.0
  %59 = vadd.xlane.f32.xlu0 %v58
  %v60 = vpop.xlane.xlu0 %59
  %vm61 = vcmask 125952
  %v62 = vsel %vm61, %v30, 0.0
  %63 = vadd.xlane.f32.xlu0 %v62
  %v64 = vpop.xlane.xlu0 %63
  %v65 = vrcp.pop 16.0
  %v66 = vmul.f32 %v36, %v65
  %v67 = vmul.f32 %v39, %v65
  %v68 = vmul.f32 %v42, %v65
  %v69 = vmul.f32 %v45, %v65
  %v70 = vmul.f32 %v48, %v65
  %v71 = vmul.f32 %v51, %v65
  %v72 = vmul.f32 %v54, %v65
  %v73 = vmul.f32 %v57, %v65
  %v74 = vmul.f32 %v60, %v65
  %v75 = vmul.f32 %v64, %v65
  %v76 = vsub.f32 %v21, %v66
  %v77 = vsub.f32 %v22, %v67
  %v78 = vsub.f32 %v23, %v68
  %v79 = vsub.f32 %v24, %v69
  %v80 = vsub.f32 %v25, %v70
  %v81 = vsub.f32 %v26, %v71
  %v82 = vsub.f32 %v27, %v72
  %v83 = vsub.f32 %v28, %v73
  %v84 = vsub.f32 %v29, %v74
  %v85 = vsub.f32 %v30, %v75
  %v86 = vmul.f32 %v76, %v76
  %v87 = vmul.f32 %v77, %v77
  %v88 = vmul.f32 %v78, %v78
  %v89 = vmul.f32 %v79, %v79
  %v90 = vmul.f32 %v80, %v80
  %v91 = vmul.f32 %v81, %v81
  %v92 = vmul.f32 %v82, %v82
  %v93 = vmul.f32 %v83, %v83
  %v94 = vmul.f32 %v84, %v84
  %v95 = vmul.f32 %v85, %v85
  %v96 = vsel %vm33, %v86, 0.0
  %97 = vadd.xlane.f32.xlu0 %v96
  %v98 = vpop.xlane.xlu0 %97
  %v99 = vsel %vm33, %v87, 0.0
  %100 = vadd.xlane.f32.xlu0 %v99
  %v101 = vpop.xlane.xlu0 %100
  %v102 = vsel %vm33, %v88, 0.0
  %103 = vadd.xlane.f32.xlu0 %v102
  %v104 = vpop.xlane.xlu0 %103
  %v105 = vsel %vm33, %v89, 0.0
  %106 = vadd.xlane.f32.xlu0 %v105
  %v107 = vpop.xlane.xlu0 %106
  %v108 = vsel %vm33, %v90, 0.0
  %109 = vadd.xlane.f32.xlu0 %v108
  %v110 = vpop.xlane.xlu0 %109
  %v111 = vsel %vm33, %v91, 0.0
  %112 = vadd.xlane.f32.xlu0 %v111
  %v113 = vpop.xlane.xlu0 %112
  %v114 = vsel %vm33, %v92, 0.0
  %115 = vadd.xlane.f32.xlu0 %v114
  %v116 = vpop.xlane.xlu0 %115
  %v117 = vsel %vm33, %v93, 0.0
  %118 = vadd.xlane.f32.xlu0 %v117
  %v119 = vpop.xlane.xlu0 %118
  %v120 = vsel %vm33, %v94, 0.0
  %121 = vadd.xlane.f32.xlu0 %v120
  %v122 = vpop.xlane.xlu0 %121
  %v123 = vsel %vm61, %v95, 0.0
  %124 = vadd.xlane.f32.xlu0 %v123
  %v125 = vpop.xlane.xlu0 %124
  %v126 = vmul.f32 %v98, %v65
  %v127 = vmul.f32 %v101, %v65
  %v128 = vmul.f32 %v104, %v65
  %v129 = vmul.f32 %v107, %v65
  %v130 = vmul.f32 %v110, %v65
  %v131 = vmul.f32 %v113, %v65
  %v132 = vmul.f32 %v116, %v65
  %v133 = vmul.f32 %v119, %v65
  %v134 = vmul.f32 %v122, %v65
  %v135 = vmul.f32 %v125, %v65
  %v136 = vadd.f32 %v126, 1e-05
  %v137 = vadd.f32 %v127, 1e-05
  %v138 = vadd.f32 %v128, 1e-05
  %v139 = vadd.f32 %v129, 1e-05
  %v140 = vadd.f32 %v130, 1e-05
  %v141 = vadd.f32 %v131, 1e-05
  %v142 = vadd.f32 %v132, 1e-05
  %v143 = vadd.f32 %v133, 1e-05
  %v144 = vadd.f32 %v134, 1e-05
  %v145 = vadd.f32 %v135, 1e-05
  %v146 = vrsqrt.pop %v136
  %v147 = vrsqrt.pop %v137
  %v148 = vrsqrt.pop %v138
  %v149 = vrsqrt.pop %v139
  %v150 = vrsqrt.pop %v140
  %v151 = vrsqrt.pop %v141
  %v152 = vrsqrt.pop %v142
  %v153 = vrsqrt.pop %v143
  %v154 = vrsqrt.pop %v144
  %v155 = vrsqrt.pop %v145
  %v156 = vmul.f32 %v76, %v146
  %v157 = vmul.f32 %v77, %v147
  %v158 = vmul.f32 %v78, %v148
  %v159 = vmul.f32 %v79, %v149
  %v160 = vmul.f32 %v80, %v150
  %v161 = vmul.f32 %v81, %v151
  %v162 = vmul.f32 %v82, %v152
  %v163 = vmul.f32 %v83, %v153
  %v164 = vmul.f32 %v84, %v154
  %v165 = vmul.f32 %v85, %v155
  %v167 = vlaneseq
  %v168 = vshrl.u32 %v167, 7
  %v169 = vsub.s32 0, %v168
  %v170 = vrot.slane %v31, %v169
  %v172 = vmul.f32 %v156, %v170
  %v173 = vmul.f32 %v157, %v170
  %v174 = vmul.f32 %v158, %v170
  %v175 = vmul.f32 %v159, %v170
  %v176 = vmul.f32 %v160, %v170
  %v177 = vmul.f32 %v161, %v170
  %v178 = vmul.f32 %v162, %v170
  %v179 = vmul.f32 %v163, %v170
  %v180 = vmul.f32 %v164, %v170
  %v181 = vmul.f32 %v165, %v170
  %v183 = vlaneseq
  %v184 = vshrl.u32 %v183, 7
  %v185 = vsub.s32 0, %v184
  %v186 = vrot.slane %v32, %v185
  %v188 = vadd.f32 %v172, %v186
  %v189 = vadd.f32 %v173, %v186
  %v190 = vadd.f32 %v174, %v186
  %v191 = vadd.f32 %v175, %v186
  %v192 = vadd.f32 %v176, %v186
  %v193 = vadd.f32 %v177, %v186
  %v194 = vadd.f32 %v178, %v186
  %v195 = vadd.f32 %v179, %v186
  %v196 = vadd.f32 %v180, %v186
  %v197 = vadd.f32 %v181, %v186
  %v198 = vpack.c.bf16 %v189, %v188
  %v199 = vpack.c.bf16 %v191, %v190
  %v200 = vpack.c.bf16 %v193, %v192
  %v201 = vpack.c.bf16 %v195, %v194
  %v202 = vpack.c.bf16 %v197, %v196
  %v203 = vld [vmem:[%s3] sm:$0xf]
  %v204 = vld [vmem:[%s3 + $0x4] sm:$0xf]
  %v205 = vld [vmem:[%s4] sm:$0x1]
  %v207 = vlaneseq
  %v208 = vshrl.u32 %v207, 7
  %v209 = vsub.s32 0, %v208
  %v210 = vrot.slane %v205, %v209
  %v214 = vunpack.c.l.b16 %v203
  %v215 = vunpack.c.l.b16 %v204
  %v216 = vpack.c.b16 %v215, %v214
  %v219 = vsel %vm33, %v198, 0
  %v222 = vsel %vm33, %v199, 0
  %v225 = vsel %vm33, %v200, 0
  %v228 = vsel %vm33, %v201, 0
  %v231 = vsel %vm33, %v202, 0
  %233 = vmatprep.subr.bf16.mxu0 0
  %234 = vmatpush1.bf16.msra.mxu0 %v216
  %235 = vmatprep.subr.bf16.mxu0 0
  %236 = vmatpush1.bf16.msra.mxu0 0
  %237 = vmatprep.subr.bf16.mxu0 0
  %238 = vmatpush1.bf16.msra.mxu0 0
  %239 = vmatprep.subr.bf16.mxu0 0
  %240 = vmatpush1.bf16.msra.mxu0 0
  %241 = vmatprep.subr.bf16.mxu0 0
  %242 = vmatpush1.bf16.msra.mxu0 0
  %243 = vmatprep.subr.bf16.mxu0 0
  %244 = vmatpush1.bf16.msra.mxu0 0
  %245 = vmatprep.subr.bf16.mxu0 0
  %246 = vmatpush1.bf16.msra.mxu0 0
  %247 = vmatprep.subr.bf16.mxu0 0
  %248 = vmatpush1.bf16.msra.mxu0 0
  %249 = vmatprep.subr.bf16.mxu0 0
  %250 = vmatpush1.bf16.msra.mxu0 0
  %251 = vmatprep.subr.bf16.mxu0 0
  %252 = vmatpush1.bf16.msra.mxu0 0
  %253 = vmatprep.subr.bf16.mxu0 0
  %254 = vmatpush1.bf16.msra.mxu0 0
  %255 = vmatprep.subr.bf16.mxu0 0
  %256 = vmatpush1.bf16.msra.mxu0 0
  %257 = vmatprep.subr.bf16.mxu0 0
  %258 = vmatpush1.bf16.msra.mxu0 0
  %259 = vmatprep.subr.bf16.mxu0 0
  %260 = vmatpush1.bf16.msra.mxu0 0
  %261 = vmatprep.subr.bf16.mxu0 0
  %262 = vmatpush1.bf16.msra.mxu0 0
  %263 = vmatprep.subr.bf16.mxu0 0
  %264 = vmatpush1.bf16.msra.mxu0 0
  %265 = vmatprep.mubr.bf16.mxu0 0
  %266 = vmatmul.mubr.bf16.gmra.mrb[0].mxu0 %v219
  %v267 = vpop.f32.mrb[0].mxu0
  %v268 = vadd.f32 %v210, %v267
  %v269 = vpop.f32.mrb[0].mxu0
  %v270 = vpop.f32.mrb[0].mxu0
  %v271 = vadd.f32 %v210, %v270
  %v272 = vpop.f32.mrb[0].mxu0
  %273 = vmatprep.mubr.bf16.mxu0 0
  %274 = vmatmul.mubr.bf16.gmra.mrb[0].mxu0 %v222
  %v275 = vpop.f32.mrb[0].mxu0
  %v276 = vadd.f32 %v210, %v275
  %v277 = vpop.f32.mrb[0].mxu0
  %v278 = vpop.f32.mrb[0].mxu0
  %v279 = vadd.f32 %v210, %v278
  %v280 = vpop.f32.mrb[0].mxu0
  %281 = vmatprep.mubr.bf16.mxu0 0
  %282 = vmatmul.mubr.bf16.gmra.mrb[0].mxu0 %v225
  %v283 = vpop.f32.mrb[0].mxu0
  %v284 = vadd.f32 %v210, %v283
  %v285 = vpop.f32.mrb[0].mxu0
  %v286 = vpop.f32.mrb[0].mxu0
  %v287 = vadd.f32 %v210, %v286
  %v288 = vpop.f32.mrb[0].mxu0
  %289 = vmatprep.mubr.bf16.mxu0 0
  %290 = vmatmul.mubr.bf16.gmra.mrb[0].mxu0 %v228
  %v291 = vpop.f32.mrb[0].mxu0
  %v292 = vadd.f32 %v210, %v291
  %v293 = vpop.f32.mrb[0].mxu0
  %v294 = vpop.f32.mrb[0].mxu0
  %v295 = vadd.f32 %v210, %v294
  %v296 = vpop.f32.mrb[0].mxu0
  %297 = vmatprep.mubr.bf16.mxu0 0
  %298 = vmatmul.mubr.bf16.gmra.mrb[0].mxu0 %v231
  %v299 = vpop.f32.mrb[0].mxu0
  %v300 = vadd.f32 %v210, %v299
  %v301 = vpop.f32.mrb[0].mxu0
  %v302 = vpop.f32.mrb[0].mxu0
  %v303 = vadd.f32 %v210, %v302
  %v304 = vpop.f32.mrb[0].mxu0
  %305 = vdwg.mxu0
  %vm306 = vcmask 261120
  %307 = vst.msk [vmem:[%s5] sm:$0xff] %vm306, %v268
  %308 = vst.msk [vmem:[%s5 + $0x8] sm:$0xff] %vm306, %v271
  %309 = vst.msk [vmem:[%s5 + $0x10] sm:$0xff] %vm306, %v276
  %310 = vst.msk [vmem:[%s5 + $0x18] sm:$0xff] %vm306, %v279
  %311 = vst.msk [vmem:[%s5 + $0x20] sm:$0xff] %vm306, %v284
  %312 = vst.msk [vmem:[%s5 + $0x28] sm:$0xff] %vm306, %v287
  %313 = vst.msk [vmem:[%s5 + $0x30] sm:$0xff] %vm306, %v292
  %314 = vst.msk [vmem:[%s5 + $0x38] sm:$0xff] %vm306, %v295
  %315 = vst.msk [vmem:[%s5 + $0x40] sm:$0xff] %vm306, %v300
  %vm316 = vcmask 257024
  %317 = vst.msk [vmem:[%s5 + $0x48] sm:$0xf] %vm316, %v303
  // Predicated region
  $region22: #{forward.11} parent=0 // pred_check
    _
  $region23: #{forward.11} parent=0 // pred_check_branch
    %319 = sbr.rel (0) target = $region25
  $region24: #{forward.11} parent=0 // pred_region
    _
  $region25: #{forward.11} parent=0 // pred_fallthru
    _
  // Predicated region
  $region26: #{forward.11} parent=0 // pred_check
    _
  $region27: #{forward.11} parent=0 // pred_check_branch
    %321 = sbr.rel (0) target = $region29
  $region28: #{forward.11} parent=0 // pred_region
    _
  $region29: #{forward.11} parent=0 // pred_fallthru
    _

// kernel: forward.12
$region0: #{forward.12}
  #allocation0 [shape = 'u32[]', space=smem, size = 0x4, offset = 0x4, fixed_abs, tag = 'smem constant byte address 0x4 - core index']
  #allocation1 [shape = 'u32[144,128]{1,0:T(1,128)}', space=vmem, size = 0x12000, scoped, tag = 'internal scratch']
  %s0 = inlined_call_operand.vmem [shape: bf16[4,78,64], index: 0, kind: input, shape index: {}]
  %s1 = inlined_call_operand.vmem [shape: bf16[4,64,8], index: 1, kind: input, shape index: {}]
  %s2 = inlined_call_operand.vmem [shape: f32[4,1,8], index: 2, kind: input, shape index: {}]
  %s3 = inlined_call_operand.vmem [shape: f32[4,78,8], index: 3, kind: output, shape index: {}]
  %s4 = sld [smem:[#allocation0]]
  $region45: #{forward.12} parent=0
    _
  %s6 = ssub.s32 1, %s4
  %s7 = scalar_select 0, %s6, %s4
  loop: start=0, step=1, limit=6
  $region2: #{forward.12} parent=0 // loop_pre_header
    _
  $region3: #{forward.12} parent=0 // loop_header
    %s9 = sphi 0, %s13
    %p10 = scmp.ge.s32.totalorder %s9, 6
    %s19 = sphi 0, %s21
    %s22 = sphi 0, %s19
    %s23 = sphi 0, %s22
    %s39 = sphi 0, %s23
    %s45 = sphi 0, %s47
    %s48 = sphi 0, %s45
    %s49 = sphi 0, %s48
    %s65 = sphi 0, %s49
    %s71 = sphi 0, %s73
    %s74 = sphi 0, %s71
    %s75 = sphi 0, %s74
    %s91 = sphi 0, %s75
    %s97 = sphi 0, %s99
    %s100 = sphi 0, %s97
    %s101 = sphi 0, %s100
    %s117 = sphi 0, %s101
  $region4: #{forward.12} parent=0 // loop_header_branch
    %12 = sbr.rel (%p10) target = $region8
  $region5: #{forward.12} parent=0 // loop_body
    %s14 = ssub.s32 %s9, 1
    %s15 = ssub.s32 %s9, 2
    %s16 = sadd.s32 %s9, 1
    %s17 = ssub.s32 %s9, %s16
    %p18 = scmp.eq.s32.totalorder %s17, 0
    %s20 = sadd.s32 %s19, 1
    %s21 = scalar_select %p18, %s19, %s20
    %p24 = pneg %p18
    %p25 = scmp.eq.s32.totalorder %s9, 3
    %p26 = por %p24, %p25
    %p27 = scmp.ne.s32.totalorder %s19, %s22
    %p28 = scmp.eq.s32.totalorder %s9, 0
    %p29 = por %p27, %p28
    %p30 = scmp.ne.s32.totalorder %s19, %s22
    %p31 = scmp.eq.s32.totalorder %s14, 3
    %p32 = por %p30, %p31
    %p33 = scmp.ne.s32.totalorder %s22, %s23
    %p34 = scmp.eq.s32.totalorder %s14, 0
    %p35 = por %p33, %p34
    %p36 = scmp.ne.s32.totalorder %s22, %s23
    %p37 = scmp.eq.s32.totalorder %s15, 3
    %p38 = por %p36, %p37
    %p40 = scmp.ne.s32.totalorder %s23, %s39
    %p41 = scmp.eq.s32.totalorder %s15, 0
    %p42 = por %p40, %p41
    %s43 = ssub.s32 %s9, %s16
    %p44 = scmp.eq.s32.totalorder %s43, 0
    %s46 = sadd.s32 %s45, 1
    %s47 = scalar_select %p44, %s45, %s46
    %p50 = pneg %p44
    %p51 = scmp.eq.s32.totalorder %s9, 3
    %p52 = por %p50, %p51
    %p53 = scmp.ne.s32.totalorder %s45, %s48
    %p54 = scmp.eq.s32.totalorder %s9, 0
    %p55 = por %p53, %p54
    %p56 = scmp.ne.s32.totalorder %s45, %s48
    %p57 = scmp.eq.s32.totalorder %s14, 3
    %p58 = por %p56, %p57
    %p59 = scmp.ne.s32.totalorder %s48, %s49
    %p60 = scmp.eq.s32.totalorder %s14, 0
    %p61 = por %p59, %p60
    %p62 = scmp.ne.s32.totalorder %s48, %s49
    %p63 = scmp.eq.s32.totalorder %s15, 3
    %p64 = por %p62, %p63
    %p66 = scmp.ne.s32.totalorder %s49, %s65
    %p67 = scmp.eq.s32.totalorder %s15, 0
    %p68 = por %p66, %p67
    %s69 = ssub.s32 %s9, %s16
    %p70 = scmp.eq.s32.totalorder %s69, 0
    %s72 = sadd.s32 %s71, 1
    %s73 = scalar_select %p70, %s71, %s72
    %p76 = pneg %p70
    %p77 = scmp.eq.s32.totalorder %s9, 3
    %p78 = por %p76, %p77
    %p79 = scmp.ne.s32.totalorder %s71, %s74
    %p80 = scmp.eq.s32.totalorder %s9, 0
    %p81 = por %p79, %p80
    %p82 = scmp.ne.s32.totalorder %s71, %s74
    %p83 = scmp.eq.s32.totalorder %s14, 3
    %p84 = por %p82, %p83
    %p85 = scmp.ne.s32.totalorder %s74, %s75
    %p86 = scmp.eq.s32.totalorder %s14, 0
    %p87 = por %p85, %p86
    %p88 = scmp.ne.s32.totalorder %s74, %s75
    %p89 = scmp.eq.s32.totalorder %s15, 3
    %p90 = por %p88, %p89
    %p92 = scmp.ne.s32.totalorder %s75, %s91
    %p93 = scmp.eq.s32.totalorder %s15, 0
    %p94 = por %p92, %p93
    %s95 = ssub.s32 %s9, %s16
    %p96 = scmp.eq.s32.totalorder %s95, 0
    %s98 = sadd.s32 %s97, 1
    %s99 = scalar_select %p96, %s97, %s98
    %p102 = pneg %p96
    %p103 = scmp.eq.s32.totalorder %s9, 3
    %p104 = por %p102, %p103
    %p105 = scmp.ne.s32.totalorder %s97, %s100
    %p106 = scmp.eq.s32.totalorder %s9, 0
    %p107 = por %p105, %p106
    %p108 = scmp.ne.s32.totalorder %s97, %s100
    %p109 = scmp.eq.s32.totalorder %s14, 3
    %p110 = por %p108, %p109
    %p111 = scmp.ne.s32.totalorder %s100, %s101
    %p112 = scmp.eq.s32.totalorder %s14, 0
    %p113 = por %p111, %p112
    %p114 = scmp.ne.s32.totalorder %s100, %s101
    %p115 = scmp.eq.s32.totalorder %s15, 3
    %p116 = por %p114, %p115
    %p118 = scmp.ne.s32.totalorder %s101, %s117
    %p119 = scmp.eq.s32.totalorder %s15, 0
    %p120 = por %p118, %p119
    %p121 = scmp.le.s32.totalorder 1, %s9
    %p122 = scmp.lt.s32.totalorder %s9, 5
    %p123 = pnand %p121, %p122
    %p124 = pneg %p123
    // Predicated region
    $region9: #{forward.12} parent=5 // pred_check
      _
    $region10: #{forward.12} parent=5 // pred_check_branch
      %126 = sbr.rel (%p123) target = $region12
    $region11: #{forward.12} parent=5 // pred_region
      %s127 = ssub.s32 %s9, 1
    $region12: #{forward.12} parent=5 // pred_fallthru
      _
    %p128 = scmp.lt.s32.totalorder %s9, 4
    // Predicated region
    $region13: #{forward.12} parent=5 // pred_check
      %p129 = pneg %p128
    $region14: #{forward.12} parent=5 // pred_check_branch
      %131 = sbr.rel (%p129) target = $region16
    $region15: #{forward.12} parent=5 // pred_region
      // Predicated region
      $region17: #{forward.12} parent=15 // pred_check
        %p132 = pneg %p29
      $region18: #{forward.12} parent=15 // pred_check_branch
        %134 = sbr.rel (%p132) target = $region20
      $region19: #{forward.12} parent=15 // pred_region
        %p135 = scmp.lt.s32.totalorder %s9, 3
        %s136 = scalar_select %p135, %s9, 3
        %s137 = smul.addr %s136, 10
        %s138 = smul.addr %s137, 4
        %s139 = scalar_lea.vmem %s0, %s138
      $region20: #{forward.12} parent=15 // pred_fallthru
        _
      // Predicated region
      $region21: #{forward.12} parent=15 // pred_check
        %p140 = pneg %p55
      $region22: #{forward.12} parent=15 // pred_check_branch
        %142 = sbr.rel (%p140) target = $region24
      $region23: #{forward.12} parent=15 // pred_region
        %p143 = scmp.lt.s32.totalorder %s9, 3
        %s144 = scalar_select %p143, %s9, 3
        %s145 = smul.addr %s144, 8
        %s146 = smul.addr %s145, 4
        %s147 = scalar_lea.vmem %s1, %s146
      $region24: #{forward.12} parent=15 // pred_fallthru
        _
      // Predicated region
      $region25: #{forward.12} parent=15 // pred_check
        %p148 = pneg %p81
      $region26: #{forward.12} parent=15 // pred_check_branch
        %150 = sbr.rel (%p148) target = $region28
      $region27: #{forward.12} parent=15 // pred_region
        %p151 = scmp.lt.s32.totalorder %s9, 3
        %s152 = scalar_select %p151, %s9, 3
        %s153 = scalar_lea.vmem %s2, %s152
      $region28: #{forward.12} parent=15 // pred_fallthru
        _
    $region16: #{forward.12} parent=5 // pred_fallthru
      _
    %p154 = scmp.le.s32.totalorder 1, %s9
    %p155 = scmp.lt.s32.totalorder %s9, 5
    %p156 = pnand %p154, %p155
    %p157 = pneg %p156
    // Predicated region
    $region29: #{forward.12} parent=5 // pred_check
      _
    $region30: #{forward.12} parent=5 // pred_check_branch
      %159 = sbr.rel (%p156) target = $region32
    $region31: #{forward.12} parent=5 // pred_region
      %s160 = ssub.s32 %s9, 1
      %p161 = scmp.lt.s32.totalorder %s14, 3
      %s162 = scalar_select %p161, %s14, 3
      %s163 = smul.addr %s162, 10
      %s164 = smul.addr %s163, 4
      %s165 = scalar_lea.vmem %s0, %s164
      %p166 = pneg %p35
      %p167 = pneg %p32
      %p168 = scmp.lt.s32.totalorder %s14, 3
      %s169 = scalar_select %p168, %s14, 3
      %s170 = smul.addr %s169, 8
      %s171 = smul.addr %s170, 4
      %s172 = scalar_lea.vmem %s1, %s171
      %p173 = pneg %p61
      %p174 = pneg %p58
      %p175 = scmp.lt.s32.totalorder %s14, 3
      %s176 = scalar_select %p175, %s14, 3
      %s177 = scalar_lea.vmem %s2, %s176
      %p178 = pneg %p87
      %p179 = pneg %p84
      %p180 = pneg %p113
      %p181 = pneg %p110
      %p182 = scmp.lt.s32.totalorder %s14, 3
      %s183 = scalar_select %p182, %s14, 3
      %s184 = smul.addr %s183, 10
      %s185 = smul.addr %s184, 8
      %s186 = scalar_lea.vmem %s3, %s185
      %p187 = scmp.lt.s32.totalorder %s14, 3
      %s188 = scalar_select %p187, %s14, 3
      %s189 = smul.addr %s188, 10
      %s190 = smul.addr %s189, 4
      %s191 = scalar_lea.vmem %s0, %s190
      %p192 = scmp.lt.s32.totalorder %s14, 3
      %s193 = scalar_select %p192, %s14, 3
      %s194 = smul.addr %s193, 8
      %s195 = smul.addr %s194, 4
      %s196 = scalar_lea.vmem %s1, %s195
      %p197 = scmp.lt.s32.totalorder %s14, 3
      %s198 = scalar_select %p197, %s14, 3
      %s199 = scalar_lea.vmem %s2, %s198
      %p200 = scmp.lt.s32.totalorder %s14, 3
      %s201 = scalar_select %p200, %s14, 3
      %s202 = smul.addr %s201, 10
      %s203 = smul.addr %s202, 8
      %s204 = scalar_lea.vmem %s3, %s203
      %v206 = vld [vmem:[%s191] sm:$0xf]
      %v207 = vld [vmem:[%s191 + $0x4] sm:$0xf]
      %v208 = vld [vmem:[%s191 + $0x8] sm:$0xf]
      %v209 = vld [vmem:[%s191 + $0xc] sm:$0xf]
      %v210 = vld [vmem:[%s191 + $0x10] sm:$0xf]
      %v211 = vld [vmem:[%s191 + $0x14] sm:$0xf]
      %v212 = vld [vmem:[%s191 + $0x18] sm:$0xf]
      %v213 = vld [vmem:[%s191 + $0x1c] sm:$0xf]
      %v214 = vld [vmem:[%s191 + $0x20] sm:$0xf]
      %v215 = vld [vmem:[%s191 + $0x24] sm:$0x7]
      %v216 = vld [vmem:[%s196] sm:$0xf]
      %v217 = vld [vmem:[%s196 + $0x4] sm:$0xf]
      %v218 = vld [vmem:[%s196 + $0x8] sm:$0xf]
      %v219 = vld [vmem:[%s196 + $0xc] sm:$0xf]
      %v220 = vld [vmem:[%s196 + $0x10] sm:$0xf]
      %v221 = vld [vmem:[%s196 + $0x14] sm:$0xf]
      %v222 = vld [vmem:[%s196 + $0x18] sm:$0xf]
      %v223 = vld [vmem:[%s196 + $0x1c] sm:$0xf]
      %v224 = vld [vmem:[%s199] sm:$0x1]
      %v226 = vlaneseq
      %v227 = vshrl.u32 %v226, 7
      %v228 = vsub.s32 0, %v227
      %v229 = vrot.slane %v224, %v228
      %v241 = vunpack.c.l.b16 %v206
      %v242 = vunpack.c.l.b16 %v207
      %v243 = vunpack.c.l.b16 %v208
      %v244 = vunpack.c.l.b16 %v209
      %v245 = vunpack.c.l.b16 %v210
      %v246 = vunpack.c.l.b16 %v211
      %v247 = vunpack.c.l.b16 %v212
      %v248 = vunpack.c.l.b16 %v213
      %v249 = vunpack.c.l.b16 %v214
      %v250 = vunpack.c.l.b16 %v215
      %v251 = vpack.c.b16 %v242, %v241
      %v252 = vpack.c.b16 %v244, %v243
      %v253 = vpack.c.b16 %v246, %v245
      %v254 = vpack.c.b16 %v248, %v247
      %v255 = vpack.c.b16 %v250, %v249
      %v264 = vunpack.c.l.b16 %v216
      %v265 = vunpack.c.l.b16 %v217
      %v266 = vunpack.c.l.b16 %v218
      %v267 = vunpack.c.l.b16 %v219
      %v268 = vunpack.c.l.b16 %v220
      %v269 = vunpack.c.l.b16 %v221
      %v270 = vunpack.c.l.b16 %v222
      %v271 = vunpack.c.l.b16 %v223
      %v272 = vpack.c.b16 %v265, %v264
      %v273 = vpack.c.b16 %v267, %v266
      %v274 = vpack.c.b16 %v269, %v268
      %v275 = vpack.c.b16 %v271, %v270
      %vm280 = vcmask 523264
      %v282 = vsel %vm280, %v251, 0
      %v285 = vsel %vm280, %v252, 0
      %v288 = vsel %vm280, %v253, 0
      %v291 = vsel %vm280, %v254, 0
      %v294 = vsel %vm280, %v255, 0
      %296 = vmatprep.subr.bf16.mxu0 0
      %297 = vmatpush1.bf16.msra.mxu0 %v272
      %298 = vmatprep.subr.bf16.mxu0 0
      %299 = vmatpush1.bf16.msra.mxu0 %v273
      %300 = vmatprep.subr.bf16.mxu0 0
      %301 = vmatpush1.bf16.msra.mxu0 %v274
      %302 = vmatprep.subr.bf16.mxu0 0
      %303 = vmatpush1.bf16.msra.mxu0 %v275
      %304 = vmatprep.subr.bf16.mxu0 0
      %305 = vmatpush1.bf16.msra.mxu0 0
      %306 = vmatprep.subr.bf16.mxu0 0
      %307 = vmatpush1.bf16.msra.mxu0 0
      %308 = vmatprep.subr.bf16.mxu0 0
      %309 = vmatpush1.bf16.msra.mxu0 0
      %310 = vmatprep.subr.bf16.mxu0 0
      %311 = vmatpush1.bf16.msra.mxu0 0
      %312 = vmatprep.subr.bf16.mxu0 0
      %313 = vmatpush1.bf16.msra.mxu0 0
      %314 = vmatprep.subr.bf16.mxu0 0
      %315 = vmatpush1.bf16.msra.mxu0 0
      %316 = vmatprep.subr.bf16.mxu0 0
      %317 = vmatpush1.bf16.msra.mxu0 0
      %318 = vmatprep.subr.bf16.mxu0 0
      %319 = vmatpush1.bf16.msra.mxu0 0
      %320 = vmatprep.subr.bf16.mxu0 0
      %321 = vmatpush1.bf16.msra.mxu0 0
      %322 = vmatprep.subr.bf16.mxu0 0
      %323 = vmatpush1.bf16.msra.mxu0 0
      %324 = vmatprep.subr.bf16.mxu0 0
      %325 = vmatpush1.bf16.msra.mxu0 0
      %326 = vmatprep.subr.bf16.mxu0 0
      %327 = vmatpush1.bf16.msra.mxu0 0
      %328 = vmatprep.mubr.bf16.mxu0 0
      %329 = vmatmul.mubr.bf16.gmra.mrb[0].mxu0 %v282
      %v330 = vpop.f32.mrb[0].mxu0
      %v331 = vadd.f32 %v229, %v330
      %v332 = vpop.f32.mrb[0].mxu0
      %v333 = vpop.f32.mrb[0].mxu0
      %v334 = vadd.f32 %v229, %v333
      %v335 = vpop.f32.mrb[0].mxu0
      %336 = vmatprep.mubr.bf16.mxu0 0
      %337 = vmatmul.mubr.bf16.gmra.mrb[0].mxu0 %v285
      %v338 = vpop.f32.mrb[0].mxu0
      %v339 = vadd.f32 %v229, %v338
      %v340 = vpop.f32.mrb[0].mxu0
      %v341 = vpop.f32.mrb[0].mxu0
      %v342 = vadd.f32 %v229, %v341
      %v343 = vpop.f32.mrb[0].mxu0
      %344 = vmatprep.mubr.bf16.mxu0 0
      %345 = vmatmul.mubr.bf16.gmra.mrb[0].mxu0 %v288
      %v346 = vpop.f32.mrb[0].mxu0
      %v347 = vadd.f32 %v229, %v346
      %v348 = vpop.f32.mrb[0].mxu0
      %v349 = vpop.f32.mrb[0].mxu0
      %v350 = vadd.f32 %v229, %v349
      %v351 = vpop.f32.mrb[0].mxu0
      %352 = vmatprep.mubr.bf16.mxu0 0
      %353 = vmatmul.mubr.bf16.gmra.mrb[0].mxu0 %v291
      %v354 = vpop.f32.mrb[0].mxu0
      %v355 = vadd.f32 %v229, %v354
      %v356 = vpop.f32.mrb[0].mxu0
      %v357 = vpop.f32.mrb[0].mxu0
      %v358 = vadd.f32 %v229, %v357
      %v359 = vpop.f32.mrb[0].mxu0
      %360 = vmatprep.mubr.bf16.mxu0 0
      %361 = vmatmul.mubr.bf16.gmra.mrb[0].mxu0 %v294
      %v362 = vpop.f32.mrb[0].mxu0
      %v363 = vadd.f32 %v229, %v362
      %v364 = vpop.f32.mrb[0].mxu0
      %v365 = vpop.f32.mrb[0].mxu0
      %v366 = vadd.f32 %v229, %v365
      %v367 = vpop.f32.mrb[0].mxu0
      %368 = vdwg.mxu0
      %v369 = vmul.f32 %v331, 0.5
      %v370 = vmul.f32 %v334, 0.5
      %v371 = vmul.f32 %v339, 0.5
      %v372 = vmul.f32 %v342, 0.5
      %v373 = vmul.f32 %v347, 0.5
      %v374 = vmul.f32 %v350, 0.5
      %v375 = vmul.f32 %v355, 0.5
      %v376 = vmul.f32 %v358, 0.5
      %v377 = vmul.f32 %v363, 0.5
      %v378 = vmul.f32 %v366, 0.5
      %v379 = vmul.f32 %v331, 0.70710677
      %v380 = vmul.f32 %v334, 0.70710677
      %v381 = vmul.f32 %v339, 0.70710677
      %v382 = vmul.f32 %v342, 0.70710677
      %v383 = vmul.f32 %v347, 0.70710677
      %v384 = vmul.f32 %v350, 0.70710677
      %v385 = vmul.f32 %v355, 0.70710677
      %v386 = vmul.f32 %v358, 0.70710677
      %v387 = vmul.f32 %v363, 0.70710677
      %v388 = vmul.f32 %v366, 0.70710677
      %v389 = verf.f32.pop %v379
      %v390 = verf.f32.pop %v380
      %v391 = verf.f32.pop %v381
      %v392 = verf.f32.pop %v382
      %v393 = verf.f32.pop %v383
      %v394 = verf.f32.pop %v384
      %v395 = verf.f32.pop %v385
      %v396 = verf.f32.pop %v386
      %v397 = verf.f32.pop %v387
      %v398 = verf.f32.pop %v388
      %v399 = vadd.f32 %v389, 1.0
      %v400 = vadd.f32 %v390, 1.0
      %v401 = vadd.f32 %v391, 1.0
      %v402 = vadd.f32 %v392, 1.0
      %v403 = vadd.f32 %v393, 1.0
      %v404 = vadd.f32 %v394, 1.0
      %v405 = vadd.f32 %v395, 1.0
      %v406 = vadd.f32 %v396, 1.0
      %v407 = vadd.f32 %v397, 1.0
      %v408 = vadd.f32 %v398, 1.0
      %v409 = vmul.f32 %v369, %v399
      %v410 = vmul.f32 %v370, %v400
      %v411 = vmul.f32 %v371, %v401
      %v412 = vmul.f32 %v372, %v402
      %v413 = vmul.f32 %v373, %v403
      %v414 = vmul.f32 %v374, %v404
      %v415 = vmul.f32 %v375, %v405
      %v416 = vmul.f32 %v376, %v406
      %v417 = vmul.f32 %v377, %v407
      %v418 = vmul.f32 %v378, %v408
      %vm419 = vcmask 64512
      %420 = vst.msk [vmem:[%s204] sm:$0xff] %vm419, %v409
      %421 = vst.msk [vmem:[%s204 + $0x8] sm:$0xff] %vm419, %v410
      %422 = vst.msk [vmem:[%s204 + $0x10] sm:$0xff] %vm419, %v411
      %423 = vst.msk [vmem:[%s204 + $0x18] sm:$0xff] %vm419, %v412
      %424 = vst.msk [vmem:[%s204 + $0x20] sm:$0xff] %vm419, %v413
      %425 = vst.msk [vmem:[%s204 + $0x28] sm:$0xff] %vm419, %v414
      %426 = vst.msk [vmem:[%s204 + $0x30] sm:$0xff] %vm419, %v415
      %427 = vst.msk [vmem:[%s204 + $0x38] sm:$0xff] %vm419, %v416
      %428 = vst.msk [vmem:[%s204 + $0x40] sm:$0xff] %vm419, %v417
      %vm429 = vcmask 62464
      %430 = vst.msk [vmem:[%s204 + $0x48] sm:$0x3f] %vm429, %v418
      %p431 = scmp.lt.s32.totalorder %s14, 3
      %s432 = scalar_select %p431, %s14, 3
      %s433 = smul.addr %s432, 10
      %s434 = smul.addr %s433, 8
      %s435 = scalar_lea.vmem %s3, %s434
      // Predicated region
      $region33: #{forward.12} parent=31 // pred_check
        %p436 = pneg %p110
      $region34: #{forward.12} parent=31 // pred_check_branch
        %438 = sbr.rel (%p436) target = $region36
      $region35: #{forward.12} parent=31 // pred_region
        _
      $region36: #{forward.12} parent=31 // pred_fallthru
        _
    $region32: #{forward.12} parent=5 // pred_fallthru
      _
    %p439 = scmp.le.s32.totalorder 2, %s9
    // Predicated region
    $region37: #{forward.12} parent=5 // pred_check
      %p440 = pneg %p439
    $region38: #{forward.12} parent=5 // pred_check_branch
      %442 = sbr.rel (%p440) target = $region40
    $region39: #{forward.12} parent=5 // pred_region
      %s443 = ssub.s32 %s9, 2
      // Predicated region
      $region41: #{forward.12} parent=39 // pred_check
        %p444 = pneg %p116
      $region42: #{forward.12} parent=39 // pred_check_branch
        %446 = sbr.rel (%p444) target = $region44
      $region43: #{forward.12} parent=39 // pred_region
        %p447 = scmp.lt.s32.totalorder %s15, 3
        %s448 = scalar_select %p447, %s15, 3
        %s449 = smul.addr %s448, 10
        %s450 = smul.addr %s449, 8
        %s451 = scalar_lea.vmem %s3, %s450
      $region44: #{forward.12} parent=39 // pred_fallthru
        _
    $region40: #{forward.12} parent=5 // pred_fallthru
      _
  $region6: #{forward.12} parent=0 // loop_footer
    %s13 = sadd.s32 1, %s9
  $region7: #{forward.12} parent=0 // loop_footer_branch
    %8 = sbr.rel target = $region3
  $region8: #{forward.12} parent=0 // loop_exit
    _

// kernel: custom-call.6
$region0: #{custom-call.6}
  %s0 = inlined_call_operand.vmem [shape: bf16[12,2,38,32], index: 0, kind: output, shape index: {}]

// kernel: forward.13
$region0: #{forward.13}
  #allocation0 [shape = 'u32[]', space=smem, size = 0x4, offset = 0x4, fixed_abs, tag = 'smem constant byte address 0x4 - core index']
  #allocation1 [shape = 'u32[144,128]{1,0:T(1,128)}', space=vmem, size = 0x12000, scoped, tag = 'internal scratch']
  %s0 = inlined_call_operand.vmem [shape: f32[76,32], index: 0, kind: input, shape index: {}]
  %s1 = inlined_call_operand.vmem [shape: f32[76,32], index: 1, kind: input, shape index: {}]
  %s2 = inlined_call_operand.vmem [shape: f32[1,32], index: 2, kind: input, shape index: {}]
  %s3 = inlined_call_operand.vmem [shape: f32[1,32], index: 3, kind: input, shape index: {}]
  %s4 = inlined_call_operand.vmem [shape: f32[76,32], index: 4, kind: output, shape index: {}]
  %s5 = sld [smem:[#allocation0]]
  $region26: #{forward.13} parent=0
    _
  %s7 = ssub.s32 1, %s5
  %s8 = scalar_select 0, %s7, %s5
  // Predicated region
  $region2: #{forward.13} parent=0 // pred_check
    _
  $region3: #{forward.13} parent=0 // pred_check_branch
    %10 = sbr.rel (0) target = $region5
  $region4: #{forward.13} parent=0 // pred_region
    _
  $region5: #{forward.13} parent=0 // pred_fallthru
    _
  // Predicated region
  $region6: #{forward.13} parent=0 // pred_check
    _
  $region7: #{forward.13} parent=0 // pred_check_branch
    %12 = sbr.rel (0) target = $region9
  $region8: #{forward.13} parent=0 // pred_region
    _
  $region9: #{forward.13} parent=0 // pred_fallthru
    _
  // Predicated region
  $region10: #{forward.13} parent=0 // pred_check
    _
  $region11: #{forward.13} parent=0 // pred_check_branch
    %14 = sbr.rel (0) target = $region13
  $region12: #{forward.13} parent=0 // pred_region
    _
  $region13: #{forward.13} parent=0 // pred_fallthru
    _
  // Predicated region
  $region14: #{forward.13} parent=0 // pred_check
    _
  $region15: #{forward.13} parent=0 // pred_check_branch
    %16 = sbr.rel (0) target = $region17
  $region16: #{forward.13} parent=0 // pred_region
    _
  $region17: #{forward.13} parent=0 // pred_fallthru
    _
  %v17 = vld [vmem:[%s0] sm:$0xff]
  %v18 = vld [vmem:[%s0 + $0x8] sm:$0xff]
  %v19 = vld [vmem:[%s0 + $0x10] sm:$0xff]
  %v20 = vld [vmem:[%s0 + $0x18] sm:$0xff]
  %v21 = vld [vmem:[%s0 + $0x20] sm:$0xff]
  %v22 = vld [vmem:[%s0 + $0x28] sm:$0xff]
  %v23 = vld [vmem:[%s0 + $0x30] sm:$0xff]
  %v24 = vld [vmem:[%s0 + $0x38] sm:$0xff]
  %v25 = vld [vmem:[%s0 + $0x40] sm:$0xff]
  %v26 = vld [vmem:[%s0 + $0x48] sm:$0xf]
  %v27 = vld [vmem:[%s1] sm:$0xff]
  %v28 = vld [vmem:[%s1 + $0x8] sm:$0xff]
  %v29 = vld [vmem:[%s1 + $0x10] sm:$0xff]
  %v30 = vld [vmem:[%s1 + $0x18] sm:$0xff]
  %v31 = vld [vmem:[%s1 + $0x20] sm:$0xff]
  %v32 = vld [vmem:[%s1 + $0x28] sm:$0xff]
  %v33 = vld [vmem:[%s1 + $0x30] sm:$0xff]
  %v34 = vld [vmem:[%s1 + $0x38] sm:$0xff]
  %v35 = vld [vmem:[%s1 + $0x40] sm:$0xff]
  %v36 = vld [vmem:[%s1 + $0x48] sm:$0xf]
  %v37 = vadd.f32 %v17, %v27
  %v38 = vadd.f32 %v18, %v28
  %v39 = vadd.f32 %v19, %v29
  %v40 = vadd.f32 %v20, %v30
  %v41 = vadd.f32 %v21, %v31
  %v42 = vadd.f32 %v22, %v32
  %v43 = vadd.f32 %v23, %v33
  %v44 = vadd.f32 %v24, %v34
  %v45 = vadd.f32 %v25, %v35
  %v46 = vadd.f32 %v26, %v36
  %v47 = vld [vmem:[%s2] sm:$0x1]
  %v48 = vld [vmem:[%s3] sm:$0x1]
  %vm49 = vcmask 261120
  %v50 = vsel %vm49, %v37, 0.0
  %51 = vadd.xlane.f32.xlu0 %v50
  %v52 = vpop.xlane.xlu0 %51
  %v53 = vsel %vm49, %v38, 0.0
  %54 = vadd.xlane.f32.xlu0 %v53
  %v55 = vpop.xlane.xlu0 %54
  %v56 = vsel %vm49, %v39, 0.0
  %57 = vadd.xlane.f32.xlu0 %v56
  %v58 = vpop.xlane.xlu0 %57
  %v59 = vsel %vm49, %v40, 0.0
  %60 = vadd.xlane.f32.xlu0 %v59
  %v61 = vpop.xlane.xlu0 %60
  %v62 = vsel %vm49, %v41, 0.0
  %63 = vadd.xlane.f32.xlu0 %v62
  %v64 = vpop.xlane.xlu0 %63
  %v65 = vsel %vm49, %v42, 0.0
  %66 = vadd.xlane.f32.xlu0 %v65
  %v67 = vpop.xlane.xlu0 %66
  %v68 = vsel %vm49, %v43, 0.0
  %69 = vadd.xlane.f32.xlu0 %v68
  %v70 = vpop.xlane.xlu0 %69
  %v71 = vsel %vm49, %v44, 0.0
  %72 = vadd.xlane.f32.xlu0 %v71
  %v73 = vpop.xlane.xlu0 %72
  %v74 = vsel %vm49, %v45, 0.0
  %75 = vadd.xlane.f32.xlu0 %v74
  %v76 = vpop.xlane.xlu0 %75
  %vm77 = vcmask 257024
  %v78 = vsel %vm77, %v46, 0.0
  %79 = vadd.xlane.f32.xlu0 %v78
  %v80 = vpop.xlane.xlu0 %79
  %v81 = vrcp.pop 32.0
  %v82 = vmul.f32 %v52, %v81
  %v83 = vmul.f32 %v55, %v81
  %v84 = vmul.f32 %v58, %v81
  %v85 = vmul.f32 %v61, %v81
  %v86 = vmul.f32 %v64, %v81
  %v87 = vmul.f32 %v67, %v81
  %v88 = vmul.f32 %v70, %v81
  %v89 = vmul.f32 %v73, %v81
  %v90 = vmul.f32 %v76, %v81
  %v91 = vmul.f32 %v80, %v81
  %v92 = vsub.f32 %v37, %v82
  %v93 = vsub.f32 %v38, %v83
  %v94 = vsub.f32 %v39, %v84
  %v95 = vsub.f32 %v40, %v85
  %v96 = vsub.f32 %v41, %v86
  %v97 = vsub.f32 %v42, %v87
  %v98 = vsub.f32 %v43, %v88
  %v99 = vsub.f32 %v44, %v89
  %v100 = vsub.f32 %v45, %v90
  %v101 = vsub.f32 %v46, %v91
  %v102 = vmul.f32 %v92, %v92
  %v103 = vmul.f32 %v93, %v93
  %v104 = vmul.f32 %v94, %v94
  %v105 = vmul.f32 %v95, %v95
  %v106 = vmul.f32 %v96, %v96
  %v107 = vmul.f32 %v97, %v97
  %v108 = vmul.f32 %v98, %v98
  %v109 = vmul.f32 %v99, %v99
  %v110 = vmul.f32 %v100, %v100
  %v111 = vmul.f32 %v101, %v101
  %v112 = vsel %vm49, %v102, 0.0
  %113 = vadd.xlane.f32.xlu0 %v112
  %v114 = vpop.xlane.xlu0 %113
  %v115 = vsel %vm49, %v103, 0.0
  %116 = vadd.xlane.f32.xlu0 %v115
  %v117 = vpop.xlane.xlu0 %116
  %v118 = vsel %vm49, %v104, 0.0
  %119 = vadd.xlane.f32.xlu0 %v118
  %v120 = vpop.xlane.xlu0 %119
  %v121 = vsel %vm49, %v105, 0.0
  %122 = vadd.xlane.f32.xlu0 %v121
  %v123 = vpop.xlane.xlu0 %122
  %v124 = vsel %vm49, %v106, 0.0
  %125 = vadd.xlane.f32.xlu0 %v124
  %v126 = vpop.xlane.xlu0 %125
  %v127 = vsel %vm49, %v107, 0.0
  %128 = vadd.xlane.f32.xlu0 %v127
  %v129 = vpop.xlane.xlu0 %128
  %v130 = vsel %vm49, %v108, 0.0
  %131 = vadd.xlane.f32.xlu0 %v130
  %v132 = vpop.xlane.xlu0 %131
  %v133 = vsel %vm49, %v109, 0.0
  %134 = vadd.xlane.f32.xlu0 %v133
  %v135 = vpop.xlane.xlu0 %134
  %v136 = vsel %vm49, %v110, 0.0
  %137 = vadd.xlane.f32.xlu0 %v136
  %v138 = vpop.xlane.xlu0 %137
  %v139 = vsel %vm77, %v111, 0.0
  %140 = vadd.xlane.f32.xlu0 %v139
  %v141 = vpop.xlane.xlu0 %140
  %v142 = vmul.f32 %v114, %v81
  %v143 = vmul.f32 %v117, %v81
  %v144 = vmul.f32 %v120, %v81
  %v145 = vmul.f32 %v123, %v81
  %v146 = vmul.f32 %v126, %v81
  %v147 = vmul.f32 %v129, %v81
  %v148 = vmul.f32 %v132, %v81
  %v149 = vmul.f32 %v135, %v81
  %v150 = vmul.f32 %v138, %v81
  %v151 = vmul.f32 %v141, %v81
  %v152 = vadd.f32 %v142, 1e-05
  %v153 = vadd.f32 %v143, 1e-05
  %v154 = vadd.f32 %v144, 1e-05
  %v155 = vadd.f32 %v145, 1e-05
  %v156 = vadd.f32 %v146, 1e-05
  %v157 = vadd.f32 %v147, 1e-05
  %v158 = vadd.f32 %v148, 1e-05
  %v159 = vadd.f32 %v149, 1e-05
  %v160 = vadd.f32 %v150, 1e-05
  %v161 = vadd.f32 %v151, 1e-05
  %v162 = vrsqrt.pop %v152
  %v163 = vrsqrt.pop %v153
  %v164 = vrsqrt.pop %v154
  %v165 = vrsqrt.pop %v155
  %v166 = vrsqrt.pop %v156
  %v167 = vrsqrt.pop %v157
  %v168 = vrsqrt.pop %v158
  %v169 = vrsqrt.pop %v159
  %v170 = vrsqrt.pop %v160
  %v171 = vrsqrt.pop %v161
  %v172 = vmul.f32 %v92, %v162
  %v173 = vmul.f32 %v93, %v163
  %v174 = vmul.f32 %v94, %v164
  %v175 = vmul.f32 %v95, %v165
  %v176 = vmul.f32 %v96, %v166
  %v177 = vmul.f32 %v97, %v167
  %v178 = vmul.f32 %v98, %v168
  %v179 = vmul.f32 %v99, %v169
  %v180 = vmul.f32 %v100, %v170
  %v181 = vmul.f32 %v101, %v171
  %v183 = vlaneseq
  %v184 = vshrl.u32 %v183, 7
  %v185 = vsub.s32 0, %v184
  %v186 = vrot.slane %v47, %v185
  %v188 = vmul.f32 %v172, %v186
  %v189 = vmul.f32 %v173, %v186
  %v190 = vmul.f32 %v174, %v186
  %v191 = vmul.f32 %v175, %v186
  %v192 = vmul.f32 %v176, %v186
  %v193 = vmul.f32 %v177, %v186
  %v194 = vmul.f32 %v178, %v186
  %v195 = vmul.f32 %v179, %v186
  %v196 = vmul.f32 %v180, %v186
  %v197 = vmul.f32 %v181, %v186
  %v199 = vlaneseq
  %v200 = vshrl.u32 %v199, 7
  %v201 = vsub.s32 0, %v200
  %v202 = vrot.slane %v48, %v201
  %v204 = vadd.f32 %v188, %v202
  %v205 = vadd.f32 %v189, %v202
  %v206 = vadd.f32 %v190, %v202
  %v207 = vadd.f32 %v191, %v202
  %v208 = vadd.f32 %v192, %v202
  %v209 = vadd.f32 %v193, %v202
  %v210 = vadd.f32 %v194, %v202
  %v211 = vadd.f32 %v195, %v202
  %v212 = vadd.f32 %v196, %v202
  %v213 = vadd.f32 %v197, %v202
  %214 = vst.msk [vmem:[%s4] sm:$0xff] %vm49, %v204
  %215 = vst.msk [vmem:[%s4 + $0x8] sm:$0xff] %vm49, %v205
  %216 = vst.msk [vmem:[%s4 + $0x10] sm:$0xff] %vm49, %v206
  %217 = vst.msk [vmem:[%s4 + $0x18] sm:$0xff] %vm49, %v207
  %218 = vst.msk [vmem:[%s4 + $0x20] sm:$0xff] %vm49, %v208
  %219 = vst.msk [vmem:[%s4 + $0x28] sm:$0xff] %vm49, %v209
  %220 = vst.msk [vmem:[%s4 + $0x30] sm:$0xff] %vm49, %v210
  %221 = vst.msk [vmem:[%s4 + $0x38] sm:$0xff] %vm49, %v211
  %222 = vst.msk [vmem:[%s4 + $0x40] sm:$0xff] %vm49, %v212
  %223 = vst.msk [vmem:[%s4 + $0x48] sm:$0xf] %vm77, %v213
  // Predicated region
  $region18: #{forward.13} parent=0 // pred_check
    _
  $region19: #{forward.13} parent=0 // pred_check_branch
    %225 = sbr.rel (0) target = $region21
  $region20: #{forward.13} parent=0 // pred_region
    _
  $region21: #{forward.13} parent=0 // pred_fallthru
    _
  // Predicated region
  $region22: #{forward.13} parent=0 // pred_check
    _
  $region23: #{forward.13} parent=0 // pred_check_branch
    %227 = sbr.rel (0) target = $region25
  $region24: #{forward.13} parent=0 // pred_region
    _
  $region25: #{forward.13} parent=0 // pred_fallthru
    _

// kernel: forward.15
$region0: #{forward.15}
  #allocation0 [shape = 'u32[]', space=smem, size = 0x4, offset = 0x4, fixed_abs, tag = 'smem constant byte address 0x4 - core index']
  #allocation1 [shape = 'u32[144,128]{1,0:T(1,128)}', space=vmem, size = 0x12000, scoped, tag = 'internal scratch']
  %s0 = inlined_call_operand.vmem [shape: f32[2,128], index: 0, kind: input, shape index: {}]
  %s1 = inlined_call_operand.vmem [shape: bf16[128,32], index: 1, kind: input, shape index: {}]
  %s2 = inlined_call_operand.vmem [shape: f32[1,32], index: 2, kind: input, shape index: {}]
  %s3 = inlined_call_operand.hbm [shape: f32[2,32], index: 3, kind: output, shape index: {}]
  %s4 = sld [smem:[#allocation0]]
  $region22: #{forward.15} parent=0
    _
  %s6 = ssub.s32 1, %s4
  %s7 = scalar_select 0, %s6, %s4
  $region1: #{forward.15} parent=0
    #allocation2 [shape = 'u8[1024]{0}', space=vmem, size = 0x400, scoped, tag = 'output window, operand 0, single buffered']
    #allocation3 [shape = 's32[1]{0}', space=sflag, size = 0x4, scoped, tag = 'scoped memory for forward.15']
    %8 = vsyncpa [#allocation3], 0
    // Predicated region
    $region2: #{forward.15} parent=1 // pred_check
      _
    $region3: #{forward.15} parent=1 // pred_check_branch
      %10 = sbr.rel (0) target = $region5
    $region4: #{forward.15} parent=1 // pred_region
      _
    $region5: #{forward.15} parent=1 // pred_fallthru
      _
    // Predicated region
    $region6: #{forward.15} parent=1 // pred_check
      _
    $region7: #{forward.15} parent=1 // pred_check_branch
      %12 = sbr.rel (0) target = $region9
    $region8: #{forward.15} parent=1 // pred_region
      _
    $region9: #{forward.15} parent=1 // pred_fallthru
      _
    // Predicated region
    $region10: #{forward.15} parent=1 // pred_check
      _
    $region11: #{forward.15} parent=1 // pred_check_branch
      %14 = sbr.rel (0) target = $region13
    $region12: #{forward.15} parent=1 // pred_region
      _
    $region13: #{forward.15} parent=1 // pred_fallthru
      _
    %v16 = vld [vmem:[%s0] sm:$0x3]
    %v17 = vpack.c.bf16 %v16, %v16
    %v18 = vld [vmem:[%s1] sm:$0xf]
    %v19 = vld [vmem:[%s1 + $0x4] sm:$0xf]
    %v20 = vld [vmem:[%s1 + $0x8] sm:$0xf]
    %v21 = vld [vmem:[%s1 + $0xc] sm:$0xf]
    %v22 = vld [vmem:[%s1 + $0x10] sm:$0xf]
    %v23 = vld [vmem:[%s1 + $0x14] sm:$0xf]
    %v24 = vld [vmem:[%s1 + $0x18] sm:$0xf]
    %v25 = vld [vmem:[%s1 + $0x1c] sm:$0xf]
    %v26 = vld [vmem:[%s1 + $0x20] sm:$0xf]
    %v27 = vld [vmem:[%s1 + $0x24] sm:$0xf]
    %v28 = vld [vmem:[%s1 + $0x28] sm:$0xf]
    %v29 = vld [vmem:[%s1 + $0x2c] sm:$0xf]
    %v30 = vld [vmem:[%s1 + $0x30] sm:$0xf]
    %v31 = vld [vmem:[%s1 + $0x34] sm:$0xf]
    %v32 = vld [vmem:[%s1 + $0x38] sm:$0xf]
    %v33 = vld [vmem:[%s1 + $0x3c] sm:$0xf]
    %v34 = vld [vmem:[%s2] sm:$0x1]
    %v36 = vlaneseq
    %v37 = vshrl.u32 %v36, 7
    %v38 = vsub.s32 0, %v37
    %v39 = vrot.slane %v34, %v38
    %v57 = vunpack.c.l.b16 %v18
    %v58 = vunpack.c.l.b16 %v19
    %v59 = vunpack.c.l.b16 %v20
    %v60 = vunpack.c.l.b16 %v21
    %v61 = vunpack.c.l.b16 %v22
    %v62 = vunpack.c.l.b16 %v23
    %v63 = vunpack.c.l.b16 %v24
    %v64 = vunpack.c.l.b16 %v25
    %v65 = vunpack.c.l.b16 %v26
    %v66 = vunpack.c.l.b16 %v27
    %v67 = vunpack.c.l.b16 %v28
    %v68 = vunpack.c.l.b16 %v29
    %v69 = vunpack.c.l.b16 %v30
    %v70 = vunpack.c.l.b16 %v31
    %v71 = vunpack.c.l.b16 %v32
    %v72 = vunpack.c.l.b16 %v33
    %v73 = vpack.c.b16 %v58, %v57
    %v74 = vpack.c.b16 %v60, %v59
    %v75 = vpack.c.b16 %v62, %v61
    %v76 = vpack.c.b16 %v64, %v63
    %v77 = vpack.c.b16 %v66, %v65
    %v78 = vpack.c.b16 %v68, %v67
    %v79 = vpack.c.b16 %v70, %v69
    %v80 = vpack.c.b16 %v72, %v71
    %89 = vmatprep.subr.bf16.mxu0 0
    %90 = vmatpush1.bf16.msra.mxu0 %v73
    %91 = vmatprep.subr.bf16.mxu0 0
    %92 = vmatpush1.bf16.msra.mxu0 %v74
    %93 = vmatprep.subr.bf16.mxu0 0
    %94 = vmatpush1.bf16.msra.mxu0 %v75
    %95 = vmatprep.subr.bf16.mxu0 0
    %96 = vmatpush1.bf16.msra.mxu0 %v76
    %97 = vmatprep.subr.bf16.mxu0 0
    %98 = vmatpush1.bf16.msra.mxu0 %v77
    %99 = vmatprep.subr.bf16.mxu0 0
    %100 = vmatpush1.bf16.msra.mxu0 %v78
    %101 = vmatprep.subr.bf16.mxu0 0
    %102 = vmatpush1.bf16.msra.mxu0 %v79
    %103 = vmatprep.subr.bf16.mxu0 0
    %104 = vmatpush1.bf16.msra.mxu0 %v80
    %105 = vmatprep.subr.bf16.mxu0 0
    %106 = vmatpush1.bf16.msra.mxu0 0
    %107 = vmatprep.subr.bf16.mxu0 0
    %108 = vmatpush1.bf16.msra.mxu0 0
    %109 = vmatprep.subr.bf16.mxu0 0
    %110 = vmatpush1.bf16.msra.mxu0 0
    %111 = vmatprep.subr.bf16.mxu0 0
    %112 = vmatpush1.bf16.msra.mxu0 0
    %113 = vmatprep.subr.bf16.mxu0 0
    %114 = vmatpush1.bf16.msra.mxu0 0
    %115 = vmatprep.subr.bf16.mxu0 0
    %116 = vmatpush1.bf16.msra.mxu0 0
    %117 = vmatprep.subr.bf16.mxu0 0
    %118 = vmatpush1.bf16.msra.mxu0 0
    %119 = vmatprep.subr.bf16.mxu0 0
    %120 = vmatpush1.bf16.msra.mxu0 0
    %121 = vmatprep.mubr.bf16.mxu0 0
    %122 = vmatmul.mubr.bf16.gmra.mrb[0].mxu0 %v17
    %v123 = vpop.f32.mrb[0].mxu0
    %v124 = vadd.f32 %v39, %v123
    %v125 = vpop.f32.mrb[0].mxu0
    %v126 = vpop.f32.mrb[0].mxu0
    %v127 = vpop.f32.mrb[0].mxu0
    %128 = vdwg.mxu0
    %vm129 = vcmask 254976
    %130 = vst.msk [vmem:[#allocation2] sm:$0x3] %vm129, %v124
    // Predicated region
    $region14: #{forward.15} parent=1 // pred_check
      _
    $region15: #{forward.15} parent=1 // pred_check_branch
      %132 = sbr.rel (0) target = $region17
    $region16: #{forward.15} parent=1 // pred_region
      %s134 = ssub.s32 32, 32
      %135 = vsyncadd [#allocation3], %s134
      %s137 = sshll.u32 [#allocation2], 4
      %s138 = int_to_ptr.vmem [resolvable:$true] %s137
      %140 = dma.vmem_to_hbm [thread:$0]  %s138, 32, %s3, [#allocation3]
    $region17: #{forward.15} parent=1 // pred_fallthru
      _
    // Predicated region
    $region18: #{forward.15} parent=1 // pred_check
      _
    $region19: #{forward.15} parent=1 // pred_check_branch
      %142 = sbr.rel (0) target = $region21
    $region20: #{forward.15} parent=1 // pred_region
      %143 = dma.done [#allocation3], 32
    $region21: #{forward.15} parent=1 // pred_fallthru
      _
    %144 = vsyncpa [#allocation3], 1

// kernel: forward.14
$region0: #{forward.14}
  #allocation0 [shape = 'u32[]', space=smem, size = 0x4, offset = 0x4, fixed_abs, tag = 'smem constant byte address 0x4 - core index']
  #allocation1 [shape = 'u32[144,128]{1,0:T(1,128)}', space=vmem, size = 0x12000, scoped, tag = 'internal scratch']
  #allocation2 [shape = 'f32[2,38,16]{2,1,0:T(8,128)}', space=vmem, size = 0xa000, scoped, tag = 'scratch operand']
  #allocation3 [shape = 'f32[2,38,8]{2,1,0:T(8,128)}', space=vmem, size = 0xa000, scoped, tag = 'scratch operand']
  %s0 = inlined_call_operand.vmem [shape: bf16[13,2,38,32], index: 0, kind: input, shape index: {}]
  %s1 = inlined_call_operand.vmem [shape: bf16[13,32,16], index: 1, kind: input, shape index: {}]
  %s2 = inlined_call_operand.vmem [shape: bf16[13,32,8], index: 2, kind: input, shape index: {}]
  %s3 = inlined_call_operand.vmem [shape: f32[1,16], index: 3, kind: input, shape index: {}]
  %s4 = inlined_call_operand.vmem [shape: f32[1,8], index: 4, kind: input, shape index: {}]
  %s5 = inlined_call_operand.vmem [shape: f32[2,8,16], index: 5, kind: output, shape index: {}]
  %s6 = sld [smem:[#allocation0]]
  $region61: #{forward.14} parent=0
    _
  %s8 = ssub.s32 1, %s6
  %s9 = scalar_select 0, %s8, %s6
  loop: start=0, step=1, limit=15
  $region2: #{forward.14} parent=0 // loop_pre_header
    _
  $region3: #{forward.14} parent=0 // loop_header
    %s11 = sphi 0, %s15
    %p12 = scmp.ge.s32.totalorder %s11, 15
    %s21 = sphi 0, %s23
    %s24 = sphi 0, %s21
    %s25 = sphi 0, %s24
    %s41 = sphi 0, %s25
    %s47 = sphi 0, %s49
    %s50 = sphi 0, %s47
    %s51 = sphi 0, %s50
    %s67 = sphi 0, %s51
    %s73 = sphi 0, %s75
    %s76 = sphi 0, %s73
    %s77 = sphi 0, %s76
    %s93 = sphi 0, %s77
    %s97 = sphi 0, %s97
    %s99 = sphi 0, %s97
    %s100 = sphi 0, %s99
    %s114 = sphi 0, %s100
    %s118 = sphi 0, %s118
    %s120 = sphi 0, %s118
    %s121 = sphi 0, %s120
    %s135 = sphi 0, %s121
    %s139 = sphi 0, %s139
    %s141 = sphi 0, %s139
    %s142 = sphi 0, %s141
    %s156 = sphi 0, %s142
  $region4: #{forward.14} parent=0 // loop_header_branch
    %14 = sbr.rel (%p12) target = $region8
  $region5: #{forward.14} parent=0 // loop_body
    %s16 = ssub.s32 %s11, 1
    %s17 = ssub.s32 %s11, 2
    %s18 = sadd.s32 %s11, 1
    %s19 = ssub.s32 %s11, %s18
    %p20 = scmp.eq.s32.totalorder %s19, 0
    %s22 = sadd.s32 %s21, 1
    %s23 = scalar_select %p20, %s21, %s22
    %p26 = pneg %p20
    %p27 = scmp.eq.s32.totalorder %s11, 12
    %p28 = por %p26, %p27
    %p29 = scmp.ne.s32.totalorder %s21, %s24
    %p30 = scmp.eq.s32.totalorder %s11, 0
    %p31 = por %p29, %p30
    %p32 = scmp.ne.s32.totalorder %s21, %s24
    %p33 = scmp.eq.s32.totalorder %s16, 12
    %p34 = por %p32, %p33
    %p35 = scmp.ne.s32.totalorder %s24, %s25
    %p36 = scmp.eq.s32.totalorder %s16, 0
    %p37 = por %p35, %p36
    %p38 = scmp.ne.s32.totalorder %s24, %s25
    %p39 = scmp.eq.s32.totalorder %s17, 12
    %p40 = por %p38, %p39
    %p42 = scmp.ne.s32.totalorder %s25, %s41
    %p43 = scmp.eq.s32.totalorder %s17, 0
    %p44 = por %p42, %p43
    %s45 = ssub.s32 %s11, %s18
    %p46 = scmp.eq.s32.totalorder %s45, 0
    %s48 = sadd.s32 %s47, 1
    %s49 = scalar_select %p46, %s47, %s48
    %p52 = pneg %p46
    %p53 = scmp.eq.s32.totalorder %s11, 12
    %p54 = por %p52, %p53
    %p55 = scmp.ne.s32.totalorder %s47, %s50
    %p56 = scmp.eq.s32.totalorder %s11, 0
    %p57 = por %p55, %p56
    %p58 = scmp.ne.s32.totalorder %s47, %s50
    %p59 = scmp.eq.s32.totalorder %s16, 12
    %p60 = por %p58, %p59
    %p61 = scmp.ne.s32.totalorder %s50, %s51
    %p62 = scmp.eq.s32.totalorder %s16, 0
    %p63 = por %p61, %p62
    %p64 = scmp.ne.s32.totalorder %s50, %s51
    %p65 = scmp.eq.s32.totalorder %s17, 12
    %p66 = por %p64, %p65
    %p68 = scmp.ne.s32.totalorder %s51, %s67
    %p69 = scmp.eq.s32.totalorder %s17, 0
    %p70 = por %p68, %p69
    %s71 = ssub.s32 %s11, %s18
    %p72 = scmp.eq.s32.totalorder %s71, 0
    %s74 = sadd.s32 %s73, 1
    %s75 = scalar_select %p72, %s73, %s74
    %p78 = pneg %p72
    %p79 = scmp.eq.s32.totalorder %s11, 12
    %p80 = por %p78, %p79
    %p81 = scmp.ne.s32.totalorder %s73, %s76
    %p82 = scmp.eq.s32.totalorder %s11, 0
    %p83 = por %p81, %p82
    %p84 = scmp.ne.s32.totalorder %s73, %s76
    %p85 = scmp.eq.s32.totalorder %s16, 12
    %p86 = por %p84, %p85
    %p87 = scmp.ne.s32.totalorder %s76, %s77
    %p88 = scmp.eq.s32.totalorder %s16, 0
    %p89 = por %p87, %p88
    %p90 = scmp.ne.s32.totalorder %s76, %s77
    %p91 = scmp.eq.s32.totalorder %s17, 12
    %p92 = por %p90, %p91
    %p94 = scmp.ne.s32.totalorder %s77, %s93
    %p95 = scmp.eq.s32.totalorder %s17, 0
    %p96 = por %p94, %p95
    %s98 = sadd.s32 %s97, 1
    %p101 = scmp.eq.s32.totalorder %s11, 12
    %p102 = scmp.ne.s32.totalorder %s97, %s99
    %p103 = scmp.eq.s32.totalorder %s11, 0
    %p104 = por %p102, %p103
    %p105 = scmp.ne.s32.totalorder %s97, %s99
    %p106 = scmp.eq.s32.totalorder %s16, 12
    %p107 = por %p105, %p106
    %p108 = scmp.ne.s32.totalorder %s99, %s100
    %p109 = scmp.eq.s32.totalorder %s16, 0
    %p110 = por %p108, %p109
    %p111 = scmp.ne.s32.totalorder %s99, %s100
    %p112 = scmp.eq.s32.totalorder %s17, 12
    %p113 = por %p111, %p112
    %p115 = scmp.ne.s32.totalorder %s100, %s114
    %p116 = scmp.eq.s32.totalorder %s17, 0
    %p117 = por %p115, %p116
    %s119 = sadd.s32 %s118, 1
    %p122 = scmp.eq.s32.totalorder %s11, 12
    %p123 = scmp.ne.s32.totalorder %s118, %s120
    %p124 = scmp.eq.s32.totalorder %s11, 0
    %p125 = por %p123, %p124
    %p126 = scmp.ne.s32.totalorder %s118, %s120
    %p127 = scmp.eq.s32.totalorder %s16, 12
    %p128 = por %p126, %p127
    %p129 = scmp.ne.s32.totalorder %s120, %s121
    %p130 = scmp.eq.s32.totalorder %s16, 0
    %p131 = por %p129, %p130
    %p132 = scmp.ne.s32.totalorder %s120, %s121
    %p133 = scmp.eq.s32.totalorder %s17, 12
    %p134 = por %p132, %p133
    %p136 = scmp.ne.s32.totalorder %s121, %s135
    %p137 = scmp.eq.s32.totalorder %s17, 0
    %p138 = por %p136, %p137
    %s140 = sadd.s32 %s139, 1
    %p143 = scmp.eq.s32.totalorder %s11, 12
    %p144 = scmp.ne.s32.totalorder %s139, %s141
    %p145 = scmp.eq.s32.totalorder %s11, 0
    %p146 = por %p144, %p145
    %p147 = scmp.ne.s32.totalorder %s139, %s141
    %p148 = scmp.eq.s32.totalorder %s16, 12
    %p149 = por %p147, %p148
    %p150 = scmp.ne.s32.totalorder %s141, %s142
    %p151 = scmp.eq.s32.totalorder %s16, 0
    %p152 = por %p150, %p151
    %p153 = scmp.ne.s32.totalorder %s141, %s142
    %p154 = scmp.eq.s32.totalorder %s17, 12
    %p155 = por %p153, %p154
    %p157 = scmp.ne.s32.totalorder %s142, %s156
    %p158 = scmp.eq.s32.totalorder %s17, 0
    %p159 = por %p157, %p158
    %p160 = scmp.le.s32.totalorder 1, %s11
    %p161 = scmp.lt.s32.totalorder %s11, 14
    %p162 = pnand %p160, %p161
    %p163 = pneg %p162
    // Predicated region
    $region9: #{forward.14} parent=5 // pred_check
      _
    $region10: #{forward.14} parent=5 // pred_check_branch
      %165 = sbr.rel (%p162) target = $region12
    $region11: #{forward.14} parent=5 // pred_region
      %s166 = ssub.s32 %s11, 1
      // Predicated region
      $region13: #{forward.14} parent=11 // pred_check
        %p167 = pneg %p110
      $region14: #{forward.14} parent=11 // pred_check_branch
        %169 = sbr.rel (%p167) target = $region16
      $region15: #{forward.14} parent=11 // pred_region
        _
      $region16: #{forward.14} parent=11 // pred_fallthru
        _
      // Predicated region
      $region17: #{forward.14} parent=11 // pred_check
        %p170 = pneg %p131
      $region18: #{forward.14} parent=11 // pred_check_branch
        %172 = sbr.rel (%p170) target = $region20
      $region19: #{forward.14} parent=11 // pred_region
        _
      $region20: #{forward.14} parent=11 // pred_fallthru
        _
    $region12: #{forward.14} parent=5 // pred_fallthru
      _
    %p173 = scmp.lt.s32.totalorder %s11, 13
    // Predicated region
    $region21: #{forward.14} parent=5 // pred_check
      %p174 = pneg %p173
    $region22: #{forward.14} parent=5 // pred_check_branch
      %176 = sbr.rel (%p174) target = $region24
    $region23: #{forward.14} parent=5 // pred_region
      // Predicated region
      $region25: #{forward.14} parent=23 // pred_check
        %p177 = pneg %p31
      $region26: #{forward.14} parent=23 // pred_check_branch
        %179 = sbr.rel (%p177) target = $region28
      $region27: #{forward.14} parent=23 // pred_region
        %p180 = scmp.lt.s32.totalorder %s11, 12
        %s181 = scalar_select %p180, %s11, 12
        %s182 = smul.addr %s181, 10
        %s183 = smul.addr %s182, 4
        %s184 = scalar_lea.vmem %s0, %s183
      $region28: #{forward.14} parent=23 // pred_fallthru
        _
      // Predicated region
      $region29: #{forward.14} parent=23 // pred_check
        %p185 = pneg %p57
      $region30: #{forward.14} parent=23 // pred_check_branch
        %187 = sbr.rel (%p185) target = $region32
      $region31: #{forward.14} parent=23 // pred_region
        %p188 = scmp.lt.s32.totalorder %s11, 12
        %s189 = scalar_select %p188, %s11, 12
        %s190 = smul.addr %s189, 4
        %s191 = smul.addr %s190, 4
        %s192 = scalar_lea.vmem %s1, %s191
      $region32: #{forward.14} parent=23 // pred_fallthru
        _
      // Predicated region
      $region33: #{forward.14} parent=23 // pred_check
        %p193 = pneg %p83
      $region34: #{forward.14} parent=23 // pred_check_branch
        %195 = sbr.rel (%p193) target = $region36
      $region35: #{forward.14} parent=23 // pred_region
        %p196 = scmp.lt.s32.totalorder %s11, 12
        %s197 = scalar_select %p196, %s11, 12
        %s198 = smul.addr %s197, 4
        %s199 = smul.addr %s198, 4
        %s200 = scalar_lea.vmem %s2, %s199
      $region36: #{forward.14} parent=23 // pred_fallthru
        _
    $region24: #{forward.14} parent=5 // pred_fallthru
      _
    %p201 = scmp.le.s32.totalorder 1, %s11
    %p202 = scmp.lt.s32.totalorder %s11, 14
    %p203 = pnand %p201, %p202
    %p204 = pneg %p203
    // Predicated region
    $region37: #{forward.14} parent=5 // pred_check
      _
    $region38: #{forward.14} parent=5 // pred_check_branch
      %206 = sbr.rel (%p203) target = $region40
    $region39: #{forward.14} parent=5 // pred_region
      %s207 = ssub.s32 %s11, 1
      %p208 = scmp.lt.s32.totalorder %s16, 12
      %s209 = scalar_select %p208, %s16, 12
      %s210 = smul.addr %s209, 10
      %s211 = smul.addr %s210, 4
      %s212 = scalar_lea.vmem %s0, %s211
      %p213 = pneg %p37
      %p214 = pneg %p34
      %p215 = scmp.lt.s32.totalorder %s16, 12
      %s216 = scalar_select %p215, %s16, 12
      %s217 = smul.addr %s216, 4
      %s218 = smul.addr %s217, 4
      %s219 = scalar_lea.vmem %s1, %s218
      %p220 = pneg %p63
      %p221 = pneg %p60
      %p222 = scmp.lt.s32.totalorder %s16, 12
      %s223 = scalar_select %p222, %s16, 12
      %s224 = smul.addr %s223, 4
      %s225 = smul.addr %s224, 4
      %s226 = scalar_lea.vmem %s2, %s225
      %p227 = pneg %p89
      %p228 = pneg %p86
      %p229 = pneg %p110
      %p230 = pneg %p107
      %p231 = pneg %p131
      %p232 = pneg %p128
      %p233 = pneg %p152
      %p234 = pneg %p149
      %p235 = scmp.lt.s32.totalorder %s16, 12
      %s236 = scalar_select %p235, %s16, 12
      %s237 = smul.addr %s236, 10
      %s238 = smul.addr %s237, 4
      %s239 = scalar_lea.vmem %s0, %s238
      %p240 = scmp.lt.s32.totalorder %s16, 12
      %s241 = scalar_select %p240, %s16, 12
      %s242 = smul.addr %s241, 4
      %s243 = smul.addr %s242, 4
      %s244 = scalar_lea.vmem %s1, %s243
      %p245 = scmp.lt.s32.totalorder %s16, 12
      %s246 = scalar_select %p245, %s16, 12
      %s247 = smul.addr %s246, 4
      %s248 = smul.addr %s247, 4
      %s249 = scalar_lea.vmem %s2, %s248
      %p251 = scmp.eq.s32.totalorder %s16, 0
      // Predicated region
      $region41: #{forward.14} parent=39 // pred_check
        %p252 = pneg %p251
      $region42: #{forward.14} parent=39 // pred_check_branch
        %254 = sbr.rel (%p252) target = $region44
      $region43: #{forward.14} parent=39 // pred_region
        %vm255 = vcmask 130048
        %256 = vst.msk [vmem:[#allocation2] sm:$0xff] %vm255, 0.0
        %257 = vst.msk [vmem:[#allocation2 + $0x8] sm:$0xff] %vm255, 0.0
        %258 = vst.msk [vmem:[#allocation2 + $0x10] sm:$0xff] %vm255, 0.0
        %259 = vst.msk [vmem:[#allocation2 + $0x18] sm:$0xff] %vm255, 0.0
        %vm260 = vcmask 128000
        %261 = vst.msk [vmem:[#allocation2 + $0x20] sm:$0x3f] %vm260, 0.0
        %262 = vst.msk [vmem:[#allocation2 + $0x28] sm:$0xff] %vm255, 0.0
        %263 = vst.msk [vmem:[#allocation2 + $0x30] sm:$0xff] %vm255, 0.0
        %264 = vst.msk [vmem:[#allocation2 + $0x38] sm:$0xff] %vm255, 0.0
        %265 = vst.msk [vmem:[#allocation2 + $0x40] sm:$0xff] %vm255, 0.0
        %266 = vst.msk [vmem:[#allocation2 + $0x48] sm:$0x3f] %vm260, 0.0
        %vm267 = vcmask 64512
        %268 = vst.msk [vmem:[#allocation3] sm:$0xff] %vm267, 0.0
        %269 = vst.msk [vmem:[#allocation3 + $0x8] sm:$0xff] %vm267, 0.0
        %270 = vst.msk [vmem:[#allocation3 + $0x10] sm:$0xff] %vm267, 0.0
        %271 = vst.msk [vmem:[#allocation3 + $0x18] sm:$0xff] %vm267, 0.0
        %vm272 = vcmask 62464
        %273 = vst.msk [vmem:[#allocation3 + $0x20] sm:$0x3f] %vm272, 0.0
        %274 = vst.msk [vmem:[#allocation3 + $0x28] sm:$0xff] %vm267, 0.0
        %275 = vst.msk [vmem:[#allocation3 + $0x30] sm:$0xff] %vm267, 0.0
        %276 = vst.msk [vmem:[#allocation3 + $0x38] sm:$0xff] %vm267, 0.0
        %277 = vst.msk [vmem:[#allocation3 + $0x40] sm:$0xff] %vm267, 0.0
        %278 = vst.msk [vmem:[#allocation3 + $0x48] sm:$0x3f] %vm272, 0.0
      $region44: #{forward.14} parent=39 // pred_fallthru
        _
      %v279 = vld [vmem:[%s239] sm:$0xf]
      %v280 = vld [vmem:[%s239 + $0x4] sm:$0xf]
      %v281 = vld [vmem:[%s239 + $0x8] sm:$0xf]
      %v282 = vld [vmem:[%s239 + $0xc] sm:$0xf]
      %v283 = vld [vmem:[%s239 + $0x10] sm:$0x7]
      %v284 = vld [vmem:[%s239 + $0x14] sm:$0xf]
      %v285 = vld [vmem:[%s239 + $0x18] sm:$0xf]
      %v286 = vld [vmem:[%s239 + $0x1c] sm:$0xf]
      %v287 = vld [vmem:[%s239 + $0x20] sm:$0xf]
      %v288 = vld [vmem:[%s239 + $0x24] sm:$0x7]
      %v300 = vunpack.c.l.s4 1966171168
      %v301 = vunpack.c.0.s8 %v300
      %v302 = vlaneseq
      %v303 = vshrl.u32 %v302, 7
      %v304 = vsub.s32 %v301, %v303
      %v305 = vrot.slane %v279, %v304
      %v306 = vcombine.high %v305, %v305
      %v308 = vunpack.c.l.s4 1966171168
      %v309 = vunpack.c.0.s8 %v308
      %v310 = vlaneseq
      %v311 = vshrl.u32 %v310, 7
      %v312 = vsub.s32 %v309, %v311
      %v313 = vrot.slane %v305, %v312
      %v315 = vunpack.c.l.s4 1966171168
      %v316 = vunpack.c.0.s8 %v315
      %v317 = vlaneseq
      %v318 = vshrl.u32 %v317, 7
      %v319 = vsub.s32 %v316, %v318
      %v320 = vrot.slane %v306, %v319
      %v321 = vcombine.high %v313, %v313
      %v322 = vcombine.high %v320, %v320
      %v324 = vunpack.c.l.s4 1966171168
      %v325 = vunpack.c.0.s8 %v324
      %v326 = vlaneseq
      %v327 = vshrl.u32 %v326, 7
      %v328 = vsub.s32 %v325, %v327
      %v329 = vrot.slane %v280, %v328
      %v330 = vcombine.high %v329, %v329
      %v332 = vunpack.c.l.s4 1966171168
      %v333 = vunpack.c.0.s8 %v332
      %v334 = vlaneseq
      %v335 = vshrl.u32 %v334, 7
      %v336 = vsub.s32 %v333, %v335
      %v337 = vrot.slane %v329, %v336
      %v339 = vunpack.c.l.s4 1966171168
      %v340 = vunpack.c.0.s8 %v339
      %v341 = vlaneseq
      %v342 = vshrl.u32 %v341, 7
      %v343 = vsub.s32 %v340, %v342
      %v344 = vrot.slane %v330, %v343
      %v345 = vcombine.high %v337, %v337
      %v346 = vcombine.high %v344, %v344
      %v348 = vunpack.c.l.s4 1966171168
      %v349 = vunpack.c.0.s8 %v348
      %v350 = vlaneseq
      %v351 = vshrl.u32 %v350, 7
      %v352 = vsub.s32 %v349, %v351
      %v353 = vrot.slane %v281, %v352
      %v354 = vcombine.high %v353, %v353
      %v356 = vunpack.c.l.s4 1966171168
      %v357 = vunpack.c.0.s8 %v356
      %v358 = vlaneseq
      %v359 = vshrl.u32 %v358, 7
      %v360 = vsub.s32 %v357, %v359
      %v361 = vrot.slane %v353, %v360
      %v363 = vunpack.c.l.s4 1966171168
      %v364 = vunpack.c.0.s8 %v363
      %v365 = vlaneseq
      %v366 = vshrl.u32 %v365, 7
      %v367 = vsub.s32 %v364, %v366
      %v368 = vrot.slane %v354, %v367
      %v369 = vcombine.high %v361, %v361
      %v370 = vcombine.high %v368, %v368
      %v372 = vunpack.c.l.s4 1966171168
      %v373 = vunpack.c.0.s8 %v372
      %v374 = vlaneseq
      %v375 = vshrl.u32 %v374, 7
      %v376 = vsub.s32 %v373, %v375
      %v377 = vrot.slane %v282, %v376
      %v378 = vcombine.high %v377, %v377
      %v380 = vunpack.c.l.s4 1966171168
      %v381 = vunpack.c.0.s8 %v380
      %v382 = vlaneseq
      %v383 = vshrl.u32 %v382, 7
      %v384 = vsub.s32 %v381, %v383
      %v385 = vrot.slane %v377, %v384
      %v387 = vunpack.c.l.s4 1966171168
      %v388 = vunpack.c.0.s8 %v387
      %v389 = vlaneseq
      %v390 = vshrl.u32 %v389, 7
      %v391 = vsub.s32 %v388, %v390
      %v392 = vrot.slane %v378, %v391
      %v393 = vcombine.high %v385, %v385
      %v394 = vcombine.high %v392, %v392
      %v396 = vunpack.c.l.s4 1966171168
      %v397 = vunpack.c.0.s8 %v396
      %v398 = vlaneseq
      %v399 = vshrl.u32 %v398, 7
      %v400 = vsub.s32 %v397, %v399
      %v401 = vrot.slane %v283, %v400
      %v402 = vcombine.high %v401, %v401
      %v404 = vunpack.c.l.s4 1966171168
      %v405 = vunpack.c.0.s8 %v404
      %v406 = vlaneseq
      %v407 = vshrl.u32 %v406, 7
      %v408 = vsub.s32 %v405, %v407
      %v409 = vrot.slane %v401, %v408
      %v411 = vunpack.c.l.s4 1966171168
      %v412 = vunpack.c.0.s8 %v411
      %v413 = vlaneseq
      %v414 = vshrl.u32 %v413, 7
      %v415 = vsub.s32 %v412, %v414
      %v416 = vrot.slane %v402, %v415
      %v417 = vcombine.high %v409, %v409
      %v419 = vunpack.c.l.s4 1966171168
      %v420 = vunpack.c.0.s8 %v419
      %v421 = vlaneseq
      %v422 = vshrl.u32 %v421, 7
      %v423 = vsub.s32 %v420, %v422
      %v424 = vrot.slane %v284, %v423
      %v425 = vcombine.high %v424, %v424
      %v427 = vunpack.c.l.s4 1966171168
      %v428 = vunpack.c.0.s8 %v427
      %v429 = vlaneseq
      %v430 = vshrl.u32 %v429, 7
      %v431 = vsub.s32 %v428, %v430
      %v432 = vrot.slane %v424, %v431
      %v434 = vunpack.c.l.s4 1966171168
      %v435 = vunpack.c.0.s8 %v434
      %v436 = vlaneseq
      %v437 = vshrl.u32 %v436, 7
      %v438 = vsub.s32 %v435, %v437
      %v439 = vrot.slane %v425, %v438
      %v440 = vcombine.high %v432, %v432
      %v441 = vcombine.high %v439, %v439
      %v443 = vunpack.c.l.s4 1966171168
      %v444 = vunpack.c.0.s8 %v443
      %v445 = vlaneseq
      %v446 = vshrl.u32 %v445, 7
      %v447 = vsub.s32 %v444, %v446
      %v448 = vrot.slane %v285, %v447
      %v449 = vcombine.high %v448, %v448
      %v451 = vunpack.c.l.s4 1966171168
      %v452 = vunpack.c.0.s8 %v451
      %v453 = vlaneseq
      %v454 = vshrl.u32 %v453, 7
      %v455 = vsub.s32 %v452, %v454
      %v456 = vrot.slane %v448, %v455
      %v458 = vunpack.c.l.s4 1966171168
      %v459 = vunpack.c.0.s8 %v458
      %v460 = vlaneseq
      %v461 = vshrl.u32 %v460, 7
      %v462 = vsub.s32 %v459, %v461
      %v463 = vrot.slane %v449, %v462
      %v464 = vcombine.high %v456, %v456
      %v465 = vcombine.high %v463, %v463
      %v467 = vunpack.c.l.s4 1966171168
      %v468 = vunpack.c.0.s8 %v467
      %v469 = vlaneseq
      %v470 = vshrl.u32 %v469, 7
      %v471 = vsub.s32 %v468, %v470
      %v472 = vrot.slane %v286, %v471
      %v473 = vcombine.high %v472, %v472
      %v475 = vunpack.c.l.s4 1966171168
      %v476 = vunpack.c.0.s8 %v475
      %v477 = vlaneseq
      %v478 = vshrl.u32 %v477, 7
      %v479 = vsub.s32 %v476, %v478
      %v480 = vrot.slane %v472, %v479
      %v482 = vunpack.c.l.s4 1966171168
      %v483 = vunpack.c.0.s8 %v482
      %v484 = vlaneseq
      %v485 = vshrl.u32 %v484, 7
      %v486 = vsub.s32 %v483, %v485
      %v487 = vrot.slane %v473, %v486
      %v488 = vcombine.high %v480, %v480
      %v489 = vcombine.high %v487, %v487
      %v491 = vunpack.c.l.s4 1966171168
      %v492 = vunpack.c.0.s8 %v491
      %v493 = vlaneseq
      %v494 = vshrl.u32 %v493, 7
      %v495 = vsub.s32 %v492, %v494
      %v496 = vrot.slane %v287, %v495
      %v497 = vcombine.high %v496, %v496
      %v499 = vunpack.c.l.s4 1966171168
      %v500 = vunpack.c.0.s8 %v499
      %v501 = vlaneseq
      %v502 = vshrl.u32 %v501, 7
      %v503 = vsub.s32 %v500, %v502
      %v504 = vrot.slane %v496, %v503
      %v506 = vunpack.c.l.s4 1966171168
      %v507 = vunpack.c.0.s8 %v506
      %v508 = vlaneseq
      %v509 = vshrl.u32 %v508, 7
      %v510 = vsub.s32 %v507, %v509
      %v511 = vrot.slane %v497, %v510
      %v512 = vcombine.high %v504, %v504
      %v513 = vcombine.high %v511, %v511
      %v515 = vunpack.c.l.s4 1966171168
      %v516 = vunpack.c.0.s8 %v515
      %v517 = vlaneseq
      %v518 = vshrl.u32 %v517, 7
      %v519 = vsub.s32 %v516, %v518
      %v520 = vrot.slane %v288, %v519
      %v521 = vcombine.high %v520, %v520
      %v523 = vunpack.c.l.s4 1966171168
      %v524 = vunpack.c.0.s8 %v523
      %v525 = vlaneseq
      %v526 = vshrl.u32 %v525, 7
      %v527 = vsub.s32 %v524, %v526
      %v528 = vrot.slane %v520, %v527
      %v530 = vunpack.c.l.s4 1966171168
      %v531 = vunpack.c.0.s8 %v530
      %v532 = vlaneseq
      %v533 = vshrl.u32 %v532, 7
      %v534 = vsub.s32 %v531, %v533
      %v535 = vrot.slane %v521, %v534
      %v536 = vcombine.high %v528, %v528
      %v537 = vld [vmem:[#allocation2] sm:$0xff]
      %v538 = vld [vmem:[#allocation2 + $0x8] sm:$0xff]
      %v539 = vld [vmem:[#allocation2 + $0x10] sm:$0xff]
      %v540 = vld [vmem:[#allocation2 + $0x18] sm:$0xff]
      %v541 = vld [vmem:[#allocation2 + $0x20] sm:$0x3f]
      %v542 = vld [vmem:[#allocation2 + $0x28] sm:$0xff]
      %v543 = vld [vmem:[#allocation2 + $0x30] sm:$0xff]
      %v544 = vld [vmem:[#allocation2 + $0x38] sm:$0xff]
      %v545 = vld [vmem:[#allocation2 + $0x40] sm:$0xff]
      %v546 = vld [vmem:[#allocation2 + $0x48] sm:$0x3f]
      %v547 = vld [vmem:[%s244] sm:$0xf]
      %v548 = vld [vmem:[%s244 + $0x4] sm:$0xf]
      %v549 = vld [vmem:[%s244 + $0x8] sm:$0xf]
      %v550 = vld [vmem:[%s244 + $0xc] sm:$0xf]
      %v551 = vcombine.low %v313, %v320
      %v552 = vcombine.low %v321, %v322
      %v553 = vcombine.low %v337, %v344
      %v554 = vcombine.low %v345, %v346
      %v556 = vunpack.c.l.s4 1966171168
      %v557 = vunpack.c.0.s8 %v556
      %v558 = vlaneseq
      %v559 = vshrl.u32 %v558, 7
      %v560 = vsub.s32 %v557, %v559
      %v561 = vrot.slane %v551, %v560
      %v563 = vunpack.c.l.s4 1966171168
      %v564 = vunpack.c.0.s8 %v563
      %v565 = vlaneseq
      %v566 = vshrl.u32 %v565, 7
      %v567 = vsub.s32 %v564, %v566
      %v568 = vrot.slane %v552, %v567
      %v570 = vunpack.c.l.s4 1966171168
      %v571 = vunpack.c.0.s8 %v570
      %v572 = vlaneseq
      %v573 = vshrl.u32 %v572, 7
      %v574 = vsub.s32 %v571, %v573
      %v575 = vrot.slane %v553, %v574
      %v577 = vunpack.c.l.s4 1966171168
      %v578 = vunpack.c.0.s8 %v577
      %v579 = vlaneseq
      %v580 = vshrl.u32 %v579, 7
      %v581 = vsub.s32 %v578, %v580
      %v582 = vrot.slane %v554, %v581
      %v583 = vcombine.low %v561, %v568
      %v584 = vcombine.low %v575, %v582
      %v586 = vunpack.c.l.s4 1966171168
      %v587 = vunpack.c.0.s8 %v586
      %v588 = vlaneseq
      %v589 = vshrl.u32 %v588, 7
      %v590 = vsub.s32 %v587, %v589
      %v591 = vrot.slane %v583, %v590
      %v593 = vunpack.c.l.s4 1966171168
      %v594 = vunpack.c.0.s8 %v593
      %v595 = vlaneseq
      %v596 = vshrl.u32 %v595, 7
      %v597 = vsub.s32 %v594, %v596
      %v598 = vrot.slane %v584, %v597
      %v599 = vcombine.low %v591, %v598
      %v600 = vcombine.low %v361, %v368
      %v601 = vcombine.low %v369, %v370
      %v602 = vcombine.low %v385, %v392
      %v603 = vcombine.low %v393, %v394
      %v605 = vunpack.c.l.s4 1966171168
      %v606 = vunpack.c.0.s8 %v605
      %v607 = vlaneseq
      %v608 = vshrl.u32 %v607, 7
      %v609 = vsub.s32 %v606, %v608
      %v610 = vrot.slane %v600, %v609
      %v612 = vunpack.c.l.s4 1966171168
      %v613 = vunpack.c.0.s8 %v612
      %v614 = vlaneseq
      %v615 = vshrl.u32 %v614, 7
      %v616 = vsub.s32 %v613, %v615
      %v617 = vrot.slane %v601, %v616
      %v619 = vunpack.c.l.s4 1966171168
      %v620 = vunpack.c.0.s8 %v619
      %v621 = vlaneseq
      %v622 = vshrl.u32 %v621, 7
      %v623 = vsub.s32 %v620, %v622
      %v624 = vrot.slane %v602, %v623
      %v626 = vunpack.c.l.s4 1966171168
      %v627 = vunpack.c.0.s8 %v626
      %v628 = vlaneseq
      %v629 = vshrl.u32 %v628, 7
      %v630 = vsub.s32 %v627, %v629
      %v631 = vrot.slane %v603, %v630
      %v632 = vcombine.low %v610, %v617
      %v633 = vcombine.low %v624, %v631
      %v635 = vunpack.c.l.s4 1966171168
      %v636 = vunpack.c.0.s8 %v635
      %v637 = vlaneseq
      %v638 = vshrl.u32 %v637, 7
      %v639 = vsub.s32 %v636, %v638
      %v640 = vrot.slane %v632, %v639
      %v642 = vunpack.c.l.s4 1966171168
      %v643 = vunpack.c.0.s8 %v642
      %v644 = vlaneseq
      %v645 = vshrl.u32 %v644, 7
      %v646 = vsub.s32 %v643, %v645
      %v647 = vrot.slane %v633, %v646
      %v648 = vcombine.low %v640, %v647
      %v649 = vcombine.low %v409, %v416
      %v650 = vcombine.low %v417, %v432
      %v651 = vcombine.low %v439, %v440
      %v652 = vcombine.low %v441, %v456
      %v654 = vunpack.c.l.s4 1966171168
      %v655 = vunpack.c.0.s8 %v654
      %v656 = vlaneseq
      %v657 = vshrl.u32 %v656, 7
      %v658 = vsub.s32 %v655, %v657
      %v659 = vrot.slane %v649, %v658
      %v661 = vunpack.c.l.s4 1966171168
      %v662 = vunpack.c.0.s8 %v661
      %v663 = vlaneseq
      %v664 = vshrl.u32 %v663, 7
      %v665 = vsub.s32 %v662, %v664
      %v666 = vrot.slane %v650, %v665
      %v668 = vunpack.c.l.s4 1966171168
      %v669 = vunpack.c.0.s8 %v668
      %v670 = vlaneseq
      %v671 = vshrl.u32 %v670, 7
      %v672 = vsub.s32 %v669, %v671
      %v673 = vrot.slane %v651, %v672
      %v675 = vunpack.c.l.s4 1966171168
      %v676 = vunpack.c.0.s8 %v675
      %v677 = vlaneseq
      %v678 = vshrl.u32 %v677, 7
      %v679 = vsub.s32 %v676, %v678
      %v680 = vrot.slane %v652, %v679
      %v681 = vcombine.low %v659, %v666
      %v682 = vcombine.low %v673, %v680
      %v684 = vunpack.c.l.s4 1966171168
      %v685 = vunpack.c.0.s8 %v684
      %v686 = vlaneseq
      %v687 = vshrl.u32 %v686, 7
      %v688 = vsub.s32 %v685, %v687
      %v689 = vrot.slane %v681, %v688
      %v691 = vunpack.c.l.s4 1966171168
      %v692 = vunpack.c.0.s8 %v691
      %v693 = vlaneseq
      %v694 = vshrl.u32 %v693, 7
      %v695 = vsub.s32 %v692, %v694
      %v696 = vrot.slane %v682, %v695
      %v697 = vcombine.low %v689, %v696
      %v698 = vcombine.low %v463, %v464
      %v699 = vcombine.low %v465, %v480
      %v700 = vcombine.low %v487, %v488
      %v701 = vcombine.low %v489, %v504
      %v703 = vunpack.c.l.s4 1966171168
      %v704 = vunpack.c.0.s8 %v703
      %v705 = vlaneseq
      %v706 = vshrl.u32 %v705, 7
      %v707 = vsub.s32 %v704, %v706
      %v708 = vrot.slane %v698, %v707
      %v710 = vunpack.c.l.s4 1966171168
      %v711 = vunpack.c.0.s8 %v710
      %v712 = vlaneseq
      %v713 = vshrl.u32 %v712, 7
      %v714 = vsub.s32 %v711, %v713
      %v715 = vrot.slane %v699, %v714
      %v717 = vunpack.c.l.s4 1966171168
      %v718 = vunpack.c.0.s8 %v717
      %v719 = vlaneseq
      %v720 = vshrl.u32 %v719, 7
      %v721 = vsub.s32 %v718, %v720
      %v722 = vrot.slane %v700, %v721
      %v724 = vunpack.c.l.s4 1966171168
      %v725 = vunpack.c.0.s8 %v724
      %v726 = vlaneseq
      %v727 = vshrl.u32 %v726, 7
      %v728 = vsub.s32 %v725, %v727
      %v729 = vrot.slane %v701, %v728
      %v730 = vcombine.low %v708, %v715
      %v731 = vcombine.low %v722, %v729
      %v733 = vunpack.c.l.s4 1966171168
      %v734 = vunpack.c.0.s8 %v733
      %v735 = vlaneseq
      %v736 = vshrl.u32 %v735, 7
      %v737 = vsub.s32 %v734, %v736
      %v738 = vrot.slane %v730, %v737
      %v740 = vunpack.c.l.s4 1966171168
      %v741 = vunpack.c.0.s8 %v740
      %v742 = vlaneseq
      %v743 = vshrl.u32 %v742, 7
      %v744 = vsub.s32 %v741, %v743
      %v745 = vrot.slane %v731, %v744
      %v746 = vcombine.low %v738, %v745
      %v747 = vcombine.low %v511, %v512
      %v748 = vcombine.low %v513, %v528
      %v749 = vcombine.low %v535, %v536
      %v751 = vunpack.c.l.s4 1966171168
      %v752 = vunpack.c.0.s8 %v751
      %v753 = vlaneseq
      %v754 = vshrl.u32 %v753, 7
      %v755 = vsub.s32 %v752, %v754
      %v756 = vrot.slane %v747, %v755
      %v758 = vunpack.c.l.s4 1966171168
      %v759 = vunpack.c.0.s8 %v758
      %v760 = vlaneseq
      %v761 = vshrl.u32 %v760, 7
      %v762 = vsub.s32 %v759, %v761
      %v763 = vrot.slane %v748, %v762
      %v765 = vunpack.c.l.s4 1966171168
      %v766 = vunpack.c.0.s8 %v765
      %v767 = vlaneseq
      %v768 = vshrl.u32 %v767, 7
      %v769 = vsub.s32 %v766, %v768
      %v770 = vrot.slane %v749, %v769
      %v771 = vcombine.low %v756, %v763
      %v773 = vunpack.c.l.s4 1966171168
      %v774 = vunpack.c.0.s8 %v773
      %v775 = vlaneseq
      %v776 = vshrl.u32 %v775, 7
      %v777 = vsub.s32 %v774, %v776
      %v778 = vrot.slane %v771, %v777
      %v780 = vunpack.c.l.s4 1966171168
      %v781 = vunpack.c.0.s8 %v780
      %v782 = vlaneseq
      %v783 = vshrl.u32 %v782, 7
      %v784 = vsub.s32 %v781, %v783
      %v785 = vrot.slane %v770, %v784
      %v786 = vcombine.low %v778, %v785
      %v791 = vunpack.c.l.b16 %v547
      %v792 = vunpack.c.l.b16 %v548
      %v793 = vunpack.c.l.b16 %v549
      %v794 = vunpack.c.l.b16 %v550
      %v795 = vpack.c.b16 %v792, %v791
      %v796 = vpack.c.b16 %v794, %v793
      %vm799 = vcmask 261120
      %v801 = vsel %vm799, %v599, 0
      %v804 = vsel %vm799, %v648, 0
      %v807 = vsel %vm799, %v697, 0
      %v810 = vsel %vm799, %v746, 0
      %v813 = vsel %vm799, %v786, 0
      %815 = vmatprep.subr.bf16.mxu0 0
      %816 = vmatpush1.bf16.msra.mxu0 %v795
      %817 = vmatprep.subr.bf16.mxu0 0
      %818 = vmatpush1.bf16.msra.mxu0 %v796
      %819 = vmatprep.subr.bf16.mxu0 0
      %820 = vmatpush1.bf16.msra.mxu0 0
      %821 = vmatprep.subr.bf16.mxu0 0
      %822 = vmatpush1.bf16.msra.mxu0 0
      %823 = vmatprep.subr.bf16.mxu0 0
      %824 = vmatpush1.bf16.msra.mxu0 0
      %825 = vmatprep.subr.bf16.mxu0 0
      %826 = vmatpush1.bf16.msra.mxu0 0
      %827 = vmatprep.subr.bf16.mxu0 0
      %828 = vmatpush1.bf16.msra.mxu0 0
      %829 = vmatprep.subr.bf16.mxu0 0
      %830 = vmatpush1.bf16.msra.mxu0 0
      %831 = vmatprep.subr.bf16.mxu0 0
      %832 = vmatpush1.bf16.msra.mxu0 0
      %833 = vmatprep.subr.bf16.mxu0 0
      %834 = vmatpush1.bf16.msra.mxu0 0
      %835 = vmatprep.subr.bf16.mxu0 0
      %836 = vmatpush1.bf16.msra.mxu0 0
      %837 = vmatprep.subr.bf16.mxu0 0
      %838 = vmatpush1.bf16.msra.mxu0 0
      %839 = vmatprep.subr.bf16.mxu0 0
      %840 = vmatpush1.bf16.msra.mxu0 0
      %841 = vmatprep.subr.bf16.mxu0 0
      %842 = vmatpush1.bf16.msra.mxu0 0
      %843 = vmatprep.subr.bf16.mxu0 0
      %844 = vmatpush1.bf16.msra.mxu0 0
      %845 = vmatprep.subr.bf16.mxu0 0
      %846 = vmatpush1.bf16.msra.mxu0 0
      %847 = vmatprep.mubr.bf16.mxu0 0
      %848 = vmatmul.mubr.bf16.gmra.mrb[0].mxu0 %v801
      %v849 = vpop.f32.mrb[0].mxu0
      %v850 = vadd.f32 0.0, %v849
      %v851 = vpop.f32.mrb[0].mxu0
      %v852 = vpop.f32.mrb[0].mxu0
      %v853 = vadd.f32 0.0, %v852
      %v854 = vpop.f32.mrb[0].mxu0
      %855 = vmatprep.mubr.bf16.mxu0 0
      %856 = vmatmul.mubr.bf16.gmra.mrb[0].mxu0 %v804
      %v857 = vpop.f32.mrb[0].mxu0
      %v858 = vadd.f32 0.0, %v857
      %v859 = vpop.f32.mrb[0].mxu0
      %v860 = vpop.f32.mrb[0].mxu0
      %v861 = vadd.f32 0.0, %v860
      %v862 = vpop.f32.mrb[0].mxu0
      %863 = vmatprep.mubr.bf16.mxu0 0
      %864 = vmatmul.mubr.bf16.gmra.mrb[0].mxu0 %v807
      %v865 = vpop.f32.mrb[0].mxu0
      %v866 = vadd.f32 0.0, %v865
      %v867 = vpop.f32.mrb[0].mxu0
      %v868 = vpop.f32.mrb[0].mxu0
      %v869 = vadd.f32 0.0, %v868
      %v870 = vpop.f32.mrb[0].mxu0
      %871 = vmatprep.mubr.bf16.mxu0 0
      %872 = vmatmul.mubr.bf16.gmra.mrb[0].mxu0 %v810
      %v873 = vpop.f32.mrb[0].mxu0
      %v874 = vadd.f32 0.0, %v873
      %v875 = vpop.f32.mrb[0].mxu0
      %v876 = vpop.f32.mrb[0].mxu0
      %v877 = vadd.f32 0.0, %v876
      %v878 = vpop.f32.mrb[0].mxu0
      %879 = vmatprep.mubr.bf16.mxu0 0
      %880 = vmatmul.mubr.bf16.gmra.mrb[0].mxu0 %v813
      %v881 = vpop.f32.mrb[0].mxu0
      %v882 = vadd.f32 0.0, %v881
      %v883 = vpop.f32.mrb[0].mxu0
      %v884 = vpop.f32.mrb[0].mxu0
      %v885 = vadd.f32 0.0, %v884
      %v886 = vpop.f32.mrb[0].mxu0
      %887 = vdwg.mxu0
      %v898 = vcombine.high %v850, %v850
      %v900 = vunpack.c.l.s4 1983009808
      %v901 = vunpack.c.0.s8 %v900
      %v902 = vlaneseq
      %v903 = vshrl.u32 %v902, 7
      %v904 = vsub.s32 %v901, %v903
      %v905 = vrot.slane %v850, %v904
      %v907 = vunpack.c.l.s4 1983009808
      %v908 = vunpack.c.0.s8 %v907
      %v909 = vlaneseq
      %v910 = vshrl.u32 %v909, 7
      %v911 = vsub.s32 %v908, %v910
      %v912 = vrot.slane %v898, %v911
      %v913 = vcombine.high %v905, %v905
      %v914 = vcombine.high %v912, %v912
      %v915 = vcombine.high %v853, %v853
      %v917 = vunpack.c.l.s4 1983009808
      %v918 = vunpack.c.0.s8 %v917
      %v919 = vlaneseq
      %v920 = vshrl.u32 %v919, 7
      %v921 = vsub.s32 %v918, %v920
      %v922 = vrot.slane %v853, %v921
      %v924 = vunpack.c.l.s4 1983009808
      %v925 = vunpack.c.0.s8 %v924
      %v926 = vlaneseq
      %v927 = vshrl.u32 %v926, 7
      %v928 = vsub.s32 %v925, %v927
      %v929 = vrot.slane %v915, %v928
      %v930 = vcombine.high %v922, %v922
      %v931 = vcombine.high %v929, %v929
      %v932 = vcombine.high %v858, %v858
      %v934 = vunpack.c.l.s4 1983009808
      %v935 = vunpack.c.0.s8 %v934
      %v936 = vlaneseq
      %v937 = vshrl.u32 %v936, 7
      %v938 = vsub.s32 %v935, %v937
      %v939 = vrot.slane %v858, %v938
      %v941 = vunpack.c.l.s4 1983009808
      %v942 = vunpack.c.0.s8 %v941
      %v943 = vlaneseq
      %v944 = vshrl.u32 %v943, 7
      %v945 = vsub.s32 %v942, %v944
      %v946 = vrot.slane %v932, %v945
      %v947 = vcombine.high %v939, %v939
      %v948 = vcombine.high %v946, %v946
      %v949 = vcombine.high %v861, %v861
      %v951 = vunpack.c.l.s4 1983009808
      %v952 = vunpack.c.0.s8 %v951
      %v953 = vlaneseq
      %v954 = vshrl.u32 %v953, 7
      %v955 = vsub.s32 %v952, %v954
      %v956 = vrot.slane %v861, %v955
      %v958 = vunpack.c.l.s4 1983009808
      %v959 = vunpack.c.0.s8 %v958
      %v960 = vlaneseq
      %v961 = vshrl.u32 %v960, 7
      %v962 = vsub.s32 %v959, %v961
      %v963 = vrot.slane %v949, %v962
      %v964 = vcombine.high %v956, %v956
      %v965 = vcombine.high %v963, %v963
      %v966 = vcombine.high %v866, %v866
      %v968 = vunpack.c.l.s4 1983009808
      %v969 = vunpack.c.0.s8 %v968
      %v970 = vlaneseq
      %v971 = vshrl.u32 %v970, 7
      %v972 = vsub.s32 %v969, %v971
      %v973 = vrot.slane %v866, %v972
      %v975 = vunpack.c.l.s4 1983009808
      %v976 = vunpack.c.0.s8 %v975
      %v977 = vlaneseq
      %v978 = vshrl.u32 %v977, 7
      %v979 = vsub.s32 %v976, %v978
      %v980 = vrot.slane %v966, %v979
      %v981 = vcombine.high %v973, %v973
      %v982 = vcombine.high %v980, %v980
      %v983 = vcombine.high %v869, %v869
      %v985 = vunpack.c.l.s4 1983009808
      %v986 = vunpack.c.0.s8 %v985
      %v987 = vlaneseq
      %v988 = vshrl.u32 %v987, 7
      %v989 = vsub.s32 %v986, %v988
      %v990 = vrot.slane %v869, %v989
      %v992 = vunpack.c.l.s4 1983009808
      %v993 = vunpack.c.0.s8 %v992
      %v994 = vlaneseq
      %v995 = vshrl.u32 %v994, 7
      %v996 = vsub.s32 %v993, %v995
      %v997 = vrot.slane %v983, %v996
      %v998 = vcombine.high %v990, %v990
      %v999 = vcombine.high %v997, %v997
      %v1000 = vcombine.high %v874, %v874
      %v1002 = vunpack.c.l.s4 1983009808
      %v1003 = vunpack.c.0.s8 %v1002
      %v1004 = vlaneseq
      %v1005 = vshrl.u32 %v1004, 7
      %v1006 = vsub.s32 %v1003, %v1005
      %v1007 = vrot.slane %v874, %v1006
      %v1009 = vunpack.c.l.s4 1983009808
      %v1010 = vunpack.c.0.s8 %v1009
      %v1011 = vlaneseq
      %v1012 = vshrl.u32 %v1011, 7
      %v1013 = vsub.s32 %v1010, %v1012
      %v1014 = vrot.slane %v1000, %v1013
      %v1015 = vcombine.high %v1007, %v1007
      %v1016 = vcombine.high %v1014, %v1014
      %v1017 = vcombine.high %v877, %v877
      %v1019 = vunpack.c.l.s4 1983009808
      %v1020 = vunpack.c.0.s8 %v1019
      %v1021 = vlaneseq
      %v1022 = vshrl.u32 %v1021, 7
      %v1023 = vsub.s32 %v1020, %v1022
      %v1024 = vrot.slane %v877, %v1023
      %v1026 = vunpack.c.l.s4 1983009808
      %v1027 = vunpack.c.0.s8 %v1026
      %v1028 = vlaneseq
      %v1029 = vshrl.u32 %v1028, 7
      %v1030 = vsub.s32 %v1027, %v1029
      %v1031 = vrot.slane %v1017, %v1030
      %v1032 = vcombine.high %v1024, %v1024
      %v1033 = vcombine.high %v1031, %v1031
      %v1034 = vcombine.high %v882, %v882
      %v1036 = vunpack.c.l.s4 1983009808
      %v1037 = vunpack.c.0.s8 %v1036
      %v1038 = vlaneseq
      %v1039 = vshrl.u32 %v1038, 7
      %v1040 = vsub.s32 %v1037, %v1039
      %v1041 = vrot.slane %v882, %v1040
      %v1043 = vunpack.c.l.s4 1983009808
      %v1044 = vunpack.c.0.s8 %v1043
      %v1045 = vlaneseq
      %v1046 = vshrl.u32 %v1045, 7
      %v1047 = vsub.s32 %v1044, %v1046
      %v1048 = vrot.slane %v1034, %v1047
      %v1049 = vcombine.high %v1041, %v1041
      %v1050 = vcombine.high %v1048, %v1048
      %v1052 = vunpack.c.l.s4 1983009808
      %v1053 = vunpack.c.0.s8 %v1052
      %v1054 = vlaneseq
      %v1055 = vshrl.u32 %v1054, 7
      %v1056 = vsub.s32 %v1053, %v1055
      %v1057 = vrot.slane %v885, %v1056
      %v1058 = vcombine.high %v1057, %v1057
      %v1059 = vcombine.low %v905, %v913
      %v1060 = vcombine.low %v912, %v914
      %v1062 = vunpack.c.l.s4 1983009808
      %v1063 = vunpack.c.0.s8 %v1062
      %v1064 = vlaneseq
      %v1065 = vshrl.u32 %v1064, 7
      %v1066 = vsub.s32 %v1063, %v1065
      %v1067 = vrot.slane %v1059, %v1066
      %v1069 = vunpack.c.l.s4 1983009808
      %v1070 = vunpack.c.0.s8 %v1069
      %v1071 = vlaneseq
      %v1072 = vshrl.u32 %v1071, 7
      %v1073 = vsub.s32 %v1070, %v1072
      %v1074 = vrot.slane %v1060, %v1073
      %v1075 = vcombine.low %v1067, %v1074
      %v1076 = vcombine.low %v922, %v930
      %v1077 = vcombine.low %v929, %v931
      %v1079 = vunpack.c.l.s4 1983009808
      %v1080 = vunpack.c.0.s8 %v1079
      %v1081 = vlaneseq
      %v1082 = vshrl.u32 %v1081, 7
      %v1083 = vsub.s32 %v1080, %v1082
      %v1084 = vrot.slane %v1076, %v1083
      %v1086 = vunpack.c.l.s4 1983009808
      %v1087 = vunpack.c.0.s8 %v1086
      %v1088 = vlaneseq
      %v1089 = vshrl.u32 %v1088, 7
      %v1090 = vsub.s32 %v1087, %v1089
      %v1091 = vrot.slane %v1077, %v1090
      %v1092 = vcombine.low %v1084, %v1091
      %v1093 = vcombine.low %v939, %v947
      %v1094 = vcombine.low %v946, %v948
      %v1096 = vunpack.c.l.s4 1983009808
      %v1097 = vunpack.c.0.s8 %v1096
      %v1098 = vlaneseq
      %v1099 = vshrl.u32 %v1098, 7
      %v1100 = vsub.s32 %v1097, %v1099
      %v1101 = vrot.slane %v1093, %v1100
      %v1103 = vunpack.c.l.s4 1983009808
      %v1104 = vunpack.c.0.s8 %v1103
      %v1105 = vlaneseq
      %v1106 = vshrl.u32 %v1105, 7
      %v1107 = vsub.s32 %v1104, %v1106
      %v1108 = vrot.slane %v1094, %v1107
      %v1109 = vcombine.low %v1101, %v1108
      %v1110 = vcombine.low %v956, %v964
      %v1111 = vcombine.low %v963, %v965
      %v1113 = vunpack.c.l.s4 1983009808
      %v1114 = vunpack.c.0.s8 %v1113
      %v1115 = vlaneseq
      %v1116 = vshrl.u32 %v1115, 7
      %v1117 = vsub.s32 %v1114, %v1116
      %v1118 = vrot.slane %v1110, %v1117
      %v1120 = vunpack.c.l.s4 1983009808
      %v1121 = vunpack.c.0.s8 %v1120
      %v1122 = vlaneseq
      %v1123 = vshrl.u32 %v1122, 7
      %v1124 = vsub.s32 %v1121, %v1123
      %v1125 = vrot.slane %v1111, %v1124
      %v1126 = vcombine.low %v1118, %v1125
      %v1127 = vcombine.low %v973, %v981
      %v1129 = vunpack.c.l.s4 1983009808
      %v1130 = vunpack.c.0.s8 %v1129
      %v1131 = vlaneseq
      %v1132 = vshrl.u32 %v1131, 7
      %v1133 = vsub.s32 %v1130, %v1132
      %v1134 = vrot.slane %v1127, %v1133
      %v1136 = vunpack.c.l.s4 1983009808
      %v1137 = vunpack.c.0.s8 %v1136
      %v1138 = vlaneseq
      %v1139 = vshrl.u32 %v1138, 7
      %v1140 = vsub.s32 %v1137, %v1139
      %v1141 = vrot.slane %v980, %v1140
      %v1142 = vcombine.low %v1134, %v1141
      %v1143 = vcombine.low %v982, %v990
      %v1144 = vcombine.low %v998, %v997
      %v1146 = vunpack.c.l.s4 1983009808
      %v1147 = vunpack.c.0.s8 %v1146
      %v1148 = vlaneseq
      %v1149 = vshrl.u32 %v1148, 7
      %v1150 = vsub.s32 %v1147, %v1149
      %v1151 = vrot.slane %v1143, %v1150
      %v1153 = vunpack.c.l.s4 1983009808
      %v1154 = vunpack.c.0.s8 %v1153
      %v1155 = vlaneseq
      %v1156 = vshrl.u32 %v1155, 7
      %v1157 = vsub.s32 %v1154, %v1156
      %v1158 = vrot.slane %v1144, %v1157
      %v1159 = vcombine.low %v1151, %v1158
      %v1160 = vcombine.low %v999, %v1007
      %v1161 = vcombine.low %v1015, %v1014
      %v1163 = vunpack.c.l.s4 1983009808
      %v1164 = vunpack.c.0.s8 %v1163
      %v1165 = vlaneseq
      %v1166 = vshrl.u32 %v1165, 7
      %v1167 = vsub.s32 %v1164, %v1166
      %v1168 = vrot.slane %v1160, %v1167
      %v1170 = vunpack.c.l.s4 1983009808
      %v1171 = vunpack.c.0.s8 %v1170
      %v1172 = vlaneseq
      %v1173 = vshrl.u32 %v1172, 7
      %v1174 = vsub.s32 %v1171, %v1173
      %v1175 = vrot.slane %v1161, %v1174
      %v1176 = vcombine.low %v1168, %v1175
      %v1177 = vcombine.low %v1016, %v1024
      %v1178 = vcombine.low %v1032, %v1031
      %v1180 = vunpack.c.l.s4 1983009808
      %v1181 = vunpack.c.0.s8 %v1180
      %v1182 = vlaneseq
      %v1183 = vshrl.u32 %v1182, 7
      %v1184 = vsub.s32 %v1181, %v1183
      %v1185 = vrot.slane %v1177, %v1184
      %v1187 = vunpack.c.l.s4 1983009808
      %v1188 = vunpack.c.0.s8 %v1187
      %v1189 = vlaneseq
      %v1190 = vshrl.u32 %v1189, 7
      %v1191 = vsub.s32 %v1188, %v1190
      %v1192 = vrot.slane %v1178, %v1191
      %v1193 = vcombine.low %v1185, %v1192
      %v1194 = vcombine.low %v1033, %v1041
      %v1195 = vcombine.low %v1049, %v1048
      %v1197 = vunpack.c.l.s4 1983009808
      %v1198 = vunpack.c.0.s8 %v1197
      %v1199 = vlaneseq
      %v1200 = vshrl.u32 %v1199, 7
      %v1201 = vsub.s32 %v1198, %v1200
      %v1202 = vrot.slane %v1194, %v1201
      %v1204 = vunpack.c.l.s4 1983009808
      %v1205 = vunpack.c.0.s8 %v1204
      %v1206 = vlaneseq
      %v1207 = vshrl.u32 %v1206, 7
      %v1208 = vsub.s32 %v1205, %v1207
      %v1209 = vrot.slane %v1195, %v1208
      %v1210 = vcombine.low %v1202, %v1209
      %v1211 = vcombine.low %v1050, %v1057
      %v1213 = vunpack.c.l.s4 1983009808
      %v1214 = vunpack.c.0.s8 %v1213
      %v1215 = vlaneseq
      %v1216 = vshrl.u32 %v1215, 7
      %v1217 = vsub.s32 %v1214, %v1216
      %v1218 = vrot.slane %v1211, %v1217
      %v1220 = vunpack.c.l.s4 1983009808
      %v1221 = vunpack.c.0.s8 %v1220
      %v1222 = vlaneseq
      %v1223 = vshrl.u32 %v1222, 7
      %v1224 = vsub.s32 %v1221, %v1223
      %v1225 = vrot.slane %v1058, %v1224
      %v1226 = vcombine.low %v1218, %v1225
      %v1237 = vadd.f32 %v537, %v1075
      %v1238 = vadd.f32 %v538, %v1092
      %v1239 = vadd.f32 %v539, %v1109
      %v1240 = vadd.f32 %v540, %v1126
      %v1241 = vadd.f32 %v541, %v1142
      %v1242 = vadd.f32 %v542, %v1159
      %v1243 = vadd.f32 %v543, %v1176
      %v1244 = vadd.f32 %v544, %v1193
      %v1245 = vadd.f32 %v545, %v1210
      %v1246 = vadd.f32 %v546, %v1226
      %vm1247 = vcmask 130048
      %1248 = vst.msk [vmem:[#allocation2] sm:$0xff] %vm1247, %v1237
      %1249 = vst.msk [vmem:[#allocation2 + $0x8] sm:$0xff] %vm1247, %v1238
      %1250 = vst.msk [vmem:[#allocation2 + $0x10] sm:$0xff] %vm1247, %v1239
      %1251 = vst.msk [vmem:[#allocation2 + $0x18] sm:$0xff] %vm1247, %v1240
      %vm1252 = vcmask 128000
      %1253 = vst.msk [vmem:[#allocation2 + $0x20] sm:$0x3f] %vm1252, %v1241
      %1254 = vst.msk [vmem:[#allocation2 + $0x28] sm:$0xff] %vm1247, %v1242
      %1255 = vst.msk [vmem:[#allocation2 + $0x30] sm:$0xff] %vm1247, %v1243
      %1256 = vst.msk [vmem:[#allocation2 + $0x38] sm:$0xff] %vm1247, %v1244
      %1257 = vst.msk [vmem:[#allocation2 + $0x40] sm:$0xff] %vm1247, %v1245
      %1258 = vst.msk [vmem:[#allocation2 + $0x48] sm:$0x3f] %vm1252, %v1246
      %v1259 = vld [vmem:[#allocation3] sm:$0xff]
      %v1260 = vld [vmem:[#allocation3 + $0x8] sm:$0xff]
      %v1261 = vld [vmem:[#allocation3 + $0x10] sm:$0xff]
      %v1262 = vld [vmem:[#allocation3 + $0x18] sm:$0xff]
      %v1263 = vld [vmem:[#allocation3 + $0x20] sm:$0x3f]
      %v1264 = vld [vmem:[#allocation3 + $0x28] sm:$0xff]
      %v1265 = vld [vmem:[#allocation3 + $0x30] sm:$0xff]
      %v1266 = vld [vmem:[#allocation3 + $0x38] sm:$0xff]
      %v1267 = vld [vmem:[#allocation3 + $0x40] sm:$0xff]
      %v1268 = vld [vmem:[#allocation3 + $0x48] sm:$0x3f]
      %v1269 = vld [vmem:[%s249] sm:$0xf]
      %v1270 = vld [vmem:[%s249 + $0x4] sm:$0xf]
      %v1271 = vld [vmem:[%s249 + $0x8] sm:$0xf]
      %v1272 = vld [vmem:[%s249 + $0xc] sm:$0xf]
      %v1277 = vunpack.c.l.b16 %v1269
      %v1278 = vunpack.c.l.b16 %v1270
      %v1279 = vunpack.c.l.b16 %v1271
      %v1280 = vunpack.c.l.b16 %v1272
      %v1281 = vpack.c.b16 %v1278, %v1277
      %v1282 = vpack.c.b16 %v1280, %v1279
      %1285 = vmatprep.subr.bf16.mxu0 0
      %1286 = vmatpush1.bf16.msra.mxu0 %v1281
      %1287 = vmatprep.subr.bf16.mxu0 0
      %1288 = vmatpush1.bf16.msra.mxu0 %v1282
      %1289 = vmatprep.subr.bf16.mxu0 0
      %1290 = vmatpush1.bf16.msra.mxu0 0
      %1291 = vmatprep.subr.bf16.mxu0 0
      %1292 = vmatpush1.bf16.msra.mxu0 0
      %1293 = vmatprep.subr.bf16.mxu0 0
      %1294 = vmatpush1.bf16.msra.mxu0 0
      %1295 = vmatprep.subr.bf16.mxu0 0
      %1296 = vmatpush1.bf16.msra.mxu0 0
      %1297 = vmatprep.subr.bf16.mxu0 0
      %1298 = vmatpush1.bf16.msra.mxu0 0
      %1299 = vmatprep.subr.bf16.mxu0 0
      %1300 = vmatpush1.bf16.msra.mxu0 0
      %1301 = vmatprep.subr.bf16.mxu0 0
      %1302 = vmatpush1.bf16.msra.mxu0 0
      %1303 = vmatprep.subr.bf16.mxu0 0
      %1304 = vmatpush1.bf16.msra.mxu0 0
      %1305 = vmatprep.subr.bf16.mxu0 0
      %1306 = vmatpush1.bf16.msra.mxu0 0
      %1307 = vmatprep.subr.bf16.mxu0 0
      %1308 = vmatpush1.bf16.msra.mxu0 0
      %1309 = vmatprep.subr.bf16.mxu0 0
      %1310 = vmatpush1.bf16.msra.mxu0 0
      %1311 = vmatprep.subr.bf16.mxu0 0
      %1312 = vmatpush1.bf16.msra.mxu0 0
      %1313 = vmatprep.subr.bf16.mxu0 0
      %1314 = vmatpush1.bf16.msra.mxu0 0
      %1315 = vmatprep.subr.bf16.mxu0 0
      %1316 = vmatpush1.bf16.msra.mxu0 0
      %1317 = vmatprep.mubr.bf16.mxu0 0
      %1318 = vmatmul.mubr.bf16.gmra.mrb[0].mxu0 %v801
      %v1319 = vpop.f32.mrb[0].mxu0
      %v1320 = vadd.f32 0.0, %v1319
      %v1321 = vpop.f32.mrb[0].mxu0
      %v1322 = vpop.f32.mrb[0].mxu0
      %v1323 = vadd.f32 0.0, %v1322
      %v1324 = vpop.f32.mrb[0].mxu0
      %1325 = vmatprep.mubr.bf16.mxu0 0
      %1326 = vmatmul.mubr.bf16.gmra.mrb[0].mxu0 %v804
      %v1327 = vpop.f32.mrb[0].mxu0
      %v1328 = vadd.f32 0.0, %v1327
      %v1329 = vpop.f32.mrb[0].mxu0
      %v1330 = vpop.f32.mrb[0].mxu0
      %v1331 = vadd.f32 0.0, %v1330
      %v1332 = vpop.f32.mrb[0].mxu0
      %1333 = vmatprep.mubr.bf16.mxu0 0
      %1334 = vmatmul.mubr.bf16.gmra.mrb[0].mxu0 %v807
      %v1335 = vpop.f32.mrb[0].mxu0
      %v1336 = vadd.f32 0.0, %v1335
      %v1337 = vpop.f32.mrb[0].mxu0
      %v1338 = vpop.f32.mrb[0].mxu0
      %v1339 = vadd.f32 0.0, %v1338
      %v1340 = vpop.f32.mrb[0].mxu0
      %1341 = vmatprep.mubr.bf16.mxu0 0
      %1342 = vmatmul.mubr.bf16.gmra.mrb[0].mxu0 %v810
      %v1343 = vpop.f32.mrb[0].mxu0
      %v1344 = vadd.f32 0.0, %v1343
      %v1345 = vpop.f32.mrb[0].mxu0
      %v1346 = vpop.f32.mrb[0].mxu0
      %v1347 = vadd.f32 0.0, %v1346
      %v1348 = vpop.f32.mrb[0].mxu0
      %1349 = vmatprep.mubr.bf16.mxu0 0
      %1350 = vmatmul.mubr.bf16.gmra.mrb[0].mxu0 %v813
      %v1351 = vpop.f32.mrb[0].mxu0
      %v1352 = vadd.f32 0.0, %v1351
      %v1353 = vpop.f32.mrb[0].mxu0
      %v1354 = vpop.f32.mrb[0].mxu0
      %v1355 = vadd.f32 0.0, %v1354
      %v1356 = vpop.f32.mrb[0].mxu0
      %1357 = vdwg.mxu0
      %v1368 = vcombine.high %v1320, %v1320
      %v1370 = vunpack.c.l.s4 1983009808
      %v1371 = vunpack.c.0.s8 %v1370
      %v1372 = vlaneseq
      %v1373 = vshrl.u32 %v1372, 7
      %v1374 = vsub.s32 %v1371, %v1373
      %v1375 = vrot.slane %v1320, %v1374
      %v1377 = vunpack.c.l.s4 1983009808
      %v1378 = vunpack.c.0.s8 %v1377
      %v1379 = vlaneseq
      %v1380 = vshrl.u32 %v1379, 7
      %v1381 = vsub.s32 %v1378, %v1380
      %v1382 = vrot.slane %v1368, %v1381
      %v1383 = vcombine.high %v1375, %v1375
      %v1384 = vcombine.high %v1382, %v1382
      %v1385 = vcombine.high %v1323, %v1323
      %v1387 = vunpack.c.l.s4 1983009808
      %v1388 = vunpack.c.0.s8 %v1387
      %v1389 = vlaneseq
      %v1390 = vshrl.u32 %v1389, 7
      %v1391 = vsub.s32 %v1388, %v1390
      %v1392 = vrot.slane %v1323, %v1391
      %v1394 = vunpack.c.l.s4 1983009808
      %v1395 = vunpack.c.0.s8 %v1394
      %v1396 = vlaneseq
      %v1397 = vshrl.u32 %v1396, 7
      %v1398 = vsub.s32 %v1395, %v1397
      %v1399 = vrot.slane %v1385, %v1398
      %v1400 = vcombine.high %v1392, %v1392
      %v1401 = vcombine.high %v1399, %v1399
      %v1402 = vcombine.high %v1328, %v1328
      %v1404 = vunpack.c.l.s4 1983009808
      %v1405 = vunpack.c.0.s8 %v1404
      %v1406 = vlaneseq
      %v1407 = vshrl.u32 %v1406, 7
      %v1408 = vsub.s32 %v1405, %v1407
      %v1409 = vrot.slane %v1328, %v1408
      %v1411 = vunpack.c.l.s4 1983009808
      %v1412 = vunpack.c.0.s8 %v1411
      %v1413 = vlaneseq
      %v1414 = vshrl.u32 %v1413, 7
      %v1415 = vsub.s32 %v1412, %v1414
      %v1416 = vrot.slane %v1402, %v1415
      %v1417 = vcombine.high %v1409, %v1409
      %v1418 = vcombine.high %v1416, %v1416
      %v1419 = vcombine.high %v1331, %v1331
      %v1421 = vunpack.c.l.s4 1983009808
      %v1422 = vunpack.c.0.s8 %v1421
      %v1423 = vlaneseq
      %v1424 = vshrl.u32 %v1423, 7
      %v1425 = vsub.s32 %v1422, %v1424
      %v1426 = vrot.slane %v1331, %v1425
      %v1428 = vunpack.c.l.s4 1983009808
      %v1429 = vunpack.c.0.s8 %v1428
      %v1430 = vlaneseq
      %v1431 = vshrl.u32 %v1430, 7
      %v1432 = vsub.s32 %v1429, %v1431
      %v1433 = vrot.slane %v1419, %v1432
      %v1434 = vcombine.high %v1426, %v1426
      %v1435 = vcombine.high %v1433, %v1433
      %v1436 = vcombine.high %v1336, %v1336
      %v1438 = vunpack.c.l.s4 1983009808
      %v1439 = vunpack.c.0.s8 %v1438
      %v1440 = vlaneseq
      %v1441 = vshrl.u32 %v1440, 7
      %v1442 = vsub.s32 %v1439, %v1441
      %v1443 = vrot.slane %v1336, %v1442
      %v1445 = vunpack.c.l.s4 1983009808
      %v1446 = vunpack.c.0.s8 %v1445
      %v1447 = vlaneseq
      %v1448 = vshrl.u32 %v1447, 7
      %v1449 = vsub.s32 %v1446, %v1448
      %v1450 = vrot.slane %v1436, %v1449
      %v1451 = vcombine.high %v1443, %v1443
      %v1452 = vcombine.high %v1450, %v1450
      %v1453 = vcombine.high %v1339, %v1339
      %v1455 = vunpack.c.l.s4 1983009808
      %v1456 = vunpack.c.0.s8 %v1455
      %v1457 = vlaneseq
      %v1458 = vshrl.u32 %v1457, 7
      %v1459 = vsub.s32 %v1456, %v1458
      %v1460 = vrot.slane %v1339, %v1459
      %v1462 = vunpack.c.l.s4 1983009808
      %v1463 = vunpack.c.0.s8 %v1462
      %v1464 = vlaneseq
      %v1465 = vshrl.u32 %v1464, 7
      %v1466 = vsub.s32 %v1463, %v1465
      %v1467 = vrot.slane %v1453, %v1466
      %v1468 = vcombine.high %v1460, %v1460
      %v1469 = vcombine.high %v1467, %v1467
      %v1470 = vcombine.high %v1344, %v1344
      %v1472 = vunpack.c.l.s4 1983009808
      %v1473 = vunpack.c.0.s8 %v1472
      %v1474 = vlaneseq
      %v1475 = vshrl.u32 %v1474, 7
      %v1476 = vsub.s32 %v1473, %v1475
      %v1477 = vrot.slane %v1344, %v1476
      %v1479 = vunpack.c.l.s4 1983009808
      %v1480 = vunpack.c.0.s8 %v1479
      %v1481 = vlaneseq
      %v1482 = vshrl.u32 %v1481, 7
      %v1483 = vsub.s32 %v1480, %v1482
      %v1484 = vrot.slane %v1470, %v1483
      %v1485 = vcombine.high %v1477, %v1477
      %v1486 = vcombine.high %v1484, %v1484
      %v1487 = vcombine.high %v1347, %v1347
      %v1489 = vunpack.c.l.s4 1983009808
      %v1490 = vunpack.c.0.s8 %v1489
      %v1491 = vlaneseq
      %v1492 = vshrl.u32 %v1491, 7
      %v1493 = vsub.s32 %v1490, %v1492
      %v1494 = vrot.slane %v1347, %v1493
      %v1496 = vunpack.c.l.s4 1983009808
      %v1497 = vunpack.c.0.s8 %v1496
      %v1498 = vlaneseq
      %v1499 = vshrl.u32 %v1498, 7
      %v1500 = vsub.s32 %v1497, %v1499
      %v1501 = vrot.slane %v1487, %v1500
      %v1502 = vcombine.high %v1494, %v1494
      %v1503 = vcombine.high %v1501, %v1501
      %v1504 = vcombine.high %v1352, %v1352
      %v1506 = vunpack.c.l.s4 1983009808
      %v1507 = vunpack.c.0.s8 %v1506
      %v1508 = vlaneseq
      %v1509 = vshrl.u32 %v1508, 7
      %v1510 = vsub.s32 %v1507, %v1509
      %v1511 = vrot.slane %v1352, %v1510
      %v1513 = vunpack.c.l.s4 1983009808
      %v1514 = vunpack.c.0.s8 %v1513
      %v1515 = vlaneseq
      %v1516 = vshrl.u32 %v1515, 7
      %v1517 = vsub.s32 %v1514, %v1516
      %v1518 = vrot.slane %v1504, %v1517
      %v1519 = vcombine.high %v1511, %v1511
      %v1520 = vcombine.high %v1518, %v1518
      %v1522 = vunpack.c.l.s4 1983009808
      %v1523 = vunpack.c.0.s8 %v1522
      %v1524 = vlaneseq
      %v1525 = vshrl.u32 %v1524, 7
      %v1526 = vsub.s32 %v1523, %v1525
      %v1527 = vrot.slane %v1355, %v1526
      %v1528 = vcombine.high %v1527, %v1527
      %v1529 = vcombine.low %v1375, %v1383
      %v1530 = vcombine.low %v1382, %v1384
      %v1532 = vunpack.c.l.s4 1983009808
      %v1533 = vunpack.c.0.s8 %v1532
      %v1534 = vlaneseq
      %v1535 = vshrl.u32 %v1534, 7
      %v1536 = vsub.s32 %v1533, %v1535
      %v1537 = vrot.slane %v1529, %v1536
      %v1539 = vunpack.c.l.s4 1983009808
      %v1540 = vunpack.c.0.s8 %v1539
      %v1541 = vlaneseq
      %v1542 = vshrl.u32 %v1541, 7
      %v1543 = vsub.s32 %v1540, %v1542
      %v1544 = vrot.slane %v1530, %v1543
      %v1545 = vcombine.low %v1537, %v1544
      %v1546 = vcombine.low %v1392, %v1400
      %v1547 = vcombine.low %v1399, %v1401
      %v1549 = vunpack.c.l.s4 1983009808
      %v1550 = vunpack.c.0.s8 %v1549
      %v1551 = vlaneseq
      %v1552 = vshrl.u32 %v1551, 7
      %v1553 = vsub.s32 %v1550, %v1552
      %v1554 = vrot.slane %v1546, %v1553
      %v1556 = vunpack.c.l.s4 1983009808
      %v1557 = vunpack.c.0.s8 %v1556
      %v1558 = vlaneseq
      %v1559 = vshrl.u32 %v1558, 7
      %v1560 = vsub.s32 %v1557, %v1559
      %v1561 = vrot.slane %v1547, %v1560
      %v1562 = vcombine.low %v1554, %v1561
      %v1563 = vcombine.low %v1409, %v1417
      %v1564 = vcombine.low %v1416, %v1418
      %v1566 = vunpack.c.l.s4 1983009808
      %v1567 = vunpack.c.0.s8 %v1566
      %v1568 = vlaneseq
      %v1569 = vshrl.u32 %v1568, 7
      %v1570 = vsub.s32 %v1567, %v1569
      %v1571 = vrot.slane %v1563, %v1570
      %v1573 = vunpack.c.l.s4 1983009808
      %v1574 = vunpack.c.0.s8 %v1573
      %v1575 = vlaneseq
      %v1576 = vshrl.u32 %v1575, 7
      %v1577 = vsub.s32 %v1574, %v1576
      %v1578 = vrot.slane %v1564, %v1577
      %v1579 = vcombine.low %v1571, %v1578
      %v1580 = vcombine.low %v1426, %v1434
      %v1581 = vcombine.low %v1433, %v1435
      %v1583 = vunpack.c.l.s4 1983009808
      %v1584 = vunpack.c.0.s8 %v1583
      %v1585 = vlaneseq
      %v1586 = vshrl.u32 %v1585, 7
      %v1587 = vsub.s32 %v1584, %v1586
      %v1588 = vrot.slane %v1580, %v1587
      %v1590 = vunpack.c.l.s4 1983009808
      %v1591 = vunpack.c.0.s8 %v1590
      %v1592 = vlaneseq
      %v1593 = vshrl.u32 %v1592, 7
      %v1594 = vsub.s32 %v1591, %v1593
      %v1595 = vrot.slane %v1581, %v1594
      %v1596 = vcombine.low %v1588, %v1595
      %v1597 = vcombine.low %v1443, %v1451
      %v1599 = vunpack.c.l.s4 1983009808
      %v1600 = vunpack.c.0.s8 %v1599
      %v1601 = vlaneseq
      %v1602 = vshrl.u32 %v1601, 7
      %v1603 = vsub.s32 %v1600, %v1602
      %v1604 = vrot.slane %v1597, %v1603
      %v1606 = vunpack.c.l.s4 1983009808
      %v1607 = vunpack.c.0.s8 %v1606
      %v1608 = vlaneseq
      %v1609 = vshrl.u32 %v1608, 7
      %v1610 = vsub.s32 %v1607, %v1609
      %v1611 = vrot.slane %v1450, %v1610
      %v1612 = vcombine.low %v1604, %v1611
      %v1613 = vcombine.low %v1452, %v1460
      %v1614 = vcombine.low %v1468, %v1467
      %v1616 = vunpack.c.l.s4 1983009808
      %v1617 = vunpack.c.0.s8 %v1616
      %v1618 = vlaneseq
      %v1619 = vshrl.u32 %v1618, 7
      %v1620 = vsub.s32 %v1617, %v1619
      %v1621 = vrot.slane %v1613, %v1620
      %v1623 = vunpack.c.l.s4 1983009808
      %v1624 = vunpack.c.0.s8 %v1623
      %v1625 = vlaneseq
      %v1626 = vshrl.u32 %v1625, 7
      %v1627 = vsub.s32 %v1624, %v1626
      %v1628 = vrot.slane %v1614, %v1627
      %v1629 = vcombine.low %v1621, %v1628
      %v1630 = vcombine.low %v1469, %v1477
      %v1631 = vcombine.low %v1485, %v1484
      %v1633 = vunpack.c.l.s4 1983009808
      %v1634 = vunpack.c.0.s8 %v1633
      %v1635 = vlaneseq
      %v1636 = vshrl.u32 %v1635, 7
      %v1637 = vsub.s32 %v1634, %v1636
      %v1638 = vrot.slane %v1630, %v1637
      %v1640 = vunpack.c.l.s4 1983009808
      %v1641 = vunpack.c.0.s8 %v1640
      %v1642 = vlaneseq
      %v1643 = vshrl.u32 %v1642, 7
      %v1644 = vsub.s32 %v1641, %v1643
      %v1645 = vrot.slane %v1631, %v1644
      %v1646 = vcombine.low %v1638, %v1645
      %v1647 = vcombine.low %v1486, %v1494
      %v1648 = vcombine.low %v1502, %v1501
      %v1650 = vunpack.c.l.s4 1983009808
      %v1651 = vunpack.c.0.s8 %v1650
      %v1652 = vlaneseq
      %v1653 = vshrl.u32 %v1652, 7
      %v1654 = vsub.s32 %v1651, %v1653
      %v1655 = vrot.slane %v1647, %v1654
      %v1657 = vunpack.c.l.s4 1983009808
      %v1658 = vunpack.c.0.s8 %v1657
      %v1659 = vlaneseq
      %v1660 = vshrl.u32 %v1659, 7
      %v1661 = vsub.s32 %v1658, %v1660
      %v1662 = vrot.slane %v1648, %v1661
      %v1663 = vcombine.low %v1655, %v1662
      %v1664 = vcombine.low %v1503, %v1511
      %v1665 = vcombine.low %v1519, %v1518
      %v1667 = vunpack.c.l.s4 1983009808
      %v1668 = vunpack.c.0.s8 %v1667
      %v1669 = vlaneseq
      %v1670 = vshrl.u32 %v1669, 7
      %v1671 = vsub.s32 %v1668, %v1670
      %v1672 = vrot.slane %v1664, %v1671
      %v1674 = vunpack.c.l.s4 1983009808
      %v1675 = vunpack.c.0.s8 %v1674
      %v1676 = vlaneseq
      %v1677 = vshrl.u32 %v1676, 7
      %v1678 = vsub.s32 %v1675, %v1677
      %v1679 = vrot.slane %v1665, %v1678
      %v1680 = vcombine.low %v1672, %v1679
      %v1681 = vcombine.low %v1520, %v1527
      %v1683 = vunpack.c.l.s4 1983009808
      %v1684 = vunpack.c.0.s8 %v1683
      %v1685 = vlaneseq
      %v1686 = vshrl.u32 %v1685, 7
      %v1687 = vsub.s32 %v1684, %v1686
      %v1688 = vrot.slane %v1681, %v1687
      %v1690 = vunpack.c.l.s4 1983009808
      %v1691 = vunpack.c.0.s8 %v1690
      %v1692 = vlaneseq
      %v1693 = vshrl.u32 %v1692, 7
      %v1694 = vsub.s32 %v1691, %v1693
      %v1695 = vrot.slane %v1528, %v1694
      %v1696 = vcombine.low %v1688, %v1695
      %v1707 = vadd.f32 %v1259, %v1545
      %v1708 = vadd.f32 %v1260, %v1562
      %v1709 = vadd.f32 %v1261, %v1579
      %v1710 = vadd.f32 %v1262, %v1596
      %v1711 = vadd.f32 %v1263, %v1612
      %v1712 = vadd.f32 %v1264, %v1629
      %v1713 = vadd.f32 %v1265, %v1646
      %v1714 = vadd.f32 %v1266, %v1663
      %v1715 = vadd.f32 %v1267, %v1680
      %v1716 = vadd.f32 %v1268, %v1696
      %vm1717 = vcmask 64512
      %1718 = vst.msk [vmem:[#allocation3] sm:$0xff] %vm1717, %v1707
      %1719 = vst.msk [vmem:[#allocation3 + $0x8] sm:$0xff] %vm1717, %v1708
      %1720 = vst.msk [vmem:[#allocation3 + $0x10] sm:$0xff] %vm1717, %v1709
      %1721 = vst.msk [vmem:[#allocation3 + $0x18] sm:$0xff] %vm1717, %v1710
      %vm1722 = vcmask 62464
      %1723 = vst.msk [vmem:[#allocation3 + $0x20] sm:$0x3f] %vm1722, %v1711
      %1724 = vst.msk [vmem:[#allocation3 + $0x28] sm:$0xff] %vm1717, %v1712
      %1725 = vst.msk [vmem:[#allocation3 + $0x30] sm:$0xff] %vm1717, %v1713
      %1726 = vst.msk [vmem:[#allocation3 + $0x38] sm:$0xff] %vm1717, %v1714
      %1727 = vst.msk [vmem:[#allocation3 + $0x40] sm:$0xff] %vm1717, %v1715
      %1728 = vst.msk [vmem:[#allocation3 + $0x48] sm:$0x3f] %vm1722, %v1716
      %p1729 = scmp.eq.s32.totalorder %s16, 12
      // Predicated region
      $region45: #{forward.14} parent=39 // pred_check
        %p1730 = pneg %p1729
      $region46: #{forward.14} parent=39 // pred_check_branch
        %1732 = sbr.rel (%p1730) target = $region48
      $region47: #{forward.14} parent=39 // pred_region
        %v1733 = vld [vmem:[#allocation2] sm:$0xff]
        %v1734 = vld [vmem:[#allocation2 + $0x8] sm:$0xff]
        %v1735 = vld [vmem:[#allocation2 + $0x10] sm:$0xff]
        %v1736 = vld [vmem:[#allocation2 + $0x18] sm:$0xff]
        %v1737 = vld [vmem:[#allocation2 + $0x20] sm:$0x3f]
        %v1738 = vld [vmem:[#allocation2 + $0x28] sm:$0xff]
        %v1739 = vld [vmem:[#allocation2 + $0x30] sm:$0xff]
        %v1740 = vld [vmem:[#allocation2 + $0x38] sm:$0xff]
        %v1741 = vld [vmem:[#allocation2 + $0x40] sm:$0xff]
        %v1742 = vld [vmem:[#allocation2 + $0x48] sm:$0x3f]
        %v1743 = vld [vmem:[%s3] sm:$0x1]
        %v1745 = vlaneseq
        %v1746 = vshrl.u32 %v1745, 7
        %v1747 = vsub.s32 0, %v1746
        %v1748 = vrot.slane %v1743, %v1747
        %v1750 = vadd.f32 %v1733, %v1748
        %v1751 = vadd.f32 %v1734, %v1748
        %v1752 = vadd.f32 %v1735, %v1748
        %v1753 = vadd.f32 %v1736, %v1748
        %v1754 = vadd.f32 %v1737, %v1748
        %v1755 = vadd.f32 %v1738, %v1748
        %v1756 = vadd.f32 %v1739, %v1748
        %v1757 = vadd.f32 %v1740, %v1748
        %v1758 = vadd.f32 %v1741, %v1748
        %v1759 = vadd.f32 %v1742, %v1748
        %v1760 = vld [vmem:[#allocation3] sm:$0xff]
        %v1761 = vld [vmem:[#allocation3 + $0x8] sm:$0xff]
        %v1762 = vld [vmem:[#allocation3 + $0x10] sm:$0xff]
        %v1763 = vld [vmem:[#allocation3 + $0x18] sm:$0xff]
        %v1764 = vld [vmem:[#allocation3 + $0x20] sm:$0x3f]
        %v1765 = vld [vmem:[#allocation3 + $0x28] sm:$0xff]
        %v1766 = vld [vmem:[#allocation3 + $0x30] sm:$0xff]
        %v1767 = vld [vmem:[#allocation3 + $0x38] sm:$0xff]
        %v1768 = vld [vmem:[#allocation3 + $0x40] sm:$0xff]
        %v1769 = vld [vmem:[#allocation3 + $0x48] sm:$0x3f]
        %v1770 = vld [vmem:[%s4] sm:$0x1]
        %v1772 = vlaneseq
        %v1773 = vshrl.u32 %v1772, 7
        %v1774 = vsub.s32 0, %v1773
        %v1775 = vrot.slane %v1770, %v1774
        %v1777 = vadd.f32 %v1760, %v1775
        %v1778 = vadd.f32 %v1761, %v1775
        %v1779 = vadd.f32 %v1762, %v1775
        %v1780 = vadd.f32 %v1763, %v1775
        %v1781 = vadd.f32 %v1764, %v1775
        %v1782 = vadd.f32 %v1765, %v1775
        %v1783 = vadd.f32 %v1766, %v1775
        %v1784 = vadd.f32 %v1767, %v1775
        %v1785 = vadd.f32 %v1768, %v1775
        %v1786 = vadd.f32 %v1769, %v1775
        %v1787 = vsel %vm1717, %v1777, -inf
        %v1788 = vsel %vm1717, %v1778, -inf
        %v1789 = vsel %vm1717, %v1779, -inf
        %v1790 = vmax.f32 %v1787, %v1789
        %v1791 = vsel %vm1717, %v1780, -inf
        %v1792 = vmax.f32 %v1788, %v1791
        %v1793 = vsel %vm1722, %v1781, -inf
        %v1794 = vmax.f32 %v1790, %v1793
        %v1795 = vmax.f32 %v1794, %v1792
        %v1796 = vrot.slane %v1795, 4
        %v1797 = vmax.f32 %v1795, %v1796
        %v1798 = vrot.slane %v1797, 2
        %v1799 = vmax.f32 %v1797, %v1798
        %v1800 = vrot.slane %v1799, 1
        %v1801 = vmax.f32 %v1799, %v1800
        %v1802 = vsel %vm1717, %v1782, -inf
        %v1803 = vsel %vm1717, %v1783, -inf
        %v1804 = vsel %vm1717, %v1784, -inf
        %v1805 = vmax.f32 %v1802, %v1804
        %v1806 = vsel %vm1717, %v1785, -inf
        %v1807 = vmax.f32 %v1803, %v1806
        %v1808 = vsel %vm1722, %v1786, -inf
        %v1809 = vmax.f32 %v1805, %v1808
        %v1810 = vmax.f32 %v1809, %v1807
        %v1811 = vrot.slane %v1810, 4
        %v1812 = vmax.f32 %v1810, %v1811
        %v1813 = vrot.slane %v1812, 2
        %v1814 = vmax.f32 %v1812, %v1813
        %v1815 = vrot.slane %v1814, 1
        %v1816 = vmax.f32 %v1814, %v1815
        %v1817 = vsub.f32 %v1777, %v1801
        %v1818 = vsub.f32 %v1778, %v1801
        %v1819 = vsub.f32 %v1779, %v1801
        %v1820 = vsub.f32 %v1780, %v1801
        %v1821 = vsub.f32 %v1781, %v1801
        %v1822 = vsub.f32 %v1782, %v1816
        %v1823 = vsub.f32 %v1783, %v1816
        %v1824 = vsub.f32 %v1784, %v1816
        %v1825 = vsub.f32 %v1785, %v1816
        %v1826 = vsub.f32 %v1786, %v1816
        %v1827 = vmul.f32 %v1817, 1.442695
        %v1828 = vpow.pop %v1827
        %v1829 = vmul.f32 %v1818, 1.442695
        %v1830 = vpow.pop %v1829
        %v1831 = vmul.f32 %v1819, 1.442695
        %v1832 = vpow.pop %v1831
        %v1833 = vmul.f32 %v1820, 1.442695
        %v1834 = vpow.pop %v1833
        %v1835 = vmul.f32 %v1821, 1.442695
        %v1836 = vpow.pop %v1835
        %v1837 = vmul.f32 %v1822, 1.442695
        %v1838 = vpow.pop %v1837
        %v1839 = vmul.f32 %v1823, 1.442695
        %v1840 = vpow.pop %v1839
        %v1841 = vmul.f32 %v1824, 1.442695
        %v1842 = vpow.pop %v1841
        %v1843 = vmul.f32 %v1825, 1.442695
        %v1844 = vpow.pop %v1843
        %v1845 = vmul.f32 %v1826, 1.442695
        %v1846 = vpow.pop %v1845
        %v1847 = vsel %vm1717, %v1828, 0.0
        %v1848 = vsel %vm1717, %v1830, 0.0
        %v1849 = vadd.f32 %v1847, %v1848
        %v1850 = vsel %vm1717, %v1832, 0.0
        %v1851 = vadd.f32 %v1849, %v1850
        %v1852 = vsel %vm1717, %v1834, 0.0
        %v1853 = vadd.f32 %v1851, %v1852
        %v1854 = vsel %vm1722, %v1836, 0.0
        %v1855 = vadd.f32 %v1853, %v1854
        %v1856 = vrot.slane %v1855, 4
        %v1857 = vadd.f32 %v1855, %v1856
        %v1858 = vrot.slane %v1857, 2
        %v1859 = vadd.f32 %v1857, %v1858
        %v1860 = vrot.slane %v1859, 1
        %v1861 = vadd.f32 %v1859, %v1860
        %v1862 = vsel %vm1717, %v1838, 0.0
        %v1863 = vsel %vm1717, %v1840, 0.0
        %v1864 = vadd.f32 %v1862, %v1863
        %v1865 = vsel %vm1717, %v1842, 0.0
        %v1866 = vadd.f32 %v1864, %v1865
        %v1867 = vsel %vm1717, %v1844, 0.0
        %v1868 = vadd.f32 %v1866, %v1867
        %v1869 = vsel %vm1722, %v1846, 0.0
        %v1870 = vadd.f32 %v1868, %v1869
        %v1871 = vrot.slane %v1870, 4
        %v1872 = vadd.f32 %v1870, %v1871
        %v1873 = vrot.slane %v1872, 2
        %v1874 = vadd.f32 %v1872, %v1873
        %v1875 = vrot.slane %v1874, 1
        %v1876 = vadd.f32 %v1874, %v1875
        %v1877 = vrcp.pop %v1861
        %v1878 = vrcp.pop %v1876
        %v1879 = vmul.f32 %v1828, %v1877
        %v1880 = vmul.f32 %v1830, %v1877
        %v1881 = vmul.f32 %v1832, %v1877
        %v1882 = vmul.f32 %v1834, %v1877
        %v1883 = vmul.f32 %v1836, %v1877
        %v1884 = vmul.f32 %v1838, %v1878
        %v1885 = vmul.f32 %v1840, %v1878
        %v1886 = vmul.f32 %v1842, %v1878
        %v1887 = vmul.f32 %v1844, %v1878
        %v1888 = vmul.f32 %v1846, %v1878
        %v1889 = vpack.c.bf16 %v1880, %v1879
        %v1890 = vpack.c.bf16 %v1882, %v1881
        %v1891 = vpack.c.bf16 %v1883, %v1883
        %v1892 = vpack.c.bf16 %v1885, %v1884
        %v1893 = vpack.c.bf16 %v1887, %v1886
        %v1894 = vpack.c.bf16 %v1888, %v1888
        %v1895 = vpack.c.bf16 %v1751, %v1750
        %v1896 = vpack.c.bf16 %v1753, %v1752
        %v1897 = vpack.c.bf16 %v1754, %v1754
        %v1898 = vpack.c.bf16 %v1756, %v1755
        %v1899 = vpack.c.bf16 %v1758, %v1757
        %v1900 = vpack.c.bf16 %v1759, %v1759
        %1901 = vxpose.xlu0.c.b16.start [1/8] %v1889, 128
        %1902 = vxpose.xlu0.c.b16.cont [2/8] %v1890, 128
        %1903 = vxpose.xlu0.c.b16.cont [3/8] %v1891, 128
        %1904 = vxpose.xlu0.c.b16.cont [4/8] 0, 128
        %1905 = vxpose.xlu0.c.b16.cont [5/8] 0, 128
        %1906 = vxpose.xlu0.c.b16.cont [6/8] 0, 128
        %1907 = vxpose.xlu0.c.b16.cont [7/8] 0, 128
        %1908 = vxpose.xlu0.c.b16.end [8/8] 0, 128
        %v1909 = vpop.trf.xlu0
        %v1910 = vpop.trf.xlu0
        %v1911 = vpop.trf.xlu0
        %v1912 = vpop.trf.xlu0
        %v1913 = vpop.trf.xlu0
        %v1914 = vpop.trf.xlu0
        %v1915 = vpop.trf.xlu0
        %v1916 = vpop.trf.xlu0
        %vm1917 = vcmask 310272
        %v1919 = vsel %vm1917, %v1909, 0
        %vm1921 = vcmask 1042432
        %v1923 = vsel %vm1921, %v1897, 0
        %1925 = vmatprep.subr.bf16.mxu0 0
        %1926 = vmatpush1.bf16.msra.mxu0 %v1895
        %1927 = vmatprep.subr.bf16.mxu0 0
        %1928 = vmatpush1.bf16.msra.mxu0 %v1896
        %1929 = vmatprep.subr.bf16.mxu0 0
        %1930 = vmatpush1.bf16.msra.mxu0 %v1923
        %1931 = vmatprep.subr.bf16.mxu0 0
        %1932 = vmatpush1.bf16.msra.mxu0 0
        %1933 = vmatprep.subr.bf16.mxu0 0
        %1934 = vmatpush1.bf16.msra.mxu0 0
        %1935 = vmatprep.subr.bf16.mxu0 0
        %1936 = vmatpush1.bf16.msra.mxu0 0
        %1937 = vmatprep.subr.bf16.mxu0 0
        %1938 = vmatpush1.bf16.msra.mxu0 0
        %1939 = vmatprep.subr.bf16.mxu0 0
        %1940 = vmatpush1.bf16.msra.mxu0 0
        %1941 = vmatprep.subr.bf16.mxu0 0
        %1942 = vmatpush1.bf16.msra.mxu0 0
        %1943 = vmatprep.subr.bf16.mxu0 0
        %1944 = vmatpush1.bf16.msra.mxu0 0
        %1945 = vmatprep.subr.bf16.mxu0 0
        %1946 = vmatpush1.bf16.msra.mxu0 0
        %1947 = vmatprep.subr.bf16.mxu0 0
        %1948 = vmatpush1.bf16.msra.mxu0 0
        %1949 = vmatprep.subr.bf16.mxu0 0
        %1950 = vmatpush1.bf16.msra.mxu0 0
        %1951 = vmatprep.subr.bf16.mxu0 0
        %1952 = vmatpush1.bf16.msra.mxu0 0
        %1953 = vmatprep.subr.bf16.mxu0 0
        %1954 = vmatpush1.bf16.msra.mxu0 0
        %1955 = vmatprep.subr.bf16.mxu0 0
        %1956 = vmatpush1.bf16.msra.mxu0 0
        %1957 = vmatprep.mubr.bf16.mxu0 0
        %1958 = vmatmul.mubr.bf16.gmra.mrb[0].mxu0 %v1919
        %v1959 = vpop.f32.mrb[0].mxu0
        %v1960 = vadd.f32 0.0, %v1959
        %v1961 = vpop.f32.mrb[0].mxu0
        %v1962 = vpop.f32.mrb[0].mxu0
        %v1963 = vpop.f32.mrb[0].mxu0
        %1964 = vdwg.mxu0
        %1965 = vxpose.xlu0.c.b16.start [1/8] %v1892, 128
        %1966 = vxpose.xlu0.c.b16.cont [2/8] %v1893, 128
        %1967 = vxpose.xlu0.c.b16.cont [3/8] %v1894, 128
        %1968 = vxpose.xlu0.c.b16.cont [4/8] 0, 128
        %1969 = vxpose.xlu0.c.b16.cont [5/8] 0, 128
        %1970 = vxpose.xlu0.c.b16.cont [6/8] 0, 128
        %1971 = vxpose.xlu0.c.b16.cont [7/8] 0, 128
        %1972 = vxpose.xlu0.c.b16.end [8/8] 0, 128
        %v1973 = vpop.trf.xlu0
        %v1974 = vpop.trf.xlu0
        %v1975 = vpop.trf.xlu0
        %v1976 = vpop.trf.xlu0
        %v1977 = vpop.trf.xlu0
        %v1978 = vpop.trf.xlu0
        %v1979 = vpop.trf.xlu0
        %v1980 = vpop.trf.xlu0
        %v1982 = vsel %vm1917, %v1973, 0
        %v1985 = vsel %vm1921, %v1900, 0
        %1987 = vmatprep.subr.bf16.mxu0 0
        %1988 = vmatpush1.bf16.msra.mxu0 %v1898
        %1989 = vmatprep.subr.bf16.mxu0 0
        %1990 = vmatpush1.bf16.msra.mxu0 %v1899
        %1991 = vmatprep.subr.bf16.mxu0 0
        %1992 = vmatpush1.bf16.msra.mxu0 %v1985
        %1993 = vmatprep.subr.bf16.mxu0 0
        %1994 = vmatpush1.bf16.msra.mxu0 0
        %1995 = vmatprep.subr.bf16.mxu0 0
        %1996 = vmatpush1.bf16.msra.mxu0 0
        %1997 = vmatprep.subr.bf16.mxu0 0
        %1998 = vmatpush1.bf16.msra.mxu0 0
        %1999 = vmatprep.subr.bf16.mxu0 0
        %2000 = vmatpush1.bf16.msra.mxu0 0
        %2001 = vmatprep.subr.bf16.mxu0 0
        %2002 = vmatpush1.bf16.msra.mxu0 0
        %2003 = vmatprep.subr.bf16.mxu0 0
        %2004 = vmatpush1.bf16.msra.mxu0 0
        %2005 = vmatprep.subr.bf16.mxu0 0
        %2006 = vmatpush1.bf16.msra.mxu0 0
        %2007 = vmatprep.subr.bf16.mxu0 0
        %2008 = vmatpush1.bf16.msra.mxu0 0
        %2009 = vmatprep.subr.bf16.mxu0 0
        %2010 = vmatpush1.bf16.msra.mxu0 0
        %2011 = vmatprep.subr.bf16.mxu0 0
        %2012 = vmatpush1.bf16.msra.mxu0 0
        %2013 = vmatprep.subr.bf16.mxu0 0
        %2014 = vmatpush1.bf16.msra.mxu0 0
        %2015 = vmatprep.subr.bf16.mxu0 0
        %2016 = vmatpush1.bf16.msra.mxu0 0
        %2017 = vmatprep.subr.bf16.mxu0 0
        %2018 = vmatpush1.bf16.msra.mxu0 0
        %2019 = vmatprep.mubr.bf16.mxu0 0
        %2020 = vmatmul.mubr.bf16.gmra.mrb[0].mxu0 %v1982
        %v2021 = vpop.f32.mrb[0].mxu0
        %v2022 = vadd.f32 0.0, %v2021
        %v2023 = vpop.f32.mrb[0].mxu0
        %v2024 = vpop.f32.mrb[0].mxu0
        %v2025 = vpop.f32.mrb[0].mxu0
        %2026 = vdwg.mxu0
        %2027 = vst.msk [vmem:[%s5] sm:$0xff] %vm1247, %v1960
        %2028 = vst.msk [vmem:[%s5 + $0x8] sm:$0xff] %vm1247, %v2022
      $region48: #{forward.14} parent=39 // pred_fallthru
        _
      // Predicated region
      $region49: #{forward.14} parent=39 // pred_check
        %p2029 = pneg %p149
      $region50: #{forward.14} parent=39 // pred_check_branch
        %2031 = sbr.rel (%p2029) target = $region52
      $region51: #{forward.14} parent=39 // pred_region
        _
      $region52: #{forward.14} parent=39 // pred_fallthru
        _
      // Predicated region
      $region53: #{forward.14} parent=39 // pred_check
        %p2032 = pneg %p149
      $region54: #{forward.14} parent=39 // pred_check_branch
        %2034 = sbr.rel (%p2032) target = $region56
      $region55: #{forward.14} parent=39 // pred_region
        _
      $region56: #{forward.14} parent=39 // pred_fallthru
        _
    $region40: #{forward.14} parent=5 // pred_fallthru
      _
    %p2035 = scmp.le.s32.totalorder 2, %s11
    // Predicated region
    $region57: #{forward.14} parent=5 // pred_check
      %p2036 = pneg %p2035
    $region58: #{forward.14} parent=5 // pred_check_branch
      %2038 = sbr.rel (%p2036) target = $region60
    $region59: #{forward.14} parent=5 // pred_region
      %s2039 = ssub.s32 %s11, 2
    $region60: #{forward.14} parent=5 // pred_fallthru
      _
  $region6: #{forward.14} parent=0 // loop_footer
    %s15 = sadd.s32 1, %s11
  $region7: #{forward.14} parent=0 // loop_footer_branch
    %10 = sbr.rel target = $region3
  $region8: #{forward.14} parent=0 // loop_exit
    _

// kernel: closed_call.6
$region0: #{closed_call.6}
  #allocation0 [shape = 'u32[]', space=smem, size = 0x4, offset = 0x4, fixed_abs, tag = 'smem constant byte address 0x4 - core index']
  #allocation1 [shape = 'u32[144,128]{1,0:T(1,128)}', space=vmem, size = 0x12000, scoped, tag = 'internal scratch']
  %s0 = inlined_call_operand.vmem [shape: f32[2,38,32], index: 0, kind: input, shape index: {}]
  %s1 = inlined_call_operand.vmem [shape: bf16[32,96], index: 1, kind: input, shape index: {}]
  %s2 = inlined_call_operand.vmem [shape: f32[1,96], index: 2, kind: input, shape index: {}]
  %s3 = inlined_call_operand.vmem [shape: bf16[32,32], index: 3, kind: input, shape index: {}]
  %s4 = inlined_call_operand.vmem [shape: f32[1,32], index: 4, kind: input, shape index: {}]
  %s5 = inlined_call_operand.vmem [shape: f32[1,32], index: 5, kind: input, shape index: {}]
  %s6 = inlined_call_operand.vmem [shape: f32[1,32], index: 6, kind: input, shape index: {}]
  %s7 = inlined_call_operand.vmem [shape: bf16[32,64], index: 7, kind: input, shape index: {}]
  %s8 = inlined_call_operand.vmem [shape: f32[1,64], index: 8, kind: input, shape index: {}]
  %s9 = inlined_call_operand.vmem [shape: bf16[64,32], index: 9, kind: input, shape index: {}]
  %s10 = inlined_call_operand.vmem [shape: f32[1,32], index: 10, kind: input, shape index: {}]
  %s11 = inlined_call_operand.vmem [shape: f32[1,32], index: 11, kind: input, shape index: {}]
  %s12 = inlined_call_operand.vmem [shape: f32[1,32], index: 12, kind: input, shape index: {}]
  %s13 = inlined_call_operand.vmem [shape: f32[2,38,32], index: 13, kind: output, shape index: {}]
  %s14 = sld [smem:[#allocation0]]
  $region62: #{closed_call.6} parent=0
    _
  %s16 = ssub.s32 1, %s14
  %s17 = scalar_select 0, %s16, %s14
  // Predicated region
  $region2: #{closed_call.6} parent=0 // pred_check
    _
  $region3: #{closed_call.6} parent=0 // pred_check_branch
    %19 = sbr.rel (0) target = $region5
  $region4: #{closed_call.6} parent=0 // pred_region
    _
  $region5: #{closed_call.6} parent=0 // pred_fallthru
    _
  // Predicated region
  $region6: #{closed_call.6} parent=0 // pred_check
    _
  $region7: #{closed_call.6} parent=0 // pred_check_branch
    %21 = sbr.rel (0) target = $region9
  $region8: #{closed_call.6} parent=0 // pred_region
    _
  $region9: #{closed_call.6} parent=0 // pred_fallthru
    _
  // Predicated region
  $region10: #{closed_call.6} parent=0 // pred_check
    _
  $region11: #{closed_call.6} parent=0 // pred_check_branch
    %23 = sbr.rel (0) target = $region13
  $region12: #{closed_call.6} parent=0 // pred_region
    _
  $region13: #{closed_call.6} parent=0 // pred_fallthru
    _
  // Predicated region
  $region14: #{closed_call.6} parent=0 // pred_check
    _
  $region15: #{closed_call.6} parent=0 // pred_check_branch
    %25 = sbr.rel (0) target = $region17
  $region16: #{closed_call.6} parent=0 // pred_region
    _
  $region17: #{closed_call.6} parent=0 // pred_fallthru
    _
  // Predicated region
  $region18: #{closed_call.6} parent=0 // pred_check
    _
  $region19: #{closed_call.6} parent=0 // pred_check_branch
    %27 = sbr.rel (0) target = $region21
  $region20: #{closed_call.6} parent=0 // pred_region
    _
  $region21: #{closed_call.6} parent=0 // pred_fallthru
    _
  // Predicated region
  $region22: #{closed_call.6} parent=0 // pred_check
    _
  $region23: #{closed_call.6} parent=0 // pred_check_branch
    %29 = sbr.rel (0) target = $region25
  $region24: #{closed_call.6} parent=0 // pred_region
    _
  $region25: #{closed_call.6} parent=0 // pred_fallthru
    _
  // Predicated region
  $region26: #{closed_call.6} parent=0 // pred_check
    _
  $region27: #{closed_call.6} parent=0 // pred_check_branch
    %31 = sbr.rel (0) target = $region29
  $region28: #{closed_call.6} parent=0 // pred_region
    _
  $region29: #{closed_call.6} parent=0 // pred_fallthru
    _
  // Predicated region
  $region30: #{closed_call.6} parent=0 // pred_check
    _
  $region31: #{closed_call.6} parent=0 // pred_check_branch
    %33 = sbr.rel (0) target = $region33
  $region32: #{closed_call.6} parent=0 // pred_region
    _
  $region33: #{closed_call.6} parent=0 // pred_fallthru
    _
  // Predicated region
  $region34: #{closed_call.6} parent=0 // pred_check
    _
  $region35: #{closed_call.6} parent=0 // pred_check_branch
    %35 = sbr.rel (0) target = $region37
  $region36: #{closed_call.6} parent=0 // pred_region
    _
  $region37: #{closed_call.6} parent=0 // pred_fallthru
    _
  // Predicated region
  $region38: #{closed_call.6} parent=0 // pred_check
    _
  $region39: #{closed_call.6} parent=0 // pred_check_branch
    %37 = sbr.rel (0) target = $region41
  $region40: #{closed_call.6} parent=0 // pred_region
    _
  $region41: #{closed_call.6} parent=0 // pred_fallthru
    _
  // Predicated region
  $region42: #{closed_call.6} parent=0 // pred_check
    _
  $region43: #{closed_call.6} parent=0 // pred_check_branch
    %39 = sbr.rel (0) target = $region45
  $region44: #{closed_call.6} parent=0 // pred_region
    _
  $region45: #{closed_call.6} parent=0 // pred_fallthru
    _
  // Predicated region
  $region46: #{closed_call.6} parent=0 // pred_check
    _
  $region47: #{closed_call.6} parent=0 // pred_check_branch
    %41 = sbr.rel (0) target = $region49
  $region48: #{closed_call.6} parent=0 // pred_region
    _
  $region49: #{closed_call.6} parent=0 // pred_fallthru
    _
  // Predicated region
  $region50: #{closed_call.6} parent=0 // pred_check
    _
  $region51: #{closed_call.6} parent=0 // pred_check_branch
    %43 = sbr.rel (0) target = $region53
  $region52: #{closed_call.6} parent=0 // pred_region
    _
  $region53: #{closed_call.6} parent=0 // pred_fallthru
    _
  %v45 = vld [vmem:[%s0] sm:$0xff]
  %v46 = vld [vmem:[%s0 + $0x8] sm:$0xff]
  %v47 = vld [vmem:[%s0 + $0x10] sm:$0xff]
  %v48 = vld [vmem:[%s0 + $0x18] sm:$0xff]
  %v49 = vld [vmem:[%s0 + $0x20] sm:$0x3f]
  %v50 = vld [vmem:[%s0 + $0x28] sm:$0xff]
  %v51 = vld [vmem:[%s0 + $0x30] sm:$0xff]
  %v52 = vld [vmem:[%s0 + $0x38] sm:$0xff]
  %v53 = vld [vmem:[%s0 + $0x40] sm:$0xff]
  %v54 = vld [vmem:[%s0 + $0x48] sm:$0x3f]
  %v65 = vcombine.high %v45, %v45
  %v67 = vunpack.c.l.s4 1983009808
  %v68 = vunpack.c.0.s8 %v67
  %v69 = vlaneseq
  %v70 = vshrl.u32 %v69, 7
  %v71 = vsub.s32 %v68, %v70
  %v72 = vrot.slane %v45, %v71
  %v74 = vunpack.c.l.s4 1983009808
  %v75 = vunpack.c.0.s8 %v74
  %v76 = vlaneseq
  %v77 = vshrl.u32 %v76, 7
  %v78 = vsub.s32 %v75, %v77
  %v79 = vrot.slane %v65, %v78
  %v80 = vcombine.high %v72, %v72
  %v81 = vcombine.high %v79, %v79
  %v82 = vcombine.high %v46, %v46
  %v84 = vunpack.c.l.s4 1983009808
  %v85 = vunpack.c.0.s8 %v84
  %v86 = vlaneseq
  %v87 = vshrl.u32 %v86, 7
  %v88 = vsub.s32 %v85, %v87
  %v89 = vrot.slane %v46, %v88
  %v91 = vunpack.c.l.s4 1983009808
  %v92 = vunpack.c.0.s8 %v91
  %v93 = vlaneseq
  %v94 = vshrl.u32 %v93, 7
  %v95 = vsub.s32 %v92, %v94
  %v96 = vrot.slane %v82, %v95
  %v97 = vcombine.high %v89, %v89
  %v98 = vcombine.high %v96, %v96
  %v99 = vcombine.high %v47, %v47
  %v101 = vunpack.c.l.s4 1983009808
  %v102 = vunpack.c.0.s8 %v101
  %v103 = vlaneseq
  %v104 = vshrl.u32 %v103, 7
  %v105 = vsub.s32 %v102, %v104
  %v106 = vrot.slane %v47, %v105
  %v108 = vunpack.c.l.s4 1983009808
  %v109 = vunpack.c.0.s8 %v108
  %v110 = vlaneseq
  %v111 = vshrl.u32 %v110, 7
  %v112 = vsub.s32 %v109, %v111
  %v113 = vrot.slane %v99, %v112
  %v114 = vcombine.high %v106, %v106
  %v115 = vcombine.high %v113, %v113
  %v116 = vcombine.high %v48, %v48
  %v118 = vunpack.c.l.s4 1983009808
  %v119 = vunpack.c.0.s8 %v118
  %v120 = vlaneseq
  %v121 = vshrl.u32 %v120, 7
  %v122 = vsub.s32 %v119, %v121
  %v123 = vrot.slane %v48, %v122
  %v125 = vunpack.c.l.s4 1983009808
  %v126 = vunpack.c.0.s8 %v125
  %v127 = vlaneseq
  %v128 = vshrl.u32 %v127, 7
  %v129 = vsub.s32 %v126, %v128
  %v130 = vrot.slane %v116, %v129
  %v131 = vcombine.high %v123, %v123
  %v132 = vcombine.high %v130, %v130
  %v133 = vcombine.high %v49, %v49
  %v135 = vunpack.c.l.s4 1983009808
  %v136 = vunpack.c.0.s8 %v135
  %v137 = vlaneseq
  %v138 = vshrl.u32 %v137, 7
  %v139 = vsub.s32 %v136, %v138
  %v140 = vrot.slane %v49, %v139
  %v142 = vunpack.c.l.s4 1983009808
  %v143 = vunpack.c.0.s8 %v142
  %v144 = vlaneseq
  %v145 = vshrl.u32 %v144, 7
  %v146 = vsub.s32 %v143, %v145
  %v147 = vrot.slane %v133, %v146
  %v148 = vcombine.high %v140, %v140
  %v149 = vcombine.high %v50, %v50
  %v151 = vunpack.c.l.s4 1983009808
  %v152 = vunpack.c.0.s8 %v151
  %v153 = vlaneseq
  %v154 = vshrl.u32 %v153, 7
  %v155 = vsub.s32 %v152, %v154
  %v156 = vrot.slane %v50, %v155
  %v158 = vunpack.c.l.s4 1983009808
  %v159 = vunpack.c.0.s8 %v158
  %v160 = vlaneseq
  %v161 = vshrl.u32 %v160, 7
  %v162 = vsub.s32 %v159, %v161
  %v163 = vrot.slane %v149, %v162
  %v164 = vcombine.high %v156, %v156
  %v165 = vcombine.high %v163, %v163
  %v166 = vcombine.high %v51, %v51
  %v168 = vunpack.c.l.s4 1983009808
  %v169 = vunpack.c.0.s8 %v168
  %v170 = vlaneseq
  %v171 = vshrl.u32 %v170, 7
  %v172 = vsub.s32 %v169, %v171
  %v173 = vrot.slane %v51, %v172
  %v175 = vunpack.c.l.s4 1983009808
  %v176 = vunpack.c.0.s8 %v175
  %v177 = vlaneseq
  %v178 = vshrl.u32 %v177, 7
  %v179 = vsub.s32 %v176, %v178
  %v180 = vrot.slane %v166, %v179
  %v181 = vcombine.high %v173, %v173
  %v182 = vcombine.high %v180, %v180
  %v183 = vcombine.high %v52, %v52
  %v185 = vunpack.c.l.s4 1983009808
  %v186 = vunpack.c.0.s8 %v185
  %v187 = vlaneseq
  %v188 = vshrl.u32 %v187, 7
  %v189 = vsub.s32 %v186, %v188
  %v190 = vrot.slane %v52, %v189
  %v192 = vunpack.c.l.s4 1983009808
  %v193 = vunpack.c.0.s8 %v192
  %v194 = vlaneseq
  %v195 = vshrl.u32 %v194, 7
  %v196 = vsub.s32 %v193, %v195
  %v197 = vrot.slane %v183, %v196
  %v198 = vcombine.high %v190, %v190
  %v199 = vcombine.high %v197, %v197
  %v200 = vcombine.high %v53, %v53
  %v202 = vunpack.c.l.s4 1983009808
  %v203 = vunpack.c.0.s8 %v202
  %v204 = vlaneseq
  %v205 = vshrl.u32 %v204, 7
  %v206 = vsub.s32 %v203, %v205
  %v207 = vrot.slane %v53, %v206
  %v209 = vunpack.c.l.s4 1983009808
  %v210 = vunpack.c.0.s8 %v209
  %v211 = vlaneseq
  %v212 = vshrl.u32 %v211, 7
  %v213 = vsub.s32 %v210, %v212
  %v214 = vrot.slane %v200, %v213
  %v215 = vcombine.high %v207, %v207
  %v216 = vcombine.high %v214, %v214
  %v217 = vcombine.high %v54, %v54
  %v219 = vunpack.c.l.s4 1983009808
  %v220 = vunpack.c.0.s8 %v219
  %v221 = vlaneseq
  %v222 = vshrl.u32 %v221, 7
  %v223 = vsub.s32 %v220, %v222
  %v224 = vrot.slane %v54, %v223
  %v226 = vunpack.c.l.s4 1983009808
  %v227 = vunpack.c.0.s8 %v226
  %v228 = vlaneseq
  %v229 = vshrl.u32 %v228, 7
  %v230 = vsub.s32 %v227, %v229
  %v231 = vrot.slane %v217, %v230
  %v232 = vcombine.high %v224, %v224
  %v271 = vcombine.low %v72, %v80
  %v272 = vcombine.low %v79, %v81
  %v274 = vunpack.c.l.s4 1983009808
  %v275 = vunpack.c.0.s8 %v274
  %v276 = vlaneseq
  %v277 = vshrl.u32 %v276, 7
  %v278 = vsub.s32 %v275, %v277
  %v279 = vrot.slane %v271, %v278
  %v281 = vunpack.c.l.s4 1983009808
  %v282 = vunpack.c.0.s8 %v281
  %v283 = vlaneseq
  %v284 = vshrl.u32 %v283, 7
  %v285 = vsub.s32 %v282, %v284
  %v286 = vrot.slane %v272, %v285
  %v287 = vcombine.low %v279, %v286
  %v288 = vcombine.low %v89, %v97
  %v289 = vcombine.low %v96, %v98
  %v291 = vunpack.c.l.s4 1983009808
  %v292 = vunpack.c.0.s8 %v291
  %v293 = vlaneseq
  %v294 = vshrl.u32 %v293, 7
  %v295 = vsub.s32 %v292, %v294
  %v296 = vrot.slane %v288, %v295
  %v298 = vunpack.c.l.s4 1983009808
  %v299 = vunpack.c.0.s8 %v298
  %v300 = vlaneseq
  %v301 = vshrl.u32 %v300, 7
  %v302 = vsub.s32 %v299, %v301
  %v303 = vrot.slane %v289, %v302
  %v304 = vcombine.low %v296, %v303
  %v305 = vcombine.low %v106, %v114
  %v306 = vcombine.low %v113, %v115
  %v308 = vunpack.c.l.s4 1983009808
  %v309 = vunpack.c.0.s8 %v308
  %v310 = vlaneseq
  %v311 = vshrl.u32 %v310, 7
  %v312 = vsub.s32 %v309, %v311
  %v313 = vrot.slane %v305, %v312
  %v315 = vunpack.c.l.s4 1983009808
  %v316 = vunpack.c.0.s8 %v315
  %v317 = vlaneseq
  %v318 = vshrl.u32 %v317, 7
  %v319 = vsub.s32 %v316, %v318
  %v320 = vrot.slane %v306, %v319
  %v321 = vcombine.low %v313, %v320
  %v322 = vcombine.low %v123, %v131
  %v323 = vcombine.low %v130, %v132
  %v325 = vunpack.c.l.s4 1983009808
  %v326 = vunpack.c.0.s8 %v325
  %v327 = vlaneseq
  %v328 = vshrl.u32 %v327, 7
  %v329 = vsub.s32 %v326, %v328
  %v330 = vrot.slane %v322, %v329
  %v332 = vunpack.c.l.s4 1983009808
  %v333 = vunpack.c.0.s8 %v332
  %v334 = vlaneseq
  %v335 = vshrl.u32 %v334, 7
  %v336 = vsub.s32 %v333, %v335
  %v337 = vrot.slane %v323, %v336
  %v338 = vcombine.low %v330, %v337
  %v339 = vcombine.low %v140, %v148
  %v340 = vcombine.low %v147, %v156
  %v342 = vunpack.c.l.s4 1983009808
  %v343 = vunpack.c.0.s8 %v342
  %v344 = vlaneseq
  %v345 = vshrl.u32 %v344, 7
  %v346 = vsub.s32 %v343, %v345
  %v347 = vrot.slane %v339, %v346
  %v349 = vunpack.c.l.s4 1983009808
  %v350 = vunpack.c.0.s8 %v349
  %v351 = vlaneseq
  %v352 = vshrl.u32 %v351, 7
  %v353 = vsub.s32 %v350, %v352
  %v354 = vrot.slane %v340, %v353
  %v355 = vcombine.low %v347, %v354
  %v356 = vcombine.low %v164, %v163
  %v357 = vcombine.low %v165, %v173
  %v359 = vunpack.c.l.s4 1983009808
  %v360 = vunpack.c.0.s8 %v359
  %v361 = vlaneseq
  %v362 = vshrl.u32 %v361, 7
  %v363 = vsub.s32 %v360, %v362
  %v364 = vrot.slane %v356, %v363
  %v366 = vunpack.c.l.s4 1983009808
  %v367 = vunpack.c.0.s8 %v366
  %v368 = vlaneseq
  %v369 = vshrl.u32 %v368, 7
  %v370 = vsub.s32 %v367, %v369
  %v371 = vrot.slane %v357, %v370
  %v372 = vcombine.low %v364, %v371
  %v373 = vcombine.low %v181, %v180
  %v374 = vcombine.low %v182, %v190
  %v376 = vunpack.c.l.s4 1983009808
  %v377 = vunpack.c.0.s8 %v376
  %v378 = vlaneseq
  %v379 = vshrl.u32 %v378, 7
  %v380 = vsub.s32 %v377, %v379
  %v381 = vrot.slane %v373, %v380
  %v383 = vunpack.c.l.s4 1983009808
  %v384 = vunpack.c.0.s8 %v383
  %v385 = vlaneseq
  %v386 = vshrl.u32 %v385, 7
  %v387 = vsub.s32 %v384, %v386
  %v388 = vrot.slane %v374, %v387
  %v389 = vcombine.low %v381, %v388
  %v390 = vcombine.low %v198, %v197
  %v391 = vcombine.low %v199, %v207
  %v393 = vunpack.c.l.s4 1983009808
  %v394 = vunpack.c.0.s8 %v393
  %v395 = vlaneseq
  %v396 = vshrl.u32 %v395, 7
  %v397 = vsub.s32 %v394, %v396
  %v398 = vrot.slane %v390, %v397
  %v400 = vunpack.c.l.s4 1983009808
  %v401 = vunpack.c.0.s8 %v400
  %v402 = vlaneseq
  %v403 = vshrl.u32 %v402, 7
  %v404 = vsub.s32 %v401, %v403
  %v405 = vrot.slane %v391, %v404
  %v406 = vcombine.low %v398, %v405
  %v407 = vcombine.low %v215, %v214
  %v408 = vcombine.low %v216, %v224
  %v410 = vunpack.c.l.s4 1983009808
  %v411 = vunpack.c.0.s8 %v410
  %v412 = vlaneseq
  %v413 = vshrl.u32 %v412, 7
  %v414 = vsub.s32 %v411, %v413
  %v415 = vrot.slane %v407, %v414
  %v417 = vunpack.c.l.s4 1983009808
  %v418 = vunpack.c.0.s8 %v417
  %v419 = vlaneseq
  %v420 = vshrl.u32 %v419, 7
  %v421 = vsub.s32 %v418, %v420
  %v422 = vrot.slane %v408, %v421
  %v423 = vcombine.low %v415, %v422
  %v424 = vcombine.low %v232, %v231
  %v426 = vunpack.c.l.s4 1983009808
  %v427 = vunpack.c.0.s8 %v426
  %v428 = vlaneseq
  %v429 = vshrl.u32 %v428, 7
  %v430 = vsub.s32 %v427, %v429
  %v431 = vrot.slane %v424, %v430
  %v442 = vpack.c.bf16 %v304, %v287
  %v443 = vpack.c.bf16 %v338, %v321
  %v444 = vpack.c.bf16 %v372, %v355
  %v445 = vpack.c.bf16 %v406, %v389
  %v446 = vpack.c.bf16 %v431, %v423
  %v447 = vld [vmem:[%s1] sm:$0xf]
  %v448 = vld [vmem:[%s1 + $0x4] sm:$0xf]
  %v449 = vld [vmem:[%s1 + $0x8] sm:$0xf]
  %v450 = vld [vmem:[%s1 + $0xc] sm:$0xf]
  %v451 = vld [vmem:[%s2] sm:$0x1]
  %v453 = vlaneseq
  %v454 = vshrl.u32 %v453, 7
  %v455 = vsub.s32 0, %v454
  %v456 = vrot.slane %v451, %v455
  %v462 = vunpack.c.l.b16 %v447
  %v463 = vunpack.c.l.b16 %v448
  %v464 = vunpack.c.l.b16 %v449
  %v465 = vunpack.c.l.b16 %v450
  %v466 = vpack.c.b16 %v463, %v462
  %v467 = vpack.c.b16 %v465, %v464
  %vm470 = vcmask 261120
  %v472 = vsel %vm470, %v442, 0
  %v475 = vsel %vm470, %v443, 0
  %v478 = vsel %vm470, %v444, 0
  %v481 = vsel %vm470, %v445, 0
  %v484 = vsel %vm470, %v446, 0
  %486 = vmatprep.subr.bf16.mxu0 0
  %487 = vmatpush1.bf16.msra.mxu0 %v466
  %488 = vmatprep.subr.bf16.mxu0 0
  %489 = vmatpush1.bf16.msra.mxu0 %v467
  %490 = vmatprep.subr.bf16.mxu0 0
  %491 = vmatpush1.bf16.msra.mxu0 0
  %492 = vmatprep.subr.bf16.mxu0 0
  %493 = vmatpush1.bf16.msra.mxu0 0
  %494 = vmatprep.subr.bf16.mxu0 0
  %495 = vmatpush1.bf16.msra.mxu0 0
  %496 = vmatprep.subr.bf16.mxu0 0
  %497 = vmatpush1.bf16.msra.mxu0 0
  %498 = vmatprep.subr.bf16.mxu0 0
  %499 = vmatpush1.bf16.msra.mxu0 0
  %500 = vmatprep.subr.bf16.mxu0 0
  %501 = vmatpush1.bf16.msra.mxu0 0
  %502 = vmatprep.subr.bf16.mxu0 0
  %503 = vmatpush1.bf16.msra.mxu0 0
  %504 = vmatprep.subr.bf16.mxu0 0
  %505 = vmatpush1.bf16.msra.mxu0 0
  %506 = vmatprep.subr.bf16.mxu0 0
  %507 = vmatpush1.bf16.msra.mxu0 0
  %508 = vmatprep.subr.bf16.mxu0 0
  %509 = vmatpush1.bf16.msra.mxu0 0
  %510 = vmatprep.subr.bf16.mxu0 0
  %511 = vmatpush1.bf16.msra.mxu0 0
  %512 = vmatprep.subr.bf16.mxu0 0
  %513 = vmatpush1.bf16.msra.mxu0 0
  %514 = vmatprep.subr.bf16.mxu0 0
  %515 = vmatpush1.bf16.msra.mxu0 0
  %516 = vmatprep.subr.bf16.mxu0 0
  %517 = vmatpush1.bf16.msra.mxu0 0
  %518 = vmatprep.mubr.bf16.mxu0 0
  %519 = vmatmul.mubr.bf16.gmra.mrb[0].mxu0 %v472
  %v520 = vpop.f32.mrb[0].mxu0
  %v521 = vadd.f32 %v456, %v520
  %v522 = vpop.f32.mrb[0].mxu0
  %v523 = vpop.f32.mrb[0].mxu0
  %v524 = vadd.f32 %v456, %v523
  %v525 = vpop.f32.mrb[0].mxu0
  %526 = vmatprep.mubr.bf16.mxu0 0
  %527 = vmatmul.mubr.bf16.gmra.mrb[0].mxu0 %v475
  %v528 = vpop.f32.mrb[0].mxu0
  %v529 = vadd.f32 %v456, %v528
  %v530 = vpop.f32.mrb[0].mxu0
  %v531 = vpop.f32.mrb[0].mxu0
  %v532 = vadd.f32 %v456, %v531
  %v533 = vpop.f32.mrb[0].mxu0
  %534 = vmatprep.mubr.bf16.mxu0 0
  %535 = vmatmul.mubr.bf16.gmra.mrb[0].mxu0 %v478
  %v536 = vpop.f32.mrb[0].mxu0
  %v537 = vadd.f32 %v456, %v536
  %v538 = vpop.f32.mrb[0].mxu0
  %v539 = vpop.f32.mrb[0].mxu0
  %v540 = vadd.f32 %v456, %v539
  %v541 = vpop.f32.mrb[0].mxu0
  %542 = vmatprep.mubr.bf16.mxu0 0
  %543 = vmatmul.mubr.bf16.gmra.mrb[0].mxu0 %v481
  %v544 = vpop.f32.mrb[0].mxu0
  %v545 = vadd.f32 %v456, %v544
  %v546 = vpop.f32.mrb[0].mxu0
  %v547 = vpop.f32.mrb[0].mxu0
  %v548 = vadd.f32 %v456, %v547
  %v549 = vpop.f32.mrb[0].mxu0
  %550 = vmatprep.mubr.bf16.mxu0 0
  %551 = vmatmul.mubr.bf16.gmra.mrb[0].mxu0 %v484
  %v552 = vpop.f32.mrb[0].mxu0
  %v553 = vadd.f32 %v456, %v552
  %v554 = vpop.f32.mrb[0].mxu0
  %v555 = vpop.f32.mrb[0].mxu0
  %v556 = vadd.f32 %v456, %v555
  %v557 = vpop.f32.mrb[0].mxu0
  %558 = vdwg.mxu0
  %v559 = vmul.f32 %v521, 0.35355338
  %v560 = vmul.f32 %v524, 0.35355338
  %v561 = vmul.f32 %v529, 0.35355338
  %v562 = vmul.f32 %v532, 0.35355338
  %v563 = vmul.f32 %v537, 0.35355338
  %v564 = vmul.f32 %v540, 0.35355338
  %v565 = vmul.f32 %v545, 0.35355338
  %v566 = vmul.f32 %v548, 0.35355338
  %v567 = vmul.f32 %v553, 0.35355338
  %v568 = vmul.f32 %v556, 0.35355338
  %v579 = vcombine.high %v559, %v559
  %v581 = vunpack.c.l.s4 1983009808
  %v582 = vunpack.c.0.s8 %v581
  %v583 = vlaneseq
  %v584 = vshrl.u32 %v583, 7
  %v585 = vsub.s32 %v582, %v584
  %v586 = vrot.slane %v559, %v585
  %v588 = vunpack.c.l.s4 1983009808
  %v589 = vunpack.c.0.s8 %v588
  %v590 = vlaneseq
  %v591 = vshrl.u32 %v590, 7
  %v592 = vsub.s32 %v589, %v591
  %v593 = vrot.slane %v579, %v592
  %v594 = vcombine.high %v586, %v586
  %v595 = vcombine.high %v593, %v593
  %v596 = vcombine.high %v560, %v560
  %v598 = vunpack.c.l.s4 1983009808
  %v599 = vunpack.c.0.s8 %v598
  %v600 = vlaneseq
  %v601 = vshrl.u32 %v600, 7
  %v602 = vsub.s32 %v599, %v601
  %v603 = vrot.slane %v560, %v602
  %v605 = vunpack.c.l.s4 1983009808
  %v606 = vunpack.c.0.s8 %v605
  %v607 = vlaneseq
  %v608 = vshrl.u32 %v607, 7
  %v609 = vsub.s32 %v606, %v608
  %v610 = vrot.slane %v596, %v609
  %v611 = vcombine.high %v603, %v603
  %v612 = vcombine.high %v610, %v610
  %v613 = vcombine.high %v561, %v561
  %v615 = vunpack.c.l.s4 1983009808
  %v616 = vunpack.c.0.s8 %v615
  %v617 = vlaneseq
  %v618 = vshrl.u32 %v617, 7
  %v619 = vsub.s32 %v616, %v618
  %v620 = vrot.slane %v561, %v619
  %v622 = vunpack.c.l.s4 1983009808
  %v623 = vunpack.c.0.s8 %v622
  %v624 = vlaneseq
  %v625 = vshrl.u32 %v624, 7
  %v626 = vsub.s32 %v623, %v625
  %v627 = vrot.slane %v613, %v626
  %v628 = vcombine.high %v620, %v620
  %v629 = vcombine.high %v627, %v627
  %v630 = vcombine.high %v562, %v562
  %v632 = vunpack.c.l.s4 1983009808
  %v633 = vunpack.c.0.s8 %v632
  %v634 = vlaneseq
  %v635 = vshrl.u32 %v634, 7
  %v636 = vsub.s32 %v633, %v635
  %v637 = vrot.slane %v562, %v636
  %v639 = vunpack.c.l.s4 1983009808
  %v640 = vunpack.c.0.s8 %v639
  %v641 = vlaneseq
  %v642 = vshrl.u32 %v641, 7
  %v643 = vsub.s32 %v640, %v642
  %v644 = vrot.slane %v630, %v643
  %v645 = vcombine.high %v637, %v637
  %v646 = vcombine.high %v644, %v644
  %v647 = vcombine.high %v563, %v563
  %v649 = vunpack.c.l.s4 1983009808
  %v650 = vunpack.c.0.s8 %v649
  %v651 = vlaneseq
  %v652 = vshrl.u32 %v651, 7
  %v653 = vsub.s32 %v650, %v652
  %v654 = vrot.slane %v563, %v653
  %v656 = vunpack.c.l.s4 1983009808
  %v657 = vunpack.c.0.s8 %v656
  %v658 = vlaneseq
  %v659 = vshrl.u32 %v658, 7
  %v660 = vsub.s32 %v657, %v659
  %v661 = vrot.slane %v647, %v660
  %v662 = vcombine.high %v654, %v654
  %v663 = vcombine.high %v661, %v661
  %v664 = vcombine.high %v564, %v564
  %v666 = vunpack.c.l.s4 1983009808
  %v667 = vunpack.c.0.s8 %v666
  %v668 = vlaneseq
  %v669 = vshrl.u32 %v668, 7
  %v670 = vsub.s32 %v667, %v669
  %v671 = vrot.slane %v564, %v670
  %v673 = vunpack.c.l.s4 1983009808
  %v674 = vunpack.c.0.s8 %v673
  %v675 = vlaneseq
  %v676 = vshrl.u32 %v675, 7
  %v677 = vsub.s32 %v674, %v676
  %v678 = vrot.slane %v664, %v677
  %v679 = vcombine.high %v671, %v671
  %v680 = vcombine.high %v678, %v678
  %v681 = vcombine.high %v565, %v565
  %v683 = vunpack.c.l.s4 1983009808
  %v684 = vunpack.c.0.s8 %v683
  %v685 = vlaneseq
  %v686 = vshrl.u32 %v685, 7
  %v687 = vsub.s32 %v684, %v686
  %v688 = vrot.slane %v565, %v687
  %v690 = vunpack.c.l.s4 1983009808
  %v691 = vunpack.c.0.s8 %v690
  %v692 = vlaneseq
  %v693 = vshrl.u32 %v692, 7
  %v694 = vsub.s32 %v691, %v693
  %v695 = vrot.slane %v681, %v694
  %v696 = vcombine.high %v688, %v688
  %v697 = vcombine.high %v695, %v695
  %v698 = vcombine.high %v566, %v566
  %v700 = vunpack.c.l.s4 1983009808
  %v701 = vunpack.c.0.s8 %v700
  %v702 = vlaneseq
  %v703 = vshrl.u32 %v702, 7
  %v704 = vsub.s32 %v701, %v703
  %v705 = vrot.slane %v566, %v704
  %v707 = vunpack.c.l.s4 1983009808
  %v708 = vunpack.c.0.s8 %v707
  %v709 = vlaneseq
  %v710 = vshrl.u32 %v709, 7
  %v711 = vsub.s32 %v708, %v710
  %v712 = vrot.slane %v698, %v711
  %v713 = vcombine.high %v705, %v705
  %v714 = vcombine.high %v712, %v712
  %v715 = vcombine.high %v567, %v567
  %v717 = vunpack.c.l.s4 1983009808
  %v718 = vunpack.c.0.s8 %v717
  %v719 = vlaneseq
  %v720 = vshrl.u32 %v719, 7
  %v721 = vsub.s32 %v718, %v720
  %v722 = vrot.slane %v567, %v721
  %v724 = vunpack.c.l.s4 1983009808
  %v725 = vunpack.c.0.s8 %v724
  %v726 = vlaneseq
  %v727 = vshrl.u32 %v726, 7
  %v728 = vsub.s32 %v725, %v727
  %v729 = vrot.slane %v715, %v728
  %v730 = vcombine.high %v722, %v722
  %v731 = vcombine.high %v729, %v729
  %v733 = vunpack.c.l.s4 1983009808
  %v734 = vunpack.c.0.s8 %v733
  %v735 = vlaneseq
  %v736 = vshrl.u32 %v735, 7
  %v737 = vsub.s32 %v734, %v736
  %v738 = vrot.slane %v568, %v737
  %v739 = vcombine.high %v738, %v738
  %v750 = vcombine.high %v521, %v521
  %v752 = vunpack.c.l.s4 1983009808
  %v753 = vunpack.c.0.s8 %v752
  %v754 = vlaneseq
  %v755 = vshrl.u32 %v754, 7
  %v756 = vsub.s32 %v753, %v755
  %v757 = vrot.slane %v521, %v756
  %v759 = vunpack.c.l.s4 1983009808
  %v760 = vunpack.c.0.s8 %v759
  %v761 = vlaneseq
  %v762 = vshrl.u32 %v761, 7
  %v763 = vsub.s32 %v760, %v762
  %v764 = vrot.slane %v750, %v763
  %v765 = vcombine.high %v757, %v757
  %v766 = vcombine.high %v764, %v764
  %v767 = vcombine.high %v524, %v524
  %v769 = vunpack.c.l.s4 1983009808
  %v770 = vunpack.c.0.s8 %v769
  %v771 = vlaneseq
  %v772 = vshrl.u32 %v771, 7
  %v773 = vsub.s32 %v770, %v772
  %v774 = vrot.slane %v524, %v773
  %v776 = vunpack.c.l.s4 1983009808
  %v777 = vunpack.c.0.s8 %v776
  %v778 = vlaneseq
  %v779 = vshrl.u32 %v778, 7
  %v780 = vsub.s32 %v777, %v779
  %v781 = vrot.slane %v767, %v780
  %v782 = vcombine.high %v774, %v774
  %v783 = vcombine.high %v781, %v781
  %v784 = vcombine.high %v529, %v529
  %v786 = vunpack.c.l.s4 1983009808
  %v787 = vunpack.c.0.s8 %v786
  %v788 = vlaneseq
  %v789 = vshrl.u32 %v788, 7
  %v790 = vsub.s32 %v787, %v789
  %v791 = vrot.slane %v529, %v790
  %v793 = vunpack.c.l.s4 1983009808
  %v794 = vunpack.c.0.s8 %v793
  %v795 = vlaneseq
  %v796 = vshrl.u32 %v795, 7
  %v797 = vsub.s32 %v794, %v796
  %v798 = vrot.slane %v784, %v797
  %v799 = vcombine.high %v791, %v791
  %v800 = vcombine.high %v798, %v798
  %v801 = vcombine.high %v532, %v532
  %v803 = vunpack.c.l.s4 1983009808
  %v804 = vunpack.c.0.s8 %v803
  %v805 = vlaneseq
  %v806 = vshrl.u32 %v805, 7
  %v807 = vsub.s32 %v804, %v806
  %v808 = vrot.slane %v532, %v807
  %v810 = vunpack.c.l.s4 1983009808
  %v811 = vunpack.c.0.s8 %v810
  %v812 = vlaneseq
  %v813 = vshrl.u32 %v812, 7
  %v814 = vsub.s32 %v811, %v813
  %v815 = vrot.slane %v801, %v814
  %v816 = vcombine.high %v808, %v808
  %v817 = vcombine.high %v815, %v815
  %v818 = vcombine.high %v537, %v537
  %v820 = vunpack.c.l.s4 1983009808
  %v821 = vunpack.c.0.s8 %v820
  %v822 = vlaneseq
  %v823 = vshrl.u32 %v822, 7
  %v824 = vsub.s32 %v821, %v823
  %v825 = vrot.slane %v537, %v824
  %v827 = vunpack.c.l.s4 1983009808
  %v828 = vunpack.c.0.s8 %v827
  %v829 = vlaneseq
  %v830 = vshrl.u32 %v829, 7
  %v831 = vsub.s32 %v828, %v830
  %v832 = vrot.slane %v818, %v831
  %v833 = vcombine.high %v825, %v825
  %v834 = vcombine.high %v832, %v832
  %v835 = vcombine.high %v540, %v540
  %v837 = vunpack.c.l.s4 1983009808
  %v838 = vunpack.c.0.s8 %v837
  %v839 = vlaneseq
  %v840 = vshrl.u32 %v839, 7
  %v841 = vsub.s32 %v838, %v840
  %v842 = vrot.slane %v540, %v841
  %v844 = vunpack.c.l.s4 1983009808
  %v845 = vunpack.c.0.s8 %v844
  %v846 = vlaneseq
  %v847 = vshrl.u32 %v846, 7
  %v848 = vsub.s32 %v845, %v847
  %v849 = vrot.slane %v835, %v848
  %v850 = vcombine.high %v842, %v842
  %v851 = vcombine.high %v849, %v849
  %v852 = vcombine.high %v545, %v545
  %v854 = vunpack.c.l.s4 1983009808
  %v855 = vunpack.c.0.s8 %v854
  %v856 = vlaneseq
  %v857 = vshrl.u32 %v856, 7
  %v858 = vsub.s32 %v855, %v857
  %v859 = vrot.slane %v545, %v858
  %v861 = vunpack.c.l.s4 1983009808
  %v862 = vunpack.c.0.s8 %v861
  %v863 = vlaneseq
  %v864 = vshrl.u32 %v863, 7
  %v865 = vsub.s32 %v862, %v864
  %v866 = vrot.slane %v852, %v865
  %v867 = vcombine.high %v859, %v859
  %v868 = vcombine.high %v866, %v866
  %v869 = vcombine.high %v548, %v548
  %v871 = vunpack.c.l.s4 1983009808
  %v872 = vunpack.c.0.s8 %v871
  %v873 = vlaneseq
  %v874 = vshrl.u32 %v873, 7
  %v875 = vsub.s32 %v872, %v874
  %v876 = vrot.slane %v548, %v875
  %v878 = vunpack.c.l.s4 1983009808
  %v879 = vunpack.c.0.s8 %v878
  %v880 = vlaneseq
  %v881 = vshrl.u32 %v880, 7
  %v882 = vsub.s32 %v879, %v881
  %v883 = vrot.slane %v869, %v882
  %v884 = vcombine.high %v876, %v876
  %v885 = vcombine.high %v883, %v883
  %v886 = vcombine.high %v553, %v553
  %v888 = vunpack.c.l.s4 1983009808
  %v889 = vunpack.c.0.s8 %v888
  %v890 = vlaneseq
  %v891 = vshrl.u32 %v890, 7
  %v892 = vsub.s32 %v889, %v891
  %v893 = vrot.slane %v553, %v892
  %v895 = vunpack.c.l.s4 1983009808
  %v896 = vunpack.c.0.s8 %v895
  %v897 = vlaneseq
  %v898 = vshrl.u32 %v897, 7
  %v899 = vsub.s32 %v896, %v898
  %v900 = vrot.slane %v886, %v899
  %v901 = vcombine.high %v893, %v893
  %v902 = vcombine.high %v900, %v900
  %v904 = vunpack.c.l.s4 1983009808
  %v905 = vunpack.c.0.s8 %v904
  %v906 = vlaneseq
  %v907 = vshrl.u32 %v906, 7
  %v908 = vsub.s32 %v905, %v907
  %v909 = vrot.slane %v556, %v908
  %v910 = vcombine.high %v909, %v909
  %v911 = vcombine.low %v586, %v594
  %v912 = vcombine.low %v593, %v595
  %v914 = vunpack.c.l.s4 1983009808
  %v915 = vunpack.c.0.s8 %v914
  %v916 = vlaneseq
  %v917 = vshrl.u32 %v916, 7
  %v918 = vsub.s32 %v915, %v917
  %v919 = vrot.slane %v911, %v918
  %v921 = vunpack.c.l.s4 1983009808
  %v922 = vunpack.c.0.s8 %v921
  %v923 = vlaneseq
  %v924 = vshrl.u32 %v923, 7
  %v925 = vsub.s32 %v922, %v924
  %v926 = vrot.slane %v912, %v925
  %v927 = vcombine.low %v919, %v926
  %v928 = vcombine.low %v603, %v611
  %v929 = vcombine.low %v610, %v612
  %v931 = vunpack.c.l.s4 1983009808
  %v932 = vunpack.c.0.s8 %v931
  %v933 = vlaneseq
  %v934 = vshrl.u32 %v933, 7
  %v935 = vsub.s32 %v932, %v934
  %v936 = vrot.slane %v928, %v935
  %v938 = vunpack.c.l.s4 1983009808
  %v939 = vunpack.c.0.s8 %v938
  %v940 = vlaneseq
  %v941 = vshrl.u32 %v940, 7
  %v942 = vsub.s32 %v939, %v941
  %v943 = vrot.slane %v929, %v942
  %v944 = vcombine.low %v936, %v943
  %v945 = vcombine.low %v620, %v628
  %v946 = vcombine.low %v627, %v629
  %v948 = vunpack.c.l.s4 1983009808
  %v949 = vunpack.c.0.s8 %v948
  %v950 = vlaneseq
  %v951 = vshrl.u32 %v950, 7
  %v952 = vsub.s32 %v949, %v951
  %v953 = vrot.slane %v945, %v952
  %v955 = vunpack.c.l.s4 1983009808
  %v956 = vunpack.c.0.s8 %v955
  %v957 = vlaneseq
  %v958 = vshrl.u32 %v957, 7
  %v959 = vsub.s32 %v956, %v958
  %v960 = vrot.slane %v946, %v959
  %v961 = vcombine.low %v953, %v960
  %v962 = vcombine.low %v637, %v645
  %v963 = vcombine.low %v644, %v646
  %v965 = vunpack.c.l.s4 1983009808
  %v966 = vunpack.c.0.s8 %v965
  %v967 = vlaneseq
  %v968 = vshrl.u32 %v967, 7
  %v969 = vsub.s32 %v966, %v968
  %v970 = vrot.slane %v962, %v969
  %v972 = vunpack.c.l.s4 1983009808
  %v973 = vunpack.c.0.s8 %v972
  %v974 = vlaneseq
  %v975 = vshrl.u32 %v974, 7
  %v976 = vsub.s32 %v973, %v975
  %v977 = vrot.slane %v963, %v976
  %v978 = vcombine.low %v970, %v977
  %v979 = vcombine.low %v654, %v662
  %v981 = vunpack.c.l.s4 1983009808
  %v982 = vunpack.c.0.s8 %v981
  %v983 = vlaneseq
  %v984 = vshrl.u32 %v983, 7
  %v985 = vsub.s32 %v982, %v984
  %v986 = vrot.slane %v979, %v985
  %v988 = vunpack.c.l.s4 1983009808
  %v989 = vunpack.c.0.s8 %v988
  %v990 = vlaneseq
  %v991 = vshrl.u32 %v990, 7
  %v992 = vsub.s32 %v989, %v991
  %v993 = vrot.slane %v661, %v992
  %v994 = vcombine.low %v986, %v993
  %v995 = vcombine.low %v663, %v671
  %v996 = vcombine.low %v679, %v678
  %v998 = vunpack.c.l.s4 1983009808
  %v999 = vunpack.c.0.s8 %v998
  %v1000 = vlaneseq
  %v1001 = vshrl.u32 %v1000, 7
  %v1002 = vsub.s32 %v999, %v1001
  %v1003 = vrot.slane %v995, %v1002
  %v1005 = vunpack.c.l.s4 1983009808
  %v1006 = vunpack.c.0.s8 %v1005
  %v1007 = vlaneseq
  %v1008 = vshrl.u32 %v1007, 7
  %v1009 = vsub.s32 %v1006, %v1008
  %v1010 = vrot.slane %v996, %v1009
  %v1011 = vcombine.low %v1003, %v1010
  %v1012 = vcombine.low %v680, %v688
  %v1013 = vcombine.low %v696, %v695
  %v1015 = vunpack.c.l.s4 1983009808
  %v1016 = vunpack.c.0.s8 %v1015
  %v1017 = vlaneseq
  %v1018 = vshrl.u32 %v1017, 7
  %v1019 = vsub.s32 %v1016, %v1018
  %v1020 = vrot.slane %v1012, %v1019
  %v1022 = vunpack.c.l.s4 1983009808
  %v1023 = vunpack.c.0.s8 %v1022
  %v1024 = vlaneseq
  %v1025 = vshrl.u32 %v1024, 7
  %v1026 = vsub.s32 %v1023, %v1025
  %v1027 = vrot.slane %v1013, %v1026
  %v1028 = vcombine.low %v1020, %v1027
  %v1029 = vcombine.low %v697, %v705
  %v1030 = vcombine.low %v713, %v712
  %v1032 = vunpack.c.l.s4 1983009808
  %v1033 = vunpack.c.0.s8 %v1032
  %v1034 = vlaneseq
  %v1035 = vshrl.u32 %v1034, 7
  %v1036 = vsub.s32 %v1033, %v1035
  %v1037 = vrot.slane %v1029, %v1036
  %v1039 = vunpack.c.l.s4 1983009808
  %v1040 = vunpack.c.0.s8 %v1039
  %v1041 = vlaneseq
  %v1042 = vshrl.u32 %v1041, 7
  %v1043 = vsub.s32 %v1040, %v1042
  %v1044 = vrot.slane %v1030, %v1043
  %v1045 = vcombine.low %v1037, %v1044
  %v1046 = vcombine.low %v714, %v722
  %v1047 = vcombine.low %v730, %v729
  %v1049 = vunpack.c.l.s4 1983009808
  %v1050 = vunpack.c.0.s8 %v1049
  %v1051 = vlaneseq
  %v1052 = vshrl.u32 %v1051, 7
  %v1053 = vsub.s32 %v1050, %v1052
  %v1054 = vrot.slane %v1046, %v1053
  %v1056 = vunpack.c.l.s4 1983009808
  %v1057 = vunpack.c.0.s8 %v1056
  %v1058 = vlaneseq
  %v1059 = vshrl.u32 %v1058, 7
  %v1060 = vsub.s32 %v1057, %v1059
  %v1061 = vrot.slane %v1047, %v1060
  %v1062 = vcombine.low %v1054, %v1061
  %v1063 = vcombine.low %v731, %v738
  %v1065 = vunpack.c.l.s4 1983009808
  %v1066 = vunpack.c.0.s8 %v1065
  %v1067 = vlaneseq
  %v1068 = vshrl.u32 %v1067, 7
  %v1069 = vsub.s32 %v1066, %v1068
  %v1070 = vrot.slane %v1063, %v1069
  %v1072 = vunpack.c.l.s4 1983009808
  %v1073 = vunpack.c.0.s8 %v1072
  %v1074 = vlaneseq
  %v1075 = vshrl.u32 %v1074, 7
  %v1076 = vsub.s32 %v1073, %v1075
  %v1077 = vrot.slane %v739, %v1076
  %v1078 = vcombine.low %v1070, %v1077
  %v1089 = vpack.c.bf16 %v944, %v927
  %v1090 = vpack.c.bf16 %v978, %v961
  %v1091 = vpack.c.bf16 %v994, %v994
  %v1092 = vpack.c.bf16 %v1028, %v1011
  %v1093 = vpack.c.bf16 %v1062, %v1045
  %v1094 = vpack.c.bf16 %v1078, %v1078
  %v1095 = vcombine.low %v757, %v765
  %v1096 = vcombine.low %v764, %v766
  %v1098 = vunpack.c.l.s4 1983009808
  %v1099 = vunpack.c.0.s8 %v1098
  %v1100 = vlaneseq
  %v1101 = vshrl.u32 %v1100, 7
  %v1102 = vsub.s32 %v1099, %v1101
  %v1103 = vrot.slane %v1095, %v1102
  %v1105 = vunpack.c.l.s4 1983009808
  %v1106 = vunpack.c.0.s8 %v1105
  %v1107 = vlaneseq
  %v1108 = vshrl.u32 %v1107, 7
  %v1109 = vsub.s32 %v1106, %v1108
  %v1110 = vrot.slane %v1096, %v1109
  %v1111 = vcombine.low %v1103, %v1110
  %v1112 = vcombine.low %v774, %v782
  %v1113 = vcombine.low %v781, %v783
  %v1115 = vunpack.c.l.s4 1983009808
  %v1116 = vunpack.c.0.s8 %v1115
  %v1117 = vlaneseq
  %v1118 = vshrl.u32 %v1117, 7
  %v1119 = vsub.s32 %v1116, %v1118
  %v1120 = vrot.slane %v1112, %v1119
  %v1122 = vunpack.c.l.s4 1983009808
  %v1123 = vunpack.c.0.s8 %v1122
  %v1124 = vlaneseq
  %v1125 = vshrl.u32 %v1124, 7
  %v1126 = vsub.s32 %v1123, %v1125
  %v1127 = vrot.slane %v1113, %v1126
  %v1128 = vcombine.low %v1120, %v1127
  %v1129 = vcombine.low %v791, %v799
  %v1130 = vcombine.low %v798, %v800
  %v1132 = vunpack.c.l.s4 1983009808
  %v1133 = vunpack.c.0.s8 %v1132
  %v1134 = vlaneseq
  %v1135 = vshrl.u32 %v1134, 7
  %v1136 = vsub.s32 %v1133, %v1135
  %v1137 = vrot.slane %v1129, %v1136
  %v1139 = vunpack.c.l.s4 1983009808
  %v1140 = vunpack.c.0.s8 %v1139
  %v1141 = vlaneseq
  %v1142 = vshrl.u32 %v1141, 7
  %v1143 = vsub.s32 %v1140, %v1142
  %v1144 = vrot.slane %v1130, %v1143
  %v1145 = vcombine.low %v1137, %v1144
  %v1146 = vcombine.low %v808, %v816
  %v1147 = vcombine.low %v815, %v817
  %v1149 = vunpack.c.l.s4 1983009808
  %v1150 = vunpack.c.0.s8 %v1149
  %v1151 = vlaneseq
  %v1152 = vshrl.u32 %v1151, 7
  %v1153 = vsub.s32 %v1150, %v1152
  %v1154 = vrot.slane %v1146, %v1153
  %v1156 = vunpack.c.l.s4 1983009808
  %v1157 = vunpack.c.0.s8 %v1156
  %v1158 = vlaneseq
  %v1159 = vshrl.u32 %v1158, 7
  %v1160 = vsub.s32 %v1157, %v1159
  %v1161 = vrot.slane %v1147, %v1160
  %v1162 = vcombine.low %v1154, %v1161
  %v1163 = vcombine.low %v825, %v833
  %v1165 = vunpack.c.l.s4 1983009808
  %v1166 = vunpack.c.0.s8 %v1165
  %v1167 = vlaneseq
  %v1168 = vshrl.u32 %v1167, 7
  %v1169 = vsub.s32 %v1166, %v1168
  %v1170 = vrot.slane %v1163, %v1169
  %v1172 = vunpack.c.l.s4 1983009808
  %v1173 = vunpack.c.0.s8 %v1172
  %v1174 = vlaneseq
  %v1175 = vshrl.u32 %v1174, 7
  %v1176 = vsub.s32 %v1173, %v1175
  %v1177 = vrot.slane %v832, %v1176
  %v1178 = vcombine.low %v1170, %v1177
  %v1179 = vcombine.low %v834, %v842
  %v1180 = vcombine.low %v850, %v849
  %v1182 = vunpack.c.l.s4 1983009808
  %v1183 = vunpack.c.0.s8 %v1182
  %v1184 = vlaneseq
  %v1185 = vshrl.u32 %v1184, 7
  %v1186 = vsub.s32 %v1183, %v1185
  %v1187 = vrot.slane %v1179, %v1186
  %v1189 = vunpack.c.l.s4 1983009808
  %v1190 = vunpack.c.0.s8 %v1189
  %v1191 = vlaneseq
  %v1192 = vshrl.u32 %v1191, 7
  %v1193 = vsub.s32 %v1190, %v1192
  %v1194 = vrot.slane %v1180, %v1193
  %v1195 = vcombine.low %v1187, %v1194
  %v1196 = vcombine.low %v851, %v859
  %v1197 = vcombine.low %v867, %v866
  %v1199 = vunpack.c.l.s4 1983009808
  %v1200 = vunpack.c.0.s8 %v1199
  %v1201 = vlaneseq
  %v1202 = vshrl.u32 %v1201, 7
  %v1203 = vsub.s32 %v1200, %v1202
  %v1204 = vrot.slane %v1196, %v1203
  %v1206 = vunpack.c.l.s4 1983009808
  %v1207 = vunpack.c.0.s8 %v1206
  %v1208 = vlaneseq
  %v1209 = vshrl.u32 %v1208, 7
  %v1210 = vsub.s32 %v1207, %v1209
  %v1211 = vrot.slane %v1197, %v1210
  %v1212 = vcombine.low %v1204, %v1211
  %v1213 = vcombine.low %v868, %v876
  %v1214 = vcombine.low %v884, %v883
  %v1216 = vunpack.c.l.s4 1983009808
  %v1217 = vunpack.c.0.s8 %v1216
  %v1218 = vlaneseq
  %v1219 = vshrl.u32 %v1218, 7
  %v1220 = vsub.s32 %v1217, %v1219
  %v1221 = vrot.slane %v1213, %v1220
  %v1223 = vunpack.c.l.s4 1983009808
  %v1224 = vunpack.c.0.s8 %v1223
  %v1225 = vlaneseq
  %v1226 = vshrl.u32 %v1225, 7
  %v1227 = vsub.s32 %v1224, %v1226
  %v1228 = vrot.slane %v1214, %v1227
  %v1229 = vcombine.low %v1221, %v1228
  %v1230 = vcombine.low %v885, %v893
  %v1231 = vcombine.low %v901, %v900
  %v1233 = vunpack.c.l.s4 1983009808
  %v1234 = vunpack.c.0.s8 %v1233
  %v1235 = vlaneseq
  %v1236 = vshrl.u32 %v1235, 7
  %v1237 = vsub.s32 %v1234, %v1236
  %v1238 = vrot.slane %v1230, %v1237
  %v1240 = vunpack.c.l.s4 1983009808
  %v1241 = vunpack.c.0.s8 %v1240
  %v1242 = vlaneseq
  %v1243 = vshrl.u32 %v1242, 7
  %v1244 = vsub.s32 %v1241, %v1243
  %v1245 = vrot.slane %v1231, %v1244
  %v1246 = vcombine.low %v1238, %v1245
  %v1247 = vcombine.low %v902, %v909
  %v1249 = vunpack.c.l.s4 1983009808
  %v1250 = vunpack.c.0.s8 %v1249
  %v1251 = vlaneseq
  %v1252 = vshrl.u32 %v1251, 7
  %v1253 = vsub.s32 %v1250, %v1252
  %v1254 = vrot.slane %v1247, %v1253
  %v1256 = vunpack.c.l.s4 1983009808
  %v1257 = vunpack.c.0.s8 %v1256
  %v1258 = vlaneseq
  %v1259 = vshrl.u32 %v1258, 7
  %v1260 = vsub.s32 %v1257, %v1259
  %v1261 = vrot.slane %v910, %v1260
  %v1262 = vcombine.low %v1254, %v1261
  %v1273 = vpack.c.bf16 %v1128, %v1111
  %v1274 = vpack.c.bf16 %v1162, %v1145
  %v1275 = vpack.c.bf16 %v1178, %v1178
  %v1276 = vpack.c.bf16 %v1212, %v1195
  %v1277 = vpack.c.bf16 %v1246, %v1229
  %v1278 = vpack.c.bf16 %v1262, %v1262
  %1282 = vrot.lane.b32.xlu0 %v1273, 96
  %v1283 = vpop.permute.xlu0 %1282
  %1284 = vrot.lane.b32.xlu0 %v1274, 96
  %v1285 = vpop.permute.xlu0 %1284
  %1286 = vrot.lane.b32.xlu0 %v1275, 96
  %v1287 = vpop.permute.xlu0 %1286
  %vm1288 = vcmask 64512
  %v1290 = vsel %vm1288, %v1089, 0
  %v1293 = vsel %vm1288, %v1090, 0
  %v1296 = vsel %vm1288, %v1091, 0
  %v1299 = vsel %vm1288, %v1283, 0
  %v1302 = vsel %vm1288, %v1285, 0
  %v1305 = vsel %vm1288, %v1287, 0
  %1307 = vmatprep.subr.bf16.mxu0 0
  %1308 = vmatpush1.bf16.xpose.msra.mxu0 %v1299
  %1309 = vmatprep.subr.bf16.mxu0 0
  %1310 = vmatpush1.bf16.xpose.msra.mxu0 %v1302
  %1311 = vmatprep.subr.bf16.mxu0 0
  %1312 = vmatpush1.bf16.xpose.msra.mxu0 %v1305
  %1313 = vmatprep.subr.bf16.mxu0 0
  %1314 = vmatpush1.bf16.xpose.msra.mxu0 0
  %1315 = vmatprep.subr.bf16.mxu0 0
  %1316 = vmatpush1.bf16.xpose.msra.mxu0 0
  %1317 = vmatprep.subr.bf16.mxu0 0
  %1318 = vmatpush1.bf16.xpose.msra.mxu0 0
  %1319 = vmatprep.subr.bf16.mxu0 0
  %1320 = vmatpush1.bf16.xpose.msra.mxu0 0
  %1321 = vmatprep.subr.bf16.mxu0 0
  %1322 = vmatpush1.bf16.xpose.msra.mxu0 0
  %1323 = vmatprep.subr.bf16.mxu0 0
  %1324 = vmatpush1.bf16.xpose.msra.mxu0 0
  %1325 = vmatprep.subr.bf16.mxu0 0
  %1326 = vmatpush1.bf16.xpose.msra.mxu0 0
  %1327 = vmatprep.subr.bf16.mxu0 0
  %1328 = vmatpush1.bf16.xpose.msra.mxu0 0
  %1329 = vmatprep.subr.bf16.mxu0 0
  %1330 = vmatpush1.bf16.xpose.msra.mxu0 0
  %1331 = vmatprep.subr.bf16.mxu0 0
  %1332 = vmatpush1.bf16.xpose.msra.mxu0 0
  %1333 = vmatprep.subr.bf16.mxu0 0
  %1334 = vmatpush1.bf16.xpose.msra.mxu0 0
  %1335 = vmatprep.subr.bf16.mxu0 0
  %1336 = vmatpush1.bf16.xpose.msra.mxu0 0
  %1337 = vmatprep.subr.bf16.mxu0 0
  %1338 = vmatpush1.bf16.xpose.msra.mxu0 0
  %1339 = vmatprep.mubr.bf16.mxu0 0
  %1340 = vmatmul.mubr.bf16.gmra.mrb[0].mxu0 %v1290
  %v1341 = vpop.f32.mrb[0].mxu0
  %v1342 = vadd.f32 0.0, %v1341
  %v1343 = vpop.f32.mrb[0].mxu0
  %v1344 = vpop.f32.mrb[0].mxu0
  %v1345 = vadd.f32 0.0, %v1344
  %v1346 = vpop.f32.mrb[0].mxu0
  %1347 = vmatprep.mubr.bf16.mxu0 0
  %1348 = vmatmul.mubr.bf16.gmra.mrb[0].mxu0 %v1293
  %v1349 = vpop.f32.mrb[0].mxu0
  %v1350 = vadd.f32 0.0, %v1349
  %v1351 = vpop.f32.mrb[0].mxu0
  %v1352 = vpop.f32.mrb[0].mxu0
  %v1353 = vadd.f32 0.0, %v1352
  %v1354 = vpop.f32.mrb[0].mxu0
  %1355 = vmatprep.mubr.bf16.mxu0 0
  %1356 = vmatmul.mubr.bf16.gmra.mrb[0].mxu0 %v1296
  %v1357 = vpop.f32.mrb[0].mxu0
  %v1358 = vadd.f32 0.0, %v1357
  %v1359 = vpop.f32.mrb[0].mxu0
  %v1360 = vpop.f32.mrb[0].mxu0
  %v1361 = vpop.f32.mrb[0].mxu0
  %1362 = vdwg.mxu0
  %1366 = vrot.lane.b32.xlu0 %v1276, 96
  %v1367 = vpop.permute.xlu0 %1366
  %1368 = vrot.lane.b32.xlu0 %v1277, 96
  %v1369 = vpop.permute.xlu0 %1368
  %1370 = vrot.lane.b32.xlu0 %v1278, 96
  %v1371 = vpop.permute.xlu0 %1370
  %v1373 = vsel %vm1288, %v1092, 0
  %v1376 = vsel %vm1288, %v1093, 0
  %v1379 = vsel %vm1288, %v1094, 0
  %v1382 = vsel %vm1288, %v1367, 0
  %v1385 = vsel %vm1288, %v1369, 0
  %v1388 = vsel %vm1288, %v1371, 0
  %1390 = vmatprep.subr.bf16.mxu0 0
  %1391 = vmatpush1.bf16.xpose.msra.mxu0 %v1382
  %1392 = vmatprep.subr.bf16.mxu0 0
  %1393 = vmatpush1.bf16.xpose.msra.mxu0 %v1385
  %1394 = vmatprep.subr.bf16.mxu0 0
  %1395 = vmatpush1.bf16.xpose.msra.mxu0 %v1388
  %1396 = vmatprep.subr.bf16.mxu0 0
  %1397 = vmatpush1.bf16.xpose.msra.mxu0 0
  %1398 = vmatprep.subr.bf16.mxu0 0
  %1399 = vmatpush1.bf16.xpose.msra.mxu0 0
  %1400 = vmatprep.subr.bf16.mxu0 0
  %1401 = vmatpush1.bf16.xpose.msra.mxu0 0
  %1402 = vmatprep.subr.bf16.mxu0 0
  %1403 = vmatpush1.bf16.xpose.msra.mxu0 0
  %1404 = vmatprep.subr.bf16.mxu0 0
  %1405 = vmatpush1.bf16.xpose.msra.mxu0 0
  %1406 = vmatprep.subr.bf16.mxu0 0
  %1407 = vmatpush1.bf16.xpose.msra.mxu0 0
  %1408 = vmatprep.subr.bf16.mxu0 0
  %1409 = vmatpush1.bf16.xpose.msra.mxu0 0
  %1410 = vmatprep.subr.bf16.mxu0 0
  %1411 = vmatpush1.bf16.xpose.msra.mxu0 0
  %1412 = vmatprep.subr.bf16.mxu0 0
  %1413 = vmatpush1.bf16.xpose.msra.mxu0 0
  %1414 = vmatprep.subr.bf16.mxu0 0
  %1415 = vmatpush1.bf16.xpose.msra.mxu0 0
  %1416 = vmatprep.subr.bf16.mxu0 0
  %1417 = vmatpush1.bf16.xpose.msra.mxu0 0
  %1418 = vmatprep.subr.bf16.mxu0 0
  %1419 = vmatpush1.bf16.xpose.msra.mxu0 0
  %1420 = vmatprep.subr.bf16.mxu0 0
  %1421 = vmatpush1.bf16.xpose.msra.mxu0 0
  %1422 = vmatprep.mubr.bf16.mxu0 0
  %1423 = vmatmul.mubr.bf16.gmra.mrb[0].mxu0 %v1373
  %v1424 = vpop.f32.mrb[0].mxu0
  %v1425 = vadd.f32 0.0, %v1424
  %v1426 = vpop.f32.mrb[0].mxu0
  %v1427 = vpop.f32.mrb[0].mxu0
  %v1428 = vadd.f32 0.0, %v1427
  %v1429 = vpop.f32.mrb[0].mxu0
  %1430 = vmatprep.mubr.bf16.mxu0 0
  %1431 = vmatmul.mubr.bf16.gmra.mrb[0].mxu0 %v1376
  %v1432 = vpop.f32.mrb[0].mxu0
  %v1433 = vadd.f32 0.0, %v1432
  %v1434 = vpop.f32.mrb[0].mxu0
  %v1435 = vpop.f32.mrb[0].mxu0
  %v1436 = vadd.f32 0.0, %v1435
  %v1437 = vpop.f32.mrb[0].mxu0
  %1438 = vmatprep.mubr.bf16.mxu0 0
  %1439 = vmatmul.mubr.bf16.gmra.mrb[0].mxu0 %v1379
  %v1440 = vpop.f32.mrb[0].mxu0
  %v1441 = vadd.f32 0.0, %v1440
  %v1442 = vpop.f32.mrb[0].mxu0
  %v1443 = vpop.f32.mrb[0].mxu0
  %v1444 = vpop.f32.mrb[0].mxu0
  %1445 = vdwg.mxu0
  %vm1446 = vcmask 310272
  %v1447 = vsel %vm1446, %v1342, -inf
  %1448 = vmax.xlane.f32.xlu0 %v1447
  %v1449 = vpop.xlane.xlu0 %1448
  %v1450 = vsel %vm1446, %v1345, -inf
  %1451 = vmax.xlane.f32.xlu0 %v1450
  %v1452 = vpop.xlane.xlu0 %1451
  %v1453 = vsel %vm1446, %v1350, -inf
  %1454 = vmax.xlane.f32.xlu0 %v1453
  %v1455 = vpop.xlane.xlu0 %1454
  %v1456 = vsel %vm1446, %v1353, -inf
  %1457 = vmax.xlane.f32.xlu0 %v1456
  %v1458 = vpop.xlane.xlu0 %1457
  %vm1459 = vcmask 308224
  %v1460 = vsel %vm1459, %v1358, -inf
  %1461 = vmax.xlane.f32.xlu0 %v1460
  %v1462 = vpop.xlane.xlu0 %1461
  %v1463 = vsel %vm1446, %v1425, -inf
  %1464 = vmax.xlane.f32.xlu0 %v1463
  %v1465 = vpop.xlane.xlu0 %1464
  %v1466 = vsel %vm1446, %v1428, -inf
  %1467 = vmax.xlane.f32.xlu0 %v1466
  %v1468 = vpop.xlane.xlu0 %1467
  %v1469 = vsel %vm1446, %v1433, -inf
  %1470 = vmax.xlane.f32.xlu0 %v1469
  %v1471 = vpop.xlane.xlu0 %1470
  %v1472 = vsel %vm1446, %v1436, -inf
  %1473 = vmax.xlane.f32.xlu0 %v1472
  %v1474 = vpop.xlane.xlu0 %1473
  %v1475 = vsel %vm1459, %v1441, -inf
  %1476 = vmax.xlane.f32.xlu0 %v1475
  %v1477 = vpop.xlane.xlu0 %1476
  %v1478 = vsub.f32 %v1342, %v1449
  %v1479 = vsub.f32 %v1345, %v1452
  %v1480 = vsub.f32 %v1350, %v1455
  %v1481 = vsub.f32 %v1353, %v1458
  %v1482 = vsub.f32 %v1358, %v1462
  %v1483 = vsub.f32 %v1425, %v1465
  %v1484 = vsub.f32 %v1428, %v1468
  %v1485 = vsub.f32 %v1433, %v1471
  %v1486 = vsub.f32 %v1436, %v1474
  %v1487 = vsub.f32 %v1441, %v1477
  %v1488 = vmul.f32 %v1478, 1.442695
  %v1489 = vpow.pop %v1488
  %v1490 = vmul.f32 %v1479, 1.442695
  %v1491 = vpow.pop %v1490
  %v1492 = vmul.f32 %v1480, 1.442695
  %v1493 = vpow.pop %v1492
  %v1494 = vmul.f32 %v1481, 1.442695
  %v1495 = vpow.pop %v1494
  %v1496 = vmul.f32 %v1482, 1.442695
  %v1497 = vpow.pop %v1496
  %v1498 = vmul.f32 %v1483, 1.442695
  %v1499 = vpow.pop %v1498
  %v1500 = vmul.f32 %v1484, 1.442695
  %v1501 = vpow.pop %v1500
  %v1502 = vmul.f32 %v1485, 1.442695
  %v1503 = vpow.pop %v1502
  %v1504 = vmul.f32 %v1486, 1.442695
  %v1505 = vpow.pop %v1504
  %v1506 = vmul.f32 %v1487, 1.442695
  %v1507 = vpow.pop %v1506
  %v1508 = vsel %vm1446, %v1489, 0.0
  %1509 = vadd.xlane.f32.xlu0 %v1508
  %v1510 = vpop.xlane.xlu0 %1509
  %v1511 = vsel %vm1446, %v1491, 0.0
  %1512 = vadd.xlane.f32.xlu0 %v1511
  %v1513 = vpop.xlane.xlu0 %1512
  %v1514 = vsel %vm1446, %v1493, 0.0
  %1515 = vadd.xlane.f32.xlu0 %v1514
  %v1516 = vpop.xlane.xlu0 %1515
  %v1517 = vsel %vm1446, %v1495, 0.0
  %1518 = vadd.xlane.f32.xlu0 %v1517
  %v1519 = vpop.xlane.xlu0 %1518
  %v1520 = vsel %vm1459, %v1497, 0.0
  %1521 = vadd.xlane.f32.xlu0 %v1520
  %v1522 = vpop.xlane.xlu0 %1521
  %v1523 = vsel %vm1446, %v1499, 0.0
  %1524 = vadd.xlane.f32.xlu0 %v1523
  %v1525 = vpop.xlane.xlu0 %1524
  %v1526 = vsel %vm1446, %v1501, 0.0
  %1527 = vadd.xlane.f32.xlu0 %v1526
  %v1528 = vpop.xlane.xlu0 %1527
  %v1529 = vsel %vm1446, %v1503, 0.0
  %1530 = vadd.xlane.f32.xlu0 %v1529
  %v1531 = vpop.xlane.xlu0 %1530
  %v1532 = vsel %vm1446, %v1505, 0.0
  %1533 = vadd.xlane.f32.xlu0 %v1532
  %v1534 = vpop.xlane.xlu0 %1533
  %v1535 = vsel %vm1459, %v1507, 0.0
  %1536 = vadd.xlane.f32.xlu0 %v1535
  %v1537 = vpop.xlane.xlu0 %1536
  %v1538 = vrcp.pop %v1510
  %v1539 = vrcp.pop %v1513
  %v1540 = vrcp.pop %v1516
  %v1541 = vrcp.pop %v1519
  %v1542 = vrcp.pop %v1522
  %v1543 = vrcp.pop %v1525
  %v1544 = vrcp.pop %v1528
  %v1545 = vrcp.pop %v1531
  %v1546 = vrcp.pop %v1534
  %v1547 = vrcp.pop %v1537
  %v1548 = vmul.f32 %v1489, %v1538
  %v1549 = vmul.f32 %v1491, %v1539
  %v1550 = vmul.f32 %v1493, %v1540
  %v1551 = vmul.f32 %v1495, %v1541
  %v1552 = vmul.f32 %v1497, %v1542
  %v1553 = vmul.f32 %v1499, %v1543
  %v1554 = vmul.f32 %v1501, %v1544
  %v1555 = vmul.f32 %v1503, %v1545
  %v1556 = vmul.f32 %v1505, %v1546
  %v1557 = vmul.f32 %v1507, %v1547
  %v1558 = vpack.c.bf16 %v1549, %v1548
  %v1559 = vpack.c.bf16 %v1551, %v1550
  %v1560 = vpack.c.bf16 %v1552, %v1552
  %v1561 = vpack.c.bf16 %v1554, %v1553
  %v1562 = vpack.c.bf16 %v1556, %v1555
  %v1563 = vpack.c.bf16 %v1557, %v1557
  %1564 = vrot.lane.b32.xlu0 %v1273, 64
  %v1565 = vpop.permute.xlu0 %1564
  %1566 = vrot.lane.b32.xlu0 %v1274, 64
  %v1567 = vpop.permute.xlu0 %1566
  %1568 = vrot.lane.b32.xlu0 %v1275, 64
  %v1569 = vpop.permute.xlu0 %1568
  %v1573 = vsel %vm1446, %v1558, 0
  %v1576 = vsel %vm1446, %v1559, 0
  %v1579 = vsel %vm1446, %v1560, 0
  %vm1581 = vcmask 1042432
  %v1583 = vsel %vm1581, %v1569, 0
  %1585 = vmatprep.subr.bf16.mxu0 0
  %1586 = vmatpush1.bf16.msra.mxu0 %v1565
  %1587 = vmatprep.subr.bf16.mxu0 0
  %1588 = vmatpush1.bf16.msra.mxu0 %v1567
  %1589 = vmatprep.subr.bf16.mxu0 0
  %1590 = vmatpush1.bf16.msra.mxu0 %v1583
  %1591 = vmatprep.subr.bf16.mxu0 0
  %1592 = vmatpush1.bf16.msra.mxu0 0
  %1593 = vmatprep.subr.bf16.mxu0 0
  %1594 = vmatpush1.bf16.msra.mxu0 0
  %1595 = vmatprep.subr.bf16.mxu0 0
  %1596 = vmatpush1.bf16.msra.mxu0 0
  %1597 = vmatprep.subr.bf16.mxu0 0
  %1598 = vmatpush1.bf16.msra.mxu0 0
  %1599 = vmatprep.subr.bf16.mxu0 0
  %1600 = vmatpush1.bf16.msra.mxu0 0
  %1601 = vmatprep.subr.bf16.mxu0 0
  %1602 = vmatpush1.bf16.msra.mxu0 0
  %1603 = vmatprep.subr.bf16.mxu0 0
  %1604 = vmatpush1.bf16.msra.mxu0 0
  %1605 = vmatprep.subr.bf16.mxu0 0
  %1606 = vmatpush1.bf16.msra.mxu0 0
  %1607 = vmatprep.subr.bf16.mxu0 0
  %1608 = vmatpush1.bf16.msra.mxu0 0
  %1609 = vmatprep.subr.bf16.mxu0 0
  %1610 = vmatpush1.bf16.msra.mxu0 0
  %1611 = vmatprep.subr.bf16.mxu0 0
  %1612 = vmatpush1.bf16.msra.mxu0 0
  %1613 = vmatprep.subr.bf16.mxu0 0
  %1614 = vmatpush1.bf16.msra.mxu0 0
  %1615 = vmatprep.subr.bf16.mxu0 0
  %1616 = vmatpush1.bf16.msra.mxu0 0
  %1617 = vmatprep.mubr.bf16.mxu0 0
  %1618 = vmatmul.mubr.bf16.gmra.mrb[0].mxu0 %v1573
  %v1619 = vpop.f32.mrb[0].mxu0
  %v1620 = vadd.f32 0.0, %v1619
  %v1621 = vpop.f32.mrb[0].mxu0
  %v1622 = vpop.f32.mrb[0].mxu0
  %v1623 = vadd.f32 0.0, %v1622
  %v1624 = vpop.f32.mrb[0].mxu0
  %1625 = vmatprep.mubr.bf16.mxu0 0
  %1626 = vmatmul.mubr.bf16.gmra.mrb[0].mxu0 %v1576
  %v1627 = vpop.f32.mrb[0].mxu0
  %v1628 = vadd.f32 0.0, %v1627
  %v1629 = vpop.f32.mrb[0].mxu0
  %v1630 = vpop.f32.mrb[0].mxu0
  %v1631 = vadd.f32 0.0, %v1630
  %v1632 = vpop.f32.mrb[0].mxu0
  %1633 = vmatprep.mubr.bf16.mxu0 0
  %1634 = vmatmul.mubr.bf16.gmra.mrb[0].mxu0 %v1579
  %v1635 = vpop.f32.mrb[0].mxu0
  %v1636 = vadd.f32 0.0, %v1635
  %v1637 = vpop.f32.mrb[0].mxu0
  %v1638 = vpop.f32.mrb[0].mxu0
  %v1639 = vpop.f32.mrb[0].mxu0
  %1640 = vdwg.mxu0
  %1641 = vrot.lane.b32.xlu0 %v1276, 64
  %v1642 = vpop.permute.xlu0 %1641
  %1643 = vrot.lane.b32.xlu0 %v1277, 64
  %v1644 = vpop.permute.xlu0 %1643
  %1645 = vrot.lane.b32.xlu0 %v1278, 64
  %v1646 = vpop.permute.xlu0 %1645
  %v1650 = vsel %vm1446, %v1561, 0
  %v1653 = vsel %vm1446, %v1562, 0
  %v1656 = vsel %vm1446, %v1563, 0
  %v1659 = vsel %vm1581, %v1646, 0
  %1661 = vmatprep.subr.bf16.mxu0 0
  %1662 = vmatpush1.bf16.msra.mxu0 %v1642
  %1663 = vmatprep.subr.bf16.mxu0 0
  %1664 = vmatpush1.bf16.msra.mxu0 %v1644
  %1665 = vmatprep.subr.bf16.mxu0 0
  %1666 = vmatpush1.bf16.msra.mxu0 %v1659
  %1667 = vmatprep.subr.bf16.mxu0 0
  %1668 = vmatpush1.bf16.msra.mxu0 0
  %1669 = vmatprep.subr.bf16.mxu0 0
  %1670 = vmatpush1.bf16.msra.mxu0 0
  %1671 = vmatprep.subr.bf16.mxu0 0
  %1672 = vmatpush1.bf16.msra.mxu0 0
  %1673 = vmatprep.subr.bf16.mxu0 0
  %1674 = vmatpush1.bf16.msra.mxu0 0
  %1675 = vmatprep.subr.bf16.mxu0 0
  %1676 = vmatpush1.bf16.msra.mxu0 0
  %1677 = vmatprep.subr.bf16.mxu0 0
  %1678 = vmatpush1.bf16.msra.mxu0 0
  %1679 = vmatprep.subr.bf16.mxu0 0
  %1680 = vmatpush1.bf16.msra.mxu0 0
  %1681 = vmatprep.subr.bf16.mxu0 0
  %1682 = vmatpush1.bf16.msra.mxu0 0
  %1683 = vmatprep.subr.bf16.mxu0 0
  %1684 = vmatpush1.bf16.msra.mxu0 0
  %1685 = vmatprep.subr.bf16.mxu0 0
  %1686 = vmatpush1.bf16.msra.mxu0 0
  %1687 = vmatprep.subr.bf16.mxu0 0
  %1688 = vmatpush1.bf16.msra.mxu0 0
  %1689 = vmatprep.subr.bf16.mxu0 0
  %1690 = vmatpush1.bf16.msra.mxu0 0
  %1691 = vmatprep.subr.bf16.mxu0 0
  %1692 = vmatpush1.bf16.msra.mxu0 0
  %1693 = vmatprep.mubr.bf16.mxu0 0
  %1694 = vmatmul.mubr.bf16.gmra.mrb[0].mxu0 %v1650
  %v1695 = vpop.f32.mrb[0].mxu0
  %v1696 = vadd.f32 0.0, %v1695
  %v1697 = vpop.f32.mrb[0].mxu0
  %v1698 = vpop.f32.mrb[0].mxu0
  %v1699 = vadd.f32 0.0, %v1698
  %v1700 = vpop.f32.mrb[0].mxu0
  %1701 = vmatprep.mubr.bf16.mxu0 0
  %1702 = vmatmul.mubr.bf16.gmra.mrb[0].mxu0 %v1653
  %v1703 = vpop.f32.mrb[0].mxu0
  %v1704 = vadd.f32 0.0, %v1703
  %v1705 = vpop.f32.mrb[0].mxu0
  %v1706 = vpop.f32.mrb[0].mxu0
  %v1707 = vadd.f32 0.0, %v1706
  %v1708 = vpop.f32.mrb[0].mxu0
  %1709 = vmatprep.mubr.bf16.mxu0 0
  %1710 = vmatmul.mubr.bf16.gmra.mrb[0].mxu0 %v1656
  %v1711 = vpop.f32.mrb[0].mxu0
  %v1712 = vadd.f32 0.0, %v1711
  %v1713 = vpop.f32.mrb[0].mxu0
  %v1714 = vpop.f32.mrb[0].mxu0
  %v1715 = vpop.f32.mrb[0].mxu0
  %1716 = vdwg.mxu0
  %1720 = vrot.lane.b32.xlu0 %v1089, 120
  %v1721 = vpop.permute.xlu0 %1720
  %1722 = vrot.lane.b32.xlu0 %v1090, 120
  %v1723 = vpop.permute.xlu0 %1722
  %1724 = vrot.lane.b32.xlu0 %v1091, 120
  %v1725 = vpop.permute.xlu0 %1724
  %1726 = vrot.lane.b32.xlu0 %v1273, 88
  %v1727 = vpop.permute.xlu0 %1726
  %1728 = vrot.lane.b32.xlu0 %v1274, 88
  %v1729 = vpop.permute.xlu0 %1728
  %1730 = vrot.lane.b32.xlu0 %v1275, 88
  %v1731 = vpop.permute.xlu0 %1730
  %v1733 = vsel %vm1288, %v1721, 0
  %v1736 = vsel %vm1288, %v1723, 0
  %v1739 = vsel %vm1288, %v1725, 0
  %v1742 = vsel %vm1288, %v1727, 0
  %v1745 = vsel %vm1288, %v1729, 0
  %v1748 = vsel %vm1288, %v1731, 0
  %1750 = vmatprep.subr.bf16.mxu0 0
  %1751 = vmatpush1.bf16.xpose.msra.mxu0 %v1742
  %1752 = vmatprep.subr.bf16.mxu0 0
  %1753 = vmatpush1.bf16.xpose.msra.mxu0 %v1745
  %1754 = vmatprep.subr.bf16.mxu0 0
  %1755 = vmatpush1.bf16.xpose.msra.mxu0 %v1748
  %1756 = vmatprep.subr.bf16.mxu0 0
  %1757 = vmatpush1.bf16.xpose.msra.mxu0 0
  %1758 = vmatprep.subr.bf16.mxu0 0
  %1759 = vmatpush1.bf16.xpose.msra.mxu0 0
  %1760 = vmatprep.subr.bf16.mxu0 0
  %1761 = vmatpush1.bf16.xpose.msra.mxu0 0
  %1762 = vmatprep.subr.bf16.mxu0 0
  %1763 = vmatpush1.bf16.xpose.msra.mxu0 0
  %1764 = vmatprep.subr.bf16.mxu0 0
  %1765 = vmatpush1.bf16.xpose.msra.mxu0 0
  %1766 = vmatprep.subr.bf16.mxu0 0
  %1767 = vmatpush1.bf16.xpose.msra.mxu0 0
  %1768 = vmatprep.subr.bf16.mxu0 0
  %1769 = vmatpush1.bf16.xpose.msra.mxu0 0
  %1770 = vmatprep.subr.bf16.mxu0 0
  %1771 = vmatpush1.bf16.xpose.msra.mxu0 0
  %1772 = vmatprep.subr.bf16.mxu0 0
  %1773 = vmatpush1.bf16.xpose.msra.mxu0 0
  %1774 = vmatprep.subr.bf16.mxu0 0
  %1775 = vmatpush1.bf16.xpose.msra.mxu0 0
  %1776 = vmatprep.subr.bf16.mxu0 0
  %1777 = vmatpush1.bf16.xpose.msra.mxu0 0
  %1778 = vmatprep.subr.bf16.mxu0 0
  %1779 = vmatpush1.bf16.xpose.msra.mxu0 0
  %1780 = vmatprep.subr.bf16.mxu0 0
  %1781 = vmatpush1.bf16.xpose.msra.mxu0 0
  %1782 = vmatprep.mubr.bf16.mxu0 0
  %1783 = vmatmul.mubr.bf16.gmra.mrb[0].mxu0 %v1733
  %v1784 = vpop.f32.mrb[0].mxu0
  %v1785 = vadd.f32 0.0, %v1784
  %v1786 = vpop.f32.mrb[0].mxu0
  %v1787 = vpop.f32.mrb[0].mxu0
  %v1788 = vadd.f32 0.0, %v1787
  %v1789 = vpop.f32.mrb[0].mxu0
  %1790 = vmatprep.mubr.bf16.mxu0 0
  %1791 = vmatmul.mubr.bf16.gmra.mrb[0].mxu0 %v1736
  %v1792 = vpop.f32.mrb[0].mxu0
  %v1793 = vadd.f32 0.0, %v1792
  %v1794 = vpop.f32.mrb[0].mxu0
  %v1795 = vpop.f32.mrb[0].mxu0
  %v1796 = vadd.f32 0.0, %v1795
  %v1797 = vpop.f32.mrb[0].mxu0
  %1798 = vmatprep.mubr.bf16.mxu0 0
  %1799 = vmatmul.mubr.bf16.gmra.mrb[0].mxu0 %v1739
  %v1800 = vpop.f32.mrb[0].mxu0
  %v1801 = vadd.f32 0.0, %v1800
  %v1802 = vpop.f32.mrb[0].mxu0
  %v1803 = vpop.f32.mrb[0].mxu0
  %v1804 = vpop.f32.mrb[0].mxu0
  %1805 = vdwg.mxu0
  %1809 = vrot.lane.b32.xlu0 %v1092, 120
  %v1810 = vpop.permute.xlu0 %1809
  %1811 = vrot.lane.b32.xlu0 %v1093, 120
  %v1812 = vpop.permute.xlu0 %1811
  %1813 = vrot.lane.b32.xlu0 %v1094, 120
  %v1814 = vpop.permute.xlu0 %1813
  %1815 = vrot.lane.b32.xlu0 %v1276, 88
  %v1816 = vpop.permute.xlu0 %1815
  %1817 = vrot.lane.b32.xlu0 %v1277, 88
  %v1818 = vpop.permute.xlu0 %1817
  %1819 = vrot.lane.b32.xlu0 %v1278, 88
  %v1820 = vpop.permute.xlu0 %1819
  %v1822 = vsel %vm1288, %v1810, 0
  %v1825 = vsel %vm1288, %v1812, 0
  %v1828 = vsel %vm1288, %v1814, 0
  %v1831 = vsel %vm1288, %v1816, 0
  %v1834 = vsel %vm1288, %v1818, 0
  %v1837 = vsel %vm1288, %v1820, 0
  %1839 = vmatprep.subr.bf16.mxu0 0
  %1840 = vmatpush1.bf16.xpose.msra.mxu0 %v1831
  %1841 = vmatprep.subr.bf16.mxu0 0
  %1842 = vmatpush1.bf16.xpose.msra.mxu0 %v1834
  %1843 = vmatprep.subr.bf16.mxu0 0
  %1844 = vmatpush1.bf16.xpose.msra.mxu0 %v1837
  %1845 = vmatprep.subr.bf16.mxu0 0
  %1846 = vmatpush1.bf16.xpose.msra.mxu0 0
  %1847 = vmatprep.subr.bf16.mxu0 0
  %1848 = vmatpush1.bf16.xpose.msra.mxu0 0
  %1849 = vmatprep.subr.bf16.mxu0 0
  %1850 = vmatpush1.bf16.xpose.msra.mxu0 0
  %1851 = vmatprep.subr.bf16.mxu0 0
  %1852 = vmatpush1.bf16.xpose.msra.mxu0 0
  %1853 = vmatprep.subr.bf16.mxu0 0
  %1854 = vmatpush1.bf16.xpose.msra.mxu0 0
  %1855 = vmatprep.subr.bf16.mxu0 0
  %1856 = vmatpush1.bf16.xpose.msra.mxu0 0
  %1857 = vmatprep.subr.bf16.mxu0 0
  %1858 = vmatpush1.bf16.xpose.msra.mxu0 0
  %1859 = vmatprep.subr.bf16.mxu0 0
  %1860 = vmatpush1.bf16.xpose.msra.mxu0 0
  %1861 = vmatprep.subr.bf16.mxu0 0
  %1862 = vmatpush1.bf16.xpose.msra.mxu0 0
  %1863 = vmatprep.subr.bf16.mxu0 0
  %1864 = vmatpush1.bf16.xpose.msra.mxu0 0
  %1865 = vmatprep.subr.bf16.mxu0 0
  %1866 = vmatpush1.bf16.xpose.msra.mxu0 0
  %1867 = vmatprep.subr.bf16.mxu0 0
  %1868 = vmatpush1.bf16.xpose.msra.mxu0 0
  %1869 = vmatprep.subr.bf16.mxu0 0
  %1870 = vmatpush1.bf16.xpose.msra.mxu0 0
  %1871 = vmatprep.mubr.bf16.mxu0 0
  %1872 = vmatmul.mubr.bf16.gmra.mrb[0].mxu0 %v1822
  %v1873 = vpop.f32.mrb[0].mxu0
  %v1874 = vadd.f32 0.0, %v1873
  %v1875 = vpop.f32.mrb[0].mxu0
  %v1876 = vpop.f32.mrb[0].mxu0
  %v1877 = vadd.f32 0.0, %v1876
  %v1878 = vpop.f32.mrb[0].mxu0
  %1879 = vmatprep.mubr.bf16.mxu0 0
  %1880 = vmatmul.mubr.bf16.gmra.mrb[0].mxu0 %v1825
  %v1881 = vpop.f32.mrb[0].mxu0
  %v1882 = vadd.f32 0.0, %v1881
  %v1883 = vpop.f32.mrb[0].mxu0
  %v1884 = vpop.f32.mrb[0].mxu0
  %v1885 = vadd.f32 0.0, %v1884
  %v1886 = vpop.f32.mrb[0].mxu0
  %1887 = vmatprep.mubr.bf16.mxu0 0
  %1888 = vmatmul.mubr.bf16.gmra.mrb[0].mxu0 %v1828
  %v1889 = vpop.f32.mrb[0].mxu0
  %v1890 = vadd.f32 0.0, %v1889
  %v1891 = vpop.f32.mrb[0].mxu0
  %v1892 = vpop.f32.mrb[0].mxu0
  %v1893 = vpop.f32.mrb[0].mxu0
  %1894 = vdwg.mxu0
  %v1895 = vsel %vm1446, %v1785, -inf
  %1896 = vmax.xlane.f32.xlu0 %v1895
  %v1897 = vpop.xlane.xlu0 %1896
  %v1898 = vsel %vm1446, %v1788, -inf
  %1899 = vmax.xlane.f32.xlu0 %v1898
  %v1900 = vpop.xlane.xlu0 %1899
  %v1901 = vsel %vm1446, %v1793, -inf
  %1902 = vmax.xlane.f32.xlu0 %v1901
  %v1903 = vpop.xlane.xlu0 %1902
  %v1904 = vsel %vm1446, %v1796, -inf
  %1905 = vmax.xlane.f32.xlu0 %v1904
  %v1906 = vpop.xlane.xlu0 %1905
  %v1907 = vsel %vm1459, %v1801, -inf
  %1908 = vmax.xlane.f32.xlu0 %v1907
  %v1909 = vpop.xlane.xlu0 %1908
  %v1910 = vsel %vm1446, %v1874, -inf
  %1911 = vmax.xlane.f32.xlu0 %v1910
  %v1912 = vpop.xlane.xlu0 %1911
  %v1913 = vsel %vm1446, %v1877, -inf
  %1914 = vmax.xlane.f32.xlu0 %v1913
  %v1915 = vpop.xlane.xlu0 %1914
  %v1916 = vsel %vm1446, %v1882, -inf
  %1917 = vmax.xlane.f32.xlu0 %v1916
  %v1918 = vpop.xlane.xlu0 %1917
  %v1919 = vsel %vm1446, %v1885, -inf
  %1920 = vmax.xlane.f32.xlu0 %v1919
  %v1921 = vpop.xlane.xlu0 %1920
  %v1922 = vsel %vm1459, %v1890, -inf
  %1923 = vmax.xlane.f32.xlu0 %v1922
  %v1924 = vpop.xlane.xlu0 %1923
  %v1925 = vsub.f32 %v1785, %v1897
  %v1926 = vsub.f32 %v1788, %v1900
  %v1927 = vsub.f32 %v1793, %v1903
  %v1928 = vsub.f32 %v1796, %v1906
  %v1929 = vsub.f32 %v1801, %v1909
  %v1930 = vsub.f32 %v1874, %v1912
  %v1931 = vsub.f32 %v1877, %v1915
  %v1932 = vsub.f32 %v1882, %v1918
  %v1933 = vsub.f32 %v1885, %v1921
  %v1934 = vsub.f32 %v1890, %v1924
  %v1935 = vmul.f32 %v1925, 1.442695
  %v1936 = vpow.pop %v1935
  %v1937 = vmul.f32 %v1926, 1.442695
  %v1938 = vpow.pop %v1937
  %v1939 = vmul.f32 %v1927, 1.442695
  %v1940 = vpow.pop %v1939
  %v1941 = vmul.f32 %v1928, 1.442695
  %v1942 = vpow.pop %v1941
  %v1943 = vmul.f32 %v1929, 1.442695
  %v1944 = vpow.pop %v1943
  %v1945 = vmul.f32 %v1930, 1.442695
  %v1946 = vpow.pop %v1945
  %v1947 = vmul.f32 %v1931, 1.442695
  %v1948 = vpow.pop %v1947
  %v1949 = vmul.f32 %v1932, 1.442695
  %v1950 = vpow.pop %v1949
  %v1951 = vmul.f32 %v1933, 1.442695
  %v1952 = vpow.pop %v1951
  %v1953 = vmul.f32 %v1934, 1.442695
  %v1954 = vpow.pop %v1953
  %v1955 = vsel %vm1446, %v1936, 0.0
  %1956 = vadd.xlane.f32.xlu0 %v1955
  %v1957 = vpop.xlane.xlu0 %1956
  %v1958 = vsel %vm1446, %v1938, 0.0
  %1959 = vadd.xlane.f32.xlu0 %v1958
  %v1960 = vpop.xlane.xlu0 %1959
  %v1961 = vsel %vm1446, %v1940, 0.0
  %1962 = vadd.xlane.f32.xlu0 %v1961
  %v1963 = vpop.xlane.xlu0 %1962
  %v1964 = vsel %vm1446, %v1942, 0.0
  %1965 = vadd.xlane.f32.xlu0 %v1964
  %v1966 = vpop.xlane.xlu0 %1965
  %v1967 = vsel %vm1459, %v1944, 0.0
  %1968 = vadd.xlane.f32.xlu0 %v1967
  %v1969 = vpop.xlane.xlu0 %1968
  %v1970 = vsel %vm1446, %v1946, 0.0
  %1971 = vadd.xlane.f32.xlu0 %v1970
  %v1972 = vpop.xlane.xlu0 %1971
  %v1973 = vsel %vm1446, %v1948, 0.0
  %1974 = vadd.xlane.f32.xlu0 %v1973
  %v1975 = vpop.xlane.xlu0 %1974
  %v1976 = vsel %vm1446, %v1950, 0.0
  %1977 = vadd.xlane.f32.xlu0 %v1976
  %v1978 = vpop.xlane.xlu0 %1977
  %v1979 = vsel %vm1446, %v1952, 0.0
  %1980 = vadd.xlane.f32.xlu0 %v1979
  %v1981 = vpop.xlane.xlu0 %1980
  %v1982 = vsel %vm1459, %v1954, 0.0
  %1983 = vadd.xlane.f32.xlu0 %v1982
  %v1984 = vpop.xlane.xlu0 %1983
  %v1985 = vrcp.pop %v1957
  %v1986 = vrcp.pop %v1960
  %v1987 = vrcp.pop %v1963
  %v1988 = vrcp.pop %v1966
  %v1989 = vrcp.pop %v1969
  %v1990 = vrcp.pop %v1972
  %v1991 = vrcp.pop %v1975
  %v1992 = vrcp.pop %v1978
  %v1993 = vrcp.pop %v1981
  %v1994 = vrcp.pop %v1984
  %v1995 = vmul.f32 %v1936, %v1985
  %v1996 = vmul.f32 %v1938, %v1986
  %v1997 = vmul.f32 %v1940, %v1987
  %v1998 = vmul.f32 %v1942, %v1988
  %v1999 = vmul.f32 %v1944, %v1989
  %v2000 = vmul.f32 %v1946, %v1990
  %v2001 = vmul.f32 %v1948, %v1991
  %v2002 = vmul.f32 %v1950, %v1992
  %v2003 = vmul.f32 %v1952, %v1993
  %v2004 = vmul.f32 %v1954, %v1994
  %v2005 = vpack.c.bf16 %v1996, %v1995
  %v2006 = vpack.c.bf16 %v1998, %v1997
  %v2007 = vpack.c.bf16 %v1999, %v1999
  %v2008 = vpack.c.bf16 %v2001, %v2000
  %v2009 = vpack.c.bf16 %v2003, %v2002
  %v2010 = vpack.c.bf16 %v2004, %v2004
  %2011 = vrot.lane.b32.xlu0 %v1273, 56
  %v2012 = vpop.permute.xlu0 %2011
  %2013 = vrot.lane.b32.xlu0 %v1274, 56
  %v2014 = vpop.permute.xlu0 %2013
  %2015 = vrot.lane.b32.xlu0 %v1275, 56
  %v2016 = vpop.permute.xlu0 %2015
  %v2020 = vsel %vm1446, %v2005, 0
  %v2023 = vsel %vm1446, %v2006, 0
  %v2026 = vsel %vm1446, %v2007, 0
  %v2029 = vsel %vm1581, %v2016, 0
  %2031 = vmatprep.subr.bf16.mxu0 0
  %2032 = vmatpush1.bf16.msra.mxu0 %v2012
  %2033 = vmatprep.subr.bf16.mxu0 0
  %2034 = vmatpush1.bf16.msra.mxu0 %v2014
  %2035 = vmatprep.subr.bf16.mxu0 0
  %2036 = vmatpush1.bf16.msra.mxu0 %v2029
  %2037 = vmatprep.subr.bf16.mxu0 0
  %2038 = vmatpush1.bf16.msra.mxu0 0
  %2039 = vmatprep.subr.bf16.mxu0 0
  %2040 = vmatpush1.bf16.msra.mxu0 0
  %2041 = vmatprep.subr.bf16.mxu0 0
  %2042 = vmatpush1.bf16.msra.mxu0 0
  %2043 = vmatprep.subr.bf16.mxu0 0
  %2044 = vmatpush1.bf16.msra.mxu0 0
  %2045 = vmatprep.subr.bf16.mxu0 0
  %2046 = vmatpush1.bf16.msra.mxu0 0
  %2047 = vmatprep.subr.bf16.mxu0 0
  %2048 = vmatpush1.bf16.msra.mxu0 0
  %2049 = vmatprep.subr.bf16.mxu0 0
  %2050 = vmatpush1.bf16.msra.mxu0 0
  %2051 = vmatprep.subr.bf16.mxu0 0
  %2052 = vmatpush1.bf16.msra.mxu0 0
  %2053 = vmatprep.subr.bf16.mxu0 0
  %2054 = vmatpush1.bf16.msra.mxu0 0
  %2055 = vmatprep.subr.bf16.mxu0 0
  %2056 = vmatpush1.bf16.msra.mxu0 0
  %2057 = vmatprep.subr.bf16.mxu0 0
  %2058 = vmatpush1.bf16.msra.mxu0 0
  %2059 = vmatprep.subr.bf16.mxu0 0
  %2060 = vmatpush1.bf16.msra.mxu0 0
  %2061 = vmatprep.subr.bf16.mxu0 0
  %2062 = vmatpush1.bf16.msra.mxu0 0
  %2063 = vmatprep.mubr.bf16.mxu0 0
  %2064 = vmatmul.mubr.bf16.gmra.mrb[0].mxu0 %v2020
  %v2065 = vpop.f32.mrb[0].mxu0
  %v2066 = vadd.f32 0.0, %v2065
  %v2067 = vpop.f32.mrb[0].mxu0
  %v2068 = vpop.f32.mrb[0].mxu0
  %v2069 = vadd.f32 0.0, %v2068
  %v2070 = vpop.f32.mrb[0].mxu0
  %2071 = vmatprep.mubr.bf16.mxu0 0
  %2072 = vmatmul.mubr.bf16.gmra.mrb[0].mxu0 %v2023
  %v2073 = vpop.f32.mrb[0].mxu0
  %v2074 = vadd.f32 0.0, %v2073
  %v2075 = vpop.f32.mrb[0].mxu0
  %v2076 = vpop.f32.mrb[0].mxu0
  %v2077 = vadd.f32 0.0, %v2076
  %v2078 = vpop.f32.mrb[0].mxu0
  %2079 = vmatprep.mubr.bf16.mxu0 0
  %2080 = vmatmul.mubr.bf16.gmra.mrb[0].mxu0 %v2026
  %v2081 = vpop.f32.mrb[0].mxu0
  %v2082 = vadd.f32 0.0, %v2081
  %v2083 = vpop.f32.mrb[0].mxu0
  %v2084 = vpop.f32.mrb[0].mxu0
  %v2085 = vpop.f32.mrb[0].mxu0
  %2086 = vdwg.mxu0
  %2087 = vrot.lane.b32.xlu0 %v1276, 56
  %v2088 = vpop.permute.xlu0 %2087
  %2089 = vrot.lane.b32.xlu0 %v1277, 56
  %v2090 = vpop.permute.xlu0 %2089
  %2091 = vrot.lane.b32.xlu0 %v1278, 56
  %v2092 = vpop.permute.xlu0 %2091
  %v2096 = vsel %vm1446, %v2008, 0
  %v2099 = vsel %vm1446, %v2009, 0
  %v2102 = vsel %vm1446, %v2010, 0
  %v2105 = vsel %vm1581, %v2092, 0
  %2107 = vmatprep.subr.bf16.mxu0 0
  %2108 = vmatpush1.bf16.msra.mxu0 %v2088
  %2109 = vmatprep.subr.bf16.mxu0 0
  %2110 = vmatpush1.bf16.msra.mxu0 %v2090
  %2111 = vmatprep.subr.bf16.mxu0 0
  %2112 = vmatpush1.bf16.msra.mxu0 %v2105
  %2113 = vmatprep.subr.bf16.mxu0 0
  %2114 = vmatpush1.bf16.msra.mxu0 0
  %2115 = vmatprep.subr.bf16.mxu0 0
  %2116 = vmatpush1.bf16.msra.mxu0 0
  %2117 = vmatprep.subr.bf16.mxu0 0
  %2118 = vmatpush1.bf16.msra.mxu0 0
  %2119 = vmatprep.subr.bf16.mxu0 0
  %2120 = vmatpush1.bf16.msra.mxu0 0
  %2121 = vmatprep.subr.bf16.mxu0 0
  %2122 = vmatpush1.bf16.msra.mxu0 0
  %2123 = vmatprep.subr.bf16.mxu0 0
  %2124 = vmatpush1.bf16.msra.mxu0 0
  %2125 = vmatprep.subr.bf16.mxu0 0
  %2126 = vmatpush1.bf16.msra.mxu0 0
  %2127 = vmatprep.subr.bf16.mxu0 0
  %2128 = vmatpush1.bf16.msra.mxu0 0
  %2129 = vmatprep.subr.bf16.mxu0 0
  %2130 = vmatpush1.bf16.msra.mxu0 0
  %2131 = vmatprep.subr.bf16.mxu0 0
  %2132 = vmatpush1.bf16.msra.mxu0 0
  %2133 = vmatprep.subr.bf16.mxu0 0
  %2134 = vmatpush1.bf16.msra.mxu0 0
  %2135 = vmatprep.subr.bf16.mxu0 0
  %2136 = vmatpush1.bf16.msra.mxu0 0
  %2137 = vmatprep.subr.bf16.mxu0 0
  %2138 = vmatpush1.bf16.msra.mxu0 0
  %2139 = vmatprep.mubr.bf16.mxu0 0
  %2140 = vmatmul.mubr.bf16.gmra.mrb[0].mxu0 %v2096
  %v2141 = vpop.f32.mrb[0].mxu0
  %v2142 = vadd.f32 0.0, %v2141
  %v2143 = vpop.f32.mrb[0].mxu0
  %v2144 = vpop.f32.mrb[0].mxu0
  %v2145 = vadd.f32 0.0, %v2144
  %v2146 = vpop.f32.mrb[0].mxu0
  %2147 = vmatprep.mubr.bf16.mxu0 0
  %2148 = vmatmul.mubr.bf16.gmra.mrb[0].mxu0 %v2099
  %v2149 = vpop.f32.mrb[0].mxu0
  %v2150 = vadd.f32 0.0, %v2149
  %v2151 = vpop.f32.mrb[0].mxu0
  %v2152 = vpop.f32.mrb[0].mxu0
  %v2153 = vadd.f32 0.0, %v2152
  %v2154 = vpop.f32.mrb[0].mxu0
  %2155 = vmatprep.mubr.bf16.mxu0 0
  %2156 = vmatmul.mubr.bf16.gmra.mrb[0].mxu0 %v2102
  %v2157 = vpop.f32.mrb[0].mxu0
  %v2158 = vadd.f32 0.0, %v2157
  %v2159 = vpop.f32.mrb[0].mxu0
  %v2160 = vpop.f32.mrb[0].mxu0
  %v2161 = vpop.f32.mrb[0].mxu0
  %2162 = vdwg.mxu0
  %2163 = vrot.lane.b32.xlu0 %v1089, 112
  %v2164 = vpop.permute.xlu0 %2163
  %2165 = vrot.lane.b32.xlu0 %v1090, 112
  %v2166 = vpop.permute.xlu0 %2165
  %2167 = vrot.lane.b32.xlu0 %v1091, 112
  %v2168 = vpop.permute.xlu0 %2167
  %2169 = vrot.lane.b32.xlu0 %v1273, 80
  %v2170 = vpop.permute.xlu0 %2169
  %2171 = vrot.lane.b32.xlu0 %v1274, 80
  %v2172 = vpop.permute.xlu0 %2171
  %2173 = vrot.lane.b32.xlu0 %v1275, 80
  %v2174 = vpop.permute.xlu0 %2173
  %v2176 = vsel %vm1288, %v2164, 0
  %v2179 = vsel %vm1288, %v2166, 0
  %v2182 = vsel %vm1288, %v2168, 0
  %v2185 = vsel %vm1288, %v2170, 0
  %v2188 = vsel %vm1288, %v2172, 0
  %v2191 = vsel %vm1288, %v2174, 0
  %2193 = vmatprep.subr.bf16.mxu0 0
  %2194 = vmatpush1.bf16.xpose.msra.mxu0 %v2185
  %2195 = vmatprep.subr.bf16.mxu0 0
  %2196 = vmatpush1.bf16.xpose.msra.mxu0 %v2188
  %2197 = vmatprep.subr.bf16.mxu0 0
  %2198 = vmatpush1.bf16.xpose.msra.mxu0 %v2191
  %2199 = vmatprep.subr.bf16.mxu0 0
  %2200 = vmatpush1.bf16.xpose.msra.mxu0 0
  %2201 = vmatprep.subr.bf16.mxu0 0
  %2202 = vmatpush1.bf16.xpose.msra.mxu0 0
  %2203 = vmatprep.subr.bf16.mxu0 0
  %2204 = vmatpush1.bf16.xpose.msra.mxu0 0
  %2205 = vmatprep.subr.bf16.mxu0 0
  %2206 = vmatpush1.bf16.xpose.msra.mxu0 0
  %2207 = vmatprep.subr.bf16.mxu0 0
  %2208 = vmatpush1.bf16.xpose.msra.mxu0 0
  %2209 = vmatprep.subr.bf16.mxu0 0
  %2210 = vmatpush1.bf16.xpose.msra.mxu0 0
  %2211 = vmatprep.subr.bf16.mxu0 0
  %2212 = vmatpush1.bf16.xpose.msra.mxu0 0
  %2213 = vmatprep.subr.bf16.mxu0 0
  %2214 = vmatpush1.bf16.xpose.msra.mxu0 0
  %2215 = vmatprep.subr.bf16.mxu0 0
  %2216 = vmatpush1.bf16.xpose.msra.mxu0 0
  %2217 = vmatprep.subr.bf16.mxu0 0
  %2218 = vmatpush1.bf16.xpose.msra.mxu0 0
  %2219 = vmatprep.subr.bf16.mxu0 0
  %2220 = vmatpush1.bf16.xpose.msra.mxu0 0
  %2221 = vmatprep.subr.bf16.mxu0 0
  %2222 = vmatpush1.bf16.xpose.msra.mxu0 0
  %2223 = vmatprep.subr.bf16.mxu0 0
  %2224 = vmatpush1.bf16.xpose.msra.mxu0 0
  %2225 = vmatprep.mubr.bf16.mxu0 0
  %2226 = vmatmul.mubr.bf16.gmra.mrb[0].mxu0 %v2176
  %v2227 = vpop.f32.mrb[0].mxu0
  %v2228 = vadd.f32 0.0, %v2227
  %v2229 = vpop.f32.mrb[0].mxu0
  %v2230 = vpop.f32.mrb[0].mxu0
  %v2231 = vadd.f32 0.0, %v2230
  %v2232 = vpop.f32.mrb[0].mxu0
  %2233 = vmatprep.mubr.bf16.mxu0 0
  %2234 = vmatmul.mubr.bf16.gmra.mrb[0].mxu0 %v2179
  %v2235 = vpop.f32.mrb[0].mxu0
  %v2236 = vadd.f32 0.0, %v2235
  %v2237 = vpop.f32.mrb[0].mxu0
  %v2238 = vpop.f32.mrb[0].mxu0
  %v2239 = vadd.f32 0.0, %v2238
  %v2240 = vpop.f32.mrb[0].mxu0
  %2241 = vmatprep.mubr.bf16.mxu0 0
  %2242 = vmatmul.mubr.bf16.gmra.mrb[0].mxu0 %v2182
  %v2243 = vpop.f32.mrb[0].mxu0
  %v2244 = vadd.f32 0.0, %v2243
  %v2245 = vpop.f32.mrb[0].mxu0
  %v2246 = vpop.f32.mrb[0].mxu0
  %v2247 = vpop.f32.mrb[0].mxu0
  %2248 = vdwg.mxu0
  %2249 = vrot.lane.b32.xlu0 %v1092, 112
  %v2250 = vpop.permute.xlu0 %2249
  %2251 = vrot.lane.b32.xlu0 %v1093, 112
  %v2252 = vpop.permute.xlu0 %2251
  %2253 = vrot.lane.b32.xlu0 %v1094, 112
  %v2254 = vpop.permute.xlu0 %2253
  %2255 = vrot.lane.b32.xlu0 %v1276, 80
  %v2256 = vpop.permute.xlu0 %2255
  %2257 = vrot.lane.b32.xlu0 %v1277, 80
  %v2258 = vpop.permute.xlu0 %2257
  %2259 = vrot.lane.b32.xlu0 %v1278, 80
  %v2260 = vpop.permute.xlu0 %2259
  %v2262 = vsel %vm1288, %v2250, 0
  %v2265 = vsel %vm1288, %v2252, 0
  %v2268 = vsel %vm1288, %v2254, 0
  %v2271 = vsel %vm1288, %v2256, 0
  %v2274 = vsel %vm1288, %v2258, 0
  %v2277 = vsel %vm1288, %v2260, 0
  %2279 = vmatprep.subr.bf16.mxu0 0
  %2280 = vmatpush1.bf16.xpose.msra.mxu0 %v2271
  %2281 = vmatprep.subr.bf16.mxu0 0
  %2282 = vmatpush1.bf16.xpose.msra.mxu0 %v2274
  %2283 = vmatprep.subr.bf16.mxu0 0
  %2284 = vmatpush1.bf16.xpose.msra.mxu0 %v2277
  %2285 = vmatprep.subr.bf16.mxu0 0
  %2286 = vmatpush1.bf16.xpose.msra.mxu0 0
  %2287 = vmatprep.subr.bf16.mxu0 0
  %2288 = vmatpush1.bf16.xpose.msra.mxu0 0
  %2289 = vmatprep.subr.bf16.mxu0 0
  %2290 = vmatpush1.bf16.xpose.msra.mxu0 0
  %2291 = vmatprep.subr.bf16.mxu0 0
  %2292 = vmatpush1.bf16.xpose.msra.mxu0 0
  %2293 = vmatprep.subr.bf16.mxu0 0
  %2294 = vmatpush1.bf16.xpose.msra.mxu0 0
  %2295 = vmatprep.subr.bf16.mxu0 0
  %2296 = vmatpush1.bf16.xpose.msra.mxu0 0
  %2297 = vmatprep.subr.bf16.mxu0 0
  %2298 = vmatpush1.bf16.xpose.msra.mxu0 0
  %2299 = vmatprep.subr.bf16.mxu0 0
  %2300 = vmatpush1.bf16.xpose.msra.mxu0 0
  %2301 = vmatprep.subr.bf16.mxu0 0
  %2302 = vmatpush1.bf16.xpose.msra.mxu0 0
  %2303 = vmatprep.subr.bf16.mxu0 0
  %2304 = vmatpush1.bf16.xpose.msra.mxu0 0
  %2305 = vmatprep.subr.bf16.mxu0 0
  %2306 = vmatpush1.bf16.xpose.msra.mxu0 0
  %2307 = vmatprep.subr.bf16.mxu0 0
  %2308 = vmatpush1.bf16.xpose.msra.mxu0 0
  %2309 = vmatprep.subr.bf16.mxu0 0
  %2310 = vmatpush1.bf16.xpose.msra.mxu0 0
  %2311 = vmatprep.mubr.bf16.mxu0 0
  %2312 = vmatmul.mubr.bf16.gmra.mrb[0].mxu0 %v2262
  %v2313 = vpop.f32.mrb[0].mxu0
  %v2314 = vadd.f32 0.0, %v2313
  %v2315 = vpop.f32.mrb[0].mxu0
  %v2316 = vpop.f32.mrb[0].mxu0
  %v2317 = vadd.f32 0.0, %v2316
  %v2318 = vpop.f32.mrb[0].mxu0
  %2319 = vmatprep.mubr.bf16.mxu0 0
  %2320 = vmatmul.mubr.bf16.gmra.mrb[0].mxu0 %v2265
  %v2321 = vpop.f32.mrb[0].mxu0
  %v2322 = vadd.f32 0.0, %v2321
  %v2323 = vpop.f32.mrb[0].mxu0
  %v2324 = vpop.f32.mrb[0].mxu0
  %v2325 = vadd.f32 0.0, %v2324
  %v2326 = vpop.f32.mrb[0].mxu0
  %2327 = vmatprep.mubr.bf16.mxu0 0
  %2328 = vmatmul.mubr.bf16.gmra.mrb[0].mxu0 %v2268
  %v2329 = vpop.f32.mrb[0].mxu0
  %v2330 = vadd.f32 0.0, %v2329
  %v2331 = vpop.f32.mrb[0].mxu0
  %v2332 = vpop.f32.mrb[0].mxu0
  %v2333 = vpop.f32.mrb[0].mxu0
  %2334 = vdwg.mxu0
  %v2335 = vsel %vm1446, %v2228, -inf
  %2336 = vmax.xlane.f32.xlu0 %v2335
  %v2337 = vpop.xlane.xlu0 %2336
  %v2338 = vsel %vm1446, %v2231, -inf
  %2339 = vmax.xlane.f32.xlu0 %v2338
  %v2340 = vpop.xlane.xlu0 %2339
  %v2341 = vsel %vm1446, %v2236, -inf
  %2342 = vmax.xlane.f32.xlu0 %v2341
  %v2343 = vpop.xlane.xlu0 %2342
  %v2344 = vsel %vm1446, %v2239, -inf
  %2345 = vmax.xlane.f32.xlu0 %v2344
  %v2346 = vpop.xlane.xlu0 %2345
  %v2347 = vsel %vm1459, %v2244, -inf
  %2348 = vmax.xlane.f32.xlu0 %v2347
  %v2349 = vpop.xlane.xlu0 %2348
  %v2350 = vsel %vm1446, %v2314, -inf
  %2351 = vmax.xlane.f32.xlu0 %v2350
  %v2352 = vpop.xlane.xlu0 %2351
  %v2353 = vsel %vm1446, %v2317, -inf
  %2354 = vmax.xlane.f32.xlu0 %v2353
  %v2355 = vpop.xlane.xlu0 %2354
  %v2356 = vsel %vm1446, %v2322, -inf
  %2357 = vmax.xlane.f32.xlu0 %v2356
  %v2358 = vpop.xlane.xlu0 %2357
  %v2359 = vsel %vm1446, %v2325, -inf
  %2360 = vmax.xlane.f32.xlu0 %v2359
  %v2361 = vpop.xlane.xlu0 %2360
  %v2362 = vsel %vm1459, %v2330, -inf
  %2363 = vmax.xlane.f32.xlu0 %v2362
  %v2364 = vpop.xlane.xlu0 %2363
  %v2365 = vsub.f32 %v2228, %v2337
  %v2366 = vsub.f32 %v2231, %v2340
  %v2367 = vsub.f32 %v2236, %v2343
  %v2368 = vsub.f32 %v2239, %v2346
  %v2369 = vsub.f32 %v2244, %v2349
  %v2370 = vsub.f32 %v2314, %v2352
  %v2371 = vsub.f32 %v2317, %v2355
  %v2372 = vsub.f32 %v2322, %v2358
  %v2373 = vsub.f32 %v2325, %v2361
  %v2374 = vsub.f32 %v2330, %v2364
  %v2375 = vmul.f32 %v2365, 1.442695
  %v2376 = vpow.pop %v2375
  %v2377 = vmul.f32 %v2366, 1.442695
  %v2378 = vpow.pop %v2377
  %v2379 = vmul.f32 %v2367, 1.442695
  %v2380 = vpow.pop %v2379
  %v2381 = vmul.f32 %v2368, 1.442695
  %v2382 = vpow.pop %v2381
  %v2383 = vmul.f32 %v2369, 1.442695
  %v2384 = vpow.pop %v2383
  %v2385 = vmul.f32 %v2370, 1.442695
  %v2386 = vpow.pop %v2385
  %v2387 = vmul.f32 %v2371, 1.442695
  %v2388 = vpow.pop %v2387
  %v2389 = vmul.f32 %v2372, 1.442695
  %v2390 = vpow.pop %v2389
  %v2391 = vmul.f32 %v2373, 1.442695
  %v2392 = vpow.pop %v2391
  %v2393 = vmul.f32 %v2374, 1.442695
  %v2394 = vpow.pop %v2393
  %v2395 = vsel %vm1446, %v2376, 0.0
  %2396 = vadd.xlane.f32.xlu0 %v2395
  %v2397 = vpop.xlane.xlu0 %2396
  %v2398 = vsel %vm1446, %v2378, 0.0
  %2399 = vadd.xlane.f32.xlu0 %v2398
  %v2400 = vpop.xlane.xlu0 %2399
  %v2401 = vsel %vm1446, %v2380, 0.0
  %2402 = vadd.xlane.f32.xlu0 %v2401
  %v2403 = vpop.xlane.xlu0 %2402
  %v2404 = vsel %vm1446, %v2382, 0.0
  %2405 = vadd.xlane.f32.xlu0 %v2404
  %v2406 = vpop.xlane.xlu0 %2405
  %v2407 = vsel %vm1459, %v2384, 0.0
  %2408 = vadd.xlane.f32.xlu0 %v2407
  %v2409 = vpop.xlane.xlu0 %2408
  %v2410 = vsel %vm1446, %v2386, 0.0
  %2411 = vadd.xlane.f32.xlu0 %v2410
  %v2412 = vpop.xlane.xlu0 %2411
  %v2413 = vsel %vm1446, %v2388, 0.0
  %2414 = vadd.xlane.f32.xlu0 %v2413
  %v2415 = vpop.xlane.xlu0 %2414
  %v2416 = vsel %vm1446, %v2390, 0.0
  %2417 = vadd.xlane.f32.xlu0 %v2416
  %v2418 = vpop.xlane.xlu0 %2417
  %v2419 = vsel %vm1446, %v2392, 0.0
  %2420 = vadd.xlane.f32.xlu0 %v2419
  %v2421 = vpop.xlane.xlu0 %2420
  %v2422 = vsel %vm1459, %v2394, 0.0
  %2423 = vadd.xlane.f32.xlu0 %v2422
  %v2424 = vpop.xlane.xlu0 %2423
  %v2425 = vrcp.pop %v2397
  %v2426 = vrcp.pop %v2400
  %v2427 = vrcp.pop %v2403
  %v2428 = vrcp.pop %v2406
  %v2429 = vrcp.pop %v2409
  %v2430 = vrcp.pop %v2412
  %v2431 = vrcp.pop %v2415
  %v2432 = vrcp.pop %v2418
  %v2433 = vrcp.pop %v2421
  %v2434 = vrcp.pop %v2424
  %v2435 = vmul.f32 %v2376, %v2425
  %v2436 = vmul.f32 %v2378, %v2426
  %v2437 = vmul.f32 %v2380, %v2427
  %v2438 = vmul.f32 %v2382, %v2428
  %v2439 = vmul.f32 %v2384, %v2429
  %v2440 = vmul.f32 %v2386, %v2430
  %v2441 = vmul.f32 %v2388, %v2431
  %v2442 = vmul.f32 %v2390, %v2432
  %v2443 = vmul.f32 %v2392, %v2433
  %v2444 = vmul.f32 %v2394, %v2434
  %v2445 = vpack.c.bf16 %v2436, %v2435
  %v2446 = vpack.c.bf16 %v2438, %v2437
  %v2447 = vpack.c.bf16 %v2439, %v2439
  %v2448 = vpack.c.bf16 %v2441, %v2440
  %v2449 = vpack.c.bf16 %v2443, %v2442
  %v2450 = vpack.c.bf16 %v2444, %v2444
  %2451 = vrot.lane.b32.xlu0 %v1273, 48
  %v2452 = vpop.permute.xlu0 %2451
  %2453 = vrot.lane.b32.xlu0 %v1274, 48
  %v2454 = vpop.permute.xlu0 %2453
  %2455 = vrot.lane.b32.xlu0 %v1275, 48
  %v2456 = vpop.permute.xlu0 %2455
  %v2460 = vsel %vm1446, %v2445, 0
  %v2463 = vsel %vm1446, %v2446, 0
  %v2466 = vsel %vm1446, %v2447, 0
  %v2469 = vsel %vm1581, %v2456, 0
  %2471 = vmatprep.subr.bf16.mxu0 0
  %2472 = vmatpush1.bf16.msra.mxu0 %v2452
  %2473 = vmatprep.subr.bf16.mxu0 0
  %2474 = vmatpush1.bf16.msra.mxu0 %v2454
  %2475 = vmatprep.subr.bf16.mxu0 0
  %2476 = vmatpush1.bf16.msra.mxu0 %v2469
  %2477 = vmatprep.subr.bf16.mxu0 0
  %2478 = vmatpush1.bf16.msra.mxu0 0
  %2479 = vmatprep.subr.bf16.mxu0 0
  %2480 = vmatpush1.bf16.msra.mxu0 0
  %2481 = vmatprep.subr.bf16.mxu0 0
  %2482 = vmatpush1.bf16.msra.mxu0 0
  %2483 = vmatprep.subr.bf16.mxu0 0
  %2484 = vmatpush1.bf16.msra.mxu0 0
  %2485 = vmatprep.subr.bf16.mxu0 0
  %2486 = vmatpush1.bf16.msra.mxu0 0
  %2487 = vmatprep.subr.bf16.mxu0 0
  %2488 = vmatpush1.bf16.msra.mxu0 0
  %2489 = vmatprep.subr.bf16.mxu0 0
  %2490 = vmatpush1.bf16.msra.mxu0 0
  %2491 = vmatprep.subr.bf16.mxu0 0
  %2492 = vmatpush1.bf16.msra.mxu0 0
  %2493 = vmatprep.subr.bf16.mxu0 0
  %2494 = vmatpush1.bf16.msra.mxu0 0
  %2495 = vmatprep.subr.bf16.mxu0 0
  %2496 = vmatpush1.bf16.msra.mxu0 0
  %2497 = vmatprep.subr.bf16.mxu0 0
  %2498 = vmatpush1.bf16.msra.mxu0 0
  %2499 = vmatprep.subr.bf16.mxu0 0
  %2500 = vmatpush1.bf16.msra.mxu0 0
  %2501 = vmatprep.subr.bf16.mxu0 0
  %2502 = vmatpush1.bf16.msra.mxu0 0
  %2503 = vmatprep.mubr.bf16.mxu0 0
  %2504 = vmatmul.mubr.bf16.gmra.mrb[0].mxu0 %v2460
  %v2505 = vpop.f32.mrb[0].mxu0
  %v2506 = vadd.f32 0.0, %v2505
  %v2507 = vpop.f32.mrb[0].mxu0
  %v2508 = vpop.f32.mrb[0].mxu0
  %v2509 = vadd.f32 0.0, %v2508
  %v2510 = vpop.f32.mrb[0].mxu0
  %2511 = vmatprep.mubr.bf16.mxu0 0
  %2512 = vmatmul.mubr.bf16.gmra.mrb[0].mxu0 %v2463
  %v2513 = vpop.f32.mrb[0].mxu0
  %v2514 = vadd.f32 0.0, %v2513
  %v2515 = vpop.f32.mrb[0].mxu0
  %v2516 = vpop.f32.mrb[0].mxu0
  %v2517 = vadd.f32 0.0, %v2516
  %v2518 = vpop.f32.mrb[0].mxu0
  %2519 = vmatprep.mubr.bf16.mxu0 0
  %2520 = vmatmul.mubr.bf16.gmra.mrb[0].mxu0 %v2466
  %v2521 = vpop.f32.mrb[0].mxu0
  %v2522 = vadd.f32 0.0, %v2521
  %v2523 = vpop.f32.mrb[0].mxu0
  %v2524 = vpop.f32.mrb[0].mxu0
  %v2525 = vpop.f32.mrb[0].mxu0
  %2526 = vdwg.mxu0
  %2527 = vrot.lane.b32.xlu0 %v1276, 48
  %v2528 = vpop.permute.xlu0 %2527
  %2529 = vrot.lane.b32.xlu0 %v1277, 48
  %v2530 = vpop.permute.xlu0 %2529
  %2531 = vrot.lane.b32.xlu0 %v1278, 48
  %v2532 = vpop.permute.xlu0 %2531
  %v2536 = vsel %vm1446, %v2448, 0
  %v2539 = vsel %vm1446, %v2449, 0
  %v2542 = vsel %vm1446, %v2450, 0
  %v2545 = vsel %vm1581, %v2532, 0
  %2547 = vmatprep.subr.bf16.mxu0 0
  %2548 = vmatpush1.bf16.msra.mxu0 %v2528
  %2549 = vmatprep.subr.bf16.mxu0 0
  %2550 = vmatpush1.bf16.msra.mxu0 %v2530
  %2551 = vmatprep.subr.bf16.mxu0 0
  %2552 = vmatpush1.bf16.msra.mxu0 %v2545
  %2553 = vmatprep.subr.bf16.mxu0 0
  %2554 = vmatpush1.bf16.msra.mxu0 0
  %2555 = vmatprep.subr.bf16.mxu0 0
  %2556 = vmatpush1.bf16.msra.mxu0 0
  %2557 = vmatprep.subr.bf16.mxu0 0
  %2558 = vmatpush1.bf16.msra.mxu0 0
  %2559 = vmatprep.subr.bf16.mxu0 0
  %2560 = vmatpush1.bf16.msra.mxu0 0
  %2561 = vmatprep.subr.bf16.mxu0 0
  %2562 = vmatpush1.bf16.msra.mxu0 0
  %2563 = vmatprep.subr.bf16.mxu0 0
  %2564 = vmatpush1.bf16.msra.mxu0 0
  %2565 = vmatprep.subr.bf16.mxu0 0
  %2566 = vmatpush1.bf16.msra.mxu0 0
  %2567 = vmatprep.subr.bf16.mxu0 0
  %2568 = vmatpush1.bf16.msra.mxu0 0
  %2569 = vmatprep.subr.bf16.mxu0 0
  %2570 = vmatpush1.bf16.msra.mxu0 0
  %2571 = vmatprep.subr.bf16.mxu0 0
  %2572 = vmatpush1.bf16.msra.mxu0 0
  %2573 = vmatprep.subr.bf16.mxu0 0
  %2574 = vmatpush1.bf16.msra.mxu0 0
  %2575 = vmatprep.subr.bf16.mxu0 0
  %2576 = vmatpush1.bf16.msra.mxu0 0
  %2577 = vmatprep.subr.bf16.mxu0 0
  %2578 = vmatpush1.bf16.msra.mxu0 0
  %2579 = vmatprep.mubr.bf16.mxu0 0
  %2580 = vmatmul.mubr.bf16.gmra.mrb[0].mxu0 %v2536
  %v2581 = vpop.f32.mrb[0].mxu0
  %v2582 = vadd.f32 0.0, %v2581
  %v2583 = vpop.f32.mrb[0].mxu0
  %v2584 = vpop.f32.mrb[0].mxu0
  %v2585 = vadd.f32 0.0, %v2584
  %v2586 = vpop.f32.mrb[0].mxu0
  %2587 = vmatprep.mubr.bf16.mxu0 0
  %2588 = vmatmul.mubr.bf16.gmra.mrb[0].mxu0 %v2539
  %v2589 = vpop.f32.mrb[0].mxu0
  %v2590 = vadd.f32 0.0, %v2589
  %v2591 = vpop.f32.mrb[0].mxu0
  %v2592 = vpop.f32.mrb[0].mxu0
  %v2593 = vadd.f32 0.0, %v2592
  %v2594 = vpop.f32.mrb[0].mxu0
  %2595 = vmatprep.mubr.bf16.mxu0 0
  %2596 = vmatmul.mubr.bf16.gmra.mrb[0].mxu0 %v2542
  %v2597 = vpop.f32.mrb[0].mxu0
  %v2598 = vadd.f32 0.0, %v2597
  %v2599 = vpop.f32.mrb[0].mxu0
  %v2600 = vpop.f32.mrb[0].mxu0
  %v2601 = vpop.f32.mrb[0].mxu0
  %2602 = vdwg.mxu0
  %2603 = vrot.lane.b32.xlu0 %v1089, 104
  %v2604 = vpop.permute.xlu0 %2603
  %2605 = vrot.lane.b32.xlu0 %v1090, 104
  %v2606 = vpop.permute.xlu0 %2605
  %2607 = vrot.lane.b32.xlu0 %v1091, 104
  %v2608 = vpop.permute.xlu0 %2607
  %2609 = vrot.lane.b32.xlu0 %v1273, 72
  %v2610 = vpop.permute.xlu0 %2609
  %2611 = vrot.lane.b32.xlu0 %v1274, 72
  %v2612 = vpop.permute.xlu0 %2611
  %2613 = vrot.lane.b32.xlu0 %v1275, 72
  %v2614 = vpop.permute.xlu0 %2613
  %v2616 = vsel %vm1288, %v2604, 0
  %v2619 = vsel %vm1288, %v2606, 0
  %v2622 = vsel %vm1288, %v2608, 0
  %v2625 = vsel %vm1288, %v2610, 0
  %v2628 = vsel %vm1288, %v2612, 0
  %v2631 = vsel %vm1288, %v2614, 0
  %2633 = vmatprep.subr.bf16.mxu0 0
  %2634 = vmatpush1.bf16.xpose.msra.mxu0 %v2625
  %2635 = vmatprep.subr.bf16.mxu0 0
  %2636 = vmatpush1.bf16.xpose.msra.mxu0 %v2628
  %2637 = vmatprep.subr.bf16.mxu0 0
  %2638 = vmatpush1.bf16.xpose.msra.mxu0 %v2631
  %2639 = vmatprep.subr.bf16.mxu0 0
  %2640 = vmatpush1.bf16.xpose.msra.mxu0 0
  %2641 = vmatprep.subr.bf16.mxu0 0
  %2642 = vmatpush1.bf16.xpose.msra.mxu0 0
  %2643 = vmatprep.subr.bf16.mxu0 0
  %2644 = vmatpush1.bf16.xpose.msra.mxu0 0
  %2645 = vmatprep.subr.bf16.mxu0 0
  %2646 = vmatpush1.bf16.xpose.msra.mxu0 0
  %2647 = vmatprep.subr.bf16.mxu0 0
  %2648 = vmatpush1.bf16.xpose.msra.mxu0 0
  %2649 = vmatprep.subr.bf16.mxu0 0
  %2650 = vmatpush1.bf16.xpose.msra.mxu0 0
  %2651 = vmatprep.subr.bf16.mxu0 0
  %2652 = vmatpush1.bf16.xpose.msra.mxu0 0
  %2653 = vmatprep.subr.bf16.mxu0 0
  %2654 = vmatpush1.bf16.xpose.msra.mxu0 0
  %2655 = vmatprep.subr.bf16.mxu0 0
  %2656 = vmatpush1.bf16.xpose.msra.mxu0 0
  %2657 = vmatprep.subr.bf16.mxu0 0
  %2658 = vmatpush1.bf16.xpose.msra.mxu0 0
  %2659 = vmatprep.subr.bf16.mxu0 0
  %2660 = vmatpush1.bf16.xpose.msra.mxu0 0
  %2661 = vmatprep.subr.bf16.mxu0 0
  %2662 = vmatpush1.bf16.xpose.msra.mxu0 0
  %2663 = vmatprep.subr.bf16.mxu0 0
  %2664 = vmatpush1.bf16.xpose.msra.mxu0 0
  %2665 = vmatprep.mubr.bf16.mxu0 0
  %2666 = vmatmul.mubr.bf16.gmra.mrb[0].mxu0 %v2616
  %v2667 = vpop.f32.mrb[0].mxu0
  %v2668 = vadd.f32 0.0, %v2667
  %v2669 = vpop.f32.mrb[0].mxu0
  %v2670 = vpop.f32.mrb[0].mxu0
  %v2671 = vadd.f32 0.0, %v2670
  %v2672 = vpop.f32.mrb[0].mxu0
  %2673 = vmatprep.mubr.bf16.mxu0 0
  %2674 = vmatmul.mubr.bf16.gmra.mrb[0].mxu0 %v2619
  %v2675 = vpop.f32.mrb[0].mxu0
  %v2676 = vadd.f32 0.0, %v2675
  %v2677 = vpop.f32.mrb[0].mxu0
  %v2678 = vpop.f32.mrb[0].mxu0
  %v2679 = vadd.f32 0.0, %v2678
  %v2680 = vpop.f32.mrb[0].mxu0
  %2681 = vmatprep.mubr.bf16.mxu0 0
  %2682 = vmatmul.mubr.bf16.gmra.mrb[0].mxu0 %v2622
  %v2683 = vpop.f32.mrb[0].mxu0
  %v2684 = vadd.f32 0.0, %v2683
  %v2685 = vpop.f32.mrb[0].mxu0
  %v2686 = vpop.f32.mrb[0].mxu0
  %v2687 = vpop.f32.mrb[0].mxu0
  %2688 = vdwg.mxu0
  %2689 = vrot.lane.b32.xlu0 %v1092, 104
  %v2690 = vpop.permute.xlu0 %2689
  %2691 = vrot.lane.b32.xlu0 %v1093, 104
  %v2692 = vpop.permute.xlu0 %2691
  %2693 = vrot.lane.b32.xlu0 %v1094, 104
  %v2694 = vpop.permute.xlu0 %2693
  %2695 = vrot.lane.b32.xlu0 %v1276, 72
  %v2696 = vpop.permute.xlu0 %2695
  %2697 = vrot.lane.b32.xlu0 %v1277, 72
  %v2698 = vpop.permute.xlu0 %2697
  %2699 = vrot.lane.b32.xlu0 %v1278, 72
  %v2700 = vpop.permute.xlu0 %2699
  %v2702 = vsel %vm1288, %v2690, 0
  %v2705 = vsel %vm1288, %v2692, 0
  %v2708 = vsel %vm1288, %v2694, 0
  %v2711 = vsel %vm1288, %v2696, 0
  %v2714 = vsel %vm1288, %v2698, 0
  %v2717 = vsel %vm1288, %v2700, 0
  %2719 = vmatprep.subr.bf16.mxu0 0
  %2720 = vmatpush1.bf16.xpose.msra.mxu0 %v2711
  %2721 = vmatprep.subr.bf16.mxu0 0
  %2722 = vmatpush1.bf16.xpose.msra.mxu0 %v2714
  %2723 = vmatprep.subr.bf16.mxu0 0
  %2724 = vmatpush1.bf16.xpose.msra.mxu0 %v2717
  %2725 = vmatprep.subr.bf16.mxu0 0
  %2726 = vmatpush1.bf16.xpose.msra.mxu0 0
  %2727 = vmatprep.subr.bf16.mxu0 0
  %2728 = vmatpush1.bf16.xpose.msra.mxu0 0
  %2729 = vmatprep.subr.bf16.mxu0 0
  %2730 = vmatpush1.bf16.xpose.msra.mxu0 0
  %2731 = vmatprep.subr.bf16.mxu0 0
  %2732 = vmatpush1.bf16.xpose.msra.mxu0 0
  %2733 = vmatprep.subr.bf16.mxu0 0
  %2734 = vmatpush1.bf16.xpose.msra.mxu0 0
  %2735 = vmatprep.subr.bf16.mxu0 0
  %2736 = vmatpush1.bf16.xpose.msra.mxu0 0
  %2737 = vmatprep.subr.bf16.mxu0 0
  %2738 = vmatpush1.bf16.xpose.msra.mxu0 0
  %2739 = vmatprep.subr.bf16.mxu0 0
  %2740 = vmatpush1.bf16.xpose.msra.mxu0 0
  %2741 = vmatprep.subr.bf16.mxu0 0
  %2742 = vmatpush1.bf16.xpose.msra.mxu0 0
  %2743 = vmatprep.subr.bf16.mxu0 0
  %2744 = vmatpush1.bf16.xpose.msra.mxu0 0
  %2745 = vmatprep.subr.bf16.mxu0 0
  %2746 = vmatpush1.bf16.xpose.msra.mxu0 0
  %2747 = vmatprep.subr.bf16.mxu0 0
  %2748 = vmatpush1.bf16.xpose.msra.mxu0 0
  %2749 = vmatprep.subr.bf16.mxu0 0
  %2750 = vmatpush1.bf16.xpose.msra.mxu0 0
  %2751 = vmatprep.mubr.bf16.mxu0 0
  %2752 = vmatmul.mubr.bf16.gmra.mrb[0].mxu0 %v2702
  %v2753 = vpop.f32.mrb[0].mxu0
  %v2754 = vadd.f32 0.0, %v2753
  %v2755 = vpop.f32.mrb[0].mxu0
  %v2756 = vpop.f32.mrb[0].mxu0
  %v2757 = vadd.f32 0.0, %v2756
  %v2758 = vpop.f32.mrb[0].mxu0
  %2759 = vmatprep.mubr.bf16.mxu0 0
  %2760 = vmatmul.mubr.bf16.gmra.mrb[0].mxu0 %v2705
  %v2761 = vpop.f32.mrb[0].mxu0
  %v2762 = vadd.f32 0.0, %v2761
  %v2763 = vpop.f32.mrb[0].mxu0
  %v2764 = vpop.f32.mrb[0].mxu0
  %v2765 = vadd.f32 0.0, %v2764
  %v2766 = vpop.f32.mrb[0].mxu0
  %2767 = vmatprep.mubr.bf16.mxu0 0
  %2768 = vmatmul.mubr.bf16.gmra.mrb[0].mxu0 %v2708
  %v2769 = vpop.f32.mrb[0].mxu0
  %v2770 = vadd.f32 0.0, %v2769
  %v2771 = vpop.f32.mrb[0].mxu0
  %v2772 = vpop.f32.mrb[0].mxu0
  %v2773 = vpop.f32.mrb[0].mxu0
  %2774 = vdwg.mxu0
  %v2775 = vsel %vm1446, %v2668, -inf
  %2776 = vmax.xlane.f32.xlu0 %v2775
  %v2777 = vpop.xlane.xlu0 %2776
  %v2778 = vsel %vm1446, %v2671, -inf
  %2779 = vmax.xlane.f32.xlu0 %v2778
  %v2780 = vpop.xlane.xlu0 %2779
  %v2781 = vsel %vm1446, %v2676, -inf
  %2782 = vmax.xlane.f32.xlu0 %v2781
  %v2783 = vpop.xlane.xlu0 %2782
  %v2784 = vsel %vm1446, %v2679, -inf
  %2785 = vmax.xlane.f32.xlu0 %v2784
  %v2786 = vpop.xlane.xlu0 %2785
  %v2787 = vsel %vm1459, %v2684, -inf
  %2788 = vmax.xlane.f32.xlu0 %v2787
  %v2789 = vpop.xlane.xlu0 %2788
  %v2790 = vsel %vm1446, %v2754, -inf
  %2791 = vmax.xlane.f32.xlu0 %v2790
  %v2792 = vpop.xlane.xlu0 %2791
  %v2793 = vsel %vm1446, %v2757, -inf
  %2794 = vmax.xlane.f32.xlu0 %v2793
  %v2795 = vpop.xlane.xlu0 %2794
  %v2796 = vsel %vm1446, %v2762, -inf
  %2797 = vmax.xlane.f32.xlu0 %v2796
  %v2798 = vpop.xlane.xlu0 %2797
  %v2799 = vsel %vm1446, %v2765, -inf
  %2800 = vmax.xlane.f32.xlu0 %v2799
  %v2801 = vpop.xlane.xlu0 %2800
  %v2802 = vsel %vm1459, %v2770, -inf
  %2803 = vmax.xlane.f32.xlu0 %v2802
  %v2804 = vpop.xlane.xlu0 %2803
  %v2805 = vsub.f32 %v2668, %v2777
  %v2806 = vsub.f32 %v2671, %v2780
  %v2807 = vsub.f32 %v2676, %v2783
  %v2808 = vsub.f32 %v2679, %v2786
  %v2809 = vsub.f32 %v2684, %v2789
  %v2810 = vsub.f32 %v2754, %v2792
  %v2811 = vsub.f32 %v2757, %v2795
  %v2812 = vsub.f32 %v2762, %v2798
  %v2813 = vsub.f32 %v2765, %v2801
  %v2814 = vsub.f32 %v2770, %v2804
  %v2815 = vmul.f32 %v2805, 1.442695
  %v2816 = vpow.pop %v2815
  %v2817 = vmul.f32 %v2806, 1.442695
  %v2818 = vpow.pop %v2817
  %v2819 = vmul.f32 %v2807, 1.442695
  %v2820 = vpow.pop %v2819
  %v2821 = vmul.f32 %v2808, 1.442695
  %v2822 = vpow.pop %v2821
  %v2823 = vmul.f32 %v2809, 1.442695
  %v2824 = vpow.pop %v2823
  %v2825 = vmul.f32 %v2810, 1.442695
  %v2826 = vpow.pop %v2825
  %v2827 = vmul.f32 %v2811, 1.442695
  %v2828 = vpow.pop %v2827
  %v2829 = vmul.f32 %v2812, 1.442695
  %v2830 = vpow.pop %v2829
  %v2831 = vmul.f32 %v2813, 1.442695
  %v2832 = vpow.pop %v2831
  %v2833 = vmul.f32 %v2814, 1.442695
  %v2834 = vpow.pop %v2833
  %v2835 = vsel %vm1446, %v2816, 0.0
  %2836 = vadd.xlane.f32.xlu0 %v2835
  %v2837 = vpop.xlane.xlu0 %2836
  %v2838 = vsel %vm1446, %v2818, 0.0
  %2839 = vadd.xlane.f32.xlu0 %v2838
  %v2840 = vpop.xlane.xlu0 %2839
  %v2841 = vsel %vm1446, %v2820, 0.0
  %2842 = vadd.xlane.f32.xlu0 %v2841
  %v2843 = vpop.xlane.xlu0 %2842
  %v2844 = vsel %vm1446, %v2822, 0.0
  %2845 = vadd.xlane.f32.xlu0 %v2844
  %v2846 = vpop.xlane.xlu0 %2845
  %v2847 = vsel %vm1459, %v2824, 0.0
  %2848 = vadd.xlane.f32.xlu0 %v2847
  %v2849 = vpop.xlane.xlu0 %2848
  %v2850 = vsel %vm1446, %v2826, 0.0
  %2851 = vadd.xlane.f32.xlu0 %v2850
  %v2852 = vpop.xlane.xlu0 %2851
  %v2853 = vsel %vm1446, %v2828, 0.0
  %2854 = vadd.xlane.f32.xlu0 %v2853
  %v2855 = vpop.xlane.xlu0 %2854
  %v2856 = vsel %vm1446, %v2830, 0.0
  %2857 = vadd.xlane.f32.xlu0 %v2856
  %v2858 = vpop.xlane.xlu0 %2857
  %v2859 = vsel %vm1446, %v2832, 0.0
  %2860 = vadd.xlane.f32.xlu0 %v2859
  %v2861 = vpop.xlane.xlu0 %2860
  %v2862 = vsel %vm1459, %v2834, 0.0
  %2863 = vadd.xlane.f32.xlu0 %v2862
  %v2864 = vpop.xlane.xlu0 %2863
  %v2865 = vrcp.pop %v2837
  %v2866 = vrcp.pop %v2840
  %v2867 = vrcp.pop %v2843
  %v2868 = vrcp.pop %v2846
  %v2869 = vrcp.pop %v2849
  %v2870 = vrcp.pop %v2852
  %v2871 = vrcp.pop %v2855
  %v2872 = vrcp.pop %v2858
  %v2873 = vrcp.pop %v2861
  %v2874 = vrcp.pop %v2864
  %v2875 = vmul.f32 %v2816, %v2865
  %v2876 = vmul.f32 %v2818, %v2866
  %v2877 = vmul.f32 %v2820, %v2867
  %v2878 = vmul.f32 %v2822, %v2868
  %v2879 = vmul.f32 %v2824, %v2869
  %v2880 = vmul.f32 %v2826, %v2870
  %v2881 = vmul.f32 %v2828, %v2871
  %v2882 = vmul.f32 %v2830, %v2872
  %v2883 = vmul.f32 %v2832, %v2873
  %v2884 = vmul.f32 %v2834, %v2874
  %v2885 = vpack.c.bf16 %v2876, %v2875
  %v2886 = vpack.c.bf16 %v2878, %v2877
  %v2887 = vpack.c.bf16 %v2879, %v2879
  %v2888 = vpack.c.bf16 %v2881, %v2880
  %v2889 = vpack.c.bf16 %v2883, %v2882
  %v2890 = vpack.c.bf16 %v2884, %v2884
  %2891 = vrot.lane.b32.xlu0 %v1273, 40
  %v2892 = vpop.permute.xlu0 %2891
  %2893 = vrot.lane.b32.xlu0 %v1274, 40
  %v2894 = vpop.permute.xlu0 %2893
  %2895 = vrot.lane.b32.xlu0 %v1275, 40
  %v2896 = vpop.permute.xlu0 %2895
  %v2900 = vsel %vm1446, %v2885, 0
  %v2903 = vsel %vm1446, %v2886, 0
  %v2906 = vsel %vm1446, %v2887, 0
  %v2909 = vsel %vm1581, %v2896, 0
  %2911 = vmatprep.subr.bf16.mxu0 0
  %2912 = vmatpush1.bf16.msra.mxu0 %v2892
  %2913 = vmatprep.subr.bf16.mxu0 0
  %2914 = vmatpush1.bf16.msra.mxu0 %v2894
  %2915 = vmatprep.subr.bf16.mxu0 0
  %2916 = vmatpush1.bf16.msra.mxu0 %v2909
  %2917 = vmatprep.subr.bf16.mxu0 0
  %2918 = vmatpush1.bf16.msra.mxu0 0
  %2919 = vmatprep.subr.bf16.mxu0 0
  %2920 = vmatpush1.bf16.msra.mxu0 0
  %2921 = vmatprep.subr.bf16.mxu0 0
  %2922 = vmatpush1.bf16.msra.mxu0 0
  %2923 = vmatprep.subr.bf16.mxu0 0
  %2924 = vmatpush1.bf16.msra.mxu0 0
  %2925 = vmatprep.subr.bf16.mxu0 0
  %2926 = vmatpush1.bf16.msra.mxu0 0
  %2927 = vmatprep.subr.bf16.mxu0 0
  %2928 = vmatpush1.bf16.msra.mxu0 0
  %2929 = vmatprep.subr.bf16.mxu0 0
  %2930 = vmatpush1.bf16.msra.mxu0 0
  %2931 = vmatprep.subr.bf16.mxu0 0
  %2932 = vmatpush1.bf16.msra.mxu0 0
  %2933 = vmatprep.subr.bf16.mxu0 0
  %2934 = vmatpush1.bf16.msra.mxu0 0
  %2935 = vmatprep.subr.bf16.mxu0 0
  %2936 = vmatpush1.bf16.msra.mxu0 0
  %2937 = vmatprep.subr.bf16.mxu0 0
  %2938 = vmatpush1.bf16.msra.mxu0 0
  %2939 = vmatprep.subr.bf16.mxu0 0
  %2940 = vmatpush1.bf16.msra.mxu0 0
  %2941 = vmatprep.subr.bf16.mxu0 0
  %2942 = vmatpush1.bf16.msra.mxu0 0
  %2943 = vmatprep.mubr.bf16.mxu0 0
  %2944 = vmatmul.mubr.bf16.gmra.mrb[0].mxu0 %v2900
  %v2945 = vpop.f32.mrb[0].mxu0
  %v2946 = vadd.f32 0.0, %v2945
  %v2947 = vpop.f32.mrb[0].mxu0
  %v2948 = vpop.f32.mrb[0].mxu0
  %v2949 = vadd.f32 0.0, %v2948
  %v2950 = vpop.f32.mrb[0].mxu0
  %2951 = vmatprep.mubr.bf16.mxu0 0
  %2952 = vmatmul.mubr.bf16.gmra.mrb[0].mxu0 %v2903
  %v2953 = vpop.f32.mrb[0].mxu0
  %v2954 = vadd.f32 0.0, %v2953
  %v2955 = vpop.f32.mrb[0].mxu0
  %v2956 = vpop.f32.mrb[0].mxu0
  %v2957 = vadd.f32 0.0, %v2956
  %v2958 = vpop.f32.mrb[0].mxu0
  %2959 = vmatprep.mubr.bf16.mxu0 0
  %2960 = vmatmul.mubr.bf16.gmra.mrb[0].mxu0 %v2906
  %v2961 = vpop.f32.mrb[0].mxu0
  %v2962 = vadd.f32 0.0, %v2961
  %v2963 = vpop.f32.mrb[0].mxu0
  %v2964 = vpop.f32.mrb[0].mxu0
  %v2965 = vpop.f32.mrb[0].mxu0
  %2966 = vdwg.mxu0
  %2967 = vrot.lane.b32.xlu0 %v1276, 40
  %v2968 = vpop.permute.xlu0 %2967
  %2969 = vrot.lane.b32.xlu0 %v1277, 40
  %v2970 = vpop.permute.xlu0 %2969
  %2971 = vrot.lane.b32.xlu0 %v1278, 40
  %v2972 = vpop.permute.xlu0 %2971
  %v2976 = vsel %vm1446, %v2888, 0
  %v2979 = vsel %vm1446, %v2889, 0
  %v2982 = vsel %vm1446, %v2890, 0
  %v2985 = vsel %vm1581, %v2972, 0
  %2987 = vmatprep.subr.bf16.mxu0 0
  %2988 = vmatpush1.bf16.msra.mxu0 %v2968
  %2989 = vmatprep.subr.bf16.mxu0 0
  %2990 = vmatpush1.bf16.msra.mxu0 %v2970
  %2991 = vmatprep.subr.bf16.mxu0 0
  %2992 = vmatpush1.bf16.msra.mxu0 %v2985
  %2993 = vmatprep.subr.bf16.mxu0 0
  %2994 = vmatpush1.bf16.msra.mxu0 0
  %2995 = vmatprep.subr.bf16.mxu0 0
  %2996 = vmatpush1.bf16.msra.mxu0 0
  %2997 = vmatprep.subr.bf16.mxu0 0
  %2998 = vmatpush1.bf16.msra.mxu0 0
  %2999 = vmatprep.subr.bf16.mxu0 0
  %3000 = vmatpush1.bf16.msra.mxu0 0
  %3001 = vmatprep.subr.bf16.mxu0 0
  %3002 = vmatpush1.bf16.msra.mxu0 0
  %3003 = vmatprep.subr.bf16.mxu0 0
  %3004 = vmatpush1.bf16.msra.mxu0 0
  %3005 = vmatprep.subr.bf16.mxu0 0
  %3006 = vmatpush1.bf16.msra.mxu0 0
  %3007 = vmatprep.subr.bf16.mxu0 0
  %3008 = vmatpush1.bf16.msra.mxu0 0
  %3009 = vmatprep.subr.bf16.mxu0 0
  %3010 = vmatpush1.bf16.msra.mxu0 0
  %3011 = vmatprep.subr.bf16.mxu0 0
  %3012 = vmatpush1.bf16.msra.mxu0 0
  %3013 = vmatprep.subr.bf16.mxu0 0
  %3014 = vmatpush1.bf16.msra.mxu0 0
  %3015 = vmatprep.subr.bf16.mxu0 0
  %3016 = vmatpush1.bf16.msra.mxu0 0
  %3017 = vmatprep.subr.bf16.mxu0 0
  %3018 = vmatpush1.bf16.msra.mxu0 0
  %3019 = vmatprep.mubr.bf16.mxu0 0
  %3020 = vmatmul.mubr.bf16.gmra.mrb[0].mxu0 %v2976
  %v3021 = vpop.f32.mrb[0].mxu0
  %v3022 = vadd.f32 0.0, %v3021
  %v3023 = vpop.f32.mrb[0].mxu0
  %v3024 = vpop.f32.mrb[0].mxu0
  %v3025 = vadd.f32 0.0, %v3024
  %v3026 = vpop.f32.mrb[0].mxu0
  %3027 = vmatprep.mubr.bf16.mxu0 0
  %3028 = vmatmul.mubr.bf16.gmra.mrb[0].mxu0 %v2979
  %v3029 = vpop.f32.mrb[0].mxu0
  %v3030 = vadd.f32 0.0, %v3029
  %v3031 = vpop.f32.mrb[0].mxu0
  %v3032 = vpop.f32.mrb[0].mxu0
  %v3033 = vadd.f32 0.0, %v3032
  %v3034 = vpop.f32.mrb[0].mxu0
  %3035 = vmatprep.mubr.bf16.mxu0 0
  %3036 = vmatmul.mubr.bf16.gmra.mrb[0].mxu0 %v2982
  %v3037 = vpop.f32.mrb[0].mxu0
  %v3038 = vadd.f32 0.0, %v3037
  %v3039 = vpop.f32.mrb[0].mxu0
  %v3040 = vpop.f32.mrb[0].mxu0
  %v3041 = vpop.f32.mrb[0].mxu0
  %3042 = vdwg.mxu0
  %3053 = vrot.lane.b32.xlu0 %v2066, 8
  %v3054 = vpop.permute.xlu0 %3053
  %3055 = vrot.lane.b32.xlu0 %v2069, 8
  %v3056 = vpop.permute.xlu0 %3055
  %3057 = vrot.lane.b32.xlu0 %v2074, 8
  %v3058 = vpop.permute.xlu0 %3057
  %3059 = vrot.lane.b32.xlu0 %v2077, 8
  %v3060 = vpop.permute.xlu0 %3059
  %3061 = vrot.lane.b32.xlu0 %v2082, 8
  %v3062 = vpop.permute.xlu0 %3061
  %3063 = vrot.lane.b32.xlu0 %v2142, 8
  %v3064 = vpop.permute.xlu0 %3063
  %3065 = vrot.lane.b32.xlu0 %v2145, 8
  %v3066 = vpop.permute.xlu0 %3065
  %3067 = vrot.lane.b32.xlu0 %v2150, 8
  %v3068 = vpop.permute.xlu0 %3067
  %3069 = vrot.lane.b32.xlu0 %v2153, 8
  %v3070 = vpop.permute.xlu0 %3069
  %3071 = vrot.lane.b32.xlu0 %v2158, 8
  %v3072 = vpop.permute.xlu0 %3071
  %3093 = vrot.lane.b32.xlu0 %v2506, 16
  %v3094 = vpop.permute.xlu0 %3093
  %3095 = vrot.lane.b32.xlu0 %v2509, 16
  %v3096 = vpop.permute.xlu0 %3095
  %3097 = vrot.lane.b32.xlu0 %v2514, 16
  %v3098 = vpop.permute.xlu0 %3097
  %3099 = vrot.lane.b32.xlu0 %v2517, 16
  %v3100 = vpop.permute.xlu0 %3099
  %3101 = vrot.lane.b32.xlu0 %v2522, 16
  %v3102 = vpop.permute.xlu0 %3101
  %3103 = vrot.lane.b32.xlu0 %v2582, 16
  %v3104 = vpop.permute.xlu0 %3103
  %3105 = vrot.lane.b32.xlu0 %v2585, 16
  %v3106 = vpop.permute.xlu0 %3105
  %3107 = vrot.lane.b32.xlu0 %v2590, 16
  %v3108 = vpop.permute.xlu0 %3107
  %3109 = vrot.lane.b32.xlu0 %v2593, 16
  %v3110 = vpop.permute.xlu0 %3109
  %3111 = vrot.lane.b32.xlu0 %v2598, 16
  %v3112 = vpop.permute.xlu0 %3111
  %3133 = vrot.lane.b32.xlu0 %v2946, 24
  %v3134 = vpop.permute.xlu0 %3133
  %3135 = vrot.lane.b32.xlu0 %v2949, 24
  %v3136 = vpop.permute.xlu0 %3135
  %3137 = vrot.lane.b32.xlu0 %v2954, 24
  %v3138 = vpop.permute.xlu0 %3137
  %3139 = vrot.lane.b32.xlu0 %v2957, 24
  %v3140 = vpop.permute.xlu0 %3139
  %3141 = vrot.lane.b32.xlu0 %v2962, 24
  %v3142 = vpop.permute.xlu0 %3141
  %3143 = vrot.lane.b32.xlu0 %v3022, 24
  %v3144 = vpop.permute.xlu0 %3143
  %3145 = vrot.lane.b32.xlu0 %v3025, 24
  %v3146 = vpop.permute.xlu0 %3145
  %3147 = vrot.lane.b32.xlu0 %v3030, 24
  %v3148 = vpop.permute.xlu0 %3147
  %3149 = vrot.lane.b32.xlu0 %v3033, 24
  %v3150 = vpop.permute.xlu0 %3149
  %3151 = vrot.lane.b32.xlu0 %v3038, 24
  %v3152 = vpop.permute.xlu0 %3151
  %v3163 = vsel %vm1288, %v1620, %v3054
  %v3164 = vsel %vm1288, %v1623, %v3056
  %v3165 = vsel %vm1288, %v1628, %v3058
  %v3166 = vsel %vm1288, %v1631, %v3060
  %v3167 = vsel %vm1288, %v1636, %v3062
  %v3168 = vsel %vm1288, %v1696, %v3064
  %v3169 = vsel %vm1288, %v1699, %v3066
  %v3170 = vsel %vm1288, %v1704, %v3068
  %v3171 = vsel %vm1288, %v1707, %v3070
  %v3172 = vsel %vm1288, %v1712, %v3072
  %vm3173 = vcmask 130048
  %v3174 = vsel %vm3173, %v3163, %v3094
  %v3175 = vsel %vm3173, %v3164, %v3096
  %v3176 = vsel %vm3173, %v3165, %v3098
  %v3177 = vsel %vm3173, %v3166, %v3100
  %v3178 = vsel %vm3173, %v3167, %v3102
  %v3179 = vsel %vm3173, %v3168, %v3104
  %v3180 = vsel %vm3173, %v3169, %v3106
  %v3181 = vsel %vm3173, %v3170, %v3108
  %v3182 = vsel %vm3173, %v3171, %v3110
  %v3183 = vsel %vm3173, %v3172, %v3112
  %vm3184 = vcmask 195584
  %v3185 = vsel %vm3184, %v3174, %v3134
  %v3186 = vsel %vm3184, %v3175, %v3136
  %v3187 = vsel %vm3184, %v3176, %v3138
  %v3188 = vsel %vm3184, %v3177, %v3140
  %v3189 = vsel %vm3184, %v3178, %v3142
  %v3190 = vsel %vm3184, %v3179, %v3144
  %v3191 = vsel %vm3184, %v3180, %v3146
  %v3192 = vsel %vm3184, %v3181, %v3148
  %v3193 = vsel %vm3184, %v3182, %v3150
  %v3194 = vsel %vm3184, %v3183, %v3152
  %v3205 = vcombine.high %v3185, %v3185
  %v3207 = vunpack.c.l.s4 1983009808
  %v3208 = vunpack.c.0.s8 %v3207
  %v3209 = vlaneseq
  %v3210 = vshrl.u32 %v3209, 7
  %v3211 = vsub.s32 %v3208, %v3210
  %v3212 = vrot.slane %v3185, %v3211
  %v3214 = vunpack.c.l.s4 1983009808
  %v3215 = vunpack.c.0.s8 %v3214
  %v3216 = vlaneseq
  %v3217 = vshrl.u32 %v3216, 7
  %v3218 = vsub.s32 %v3215, %v3217
  %v3219 = vrot.slane %v3205, %v3218
  %v3220 = vcombine.high %v3212, %v3212
  %v3221 = vcombine.high %v3219, %v3219
  %v3222 = vcombine.high %v3186, %v3186
  %v3224 = vunpack.c.l.s4 1983009808
  %v3225 = vunpack.c.0.s8 %v3224
  %v3226 = vlaneseq
  %v3227 = vshrl.u32 %v3226, 7
  %v3228 = vsub.s32 %v3225, %v3227
  %v3229 = vrot.slane %v3186, %v3228
  %v3231 = vunpack.c.l.s4 1983009808
  %v3232 = vunpack.c.0.s8 %v3231
  %v3233 = vlaneseq
  %v3234 = vshrl.u32 %v3233, 7
  %v3235 = vsub.s32 %v3232, %v3234
  %v3236 = vrot.slane %v3222, %v3235
  %v3237 = vcombine.high %v3229, %v3229
  %v3238 = vcombine.high %v3236, %v3236
  %v3239 = vcombine.high %v3187, %v3187
  %v3241 = vunpack.c.l.s4 1983009808
  %v3242 = vunpack.c.0.s8 %v3241
  %v3243 = vlaneseq
  %v3244 = vshrl.u32 %v3243, 7
  %v3245 = vsub.s32 %v3242, %v3244
  %v3246 = vrot.slane %v3187, %v3245
  %v3248 = vunpack.c.l.s4 1983009808
  %v3249 = vunpack.c.0.s8 %v3248
  %v3250 = vlaneseq
  %v3251 = vshrl.u32 %v3250, 7
  %v3252 = vsub.s32 %v3249, %v3251
  %v3253 = vrot.slane %v3239, %v3252
  %v3254 = vcombine.high %v3246, %v3246
  %v3255 = vcombine.high %v3253, %v3253
  %v3256 = vcombine.high %v3188, %v3188
  %v3258 = vunpack.c.l.s4 1983009808
  %v3259 = vunpack.c.0.s8 %v3258
  %v3260 = vlaneseq
  %v3261 = vshrl.u32 %v3260, 7
  %v3262 = vsub.s32 %v3259, %v3261
  %v3263 = vrot.slane %v3188, %v3262
  %v3265 = vunpack.c.l.s4 1983009808
  %v3266 = vunpack.c.0.s8 %v3265
  %v3267 = vlaneseq
  %v3268 = vshrl.u32 %v3267, 7
  %v3269 = vsub.s32 %v3266, %v3268
  %v3270 = vrot.slane %v3256, %v3269
  %v3271 = vcombine.high %v3263, %v3263
  %v3272 = vcombine.high %v3270, %v3270
  %v3273 = vcombine.high %v3189, %v3189
  %v3275 = vunpack.c.l.s4 1983009808
  %v3276 = vunpack.c.0.s8 %v3275
  %v3277 = vlaneseq
  %v3278 = vshrl.u32 %v3277, 7
  %v3279 = vsub.s32 %v3276, %v3278
  %v3280 = vrot.slane %v3189, %v3279
  %v3282 = vunpack.c.l.s4 1983009808
  %v3283 = vunpack.c.0.s8 %v3282
  %v3284 = vlaneseq
  %v3285 = vshrl.u32 %v3284, 7
  %v3286 = vsub.s32 %v3283, %v3285
  %v3287 = vrot.slane %v3273, %v3286
  %v3288 = vcombine.high %v3280, %v3280
  %v3289 = vcombine.high %v3190, %v3190
  %v3291 = vunpack.c.l.s4 1983009808
  %v3292 = vunpack.c.0.s8 %v3291
  %v3293 = vlaneseq
  %v3294 = vshrl.u32 %v3293, 7
  %v3295 = vsub.s32 %v3292, %v3294
  %v3296 = vrot.slane %v3190, %v3295
  %v3298 = vunpack.c.l.s4 1983009808
  %v3299 = vunpack.c.0.s8 %v3298
  %v3300 = vlaneseq
  %v3301 = vshrl.u32 %v3300, 7
  %v3302 = vsub.s32 %v3299, %v3301
  %v3303 = vrot.slane %v3289, %v3302
  %v3304 = vcombine.high %v3296, %v3296
  %v3305 = vcombine.high %v3303, %v3303
  %v3306 = vcombine.high %v3191, %v3191
  %v3308 = vunpack.c.l.s4 1983009808
  %v3309 = vunpack.c.0.s8 %v3308
  %v3310 = vlaneseq
  %v3311 = vshrl.u32 %v3310, 7
  %v3312 = vsub.s32 %v3309, %v3311
  %v3313 = vrot.slane %v3191, %v3312
  %v3315 = vunpack.c.l.s4 1983009808
  %v3316 = vunpack.c.0.s8 %v3315
  %v3317 = vlaneseq
  %v3318 = vshrl.u32 %v3317, 7
  %v3319 = vsub.s32 %v3316, %v3318
  %v3320 = vrot.slane %v3306, %v3319
  %v3321 = vcombine.high %v3313, %v3313
  %v3322 = vcombine.high %v3320, %v3320
  %v3323 = vcombine.high %v3192, %v3192
  %v3325 = vunpack.c.l.s4 1983009808
  %v3326 = vunpack.c.0.s8 %v3325
  %v3327 = vlaneseq
  %v3328 = vshrl.u32 %v3327, 7
  %v3329 = vsub.s32 %v3326, %v3328
  %v3330 = vrot.slane %v3192, %v3329
  %v3332 = vunpack.c.l.s4 1983009808
  %v3333 = vunpack.c.0.s8 %v3332
  %v3334 = vlaneseq
  %v3335 = vshrl.u32 %v3334, 7
  %v3336 = vsub.s32 %v3333, %v3335
  %v3337 = vrot.slane %v3323, %v3336
  %v3338 = vcombine.high %v3330, %v3330
  %v3339 = vcombine.high %v3337, %v3337
  %v3340 = vcombine.high %v3193, %v3193
  %v3342 = vunpack.c.l.s4 1983009808
  %v3343 = vunpack.c.0.s8 %v3342
  %v3344 = vlaneseq
  %v3345 = vshrl.u32 %v3344, 7
  %v3346 = vsub.s32 %v3343, %v3345
  %v3347 = vrot.slane %v3193, %v3346
  %v3349 = vunpack.c.l.s4 1983009808
  %v3350 = vunpack.c.0.s8 %v3349
  %v3351 = vlaneseq
  %v3352 = vshrl.u32 %v3351, 7
  %v3353 = vsub.s32 %v3350, %v3352
  %v3354 = vrot.slane %v3340, %v3353
  %v3355 = vcombine.high %v3347, %v3347
  %v3356 = vcombine.high %v3354, %v3354
  %v3357 = vcombine.high %v3194, %v3194
  %v3359 = vunpack.c.l.s4 1983009808
  %v3360 = vunpack.c.0.s8 %v3359
  %v3361 = vlaneseq
  %v3362 = vshrl.u32 %v3361, 7
  %v3363 = vsub.s32 %v3360, %v3362
  %v3364 = vrot.slane %v3194, %v3363
  %v3366 = vunpack.c.l.s4 1983009808
  %v3367 = vunpack.c.0.s8 %v3366
  %v3368 = vlaneseq
  %v3369 = vshrl.u32 %v3368, 7
  %v3370 = vsub.s32 %v3367, %v3369
  %v3371 = vrot.slane %v3357, %v3370
  %v3372 = vcombine.high %v3364, %v3364
  %v3373 = vcombine.low %v3212, %v3220
  %v3374 = vcombine.low %v3219, %v3221
  %v3376 = vunpack.c.l.s4 1983009808
  %v3377 = vunpack.c.0.s8 %v3376
  %v3378 = vlaneseq
  %v3379 = vshrl.u32 %v3378, 7
  %v3380 = vsub.s32 %v3377, %v3379
  %v3381 = vrot.slane %v3373, %v3380
  %v3383 = vunpack.c.l.s4 1983009808
  %v3384 = vunpack.c.0.s8 %v3383
  %v3385 = vlaneseq
  %v3386 = vshrl.u32 %v3385, 7
  %v3387 = vsub.s32 %v3384, %v3386
  %v3388 = vrot.slane %v3374, %v3387
  %v3389 = vcombine.low %v3381, %v3388
  %v3390 = vcombine.low %v3229, %v3237
  %v3391 = vcombine.low %v3236, %v3238
  %v3393 = vunpack.c.l.s4 1983009808
  %v3394 = vunpack.c.0.s8 %v3393
  %v3395 = vlaneseq
  %v3396 = vshrl.u32 %v3395, 7
  %v3397 = vsub.s32 %v3394, %v3396
  %v3398 = vrot.slane %v3390, %v3397
  %v3400 = vunpack.c.l.s4 1983009808
  %v3401 = vunpack.c.0.s8 %v3400
  %v3402 = vlaneseq
  %v3403 = vshrl.u32 %v3402, 7
  %v3404 = vsub.s32 %v3401, %v3403
  %v3405 = vrot.slane %v3391, %v3404
  %v3406 = vcombine.low %v3398, %v3405
  %v3407 = vcombine.low %v3246, %v3254
  %v3408 = vcombine.low %v3253, %v3255
  %v3410 = vunpack.c.l.s4 1983009808
  %v3411 = vunpack.c.0.s8 %v3410
  %v3412 = vlaneseq
  %v3413 = vshrl.u32 %v3412, 7
  %v3414 = vsub.s32 %v3411, %v3413
  %v3415 = vrot.slane %v3407, %v3414
  %v3417 = vunpack.c.l.s4 1983009808
  %v3418 = vunpack.c.0.s8 %v3417
  %v3419 = vlaneseq
  %v3420 = vshrl.u32 %v3419, 7
  %v3421 = vsub.s32 %v3418, %v3420
  %v3422 = vrot.slane %v3408, %v3421
  %v3423 = vcombine.low %v3415, %v3422
  %v3424 = vcombine.low %v3263, %v3271
  %v3425 = vcombine.low %v3270, %v3272
  %v3427 = vunpack.c.l.s4 1983009808
  %v3428 = vunpack.c.0.s8 %v3427
  %v3429 = vlaneseq
  %v3430 = vshrl.u32 %v3429, 7
  %v3431 = vsub.s32 %v3428, %v3430
  %v3432 = vrot.slane %v3424, %v3431
  %v3434 = vunpack.c.l.s4 1983009808
  %v3435 = vunpack.c.0.s8 %v3434
  %v3436 = vlaneseq
  %v3437 = vshrl.u32 %v3436, 7
  %v3438 = vsub.s32 %v3435, %v3437
  %v3439 = vrot.slane %v3425, %v3438
  %v3440 = vcombine.low %v3432, %v3439
  %v3441 = vcombine.low %v3280, %v3288
  %v3442 = vcombine.low %v3287, %v3296
  %v3444 = vunpack.c.l.s4 1983009808
  %v3445 = vunpack.c.0.s8 %v3444
  %v3446 = vlaneseq
  %v3447 = vshrl.u32 %v3446, 7
  %v3448 = vsub.s32 %v3445, %v3447
  %v3449 = vrot.slane %v3441, %v3448
  %v3451 = vunpack.c.l.s4 1983009808
  %v3452 = vunpack.c.0.s8 %v3451
  %v3453 = vlaneseq
  %v3454 = vshrl.u32 %v3453, 7
  %v3455 = vsub.s32 %v3452, %v3454
  %v3456 = vrot.slane %v3442, %v3455
  %v3457 = vcombine.low %v3449, %v3456
  %v3458 = vcombine.low %v3304, %v3303
  %v3459 = vcombine.low %v3305, %v3313
  %v3461 = vunpack.c.l.s4 1983009808
  %v3462 = vunpack.c.0.s8 %v3461
  %v3463 = vlaneseq
  %v3464 = vshrl.u32 %v3463, 7
  %v3465 = vsub.s32 %v3462, %v3464
  %v3466 = vrot.slane %v3458, %v3465
  %v3468 = vunpack.c.l.s4 1983009808
  %v3469 = vunpack.c.0.s8 %v3468
  %v3470 = vlaneseq
  %v3471 = vshrl.u32 %v3470, 7
  %v3472 = vsub.s32 %v3469, %v3471
  %v3473 = vrot.slane %v3459, %v3472
  %v3474 = vcombine.low %v3466, %v3473
  %v3475 = vcombine.low %v3321, %v3320
  %v3476 = vcombine.low %v3322, %v3330
  %v3478 = vunpack.c.l.s4 1983009808
  %v3479 = vunpack.c.0.s8 %v3478
  %v3480 = vlaneseq
  %v3481 = vshrl.u32 %v3480, 7
  %v3482 = vsub.s32 %v3479, %v3481
  %v3483 = vrot.slane %v3475, %v3482
  %v3485 = vunpack.c.l.s4 1983009808
  %v3486 = vunpack.c.0.s8 %v3485
  %v3487 = vlaneseq
  %v3488 = vshrl.u32 %v3487, 7
  %v3489 = vsub.s32 %v3486, %v3488
  %v3490 = vrot.slane %v3476, %v3489
  %v3491 = vcombine.low %v3483, %v3490
  %v3492 = vcombine.low %v3338, %v3337
  %v3493 = vcombine.low %v3339, %v3347
  %v3495 = vunpack.c.l.s4 1983009808
  %v3496 = vunpack.c.0.s8 %v3495
  %v3497 = vlaneseq
  %v3498 = vshrl.u32 %v3497, 7
  %v3499 = vsub.s32 %v3496, %v3498
  %v3500 = vrot.slane %v3492, %v3499
  %v3502 = vunpack.c.l.s4 1983009808
  %v3503 = vunpack.c.0.s8 %v3502
  %v3504 = vlaneseq
  %v3505 = vshrl.u32 %v3504, 7
  %v3506 = vsub.s32 %v3503, %v3505
  %v3507 = vrot.slane %v3493, %v3506
  %v3508 = vcombine.low %v3500, %v3507
  %v3509 = vcombine.low %v3355, %v3354
  %v3510 = vcombine.low %v3356, %v3364
  %v3512 = vunpack.c.l.s4 1983009808
  %v3513 = vunpack.c.0.s8 %v3512
  %v3514 = vlaneseq
  %v3515 = vshrl.u32 %v3514, 7
  %v3516 = vsub.s32 %v3513, %v3515
  %v3517 = vrot.slane %v3509, %v3516
  %v3519 = vunpack.c.l.s4 1983009808
  %v3520 = vunpack.c.0.s8 %v3519
  %v3521 = vlaneseq
  %v3522 = vshrl.u32 %v3521, 7
  %v3523 = vsub.s32 %v3520, %v3522
  %v3524 = vrot.slane %v3510, %v3523
  %v3525 = vcombine.low %v3517, %v3524
  %v3526 = vcombine.low %v3372, %v3371
  %v3528 = vunpack.c.l.s4 1983009808
  %v3529 = vunpack.c.0.s8 %v3528
  %v3530 = vlaneseq
  %v3531 = vshrl.u32 %v3530, 7
  %v3532 = vsub.s32 %v3529, %v3531
  %v3533 = vrot.slane %v3526, %v3532
  %v3544 = vpack.c.bf16 %v3406, %v3389
  %v3545 = vpack.c.bf16 %v3440, %v3423
  %v3546 = vpack.c.bf16 %v3474, %v3457
  %v3547 = vpack.c.bf16 %v3508, %v3491
  %v3548 = vpack.c.bf16 %v3533, %v3525
  %v3549 = vld [vmem:[%s3] sm:$0xf]
  %v3550 = vld [vmem:[%s3 + $0x4] sm:$0xf]
  %v3551 = vld [vmem:[%s3 + $0x8] sm:$0xf]
  %v3552 = vld [vmem:[%s3 + $0xc] sm:$0xf]
  %v3553 = vld [vmem:[%s4] sm:$0x1]
  %v3555 = vlaneseq
  %v3556 = vshrl.u32 %v3555, 7
  %v3557 = vsub.s32 0, %v3556
  %v3558 = vrot.slane %v3553, %v3557
  %v3564 = vunpack.c.l.b16 %v3549
  %v3565 = vunpack.c.l.b16 %v3550
  %v3566 = vunpack.c.l.b16 %v3551
  %v3567 = vunpack.c.l.b16 %v3552
  %v3568 = vpack.c.b16 %v3565, %v3564
  %v3569 = vpack.c.b16 %v3567, %v3566
  %v3573 = vsel %vm470, %v3544, 0
  %v3576 = vsel %vm470, %v3545, 0
  %v3579 = vsel %vm470, %v3546, 0
  %v3582 = vsel %vm470, %v3547, 0
  %v3585 = vsel %vm470, %v3548, 0
  %3587 = vmatprep.subr.bf16.mxu0 0
  %3588 = vmatpush1.bf16.msra.mxu0 %v3568
  %3589 = vmatprep.subr.bf16.mxu0 0
  %3590 = vmatpush1.bf16.msra.mxu0 %v3569
  %3591 = vmatprep.subr.bf16.mxu0 0
  %3592 = vmatpush1.bf16.msra.mxu0 0
  %3593 = vmatprep.subr.bf16.mxu0 0
  %3594 = vmatpush1.bf16.msra.mxu0 0
  %3595 = vmatprep.subr.bf16.mxu0 0
  %3596 = vmatpush1.bf16.msra.mxu0 0
  %3597 = vmatprep.subr.bf16.mxu0 0
  %3598 = vmatpush1.bf16.msra.mxu0 0
  %3599 = vmatprep.subr.bf16.mxu0 0
  %3600 = vmatpush1.bf16.msra.mxu0 0
  %3601 = vmatprep.subr.bf16.mxu0 0
  %3602 = vmatpush1.bf16.msra.mxu0 0
  %3603 = vmatprep.subr.bf16.mxu0 0
  %3604 = vmatpush1.bf16.msra.mxu0 0
  %3605 = vmatprep.subr.bf16.mxu0 0
  %3606 = vmatpush1.bf16.msra.mxu0 0
  %3607 = vmatprep.subr.bf16.mxu0 0
  %3608 = vmatpush1.bf16.msra.mxu0 0
  %3609 = vmatprep.subr.bf16.mxu0 0
  %3610 = vmatpush1.bf16.msra.mxu0 0
  %3611 = vmatprep.subr.bf16.mxu0 0
  %3612 = vmatpush1.bf16.msra.mxu0 0
  %3613 = vmatprep.subr.bf16.mxu0 0
  %3614 = vmatpush1.bf16.msra.mxu0 0
  %3615 = vmatprep.subr.bf16.mxu0 0
  %3616 = vmatpush1.bf16.msra.mxu0 0
  %3617 = vmatprep.subr.bf16.mxu0 0
  %3618 = vmatpush1.bf16.msra.mxu0 0
  %3619 = vmatprep.mubr.bf16.mxu0 0
  %3620 = vmatmul.mubr.bf16.gmra.mrb[0].mxu0 %v3573
  %v3621 = vpop.f32.mrb[0].mxu0
  %v3622 = vadd.f32 %v3558, %v3621
  %v3623 = vpop.f32.mrb[0].mxu0
  %v3624 = vpop.f32.mrb[0].mxu0
  %v3625 = vadd.f32 %v3558, %v3624
  %v3626 = vpop.f32.mrb[0].mxu0
  %3627 = vmatprep.mubr.bf16.mxu0 0
  %3628 = vmatmul.mubr.bf16.gmra.mrb[0].mxu0 %v3576
  %v3629 = vpop.f32.mrb[0].mxu0
  %v3630 = vadd.f32 %v3558, %v3629
  %v3631 = vpop.f32.mrb[0].mxu0
  %v3632 = vpop.f32.mrb[0].mxu0
  %v3633 = vadd.f32 %v3558, %v3632
  %v3634 = vpop.f32.mrb[0].mxu0
  %3635 = vmatprep.mubr.bf16.mxu0 0
  %3636 = vmatmul.mubr.bf16.gmra.mrb[0].mxu0 %v3579
  %v3637 = vpop.f32.mrb[0].mxu0
  %v3638 = vadd.f32 %v3558, %v3637
  %v3639 = vpop.f32.mrb[0].mxu0
  %v3640 = vpop.f32.mrb[0].mxu0
  %v3641 = vadd.f32 %v3558, %v3640
  %v3642 = vpop.f32.mrb[0].mxu0
  %3643 = vmatprep.mubr.bf16.mxu0 0
  %3644 = vmatmul.mubr.bf16.gmra.mrb[0].mxu0 %v3582
  %v3645 = vpop.f32.mrb[0].mxu0
  %v3646 = vadd.f32 %v3558, %v3645
  %v3647 = vpop.f32.mrb[0].mxu0
  %v3648 = vpop.f32.mrb[0].mxu0
  %v3649 = vadd.f32 %v3558, %v3648
  %v3650 = vpop.f32.mrb[0].mxu0
  %3651 = vmatprep.mubr.bf16.mxu0 0
  %3652 = vmatmul.mubr.bf16.gmra.mrb[0].mxu0 %v3585
  %v3653 = vpop.f32.mrb[0].mxu0
  %v3654 = vadd.f32 %v3558, %v3653
  %v3655 = vpop.f32.mrb[0].mxu0
  %v3656 = vpop.f32.mrb[0].mxu0
  %v3657 = vadd.f32 %v3558, %v3656
  %v3658 = vpop.f32.mrb[0].mxu0
  %3659 = vdwg.mxu0
  %v3670 = vcombine.high %v3622, %v3622
  %v3672 = vunpack.c.l.s4 1983009808
  %v3673 = vunpack.c.0.s8 %v3672
  %v3674 = vlaneseq
  %v3675 = vshrl.u32 %v3674, 7
  %v3676 = vsub.s32 %v3673, %v3675
  %v3677 = vrot.slane %v3622, %v3676
  %v3679 = vunpack.c.l.s4 1983009808
  %v3680 = vunpack.c.0.s8 %v3679
  %v3681 = vlaneseq
  %v3682 = vshrl.u32 %v3681, 7
  %v3683 = vsub.s32 %v3680, %v3682
  %v3684 = vrot.slane %v3670, %v3683
  %v3685 = vcombine.high %v3677, %v3677
  %v3686 = vcombine.high %v3684, %v3684
  %v3687 = vcombine.high %v3625, %v3625
  %v3689 = vunpack.c.l.s4 1983009808
  %v3690 = vunpack.c.0.s8 %v3689
  %v3691 = vlaneseq
  %v3692 = vshrl.u32 %v3691, 7
  %v3693 = vsub.s32 %v3690, %v3692
  %v3694 = vrot.slane %v3625, %v3693
  %v3696 = vunpack.c.l.s4 1983009808
  %v3697 = vunpack.c.0.s8 %v3696
  %v3698 = vlaneseq
  %v3699 = vshrl.u32 %v3698, 7
  %v3700 = vsub.s32 %v3697, %v3699
  %v3701 = vrot.slane %v3687, %v3700
  %v3702 = vcombine.high %v3694, %v3694
  %v3703 = vcombine.high %v3701, %v3701
  %v3704 = vcombine.high %v3630, %v3630
  %v3706 = vunpack.c.l.s4 1983009808
  %v3707 = vunpack.c.0.s8 %v3706
  %v3708 = vlaneseq
  %v3709 = vshrl.u32 %v3708, 7
  %v3710 = vsub.s32 %v3707, %v3709
  %v3711 = vrot.slane %v3630, %v3710
  %v3713 = vunpack.c.l.s4 1983009808
  %v3714 = vunpack.c.0.s8 %v3713
  %v3715 = vlaneseq
  %v3716 = vshrl.u32 %v3715, 7
  %v3717 = vsub.s32 %v3714, %v3716
  %v3718 = vrot.slane %v3704, %v3717
  %v3719 = vcombine.high %v3711, %v3711
  %v3720 = vcombine.high %v3718, %v3718
  %v3721 = vcombine.high %v3633, %v3633
  %v3723 = vunpack.c.l.s4 1983009808
  %v3724 = vunpack.c.0.s8 %v3723
  %v3725 = vlaneseq
  %v3726 = vshrl.u32 %v3725, 7
  %v3727 = vsub.s32 %v3724, %v3726
  %v3728 = vrot.slane %v3633, %v3727
  %v3730 = vunpack.c.l.s4 1983009808
  %v3731 = vunpack.c.0.s8 %v3730
  %v3732 = vlaneseq
  %v3733 = vshrl.u32 %v3732, 7
  %v3734 = vsub.s32 %v3731, %v3733
  %v3735 = vrot.slane %v3721, %v3734
  %v3736 = vcombine.high %v3728, %v3728
  %v3737 = vcombine.high %v3735, %v3735
  %v3738 = vcombine.high %v3638, %v3638
  %v3740 = vunpack.c.l.s4 1983009808
  %v3741 = vunpack.c.0.s8 %v3740
  %v3742 = vlaneseq
  %v3743 = vshrl.u32 %v3742, 7
  %v3744 = vsub.s32 %v3741, %v3743
  %v3745 = vrot.slane %v3638, %v3744
  %v3747 = vunpack.c.l.s4 1983009808
  %v3748 = vunpack.c.0.s8 %v3747
  %v3749 = vlaneseq
  %v3750 = vshrl.u32 %v3749, 7
  %v3751 = vsub.s32 %v3748, %v3750
  %v3752 = vrot.slane %v3738, %v3751
  %v3753 = vcombine.high %v3745, %v3745
  %v3754 = vcombine.high %v3752, %v3752
  %v3755 = vcombine.high %v3641, %v3641
  %v3757 = vunpack.c.l.s4 1983009808
  %v3758 = vunpack.c.0.s8 %v3757
  %v3759 = vlaneseq
  %v3760 = vshrl.u32 %v3759, 7
  %v3761 = vsub.s32 %v3758, %v3760
  %v3762 = vrot.slane %v3641, %v3761
  %v3764 = vunpack.c.l.s4 1983009808
  %v3765 = vunpack.c.0.s8 %v3764
  %v3766 = vlaneseq
  %v3767 = vshrl.u32 %v3766, 7
  %v3768 = vsub.s32 %v3765, %v3767
  %v3769 = vrot.slane %v3755, %v3768
  %v3770 = vcombine.high %v3762, %v3762
  %v3771 = vcombine.high %v3769, %v3769
  %v3772 = vcombine.high %v3646, %v3646
  %v3774 = vunpack.c.l.s4 1983009808
  %v3775 = vunpack.c.0.s8 %v3774
  %v3776 = vlaneseq
  %v3777 = vshrl.u32 %v3776, 7
  %v3778 = vsub.s32 %v3775, %v3777
  %v3779 = vrot.slane %v3646, %v3778
  %v3781 = vunpack.c.l.s4 1983009808
  %v3782 = vunpack.c.0.s8 %v3781
  %v3783 = vlaneseq
  %v3784 = vshrl.u32 %v3783, 7
  %v3785 = vsub.s32 %v3782, %v3784
  %v3786 = vrot.slane %v3772, %v3785
  %v3787 = vcombine.high %v3779, %v3779
  %v3788 = vcombine.high %v3786, %v3786
  %v3789 = vcombine.high %v3649, %v3649
  %v3791 = vunpack.c.l.s4 1983009808
  %v3792 = vunpack.c.0.s8 %v3791
  %v3793 = vlaneseq
  %v3794 = vshrl.u32 %v3793, 7
  %v3795 = vsub.s32 %v3792, %v3794
  %v3796 = vrot.slane %v3649, %v3795
  %v3798 = vunpack.c.l.s4 1983009808
  %v3799 = vunpack.c.0.s8 %v3798
  %v3800 = vlaneseq
  %v3801 = vshrl.u32 %v3800, 7
  %v3802 = vsub.s32 %v3799, %v3801
  %v3803 = vrot.slane %v3789, %v3802
  %v3804 = vcombine.high %v3796, %v3796
  %v3805 = vcombine.high %v3803, %v3803
  %v3806 = vcombine.high %v3654, %v3654
  %v3808 = vunpack.c.l.s4 1983009808
  %v3809 = vunpack.c.0.s8 %v3808
  %v3810 = vlaneseq
  %v3811 = vshrl.u32 %v3810, 7
  %v3812 = vsub.s32 %v3809, %v3811
  %v3813 = vrot.slane %v3654, %v3812
  %v3815 = vunpack.c.l.s4 1983009808
  %v3816 = vunpack.c.0.s8 %v3815
  %v3817 = vlaneseq
  %v3818 = vshrl.u32 %v3817, 7
  %v3819 = vsub.s32 %v3816, %v3818
  %v3820 = vrot.slane %v3806, %v3819
  %v3821 = vcombine.high %v3813, %v3813
  %v3822 = vcombine.high %v3820, %v3820
  %v3824 = vunpack.c.l.s4 1983009808
  %v3825 = vunpack.c.0.s8 %v3824
  %v3826 = vlaneseq
  %v3827 = vshrl.u32 %v3826, 7
  %v3828 = vsub.s32 %v3825, %v3827
  %v3829 = vrot.slane %v3657, %v3828
  %v3830 = vcombine.high %v3829, %v3829
  %v3869 = vadd.f32 %v72, %v3677
  %v3870 = vadd.f32 %v80, %v3685
  %v3871 = vadd.f32 %v79, %v3684
  %v3872 = vadd.f32 %v81, %v3686
  %v3873 = vadd.f32 %v89, %v3694
  %v3874 = vadd.f32 %v97, %v3702
  %v3875 = vadd.f32 %v96, %v3701
  %v3876 = vadd.f32 %v98, %v3703
  %v3877 = vadd.f32 %v106, %v3711
  %v3878 = vadd.f32 %v114, %v3719
  %v3879 = vadd.f32 %v113, %v3718
  %v3880 = vadd.f32 %v115, %v3720
  %v3881 = vadd.f32 %v123, %v3728
  %v3882 = vadd.f32 %v131, %v3736
  %v3883 = vadd.f32 %v130, %v3735
  %v3884 = vadd.f32 %v132, %v3737
  %v3885 = vadd.f32 %v140, %v3745
  %v3886 = vadd.f32 %v148, %v3753
  %v3887 = vadd.f32 %v147, %v3752
  %v3888 = vadd.f32 %v156, %v3754
  %v3889 = vadd.f32 %v164, %v3762
  %v3890 = vadd.f32 %v163, %v3770
  %v3891 = vadd.f32 %v165, %v3769
  %v3892 = vadd.f32 %v173, %v3771
  %v3893 = vadd.f32 %v181, %v3779
  %v3894 = vadd.f32 %v180, %v3787
  %v3895 = vadd.f32 %v182, %v3786
  %v3896 = vadd.f32 %v190, %v3788
  %v3897 = vadd.f32 %v198, %v3796
  %v3898 = vadd.f32 %v197, %v3804
  %v3899 = vadd.f32 %v199, %v3803
  %v3900 = vadd.f32 %v207, %v3805
  %v3901 = vadd.f32 %v215, %v3813
  %v3902 = vadd.f32 %v214, %v3821
  %v3903 = vadd.f32 %v216, %v3820
  %v3904 = vadd.f32 %v224, %v3822
  %v3905 = vadd.f32 %v232, %v3829
  %v3906 = vadd.f32 %v231, %v3830
  %v3907 = vld [vmem:[%s5] sm:$0x1]
  %v3908 = vld [vmem:[%s6] sm:$0x1]
  %v3947 = vcombine.low %v3869, %v3870
  %v3948 = vcombine.low %v3871, %v3872
  %v3950 = vunpack.c.l.s4 1983009808
  %v3951 = vunpack.c.0.s8 %v3950
  %v3952 = vlaneseq
  %v3953 = vshrl.u32 %v3952, 7
  %v3954 = vsub.s32 %v3951, %v3953
  %v3955 = vrot.slane %v3947, %v3954
  %v3957 = vunpack.c.l.s4 1983009808
  %v3958 = vunpack.c.0.s8 %v3957
  %v3959 = vlaneseq
  %v3960 = vshrl.u32 %v3959, 7
  %v3961 = vsub.s32 %v3958, %v3960
  %v3962 = vrot.slane %v3948, %v3961
  %v3963 = vcombine.low %v3955, %v3962
  %v3964 = vcombine.low %v3873, %v3874
  %v3965 = vcombine.low %v3875, %v3876
  %v3967 = vunpack.c.l.s4 1983009808
  %v3968 = vunpack.c.0.s8 %v3967
  %v3969 = vlaneseq
  %v3970 = vshrl.u32 %v3969, 7
  %v3971 = vsub.s32 %v3968, %v3970
  %v3972 = vrot.slane %v3964, %v3971
  %v3974 = vunpack.c.l.s4 1983009808
  %v3975 = vunpack.c.0.s8 %v3974
  %v3976 = vlaneseq
  %v3977 = vshrl.u32 %v3976, 7
  %v3978 = vsub.s32 %v3975, %v3977
  %v3979 = vrot.slane %v3965, %v3978
  %v3980 = vcombine.low %v3972, %v3979
  %v3981 = vcombine.low %v3877, %v3878
  %v3982 = vcombine.low %v3879, %v3880
  %v3984 = vunpack.c.l.s4 1983009808
  %v3985 = vunpack.c.0.s8 %v3984
  %v3986 = vlaneseq
  %v3987 = vshrl.u32 %v3986, 7
  %v3988 = vsub.s32 %v3985, %v3987
  %v3989 = vrot.slane %v3981, %v3988
  %v3991 = vunpack.c.l.s4 1983009808
  %v3992 = vunpack.c.0.s8 %v3991
  %v3993 = vlaneseq
  %v3994 = vshrl.u32 %v3993, 7
  %v3995 = vsub.s32 %v3992, %v3994
  %v3996 = vrot.slane %v3982, %v3995
  %v3997 = vcombine.low %v3989, %v3996
  %v3998 = vcombine.low %v3881, %v3882
  %v3999 = vcombine.low %v3883, %v3884
  %v4001 = vunpack.c.l.s4 1983009808
  %v4002 = vunpack.c.0.s8 %v4001
  %v4003 = vlaneseq
  %v4004 = vshrl.u32 %v4003, 7
  %v4005 = vsub.s32 %v4002, %v4004
  %v4006 = vrot.slane %v3998, %v4005
  %v4008 = vunpack.c.l.s4 1983009808
  %v4009 = vunpack.c.0.s8 %v4008
  %v4010 = vlaneseq
  %v4011 = vshrl.u32 %v4010, 7
  %v4012 = vsub.s32 %v4009, %v4011
  %v4013 = vrot.slane %v3999, %v4012
  %v4014 = vcombine.low %v4006, %v4013
  %v4015 = vcombine.low %v3885, %v3886
  %v4016 = vcombine.low %v3887, %v3888
  %v4018 = vunpack.c.l.s4 1983009808
  %v4019 = vunpack.c.0.s8 %v4018
  %v4020 = vlaneseq
  %v4021 = vshrl.u32 %v4020, 7
  %v4022 = vsub.s32 %v4019, %v4021
  %v4023 = vrot.slane %v4015, %v4022
  %v4025 = vunpack.c.l.s4 1983009808
  %v4026 = vunpack.c.0.s8 %v4025
  %v4027 = vlaneseq
  %v4028 = vshrl.u32 %v4027, 7
  %v4029 = vsub.s32 %v4026, %v4028
  %v4030 = vrot.slane %v4016, %v4029
  %v4031 = vcombine.low %v4023, %v4030
  %v4032 = vcombine.low %v3889, %v3890
  %v4033 = vcombine.low %v3891, %v3892
  %v4035 = vunpack.c.l.s4 1983009808
  %v4036 = vunpack.c.0.s8 %v4035
  %v4037 = vlaneseq
  %v4038 = vshrl.u32 %v4037, 7
  %v4039 = vsub.s32 %v4036, %v4038
  %v4040 = vrot.slane %v4032, %v4039
  %v4042 = vunpack.c.l.s4 1983009808
  %v4043 = vunpack.c.0.s8 %v4042
  %v4044 = vlaneseq
  %v4045 = vshrl.u32 %v4044, 7
  %v4046 = vsub.s32 %v4043, %v4045
  %v4047 = vrot.slane %v4033, %v4046
  %v4048 = vcombine.low %v4040, %v4047
  %v4049 = vcombine.low %v3893, %v3894
  %v4050 = vcombine.low %v3895, %v3896
  %v4052 = vunpack.c.l.s4 1983009808
  %v4053 = vunpack.c.0.s8 %v4052
  %v4054 = vlaneseq
  %v4055 = vshrl.u32 %v4054, 7
  %v4056 = vsub.s32 %v4053, %v4055
  %v4057 = vrot.slane %v4049, %v4056
  %v4059 = vunpack.c.l.s4 1983009808
  %v4060 = vunpack.c.0.s8 %v4059
  %v4061 = vlaneseq
  %v4062 = vshrl.u32 %v4061, 7
  %v4063 = vsub.s32 %v4060, %v4062
  %v4064 = vrot.slane %v4050, %v4063
  %v4065 = vcombine.low %v4057, %v4064
  %v4066 = vcombine.low %v3897, %v3898
  %v4067 = vcombine.low %v3899, %v3900
  %v4069 = vunpack.c.l.s4 1983009808
  %v4070 = vunpack.c.0.s8 %v4069
  %v4071 = vlaneseq
  %v4072 = vshrl.u32 %v4071, 7
  %v4073 = vsub.s32 %v4070, %v4072
  %v4074 = vrot.slane %v4066, %v4073
  %v4076 = vunpack.c.l.s4 1983009808
  %v4077 = vunpack.c.0.s8 %v4076
  %v4078 = vlaneseq
  %v4079 = vshrl.u32 %v4078, 7
  %v4080 = vsub.s32 %v4077, %v4079
  %v4081 = vrot.slane %v4067, %v4080
  %v4082 = vcombine.low %v4074, %v4081
  %v4083 = vcombine.low %v3901, %v3902
  %v4084 = vcombine.low %v3903, %v3904
  %v4086 = vunpack.c.l.s4 1983009808
  %v4087 = vunpack.c.0.s8 %v4086
  %v4088 = vlaneseq
  %v4089 = vshrl.u32 %v4088, 7
  %v4090 = vsub.s32 %v4087, %v4089
  %v4091 = vrot.slane %v4083, %v4090
  %v4093 = vunpack.c.l.s4 1983009808
  %v4094 = vunpack.c.0.s8 %v4093
  %v4095 = vlaneseq
  %v4096 = vshrl.u32 %v4095, 7
  %v4097 = vsub.s32 %v4094, %v4096
  %v4098 = vrot.slane %v4084, %v4097
  %v4099 = vcombine.low %v4091, %v4098
  %v4100 = vcombine.low %v3905, %v3906
  %v4102 = vunpack.c.l.s4 1983009808
  %v4103 = vunpack.c.0.s8 %v4102
  %v4104 = vlaneseq
  %v4105 = vshrl.u32 %v4104, 7
  %v4106 = vsub.s32 %v4103, %v4105
  %v4107 = vrot.slane %v4100, %v4106
  %v4118 = vsel %vm470, %v3963, 0.0
  %4119 = vadd.xlane.f32.xlu0 %v4118
  %v4120 = vpop.xlane.xlu0 %4119
  %v4121 = vsel %vm470, %v3980, 0.0
  %4122 = vadd.xlane.f32.xlu0 %v4121
  %v4123 = vpop.xlane.xlu0 %4122
  %v4124 = vsel %vm470, %v3997, 0.0
  %4125 = vadd.xlane.f32.xlu0 %v4124
  %v4126 = vpop.xlane.xlu0 %4125
  %v4127 = vsel %vm470, %v4014, 0.0
  %4128 = vadd.xlane.f32.xlu0 %v4127
  %v4129 = vpop.xlane.xlu0 %4128
  %v4130 = vsel %vm470, %v4031, 0.0
  %4131 = vadd.xlane.f32.xlu0 %v4130
  %v4132 = vpop.xlane.xlu0 %4131
  %v4133 = vsel %vm470, %v4048, 0.0
  %4134 = vadd.xlane.f32.xlu0 %v4133
  %v4135 = vpop.xlane.xlu0 %4134
  %v4136 = vsel %vm470, %v4065, 0.0
  %4137 = vadd.xlane.f32.xlu0 %v4136
  %v4138 = vpop.xlane.xlu0 %4137
  %v4139 = vsel %vm470, %v4082, 0.0
  %4140 = vadd.xlane.f32.xlu0 %v4139
  %v4141 = vpop.xlane.xlu0 %4140
  %v4142 = vsel %vm470, %v4099, 0.0
  %4143 = vadd.xlane.f32.xlu0 %v4142
  %v4144 = vpop.xlane.xlu0 %4143
  %vm4145 = vcmask 257024
  %v4146 = vsel %vm4145, %v4107, 0.0
  %4147 = vadd.xlane.f32.xlu0 %v4146
  %v4148 = vpop.xlane.xlu0 %4147
  %v4149 = vrcp.pop 32.0
  %v4150 = vmul.f32 %v4120, %v4149
  %v4151 = vmul.f32 %v4123, %v4149
  %v4152 = vmul.f32 %v4126, %v4149
  %v4153 = vmul.f32 %v4129, %v4149
  %v4154 = vmul.f32 %v4132, %v4149
  %v4155 = vmul.f32 %v4135, %v4149
  %v4156 = vmul.f32 %v4138, %v4149
  %v4157 = vmul.f32 %v4141, %v4149
  %v4158 = vmul.f32 %v4144, %v4149
  %v4159 = vmul.f32 %v4148, %v4149
  %v4171 = vunpack.c.l.s4 269488144
  %v4172 = vunpack.c.0.s8 %v4171
  %v4173 = vlaneseq
  %v4174 = vshrl.u32 %v4173, 7
  %v4175 = vsub.s32 %v4172, %v4174
  %v4176 = vrot.slane %v4150, %v4175
  %v4178 = vunpack.c.l.s4 842150450
  %v4179 = vunpack.c.0.s8 %v4178
  %v4180 = vlaneseq
  %v4181 = vshrl.u32 %v4180, 7
  %v4182 = vsub.s32 %v4179, %v4181
  %v4183 = vrot.slane %v4150, %v4182
  %v4185 = vunpack.c.l.s4 1414812756
  %v4186 = vunpack.c.0.s8 %v4185
  %v4187 = vlaneseq
  %v4188 = vshrl.u32 %v4187, 7
  %v4189 = vsub.s32 %v4186, %v4188
  %v4190 = vrot.slane %v4150, %v4189
  %v4192 = vunpack.c.l.s4 1987475062
  %v4193 = vunpack.c.0.s8 %v4192
  %v4194 = vlaneseq
  %v4195 = vshrl.u32 %v4194, 7
  %v4196 = vsub.s32 %v4193, %v4195
  %v4197 = vrot.slane %v4150, %v4196
  %v4199 = vunpack.c.l.s4 269488144
  %v4200 = vunpack.c.0.s8 %v4199
  %v4201 = vlaneseq
  %v4202 = vshrl.u32 %v4201, 7
  %v4203 = vsub.s32 %v4200, %v4202
  %v4204 = vrot.slane %v4151, %v4203
  %v4206 = vunpack.c.l.s4 842150450
  %v4207 = vunpack.c.0.s8 %v4206
  %v4208 = vlaneseq
  %v4209 = vshrl.u32 %v4208, 7
  %v4210 = vsub.s32 %v4207, %v4209
  %v4211 = vrot.slane %v4151, %v4210
  %v4213 = vunpack.c.l.s4 1414812756
  %v4214 = vunpack.c.0.s8 %v4213
  %v4215 = vlaneseq
  %v4216 = vshrl.u32 %v4215, 7
  %v4217 = vsub.s32 %v4214, %v4216
  %v4218 = vrot.slane %v4151, %v4217
  %v4220 = vunpack.c.l.s4 1987475062
  %v4221 = vunpack.c.0.s8 %v4220
  %v4222 = vlaneseq
  %v4223 = vshrl.u32 %v4222, 7
  %v4224 = vsub.s32 %v4221, %v4223
  %v4225 = vrot.slane %v4151, %v4224
  %v4227 = vunpack.c.l.s4 269488144
  %v4228 = vunpack.c.0.s8 %v4227
  %v4229 = vlaneseq
  %v4230 = vshrl.u32 %v4229, 7
  %v4231 = vsub.s32 %v4228, %v4230
  %v4232 = vrot.slane %v4152, %v4231
  %v4234 = vunpack.c.l.s4 842150450
  %v4235 = vunpack.c.0.s8 %v4234
  %v4236 = vlaneseq
  %v4237 = vshrl.u32 %v4236, 7
  %v4238 = vsub.s32 %v4235, %v4237
  %v4239 = vrot.slane %v4152, %v4238
  %v4241 = vunpack.c.l.s4 1414812756
  %v4242 = vunpack.c.0.s8 %v4241
  %v4243 = vlaneseq
  %v4244 = vshrl.u32 %v4243, 7
  %v4245 = vsub.s32 %v4242, %v4244
  %v4246 = vrot.slane %v4152, %v4245
  %v4248 = vunpack.c.l.s4 1987475062
  %v4249 = vunpack.c.0.s8 %v4248
  %v4250 = vlaneseq
  %v4251 = vshrl.u32 %v4250, 7
  %v4252 = vsub.s32 %v4249, %v4251
  %v4253 = vrot.slane %v4152, %v4252
  %v4255 = vunpack.c.l.s4 269488144
  %v4256 = vunpack.c.0.s8 %v4255
  %v4257 = vlaneseq
  %v4258 = vshrl.u32 %v4257, 7
  %v4259 = vsub.s32 %v4256, %v4258
  %v4260 = vrot.slane %v4153, %v4259
  %v4262 = vunpack.c.l.s4 842150450
  %v4263 = vunpack.c.0.s8 %v4262
  %v4264 = vlaneseq
  %v4265 = vshrl.u32 %v4264, 7
  %v4266 = vsub.s32 %v4263, %v4265
  %v4267 = vrot.slane %v4153, %v4266
  %v4269 = vunpack.c.l.s4 1414812756
  %v4270 = vunpack.c.0.s8 %v4269
  %v4271 = vlaneseq
  %v4272 = vshrl.u32 %v4271, 7
  %v4273 = vsub.s32 %v4270, %v4272
  %v4274 = vrot.slane %v4153, %v4273
  %v4276 = vunpack.c.l.s4 1987475062
  %v4277 = vunpack.c.0.s8 %v4276
  %v4278 = vlaneseq
  %v4279 = vshrl.u32 %v4278, 7
  %v4280 = vsub.s32 %v4277, %v4279
  %v4281 = vrot.slane %v4153, %v4280
  %v4283 = vunpack.c.l.s4 269488144
  %v4284 = vunpack.c.0.s8 %v4283
  %v4285 = vlaneseq
  %v4286 = vshrl.u32 %v4285, 7
  %v4287 = vsub.s32 %v4284, %v4286
  %v4288 = vrot.slane %v4154, %v4287
  %v4290 = vunpack.c.l.s4 842150450
  %v4291 = vunpack.c.0.s8 %v4290
  %v4292 = vlaneseq
  %v4293 = vshrl.u32 %v4292, 7
  %v4294 = vsub.s32 %v4291, %v4293
  %v4295 = vrot.slane %v4154, %v4294
  %v4297 = vunpack.c.l.s4 1414812756
  %v4298 = vunpack.c.0.s8 %v4297
  %v4299 = vlaneseq
  %v4300 = vshrl.u32 %v4299, 7
  %v4301 = vsub.s32 %v4298, %v4300
  %v4302 = vrot.slane %v4154, %v4301
  %v4304 = vunpack.c.l.s4 1987475062
  %v4305 = vunpack.c.0.s8 %v4304
  %v4306 = vlaneseq
  %v4307 = vshrl.u32 %v4306, 7
  %v4308 = vsub.s32 %v4305, %v4307
  %v4309 = vrot.slane %v4154, %v4308
  %v4311 = vunpack.c.l.s4 269488144
  %v4312 = vunpack.c.0.s8 %v4311
  %v4313 = vlaneseq
  %v4314 = vshrl.u32 %v4313, 7
  %v4315 = vsub.s32 %v4312, %v4314
  %v4316 = vrot.slane %v4155, %v4315
  %v4318 = vunpack.c.l.s4 842150450
  %v4319 = vunpack.c.0.s8 %v4318
  %v4320 = vlaneseq
  %v4321 = vshrl.u32 %v4320, 7
  %v4322 = vsub.s32 %v4319, %v4321
  %v4323 = vrot.slane %v4155, %v4322
  %v4325 = vunpack.c.l.s4 1414812756
  %v4326 = vunpack.c.0.s8 %v4325
  %v4327 = vlaneseq
  %v4328 = vshrl.u32 %v4327, 7
  %v4329 = vsub.s32 %v4326, %v4328
  %v4330 = vrot.slane %v4155, %v4329
  %v4332 = vunpack.c.l.s4 1987475062
  %v4333 = vunpack.c.0.s8 %v4332
  %v4334 = vlaneseq
  %v4335 = vshrl.u32 %v4334, 7
  %v4336 = vsub.s32 %v4333, %v4335
  %v4337 = vrot.slane %v4155, %v4336
  %v4339 = vunpack.c.l.s4 269488144
  %v4340 = vunpack.c.0.s8 %v4339
  %v4341 = vlaneseq
  %v4342 = vshrl.u32 %v4341, 7
  %v4343 = vsub.s32 %v4340, %v4342
  %v4344 = vrot.slane %v4156, %v4343
  %v4346 = vunpack.c.l.s4 842150450
  %v4347 = vunpack.c.0.s8 %v4346
  %v4348 = vlaneseq
  %v4349 = vshrl.u32 %v4348, 7
  %v4350 = vsub.s32 %v4347, %v4349
  %v4351 = vrot.slane %v4156, %v4350
  %v4353 = vunpack.c.l.s4 1414812756
  %v4354 = vunpack.c.0.s8 %v4353
  %v4355 = vlaneseq
  %v4356 = vshrl.u32 %v4355, 7
  %v4357 = vsub.s32 %v4354, %v4356
  %v4358 = vrot.slane %v4156, %v4357
  %v4360 = vunpack.c.l.s4 1987475062
  %v4361 = vunpack.c.0.s8 %v4360
  %v4362 = vlaneseq
  %v4363 = vshrl.u32 %v4362, 7
  %v4364 = vsub.s32 %v4361, %v4363
  %v4365 = vrot.slane %v4156, %v4364
  %v4367 = vunpack.c.l.s4 269488144
  %v4368 = vunpack.c.0.s8 %v4367
  %v4369 = vlaneseq
  %v4370 = vshrl.u32 %v4369, 7
  %v4371 = vsub.s32 %v4368, %v4370
  %v4372 = vrot.slane %v4157, %v4371
  %v4374 = vunpack.c.l.s4 842150450
  %v4375 = vunpack.c.0.s8 %v4374
  %v4376 = vlaneseq
  %v4377 = vshrl.u32 %v4376, 7
  %v4378 = vsub.s32 %v4375, %v4377
  %v4379 = vrot.slane %v4157, %v4378
  %v4381 = vunpack.c.l.s4 1414812756
  %v4382 = vunpack.c.0.s8 %v4381
  %v4383 = vlaneseq
  %v4384 = vshrl.u32 %v4383, 7
  %v4385 = vsub.s32 %v4382, %v4384
  %v4386 = vrot.slane %v4157, %v4385
  %v4388 = vunpack.c.l.s4 1987475062
  %v4389 = vunpack.c.0.s8 %v4388
  %v4390 = vlaneseq
  %v4391 = vshrl.u32 %v4390, 7
  %v4392 = vsub.s32 %v4389, %v4391
  %v4393 = vrot.slane %v4157, %v4392
  %v4395 = vunpack.c.l.s4 269488144
  %v4396 = vunpack.c.0.s8 %v4395
  %v4397 = vlaneseq
  %v4398 = vshrl.u32 %v4397, 7
  %v4399 = vsub.s32 %v4396, %v4398
  %v4400 = vrot.slane %v4158, %v4399
  %v4402 = vunpack.c.l.s4 842150450
  %v4403 = vunpack.c.0.s8 %v4402
  %v4404 = vlaneseq
  %v4405 = vshrl.u32 %v4404, 7
  %v4406 = vsub.s32 %v4403, %v4405
  %v4407 = vrot.slane %v4158, %v4406
  %v4409 = vunpack.c.l.s4 1414812756
  %v4410 = vunpack.c.0.s8 %v4409
  %v4411 = vlaneseq
  %v4412 = vshrl.u32 %v4411, 7
  %v4413 = vsub.s32 %v4410, %v4412
  %v4414 = vrot.slane %v4158, %v4413
  %v4416 = vunpack.c.l.s4 1987475062
  %v4417 = vunpack.c.0.s8 %v4416
  %v4418 = vlaneseq
  %v4419 = vshrl.u32 %v4418, 7
  %v4420 = vsub.s32 %v4417, %v4419
  %v4421 = vrot.slane %v4158, %v4420
  %v4423 = vunpack.c.l.s4 269488144
  %v4424 = vunpack.c.0.s8 %v4423
  %v4425 = vlaneseq
  %v4426 = vshrl.u32 %v4425, 7
  %v4427 = vsub.s32 %v4424, %v4426
  %v4428 = vrot.slane %v4159, %v4427
  %v4430 = vunpack.c.l.s4 842150450
  %v4431 = vunpack.c.0.s8 %v4430
  %v4432 = vlaneseq
  %v4433 = vshrl.u32 %v4432, 7
  %v4434 = vsub.s32 %v4431, %v4433
  %v4435 = vrot.slane %v4159, %v4434
  %v4474 = vsub.f32 %v3869, %v4176
  %v4475 = vsub.f32 %v3870, %v4183
  %v4476 = vsub.f32 %v3871, %v4190
  %v4477 = vsub.f32 %v3872, %v4197
  %v4478 = vsub.f32 %v3873, %v4204
  %v4479 = vsub.f32 %v3874, %v4211
  %v4480 = vsub.f32 %v3875, %v4218
  %v4481 = vsub.f32 %v3876, %v4225
  %v4482 = vsub.f32 %v3877, %v4232
  %v4483 = vsub.f32 %v3878, %v4239
  %v4484 = vsub.f32 %v3879, %v4246
  %v4485 = vsub.f32 %v3880, %v4253
  %v4486 = vsub.f32 %v3881, %v4260
  %v4487 = vsub.f32 %v3882, %v4267
  %v4488 = vsub.f32 %v3883, %v4274
  %v4489 = vsub.f32 %v3884, %v4281
  %v4490 = vsub.f32 %v3885, %v4288
  %v4491 = vsub.f32 %v3886, %v4295
  %v4492 = vsub.f32 %v3887, %v4302
  %v4493 = vsub.f32 %v3888, %v4309
  %v4494 = vsub.f32 %v3889, %v4316
  %v4495 = vsub.f32 %v3890, %v4323
  %v4496 = vsub.f32 %v3891, %v4330
  %v4497 = vsub.f32 %v3892, %v4337
  %v4498 = vsub.f32 %v3893, %v4344
  %v4499 = vsub.f32 %v3894, %v4351
  %v4500 = vsub.f32 %v3895, %v4358
  %v4501 = vsub.f32 %v3896, %v4365
  %v4502 = vsub.f32 %v3897, %v4372
  %v4503 = vsub.f32 %v3898, %v4379
  %v4504 = vsub.f32 %v3899, %v4386
  %v4505 = vsub.f32 %v3900, %v4393
  %v4506 = vsub.f32 %v3901, %v4400
  %v4507 = vsub.f32 %v3902, %v4407
  %v4508 = vsub.f32 %v3903, %v4414
  %v4509 = vsub.f32 %v3904, %v4421
  %v4510 = vsub.f32 %v3905, %v4428
  %v4511 = vsub.f32 %v3906, %v4435
  %v4512 = vmul.f32 %v4474, %v4474
  %v4513 = vmul.f32 %v4475, %v4475
  %v4514 = vmul.f32 %v4476, %v4476
  %v4515 = vmul.f32 %v4477, %v4477
  %v4516 = vmul.f32 %v4478, %v4478
  %v4517 = vmul.f32 %v4479, %v4479
  %v4518 = vmul.f32 %v4480, %v4480
  %v4519 = vmul.f32 %v4481, %v4481
  %v4520 = vmul.f32 %v4482, %v4482
  %v4521 = vmul.f32 %v4483, %v4483
  %v4522 = vmul.f32 %v4484, %v4484
  %v4523 = vmul.f32 %v4485, %v4485
  %v4524 = vmul.f32 %v4486, %v4486
  %v4525 = vmul.f32 %v4487, %v4487
  %v4526 = vmul.f32 %v4488, %v4488
  %v4527 = vmul.f32 %v4489, %v4489
  %v4528 = vmul.f32 %v4490, %v4490
  %v4529 = vmul.f32 %v4491, %v4491
  %v4530 = vmul.f32 %v4492, %v4492
  %v4531 = vmul.f32 %v4493, %v4493
  %v4532 = vmul.f32 %v4494, %v4494
  %v4533 = vmul.f32 %v4495, %v4495
  %v4534 = vmul.f32 %v4496, %v4496
  %v4535 = vmul.f32 %v4497, %v4497
  %v4536 = vmul.f32 %v4498, %v4498
  %v4537 = vmul.f32 %v4499, %v4499
  %v4538 = vmul.f32 %v4500, %v4500
  %v4539 = vmul.f32 %v4501, %v4501
  %v4540 = vmul.f32 %v4502, %v4502
  %v4541 = vmul.f32 %v4503, %v4503
  %v4542 = vmul.f32 %v4504, %v4504
  %v4543 = vmul.f32 %v4505, %v4505
  %v4544 = vmul.f32 %v4506, %v4506
  %v4545 = vmul.f32 %v4507, %v4507
  %v4546 = vmul.f32 %v4508, %v4508
  %v4547 = vmul.f32 %v4509, %v4509
  %v4548 = vmul.f32 %v4510, %v4510
  %v4549 = vmul.f32 %v4511, %v4511
  %v4588 = vcombine.low %v4512, %v4513
  %v4589 = vcombine.low %v4514, %v4515
  %v4591 = vunpack.c.l.s4 1983009808
  %v4592 = vunpack.c.0.s8 %v4591
  %v4593 = vlaneseq
  %v4594 = vshrl.u32 %v4593, 7
  %v4595 = vsub.s32 %v4592, %v4594
  %v4596 = vrot.slane %v4588, %v4595
  %v4598 = vunpack.c.l.s4 1983009808
  %v4599 = vunpack.c.0.s8 %v4598
  %v4600 = vlaneseq
  %v4601 = vshrl.u32 %v4600, 7
  %v4602 = vsub.s32 %v4599, %v4601
  %v4603 = vrot.slane %v4589, %v4602
  %v4604 = vcombine.low %v4596, %v4603
  %v4605 = vcombine.low %v4516, %v4517
  %v4606 = vcombine.low %v4518, %v4519
  %v4608 = vunpack.c.l.s4 1983009808
  %v4609 = vunpack.c.0.s8 %v4608
  %v4610 = vlaneseq
  %v4611 = vshrl.u32 %v4610, 7
  %v4612 = vsub.s32 %v4609, %v4611
  %v4613 = vrot.slane %v4605, %v4612
  %v4615 = vunpack.c.l.s4 1983009808
  %v4616 = vunpack.c.0.s8 %v4615
  %v4617 = vlaneseq
  %v4618 = vshrl.u32 %v4617, 7
  %v4619 = vsub.s32 %v4616, %v4618
  %v4620 = vrot.slane %v4606, %v4619
  %v4621 = vcombine.low %v4613, %v4620
  %v4622 = vcombine.low %v4520, %v4521
  %v4623 = vcombine.low %v4522, %v4523
  %v4625 = vunpack.c.l.s4 1983009808
  %v4626 = vunpack.c.0.s8 %v4625
  %v4627 = vlaneseq
  %v4628 = vshrl.u32 %v4627, 7
  %v4629 = vsub.s32 %v4626, %v4628
  %v4630 = vrot.slane %v4622, %v4629
  %v4632 = vunpack.c.l.s4 1983009808
  %v4633 = vunpack.c.0.s8 %v4632
  %v4634 = vlaneseq
  %v4635 = vshrl.u32 %v4634, 7
  %v4636 = vsub.s32 %v4633, %v4635
  %v4637 = vrot.slane %v4623, %v4636
  %v4638 = vcombine.low %v4630, %v4637
  %v4639 = vcombine.low %v4524, %v4525
  %v4640 = vcombine.low %v4526, %v4527
  %v4642 = vunpack.c.l.s4 1983009808
  %v4643 = vunpack.c.0.s8 %v4642
  %v4644 = vlaneseq
  %v4645 = vshrl.u32 %v4644, 7
  %v4646 = vsub.s32 %v4643, %v4645
  %v4647 = vrot.slane %v4639, %v4646
  %v4649 = vunpack.c.l.s4 1983009808
  %v4650 = vunpack.c.0.s8 %v4649
  %v4651 = vlaneseq
  %v4652 = vshrl.u32 %v4651, 7
  %v4653 = vsub.s32 %v4650, %v4652
  %v4654 = vrot.slane %v4640, %v4653
  %v4655 = vcombine.low %v4647, %v4654
  %v4656 = vcombine.low %v4528, %v4529
  %v4657 = vcombine.low %v4530, %v4531
  %v4659 = vunpack.c.l.s4 1983009808
  %v4660 = vunpack.c.0.s8 %v4659
  %v4661 = vlaneseq
  %v4662 = vshrl.u32 %v4661, 7
  %v4663 = vsub.s32 %v4660, %v4662
  %v4664 = vrot.slane %v4656, %v4663
  %v4666 = vunpack.c.l.s4 1983009808
  %v4667 = vunpack.c.0.s8 %v4666
  %v4668 = vlaneseq
  %v4669 = vshrl.u32 %v4668, 7
  %v4670 = vsub.s32 %v4667, %v4669
  %v4671 = vrot.slane %v4657, %v4670
  %v4672 = vcombine.low %v4664, %v4671
  %v4673 = vcombine.low %v4532, %v4533
  %v4674 = vcombine.low %v4534, %v4535
  %v4676 = vunpack.c.l.s4 1983009808
  %v4677 = vunpack.c.0.s8 %v4676
  %v4678 = vlaneseq
  %v4679 = vshrl.u32 %v4678, 7
  %v4680 = vsub.s32 %v4677, %v4679
  %v4681 = vrot.slane %v4673, %v4680
  %v4683 = vunpack.c.l.s4 1983009808
  %v4684 = vunpack.c.0.s8 %v4683
  %v4685 = vlaneseq
  %v4686 = vshrl.u32 %v4685, 7
  %v4687 = vsub.s32 %v4684, %v4686
  %v4688 = vrot.slane %v4674, %v4687
  %v4689 = vcombine.low %v4681, %v4688
  %v4690 = vcombine.low %v4536, %v4537
  %v4691 = vcombine.low %v4538, %v4539
  %v4693 = vunpack.c.l.s4 1983009808
  %v4694 = vunpack.c.0.s8 %v4693
  %v4695 = vlaneseq
  %v4696 = vshrl.u32 %v4695, 7
  %v4697 = vsub.s32 %v4694, %v4696
  %v4698 = vrot.slane %v4690, %v4697
  %v4700 = vunpack.c.l.s4 1983009808
  %v4701 = vunpack.c.0.s8 %v4700
  %v4702 = vlaneseq
  %v4703 = vshrl.u32 %v4702, 7
  %v4704 = vsub.s32 %v4701, %v4703
  %v4705 = vrot.slane %v4691, %v4704
  %v4706 = vcombine.low %v4698, %v4705
  %v4707 = vcombine.low %v4540, %v4541
  %v4708 = vcombine.low %v4542, %v4543
  %v4710 = vunpack.c.l.s4 1983009808
  %v4711 = vunpack.c.0.s8 %v4710
  %v4712 = vlaneseq
  %v4713 = vshrl.u32 %v4712, 7
  %v4714 = vsub.s32 %v4711, %v4713
  %v4715 = vrot.slane %v4707, %v4714
  %v4717 = vunpack.c.l.s4 1983009808
  %v4718 = vunpack.c.0.s8 %v4717
  %v4719 = vlaneseq
  %v4720 = vshrl.u32 %v4719, 7
  %v4721 = vsub.s32 %v4718, %v4720
  %v4722 = vrot.slane %v4708, %v4721
  %v4723 = vcombine.low %v4715, %v4722
  %v4724 = vcombine.low %v4544, %v4545
  %v4725 = vcombine.low %v4546, %v4547
  %v4727 = vunpack.c.l.s4 1983009808
  %v4728 = vunpack.c.0.s8 %v4727
  %v4729 = vlaneseq
  %v4730 = vshrl.u32 %v4729, 7
  %v4731 = vsub.s32 %v4728, %v4730
  %v4732 = vrot.slane %v4724, %v4731
  %v4734 = vunpack.c.l.s4 1983009808
  %v4735 = vunpack.c.0.s8 %v4734
  %v4736 = vlaneseq
  %v4737 = vshrl.u32 %v4736, 7
  %v4738 = vsub.s32 %v4735, %v4737
  %v4739 = vrot.slane %v4725, %v4738
  %v4740 = vcombine.low %v4732, %v4739
  %v4741 = vcombine.low %v4548, %v4549
  %v4743 = vunpack.c.l.s4 1983009808
  %v4744 = vunpack.c.0.s8 %v4743
  %v4745 = vlaneseq
  %v4746 = vshrl.u32 %v4745, 7
  %v4747 = vsub.s32 %v4744, %v4746
  %v4748 = vrot.slane %v4741, %v4747
  %v4759 = vsel %vm470, %v4604, 0.0
  %4760 = vadd.xlane.f32.xlu0 %v4759
  %v4761 = vpop.xlane.xlu0 %4760
  %v4762 = vsel %vm470, %v4621, 0.0
  %4763 = vadd.xlane.f32.xlu0 %v4762
  %v4764 = vpop.xlane.xlu0 %4763
  %v4765 = vsel %vm470, %v4638, 0.0
  %4766 = vadd.xlane.f32.xlu0 %v4765
  %v4767 = vpop.xlane.xlu0 %4766
  %v4768 = vsel %vm470, %v4655, 0.0
  %4769 = vadd.xlane.f32.xlu0 %v4768
  %v4770 = vpop.xlane.xlu0 %4769
  %v4771 = vsel %vm470, %v4672, 0.0
  %4772 = vadd.xlane.f32.xlu0 %v4771
  %v4773 = vpop.xlane.xlu0 %4772
  %v4774 = vsel %vm470, %v4689, 0.0
  %4775 = vadd.xlane.f32.xlu0 %v4774
  %v4776 = vpop.xlane.xlu0 %4775
  %v4777 = vsel %vm470, %v4706, 0.0
  %4778 = vadd.xlane.f32.xlu0 %v4777
  %v4779 = vpop.xlane.xlu0 %4778
  %v4780 = vsel %vm470, %v4723, 0.0
  %4781 = vadd.xlane.f32.xlu0 %v4780
  %v4782 = vpop.xlane.xlu0 %4781
  %v4783 = vsel %vm470, %v4740, 0.0
  %4784 = vadd.xlane.f32.xlu0 %v4783
  %v4785 = vpop.xlane.xlu0 %4784
  %v4786 = vsel %vm4145, %v4748, 0.0
  %4787 = vadd.xlane.f32.xlu0 %v4786
  %v4788 = vpop.xlane.xlu0 %4787
  %v4789 = vmul.f32 %v4761, %v4149
  %v4790 = vmul.f32 %v4764, %v4149
  %v4791 = vmul.f32 %v4767, %v4149
  %v4792 = vmul.f32 %v4770, %v4149
  %v4793 = vmul.f32 %v4773, %v4149
  %v4794 = vmul.f32 %v4776, %v4149
  %v4795 = vmul.f32 %v4779, %v4149
  %v4796 = vmul.f32 %v4782, %v4149
  %v4797 = vmul.f32 %v4785, %v4149
  %v4798 = vmul.f32 %v4788, %v4149
  %v4799 = vadd.f32 %v4789, 1e-05
  %v4800 = vadd.f32 %v4790, 1e-05
  %v4801 = vadd.f32 %v4791, 1e-05
  %v4802 = vadd.f32 %v4792, 1e-05
  %v4803 = vadd.f32 %v4793, 1e-05
  %v4804 = vadd.f32 %v4794, 1e-05
  %v4805 = vadd.f32 %v4795, 1e-05
  %v4806 = vadd.f32 %v4796, 1e-05
  %v4807 = vadd.f32 %v4797, 1e-05
  %v4808 = vadd.f32 %v4798, 1e-05
  %v4809 = vrsqrt.pop %v4799
  %v4810 = vrsqrt.pop %v4800
  %v4811 = vrsqrt.pop %v4801
  %v4812 = vrsqrt.pop %v4802
  %v4813 = vrsqrt.pop %v4803
  %v4814 = vrsqrt.pop %v4804
  %v4815 = vrsqrt.pop %v4805
  %v4816 = vrsqrt.pop %v4806
  %v4817 = vrsqrt.pop %v4807
  %v4818 = vrsqrt.pop %v4808
  %v4830 = vunpack.c.l.s4 269488144
  %v4831 = vunpack.c.0.s8 %v4830
  %v4832 = vlaneseq
  %v4833 = vshrl.u32 %v4832, 7
  %v4834 = vsub.s32 %v4831, %v4833
  %v4835 = vrot.slane %v4809, %v4834
  %v4837 = vunpack.c.l.s4 842150450
  %v4838 = vunpack.c.0.s8 %v4837
  %v4839 = vlaneseq
  %v4840 = vshrl.u32 %v4839, 7
  %v4841 = vsub.s32 %v4838, %v4840
  %v4842 = vrot.slane %v4809, %v4841
  %v4844 = vunpack.c.l.s4 1414812756
  %v4845 = vunpack.c.0.s8 %v4844
  %v4846 = vlaneseq
  %v4847 = vshrl.u32 %v4846, 7
  %v4848 = vsub.s32 %v4845, %v4847
  %v4849 = vrot.slane %v4809, %v4848
  %v4851 = vunpack.c.l.s4 1987475062
  %v4852 = vunpack.c.0.s8 %v4851
  %v4853 = vlaneseq
  %v4854 = vshrl.u32 %v4853, 7
  %v4855 = vsub.s32 %v4852, %v4854
  %v4856 = vrot.slane %v4809, %v4855
  %v4858 = vunpack.c.l.s4 269488144
  %v4859 = vunpack.c.0.s8 %v4858
  %v4860 = vlaneseq
  %v4861 = vshrl.u32 %v4860, 7
  %v4862 = vsub.s32 %v4859, %v4861
  %v4863 = vrot.slane %v4810, %v4862
  %v4865 = vunpack.c.l.s4 842150450
  %v4866 = vunpack.c.0.s8 %v4865
  %v4867 = vlaneseq
  %v4868 = vshrl.u32 %v4867, 7
  %v4869 = vsub.s32 %v4866, %v4868
  %v4870 = vrot.slane %v4810, %v4869
  %v4872 = vunpack.c.l.s4 1414812756
  %v4873 = vunpack.c.0.s8 %v4872
  %v4874 = vlaneseq
  %v4875 = vshrl.u32 %v4874, 7
  %v4876 = vsub.s32 %v4873, %v4875
  %v4877 = vrot.slane %v4810, %v4876
  %v4879 = vunpack.c.l.s4 1987475062
  %v4880 = vunpack.c.0.s8 %v4879
  %v4881 = vlaneseq
  %v4882 = vshrl.u32 %v4881, 7
  %v4883 = vsub.s32 %v4880, %v4882
  %v4884 = vrot.slane %v4810, %v4883
  %v4886 = vunpack.c.l.s4 269488144
  %v4887 = vunpack.c.0.s8 %v4886
  %v4888 = vlaneseq
  %v4889 = vshrl.u32 %v4888, 7
  %v4890 = vsub.s32 %v4887, %v4889
  %v4891 = vrot.slane %v4811, %v4890
  %v4893 = vunpack.c.l.s4 842150450
  %v4894 = vunpack.c.0.s8 %v4893
  %v4895 = vlaneseq
  %v4896 = vshrl.u32 %v4895, 7
  %v4897 = vsub.s32 %v4894, %v4896
  %v4898 = vrot.slane %v4811, %v4897
  %v4900 = vunpack.c.l.s4 1414812756
  %v4901 = vunpack.c.0.s8 %v4900
  %v4902 = vlaneseq
  %v4903 = vshrl.u32 %v4902, 7
  %v4904 = vsub.s32 %v4901, %v4903
  %v4905 = vrot.slane %v4811, %v4904
  %v4907 = vunpack.c.l.s4 1987475062
  %v4908 = vunpack.c.0.s8 %v4907
  %v4909 = vlaneseq
  %v4910 = vshrl.u32 %v4909, 7
  %v4911 = vsub.s32 %v4908, %v4910
  %v4912 = vrot.slane %v4811, %v4911
  %v4914 = vunpack.c.l.s4 269488144
  %v4915 = vunpack.c.0.s8 %v4914
  %v4916 = vlaneseq
  %v4917 = vshrl.u32 %v4916, 7
  %v4918 = vsub.s32 %v4915, %v4917
  %v4919 = vrot.slane %v4812, %v4918
  %v4921 = vunpack.c.l.s4 842150450
  %v4922 = vunpack.c.0.s8 %v4921
  %v4923 = vlaneseq
  %v4924 = vshrl.u32 %v4923, 7
  %v4925 = vsub.s32 %v4922, %v4924
  %v4926 = vrot.slane %v4812, %v4925
  %v4928 = vunpack.c.l.s4 1414812756
  %v4929 = vunpack.c.0.s8 %v4928
  %v4930 = vlaneseq
  %v4931 = vshrl.u32 %v4930, 7
  %v4932 = vsub.s32 %v4929, %v4931
  %v4933 = vrot.slane %v4812, %v4932
  %v4935 = vunpack.c.l.s4 1987475062
  %v4936 = vunpack.c.0.s8 %v4935
  %v4937 = vlaneseq
  %v4938 = vshrl.u32 %v4937, 7
  %v4939 = vsub.s32 %v4936, %v4938
  %v4940 = vrot.slane %v4812, %v4939
  %v4942 = vunpack.c.l.s4 269488144
  %v4943 = vunpack.c.0.s8 %v4942
  %v4944 = vlaneseq
  %v4945 = vshrl.u32 %v4944, 7
  %v4946 = vsub.s32 %v4943, %v4945
  %v4947 = vrot.slane %v4813, %v4946
  %v4949 = vunpack.c.l.s4 842150450
  %v4950 = vunpack.c.0.s8 %v4949
  %v4951 = vlaneseq
  %v4952 = vshrl.u32 %v4951, 7
  %v4953 = vsub.s32 %v4950, %v4952
  %v4954 = vrot.slane %v4813, %v4953
  %v4956 = vunpack.c.l.s4 1414812756
  %v4957 = vunpack.c.0.s8 %v4956
  %v4958 = vlaneseq
  %v4959 = vshrl.u32 %v4958, 7
  %v4960 = vsub.s32 %v4957, %v4959
  %v4961 = vrot.slane %v4813, %v4960
  %v4963 = vunpack.c.l.s4 1987475062
  %v4964 = vunpack.c.0.s8 %v4963
  %v4965 = vlaneseq
  %v4966 = vshrl.u32 %v4965, 7
  %v4967 = vsub.s32 %v4964, %v4966
  %v4968 = vrot.slane %v4813, %v4967
  %v4970 = vunpack.c.l.s4 269488144
  %v4971 = vunpack.c.0.s8 %v4970
  %v4972 = vlaneseq
  %v4973 = vshrl.u32 %v4972, 7
  %v4974 = vsub.s32 %v4971, %v4973
  %v4975 = vrot.slane %v4814, %v4974
  %v4977 = vunpack.c.l.s4 842150450
  %v4978 = vunpack.c.0.s8 %v4977
  %v4979 = vlaneseq
  %v4980 = vshrl.u32 %v4979, 7
  %v4981 = vsub.s32 %v4978, %v4980
  %v4982 = vrot.slane %v4814, %v4981
  %v4984 = vunpack.c.l.s4 1414812756
  %v4985 = vunpack.c.0.s8 %v4984
  %v4986 = vlaneseq
  %v4987 = vshrl.u32 %v4986, 7
  %v4988 = vsub.s32 %v4985, %v4987
  %v4989 = vrot.slane %v4814, %v4988
  %v4991 = vunpack.c.l.s4 1987475062
  %v4992 = vunpack.c.0.s8 %v4991
  %v4993 = vlaneseq
  %v4994 = vshrl.u32 %v4993, 7
  %v4995 = vsub.s32 %v4992, %v4994
  %v4996 = vrot.slane %v4814, %v4995
  %v4998 = vunpack.c.l.s4 269488144
  %v4999 = vunpack.c.0.s8 %v4998
  %v5000 = vlaneseq
  %v5001 = vshrl.u32 %v5000, 7
  %v5002 = vsub.s32 %v4999, %v5001
  %v5003 = vrot.slane %v4815, %v5002
  %v5005 = vunpack.c.l.s4 842150450
  %v5006 = vunpack.c.0.s8 %v5005
  %v5007 = vlaneseq
  %v5008 = vshrl.u32 %v5007, 7
  %v5009 = vsub.s32 %v5006, %v5008
  %v5010 = vrot.slane %v4815, %v5009
  %v5012 = vunpack.c.l.s4 1414812756
  %v5013 = vunpack.c.0.s8 %v5012
  %v5014 = vlaneseq
  %v5015 = vshrl.u32 %v5014, 7
  %v5016 = vsub.s32 %v5013, %v5015
  %v5017 = vrot.slane %v4815, %v5016
  %v5019 = vunpack.c.l.s4 1987475062
  %v5020 = vunpack.c.0.s8 %v5019
  %v5021 = vlaneseq
  %v5022 = vshrl.u32 %v5021, 7
  %v5023 = vsub.s32 %v5020, %v5022
  %v5024 = vrot.slane %v4815, %v5023
  %v5026 = vunpack.c.l.s4 269488144
  %v5027 = vunpack.c.0.s8 %v5026
  %v5028 = vlaneseq
  %v5029 = vshrl.u32 %v5028, 7
  %v5030 = vsub.s32 %v5027, %v5029
  %v5031 = vrot.slane %v4816, %v5030
  %v5033 = vunpack.c.l.s4 842150450
  %v5034 = vunpack.c.0.s8 %v5033
  %v5035 = vlaneseq
  %v5036 = vshrl.u32 %v5035, 7
  %v5037 = vsub.s32 %v5034, %v5036
  %v5038 = vrot.slane %v4816, %v5037
  %v5040 = vunpack.c.l.s4 1414812756
  %v5041 = vunpack.c.0.s8 %v5040
  %v5042 = vlaneseq
  %v5043 = vshrl.u32 %v5042, 7
  %v5044 = vsub.s32 %v5041, %v5043
  %v5045 = vrot.slane %v4816, %v5044
  %v5047 = vunpack.c.l.s4 1987475062
  %v5048 = vunpack.c.0.s8 %v5047
  %v5049 = vlaneseq
  %v5050 = vshrl.u32 %v5049, 7
  %v5051 = vsub.s32 %v5048, %v5050
  %v5052 = vrot.slane %v4816, %v5051
  %v5054 = vunpack.c.l.s4 269488144
  %v5055 = vunpack.c.0.s8 %v5054
  %v5056 = vlaneseq
  %v5057 = vshrl.u32 %v5056, 7
  %v5058 = vsub.s32 %v5055, %v5057
  %v5059 = vrot.slane %v4817, %v5058
  %v5061 = vunpack.c.l.s4 842150450
  %v5062 = vunpack.c.0.s8 %v5061
  %v5063 = vlaneseq
  %v5064 = vshrl.u32 %v5063, 7
  %v5065 = vsub.s32 %v5062, %v5064
  %v5066 = vrot.slane %v4817, %v5065
  %v5068 = vunpack.c.l.s4 1414812756
  %v5069 = vunpack.c.0.s8 %v5068
  %v5070 = vlaneseq
  %v5071 = vshrl.u32 %v5070, 7
  %v5072 = vsub.s32 %v5069, %v5071
  %v5073 = vrot.slane %v4817, %v5072
  %v5075 = vunpack.c.l.s4 1987475062
  %v5076 = vunpack.c.0.s8 %v5075
  %v5077 = vlaneseq
  %v5078 = vshrl.u32 %v5077, 7
  %v5079 = vsub.s32 %v5076, %v5078
  %v5080 = vrot.slane %v4817, %v5079
  %v5082 = vunpack.c.l.s4 269488144
  %v5083 = vunpack.c.0.s8 %v5082
  %v5084 = vlaneseq
  %v5085 = vshrl.u32 %v5084, 7
  %v5086 = vsub.s32 %v5083, %v5085
  %v5087 = vrot.slane %v4818, %v5086
  %v5089 = vunpack.c.l.s4 842150450
  %v5090 = vunpack.c.0.s8 %v5089
  %v5091 = vlaneseq
  %v5092 = vshrl.u32 %v5091, 7
  %v5093 = vsub.s32 %v5090, %v5092
  %v5094 = vrot.slane %v4818, %v5093
  %v5133 = vmul.f32 %v4474, %v4835
  %v5134 = vmul.f32 %v4475, %v4842
  %v5135 = vmul.f32 %v4476, %v4849
  %v5136 = vmul.f32 %v4477, %v4856
  %v5137 = vmul.f32 %v4478, %v4863
  %v5138 = vmul.f32 %v4479, %v4870
  %v5139 = vmul.f32 %v4480, %v4877
  %v5140 = vmul.f32 %v4481, %v4884
  %v5141 = vmul.f32 %v4482, %v4891
  %v5142 = vmul.f32 %v4483, %v4898
  %v5143 = vmul.f32 %v4484, %v4905
  %v5144 = vmul.f32 %v4485, %v4912
  %v5145 = vmul.f32 %v4486, %v4919
  %v5146 = vmul.f32 %v4487, %v4926
  %v5147 = vmul.f32 %v4488, %v4933
  %v5148 = vmul.f32 %v4489, %v4940
  %v5149 = vmul.f32 %v4490, %v4947
  %v5150 = vmul.f32 %v4491, %v4954
  %v5151 = vmul.f32 %v4492, %v4961
  %v5152 = vmul.f32 %v4493, %v4968
  %v5153 = vmul.f32 %v4494, %v4975
  %v5154 = vmul.f32 %v4495, %v4982
  %v5155 = vmul.f32 %v4496, %v4989
  %v5156 = vmul.f32 %v4497, %v4996
  %v5157 = vmul.f32 %v4498, %v5003
  %v5158 = vmul.f32 %v4499, %v5010
  %v5159 = vmul.f32 %v4500, %v5017
  %v5160 = vmul.f32 %v4501, %v5024
  %v5161 = vmul.f32 %v4502, %v5031
  %v5162 = vmul.f32 %v4503, %v5038
  %v5163 = vmul.f32 %v4504, %v5045
  %v5164 = vmul.f32 %v4505, %v5052
  %v5165 = vmul.f32 %v4506, %v5059
  %v5166 = vmul.f32 %v4507, %v5066
  %v5167 = vmul.f32 %v4508, %v5073
  %v5168 = vmul.f32 %v4509, %v5080
  %v5169 = vmul.f32 %v4510, %v5087
  %v5170 = vmul.f32 %v4511, %v5094
  %v5172 = vlaneseq
  %v5173 = vshrl.u32 %v5172, 7
  %v5174 = vsub.s32 0, %v5173
  %v5175 = vrot.slane %v3907, %v5174
  %v5176 = vcombine.high %v5175, %v5175
  %v5178 = vunpack.c.l.s4 1983009808
  %v5179 = vunpack.c.0.s8 %v5178
  %v5180 = vlaneseq
  %v5181 = vshrl.u32 %v5180, 7
  %v5182 = vsub.s32 %v5179, %v5181
  %v5183 = vrot.slane %v5175, %v5182
  %v5185 = vunpack.c.l.s4 1983009808
  %v5186 = vunpack.c.0.s8 %v5185
  %v5187 = vlaneseq
  %v5188 = vshrl.u32 %v5187, 7
  %v5189 = vsub.s32 %v5186, %v5188
  %v5190 = vrot.slane %v5176, %v5189
  %v5191 = vcombine.high %v5183, %v5183
  %v5192 = vcombine.high %v5190, %v5190
  %v5197 = vmul.f32 %v5133, %v5183
  %v5198 = vmul.f32 %v5134, %v5191
  %v5199 = vmul.f32 %v5135, %v5190
  %v5200 = vmul.f32 %v5136, %v5192
  %v5201 = vmul.f32 %v5137, %v5183
  %v5202 = vmul.f32 %v5138, %v5191
  %v5203 = vmul.f32 %v5139, %v5190
  %v5204 = vmul.f32 %v5140, %v5192
  %v5205 = vmul.f32 %v5141, %v5183
  %v5206 = vmul.f32 %v5142, %v5191
  %v5207 = vmul.f32 %v5143, %v5190
  %v5208 = vmul.f32 %v5144, %v5192
  %v5209 = vmul.f32 %v5145, %v5183
  %v5210 = vmul.f32 %v5146, %v5191
  %v5211 = vmul.f32 %v5147, %v5190
  %v5212 = vmul.f32 %v5148, %v5192
  %v5213 = vmul.f32 %v5149, %v5183
  %v5214 = vmul.f32 %v5150, %v5191
  %v5215 = vmul.f32 %v5151, %v5190
  %v5216 = vmul.f32 %v5152, %v5192
  %v5217 = vmul.f32 %v5153, %v5183
  %v5218 = vmul.f32 %v5154, %v5191
  %v5219 = vmul.f32 %v5155, %v5190
  %v5220 = vmul.f32 %v5156, %v5192
  %v5221 = vmul.f32 %v5157, %v5183
  %v5222 = vmul.f32 %v5158, %v5191
  %v5223 = vmul.f32 %v5159, %v5190
  %v5224 = vmul.f32 %v5160, %v5192
  %v5225 = vmul.f32 %v5161, %v5183
  %v5226 = vmul.f32 %v5162, %v5191
  %v5227 = vmul.f32 %v5163, %v5190
  %v5228 = vmul.f32 %v5164, %v5192
  %v5229 = vmul.f32 %v5165, %v5183
  %v5230 = vmul.f32 %v5166, %v5191
  %v5231 = vmul.f32 %v5167, %v5190
  %v5232 = vmul.f32 %v5168, %v5192
  %v5233 = vmul.f32 %v5169, %v5183
  %v5234 = vmul.f32 %v5170, %v5191
  %v5236 = vlaneseq
  %v5237 = vshrl.u32 %v5236, 7
  %v5238 = vsub.s32 0, %v5237
  %v5239 = vrot.slane %v3908, %v5238
  %v5240 = vcombine.high %v5239, %v5239
  %v5242 = vunpack.c.l.s4 1983009808
  %v5243 = vunpack.c.0.s8 %v5242
  %v5244 = vlaneseq
  %v5245 = vshrl.u32 %v5244, 7
  %v5246 = vsub.s32 %v5243, %v5245
  %v5247 = vrot.slane %v5239, %v5246
  %v5249 = vunpack.c.l.s4 1983009808
  %v5250 = vunpack.c.0.s8 %v5249
  %v5251 = vlaneseq
  %v5252 = vshrl.u32 %v5251, 7
  %v5253 = vsub.s32 %v5250, %v5252
  %v5254 = vrot.slane %v5240, %v5253
  %v5255 = vcombine.high %v5247, %v5247
  %v5256 = vcombine.high %v5254, %v5254
  %v5261 = vadd.f32 %v5197, %v5247
  %v5262 = vadd.f32 %v5198, %v5255
  %v5263 = vadd.f32 %v5199, %v5254
  %v5264 = vadd.f32 %v5200, %v5256
  %v5265 = vadd.f32 %v5201, %v5247
  %v5266 = vadd.f32 %v5202, %v5255
  %v5267 = vadd.f32 %v5203, %v5254
  %v5268 = vadd.f32 %v5204, %v5256
  %v5269 = vadd.f32 %v5205, %v5247
  %v5270 = vadd.f32 %v5206, %v5255
  %v5271 = vadd.f32 %v5207, %v5254
  %v5272 = vadd.f32 %v5208, %v5256
  %v5273 = vadd.f32 %v5209, %v5247
  %v5274 = vadd.f32 %v5210, %v5255
  %v5275 = vadd.f32 %v5211, %v5254
  %v5276 = vadd.f32 %v5212, %v5256
  %v5277 = vadd.f32 %v5213, %v5247
  %v5278 = vadd.f32 %v5214, %v5255
  %v5279 = vadd.f32 %v5215, %v5254
  %v5280 = vadd.f32 %v5216, %v5256
  %v5281 = vadd.f32 %v5217, %v5247
  %v5282 = vadd.f32 %v5218, %v5255
  %v5283 = vadd.f32 %v5219, %v5254
  %v5284 = vadd.f32 %v5220, %v5256
  %v5285 = vadd.f32 %v5221, %v5247
  %v5286 = vadd.f32 %v5222, %v5255
  %v5287 = vadd.f32 %v5223, %v5254
  %v5288 = vadd.f32 %v5224, %v5256
  %v5289 = vadd.f32 %v5225, %v5247
  %v5290 = vadd.f32 %v5226, %v5255
  %v5291 = vadd.f32 %v5227, %v5254
  %v5292 = vadd.f32 %v5228, %v5256
  %v5293 = vadd.f32 %v5229, %v5247
  %v5294 = vadd.f32 %v5230, %v5255
  %v5295 = vadd.f32 %v5231, %v5254
  %v5296 = vadd.f32 %v5232, %v5256
  %v5297 = vadd.f32 %v5233, %v5247
  %v5298 = vadd.f32 %v5234, %v5255
  %v5337 = vcombine.low %v5261, %v5262
  %v5338 = vcombine.low %v5263, %v5264
  %v5340 = vunpack.c.l.s4 1983009808
  %v5341 = vunpack.c.0.s8 %v5340
  %v5342 = vlaneseq
  %v5343 = vshrl.u32 %v5342, 7
  %v5344 = vsub.s32 %v5341, %v5343
  %v5345 = vrot.slane %v5337, %v5344
  %v5347 = vunpack.c.l.s4 1983009808
  %v5348 = vunpack.c.0.s8 %v5347
  %v5349 = vlaneseq
  %v5350 = vshrl.u32 %v5349, 7
  %v5351 = vsub.s32 %v5348, %v5350
  %v5352 = vrot.slane %v5338, %v5351
  %v5353 = vcombine.low %v5345, %v5352
  %v5354 = vcombine.low %v5265, %v5266
  %v5355 = vcombine.low %v5267, %v5268
  %v5357 = vunpack.c.l.s4 1983009808
  %v5358 = vunpack.c.0.s8 %v5357
  %v5359 = vlaneseq
  %v5360 = vshrl.u32 %v5359, 7
  %v5361 = vsub.s32 %v5358, %v5360
  %v5362 = vrot.slane %v5354, %v5361
  %v5364 = vunpack.c.l.s4 1983009808
  %v5365 = vunpack.c.0.s8 %v5364
  %v5366 = vlaneseq
  %v5367 = vshrl.u32 %v5366, 7
  %v5368 = vsub.s32 %v5365, %v5367
  %v5369 = vrot.slane %v5355, %v5368
  %v5370 = vcombine.low %v5362, %v5369
  %v5371 = vcombine.low %v5269, %v5270
  %v5372 = vcombine.low %v5271, %v5272
  %v5374 = vunpack.c.l.s4 1983009808
  %v5375 = vunpack.c.0.s8 %v5374
  %v5376 = vlaneseq
  %v5377 = vshrl.u32 %v5376, 7
  %v5378 = vsub.s32 %v5375, %v5377
  %v5379 = vrot.slane %v5371, %v5378
  %v5381 = vunpack.c.l.s4 1983009808
  %v5382 = vunpack.c.0.s8 %v5381
  %v5383 = vlaneseq
  %v5384 = vshrl.u32 %v5383, 7
  %v5385 = vsub.s32 %v5382, %v5384
  %v5386 = vrot.slane %v5372, %v5385
  %v5387 = vcombine.low %v5379, %v5386
  %v5388 = vcombine.low %v5273, %v5274
  %v5389 = vcombine.low %v5275, %v5276
  %v5391 = vunpack.c.l.s4 1983009808
  %v5392 = vunpack.c.0.s8 %v5391
  %v5393 = vlaneseq
  %v5394 = vshrl.u32 %v5393, 7
  %v5395 = vsub.s32 %v5392, %v5394
  %v5396 = vrot.slane %v5388, %v5395
  %v5398 = vunpack.c.l.s4 1983009808
  %v5399 = vunpack.c.0.s8 %v5398
  %v5400 = vlaneseq
  %v5401 = vshrl.u32 %v5400, 7
  %v5402 = vsub.s32 %v5399, %v5401
  %v5403 = vrot.slane %v5389, %v5402
  %v5404 = vcombine.low %v5396, %v5403
  %v5405 = vcombine.low %v5277, %v5278
  %v5406 = vcombine.low %v5279, %v5280
  %v5408 = vunpack.c.l.s4 1983009808
  %v5409 = vunpack.c.0.s8 %v5408
  %v5410 = vlaneseq
  %v5411 = vshrl.u32 %v5410, 7
  %v5412 = vsub.s32 %v5409, %v5411
  %v5413 = vrot.slane %v5405, %v5412
  %v5415 = vunpack.c.l.s4 1983009808
  %v5416 = vunpack.c.0.s8 %v5415
  %v5417 = vlaneseq
  %v5418 = vshrl.u32 %v5417, 7
  %v5419 = vsub.s32 %v5416, %v5418
  %v5420 = vrot.slane %v5406, %v5419
  %v5421 = vcombine.low %v5413, %v5420
  %v5422 = vcombine.low %v5281, %v5282
  %v5423 = vcombine.low %v5283, %v5284
  %v5425 = vunpack.c.l.s4 1983009808
  %v5426 = vunpack.c.0.s8 %v5425
  %v5427 = vlaneseq
  %v5428 = vshrl.u32 %v5427, 7
  %v5429 = vsub.s32 %v5426, %v5428
  %v5430 = vrot.slane %v5422, %v5429
  %v5432 = vunpack.c.l.s4 1983009808
  %v5433 = vunpack.c.0.s8 %v5432
  %v5434 = vlaneseq
  %v5435 = vshrl.u32 %v5434, 7
  %v5436 = vsub.s32 %v5433, %v5435
  %v5437 = vrot.slane %v5423, %v5436
  %v5438 = vcombine.low %v5430, %v5437
  %v5439 = vcombine.low %v5285, %v5286
  %v5440 = vcombine.low %v5287, %v5288
  %v5442 = vunpack.c.l.s4 1983009808
  %v5443 = vunpack.c.0.s8 %v5442
  %v5444 = vlaneseq
  %v5445 = vshrl.u32 %v5444, 7
  %v5446 = vsub.s32 %v5443, %v5445
  %v5447 = vrot.slane %v5439, %v5446
  %v5449 = vunpack.c.l.s4 1983009808
  %v5450 = vunpack.c.0.s8 %v5449
  %v5451 = vlaneseq
  %v5452 = vshrl.u32 %v5451, 7
  %v5453 = vsub.s32 %v5450, %v5452
  %v5454 = vrot.slane %v5440, %v5453
  %v5455 = vcombine.low %v5447, %v5454
  %v5456 = vcombine.low %v5289, %v5290
  %v5457 = vcombine.low %v5291, %v5292
  %v5459 = vunpack.c.l.s4 1983009808
  %v5460 = vunpack.c.0.s8 %v5459
  %v5461 = vlaneseq
  %v5462 = vshrl.u32 %v5461, 7
  %v5463 = vsub.s32 %v5460, %v5462
  %v5464 = vrot.slane %v5456, %v5463
  %v5466 = vunpack.c.l.s4 1983009808
  %v5467 = vunpack.c.0.s8 %v5466
  %v5468 = vlaneseq
  %v5469 = vshrl.u32 %v5468, 7
  %v5470 = vsub.s32 %v5467, %v5469
  %v5471 = vrot.slane %v5457, %v5470
  %v5472 = vcombine.low %v5464, %v5471
  %v5473 = vcombine.low %v5293, %v5294
  %v5474 = vcombine.low %v5295, %v5296
  %v5476 = vunpack.c.l.s4 1983009808
  %v5477 = vunpack.c.0.s8 %v5476
  %v5478 = vlaneseq
  %v5479 = vshrl.u32 %v5478, 7
  %v5480 = vsub.s32 %v5477, %v5479
  %v5481 = vrot.slane %v5473, %v5480
  %v5483 = vunpack.c.l.s4 1983009808
  %v5484 = vunpack.c.0.s8 %v5483
  %v5485 = vlaneseq
  %v5486 = vshrl.u32 %v5485, 7
  %v5487 = vsub.s32 %v5484, %v5486
  %v5488 = vrot.slane %v5474, %v5487
  %v5489 = vcombine.low %v5481, %v5488
  %v5490 = vcombine.low %v5297, %v5298
  %v5492 = vunpack.c.l.s4 1983009808
  %v5493 = vunpack.c.0.s8 %v5492
  %v5494 = vlaneseq
  %v5495 = vshrl.u32 %v5494, 7
  %v5496 = vsub.s32 %v5493, %v5495
  %v5497 = vrot.slane %v5490, %v5496
  %v5508 = vpack.c.bf16 %v5370, %v5353
  %v5509 = vpack.c.bf16 %v5404, %v5387
  %v5510 = vpack.c.bf16 %v5438, %v5421
  %v5511 = vpack.c.bf16 %v5472, %v5455
  %v5512 = vpack.c.bf16 %v5497, %v5489
  %v5513 = vld [vmem:[%s7] sm:$0xf]
  %v5514 = vld [vmem:[%s7 + $0x4] sm:$0xf]
  %v5515 = vld [vmem:[%s7 + $0x8] sm:$0xf]
  %v5516 = vld [vmem:[%s7 + $0xc] sm:$0xf]
  %v5517 = vld [vmem:[%s8] sm:$0x1]
  %v5519 = vlaneseq
  %v5520 = vshrl.u32 %v5519, 7
  %v5521 = vsub.s32 0, %v5520
  %v5522 = vrot.slane %v5517, %v5521
  %v5528 = vunpack.c.l.b16 %v5513
  %v5529 = vunpack.c.l.b16 %v5514
  %v5530 = vunpack.c.l.b16 %v5515
  %v5531 = vunpack.c.l.b16 %v5516
  %v5532 = vpack.c.b16 %v5529, %v5528
  %v5533 = vpack.c.b16 %v5531, %v5530
  %v5537 = vsel %vm470, %v5508, 0
  %v5540 = vsel %vm470, %v5509, 0
  %v5543 = vsel %vm470, %v5510, 0
  %v5546 = vsel %vm470, %v5511, 0
  %v5549 = vsel %vm470, %v5512, 0
  %5551 = vmatprep.subr.bf16.mxu0 0
  %5552 = vmatpush1.bf16.msra.mxu0 %v5532
  %5553 = vmatprep.subr.bf16.mxu0 0
  %5554 = vmatpush1.bf16.msra.mxu0 %v5533
  %5555 = vmatprep.subr.bf16.mxu0 0
  %5556 = vmatpush1.bf16.msra.mxu0 0
  %5557 = vmatprep.subr.bf16.mxu0 0
  %5558 = vmatpush1.bf16.msra.mxu0 0
  %5559 = vmatprep.subr.bf16.mxu0 0
  %5560 = vmatpush1.bf16.msra.mxu0 0
  %5561 = vmatprep.subr.bf16.mxu0 0
  %5562 = vmatpush1.bf16.msra.mxu0 0
  %5563 = vmatprep.subr.bf16.mxu0 0
  %5564 = vmatpush1.bf16.msra.mxu0 0
  %5565 = vmatprep.subr.bf16.mxu0 0
  %5566 = vmatpush1.bf16.msra.mxu0 0
  %5567 = vmatprep.subr.bf16.mxu0 0
  %5568 = vmatpush1.bf16.msra.mxu0 0
  %5569 = vmatprep.subr.bf16.mxu0 0
  %5570 = vmatpush1.bf16.msra.mxu0 0
  %5571 = vmatprep.subr.bf16.mxu0 0
  %5572 = vmatpush1.bf16.msra.mxu0 0
  %5573 = vmatprep.subr.bf16.mxu0 0
  %5574 = vmatpush1.bf16.msra.mxu0 0
  %5575 = vmatprep.subr.bf16.mxu0 0
  %5576 = vmatpush1.bf16.msra.mxu0 0
  %5577 = vmatprep.subr.bf16.mxu0 0
  %5578 = vmatpush1.bf16.msra.mxu0 0
  %5579 = vmatprep.subr.bf16.mxu0 0
  %5580 = vmatpush1.bf16.msra.mxu0 0
  %5581 = vmatprep.subr.bf16.mxu0 0
  %5582 = vmatpush1.bf16.msra.mxu0 0
  %5583 = vmatprep.mubr.bf16.mxu0 0
  %5584 = vmatmul.mubr.bf16.gmra.mrb[0].mxu0 %v5537
  %v5585 = vpop.f32.mrb[0].mxu0
  %v5586 = vadd.f32 %v5522, %v5585
  %v5587 = vpop.f32.mrb[0].mxu0
  %v5588 = vpop.f32.mrb[0].mxu0
  %v5589 = vadd.f32 %v5522, %v5588
  %v5590 = vpop.f32.mrb[0].mxu0
  %5591 = vmatprep.mubr.bf16.mxu0 0
  %5592 = vmatmul.mubr.bf16.gmra.mrb[0].mxu0 %v5540
  %v5593 = vpop.f32.mrb[0].mxu0
  %v5594 = vadd.f32 %v5522, %v5593
  %v5595 = vpop.f32.mrb[0].mxu0
  %v5596 = vpop.f32.mrb[0].mxu0
  %v5597 = vadd.f32 %v5522, %v5596
  %v5598 = vpop.f32.mrb[0].mxu0
  %5599 = vmatprep.mubr.bf16.mxu0 0
  %5600 = vmatmul.mubr.bf16.gmra.mrb[0].mxu0 %v5543
  %v5601 = vpop.f32.mrb[0].mxu0
  %v5602 = vadd.f32 %v5522, %v5601
  %v5603 = vpop.f32.mrb[0].mxu0
  %v5604 = vpop.f32.mrb[0].mxu0
  %v5605 = vadd.f32 %v5522, %v5604
  %v5606 = vpop.f32.mrb[0].mxu0
  %5607 = vmatprep.mubr.bf16.mxu0 0
  %5608 = vmatmul.mubr.bf16.gmra.mrb[0].mxu0 %v5546
  %v5609 = vpop.f32.mrb[0].mxu0
  %v5610 = vadd.f32 %v5522, %v5609
  %v5611 = vpop.f32.mrb[0].mxu0
  %v5612 = vpop.f32.mrb[0].mxu0
  %v5613 = vadd.f32 %v5522, %v5612
  %v5614 = vpop.f32.mrb[0].mxu0
  %5615 = vmatprep.mubr.bf16.mxu0 0
  %5616 = vmatmul.mubr.bf16.gmra.mrb[0].mxu0 %v5549
  %v5617 = vpop.f32.mrb[0].mxu0
  %v5618 = vadd.f32 %v5522, %v5617
  %v5619 = vpop.f32.mrb[0].mxu0
  %v5620 = vpop.f32.mrb[0].mxu0
  %v5621 = vadd.f32 %v5522, %v5620
  %v5622 = vpop.f32.mrb[0].mxu0
  %5623 = vdwg.mxu0
  %v5624 = vmul.f32 %v5586, 0.5
  %v5625 = vmul.f32 %v5589, 0.5
  %v5626 = vmul.f32 %v5594, 0.5
  %v5627 = vmul.f32 %v5597, 0.5
  %v5628 = vmul.f32 %v5602, 0.5
  %v5629 = vmul.f32 %v5605, 0.5
  %v5630 = vmul.f32 %v5610, 0.5
  %v5631 = vmul.f32 %v5613, 0.5
  %v5632 = vmul.f32 %v5618, 0.5
  %v5633 = vmul.f32 %v5621, 0.5
  %v5634 = vmul.f32 %v5586, 0.70710677
  %v5635 = vmul.f32 %v5589, 0.70710677
  %v5636 = vmul.f32 %v5594, 0.70710677
  %v5637 = vmul.f32 %v5597, 0.70710677
  %v5638 = vmul.f32 %v5602, 0.70710677
  %v5639 = vmul.f32 %v5605, 0.70710677
  %v5640 = vmul.f32 %v5610, 0.70710677
  %v5641 = vmul.f32 %v5613, 0.70710677
  %v5642 = vmul.f32 %v5618, 0.70710677
  %v5643 = vmul.f32 %v5621, 0.70710677
  %v5644 = verf.f32.pop %v5634
  %v5645 = verf.f32.pop %v5635
  %v5646 = verf.f32.pop %v5636
  %v5647 = verf.f32.pop %v5637
  %v5648 = verf.f32.pop %v5638
  %v5649 = verf.f32.pop %v5639
  %v5650 = verf.f32.pop %v5640
  %v5651 = verf.f32.pop %v5641
  %v5652 = verf.f32.pop %v5642
  %v5653 = verf.f32.pop %v5643
  %v5654 = vadd.f32 %v5644, 1.0
  %v5655 = vadd.f32 %v5645, 1.0
  %v5656 = vadd.f32 %v5646, 1.0
  %v5657 = vadd.f32 %v5647, 1.0
  %v5658 = vadd.f32 %v5648, 1.0
  %v5659 = vadd.f32 %v5649, 1.0
  %v5660 = vadd.f32 %v5650, 1.0
  %v5661 = vadd.f32 %v5651, 1.0
  %v5662 = vadd.f32 %v5652, 1.0
  %v5663 = vadd.f32 %v5653, 1.0
  %v5664 = vmul.f32 %v5624, %v5654
  %v5665 = vmul.f32 %v5625, %v5655
  %v5666 = vmul.f32 %v5626, %v5656
  %v5667 = vmul.f32 %v5627, %v5657
  %v5668 = vmul.f32 %v5628, %v5658
  %v5669 = vmul.f32 %v5629, %v5659
  %v5670 = vmul.f32 %v5630, %v5660
  %v5671 = vmul.f32 %v5631, %v5661
  %v5672 = vmul.f32 %v5632, %v5662
  %v5673 = vmul.f32 %v5633, %v5663
  %v5674 = vpack.c.bf16 %v5665, %v5664
  %v5675 = vpack.c.bf16 %v5667, %v5666
  %v5676 = vpack.c.bf16 %v5669, %v5668
  %v5677 = vpack.c.bf16 %v5671, %v5670
  %v5678 = vpack.c.bf16 %v5673, %v5672
  %v5679 = vld [vmem:[%s9] sm:$0xf]
  %v5680 = vld [vmem:[%s9 + $0x4] sm:$0xf]
  %v5681 = vld [vmem:[%s9 + $0x8] sm:$0xf]
  %v5682 = vld [vmem:[%s9 + $0xc] sm:$0xf]
  %v5683 = vld [vmem:[%s9 + $0x10] sm:$0xf]
  %v5684 = vld [vmem:[%s9 + $0x14] sm:$0xf]
  %v5685 = vld [vmem:[%s9 + $0x18] sm:$0xf]
  %v5686 = vld [vmem:[%s9 + $0x1c] sm:$0xf]
  %v5687 = vld [vmem:[%s10] sm:$0x1]
  %v5689 = vlaneseq
  %v5690 = vshrl.u32 %v5689, 7
  %v5691 = vsub.s32 0, %v5690
  %v5692 = vrot.slane %v5687, %v5691
  %v5702 = vunpack.c.l.b16 %v5679
  %v5703 = vunpack.c.l.b16 %v5680
  %v5704 = vunpack.c.l.b16 %v5681
  %v5705 = vunpack.c.l.b16 %v5682
  %v5706 = vunpack.c.l.b16 %v5683
  %v5707 = vunpack.c.l.b16 %v5684
  %v5708 = vunpack.c.l.b16 %v5685
  %v5709 = vunpack.c.l.b16 %v5686
  %v5710 = vpack.c.b16 %v5703, %v5702
  %v5711 = vpack.c.b16 %v5705, %v5704
  %v5712 = vpack.c.b16 %v5707, %v5706
  %v5713 = vpack.c.b16 %v5709, %v5708
  %vm5718 = vcmask 523264
  %v5720 = vsel %vm5718, %v5674, 0
  %v5723 = vsel %vm5718, %v5675, 0
  %v5726 = vsel %vm5718, %v5676, 0
  %v5729 = vsel %vm5718, %v5677, 0
  %v5732 = vsel %vm5718, %v5678, 0
  %5734 = vmatprep.subr.bf16.mxu0 0
  %5735 = vmatpush1.bf16.msra.mxu0 %v5710
  %5736 = vmatprep.subr.bf16.mxu0 0
  %5737 = vmatpush1.bf16.msra.mxu0 %v5711
  %5738 = vmatprep.subr.bf16.mxu0 0
  %5739 = vmatpush1.bf16.msra.mxu0 %v5712
  %5740 = vmatprep.subr.bf16.mxu0 0
  %5741 = vmatpush1.bf16.msra.mxu0 %v5713
  %5742 = vmatprep.subr.bf16.mxu0 0
  %5743 = vmatpush1.bf16.msra.mxu0 0
  %5744 = vmatprep.subr.bf16.mxu0 0
  %5745 = vmatpush1.bf16.msra.mxu0 0
  %5746 = vmatprep.subr.bf16.mxu0 0
  %5747 = vmatpush1.bf16.msra.mxu0 0
  %5748 = vmatprep.subr.bf16.mxu0 0
  %5749 = vmatpush1.bf16.msra.mxu0 0
  %5750 = vmatprep.subr.bf16.mxu0 0
  %5751 = vmatpush1.bf16.msra.mxu0 0
  %5752 = vmatprep.subr.bf16.mxu0 0
  %5753 = vmatpush1.bf16.msra.mxu0 0
  %5754 = vmatprep.subr.bf16.mxu0 0
  %5755 = vmatpush1.bf16.msra.mxu0 0
  %5756 = vmatprep.subr.bf16.mxu0 0
  %5757 = vmatpush1.bf16.msra.mxu0 0
  %5758 = vmatprep.subr.bf16.mxu0 0
  %5759 = vmatpush1.bf16.msra.mxu0 0
  %5760 = vmatprep.subr.bf16.mxu0 0
  %5761 = vmatpush1.bf16.msra.mxu0 0
  %5762 = vmatprep.subr.bf16.mxu0 0
  %5763 = vmatpush1.bf16.msra.mxu0 0
  %5764 = vmatprep.subr.bf16.mxu0 0
  %5765 = vmatpush1.bf16.msra.mxu0 0
  %5766 = vmatprep.mubr.bf16.mxu0 0
  %5767 = vmatmul.mubr.bf16.gmra.mrb[0].mxu0 %v5720
  %v5768 = vpop.f32.mrb[0].mxu0
  %v5769 = vadd.f32 %v5692, %v5768
  %v5770 = vpop.f32.mrb[0].mxu0
  %v5771 = vpop.f32.mrb[0].mxu0
  %v5772 = vadd.f32 %v5692, %v5771
  %v5773 = vpop.f32.mrb[0].mxu0
  %5774 = vmatprep.mubr.bf16.mxu0 0
  %5775 = vmatmul.mubr.bf16.gmra.mrb[0].mxu0 %v5723
  %v5776 = vpop.f32.mrb[0].mxu0
  %v5777 = vadd.f32 %v5692, %v5776
  %v5778 = vpop.f32.mrb[0].mxu0
  %v5779 = vpop.f32.mrb[0].mxu0
  %v5780 = vadd.f32 %v5692, %v5779
  %v5781 = vpop.f32.mrb[0].mxu0
  %5782 = vmatprep.mubr.bf16.mxu0 0
  %5783 = vmatmul.mubr.bf16.gmra.mrb[0].mxu0 %v5726
  %v5784 = vpop.f32.mrb[0].mxu0
  %v5785 = vadd.f32 %v5692, %v5784
  %v5786 = vpop.f32.mrb[0].mxu0
  %v5787 = vpop.f32.mrb[0].mxu0
  %v5788 = vadd.f32 %v5692, %v5787
  %v5789 = vpop.f32.mrb[0].mxu0
  %5790 = vmatprep.mubr.bf16.mxu0 0
  %5791 = vmatmul.mubr.bf16.gmra.mrb[0].mxu0 %v5729
  %v5792 = vpop.f32.mrb[0].mxu0
  %v5793 = vadd.f32 %v5692, %v5792
  %v5794 = vpop.f32.mrb[0].mxu0
  %v5795 = vpop.f32.mrb[0].mxu0
  %v5796 = vadd.f32 %v5692, %v5795
  %v5797 = vpop.f32.mrb[0].mxu0
  %5798 = vmatprep.mubr.bf16.mxu0 0
  %5799 = vmatmul.mubr.bf16.gmra.mrb[0].mxu0 %v5732
  %v5800 = vpop.f32.mrb[0].mxu0
  %v5801 = vadd.f32 %v5692, %v5800
  %v5802 = vpop.f32.mrb[0].mxu0
  %v5803 = vpop.f32.mrb[0].mxu0
  %v5804 = vadd.f32 %v5692, %v5803
  %v5805 = vpop.f32.mrb[0].mxu0
  %5806 = vdwg.mxu0
  %v5817 = vcombine.high %v5769, %v5769
  %v5819 = vunpack.c.l.s4 1983009808
  %v5820 = vunpack.c.0.s8 %v5819
  %v5821 = vlaneseq
  %v5822 = vshrl.u32 %v5821, 7
  %v5823 = vsub.s32 %v5820, %v5822
  %v5824 = vrot.slane %v5769, %v5823
  %v5826 = vunpack.c.l.s4 1983009808
  %v5827 = vunpack.c.0.s8 %v5826
  %v5828 = vlaneseq
  %v5829 = vshrl.u32 %v5828, 7
  %v5830 = vsub.s32 %v5827, %v5829
  %v5831 = vrot.slane %v5817, %v5830
  %v5832 = vcombine.high %v5824, %v5824
  %v5833 = vcombine.high %v5831, %v5831
  %v5834 = vcombine.high %v5772, %v5772
  %v5836 = vunpack.c.l.s4 1983009808
  %v5837 = vunpack.c.0.s8 %v5836
  %v5838 = vlaneseq
  %v5839 = vshrl.u32 %v5838, 7
  %v5840 = vsub.s32 %v5837, %v5839
  %v5841 = vrot.slane %v5772, %v5840
  %v5843 = vunpack.c.l.s4 1983009808
  %v5844 = vunpack.c.0.s8 %v5843
  %v5845 = vlaneseq
  %v5846 = vshrl.u32 %v5845, 7
  %v5847 = vsub.s32 %v5844, %v5846
  %v5848 = vrot.slane %v5834, %v5847
  %v5849 = vcombine.high %v5841, %v5841
  %v5850 = vcombine.high %v5848, %v5848
  %v5851 = vcombine.high %v5777, %v5777
  %v5853 = vunpack.c.l.s4 1983009808
  %v5854 = vunpack.c.0.s8 %v5853
  %v5855 = vlaneseq
  %v5856 = vshrl.u32 %v5855, 7
  %v5857 = vsub.s32 %v5854, %v5856
  %v5858 = vrot.slane %v5777, %v5857
  %v5860 = vunpack.c.l.s4 1983009808
  %v5861 = vunpack.c.0.s8 %v5860
  %v5862 = vlaneseq
  %v5863 = vshrl.u32 %v5862, 7
  %v5864 = vsub.s32 %v5861, %v5863
  %v5865 = vrot.slane %v5851, %v5864
  %v5866 = vcombine.high %v5858, %v5858
  %v5867 = vcombine.high %v5865, %v5865
  %v5868 = vcombine.high %v5780, %v5780
  %v5870 = vunpack.c.l.s4 1983009808
  %v5871 = vunpack.c.0.s8 %v5870
  %v5872 = vlaneseq
  %v5873 = vshrl.u32 %v5872, 7
  %v5874 = vsub.s32 %v5871, %v5873
  %v5875 = vrot.slane %v5780, %v5874
  %v5877 = vunpack.c.l.s4 1983009808
  %v5878 = vunpack.c.0.s8 %v5877
  %v5879 = vlaneseq
  %v5880 = vshrl.u32 %v5879, 7
  %v5881 = vsub.s32 %v5878, %v5880
  %v5882 = vrot.slane %v5868, %v5881
  %v5883 = vcombine.high %v5875, %v5875
  %v5884 = vcombine.high %v5882, %v5882
  %v5885 = vcombine.high %v5785, %v5785
  %v5887 = vunpack.c.l.s4 1983009808
  %v5888 = vunpack.c.0.s8 %v5887
  %v5889 = vlaneseq
  %v5890 = vshrl.u32 %v5889, 7
  %v5891 = vsub.s32 %v5888, %v5890
  %v5892 = vrot.slane %v5785, %v5891
  %v5894 = vunpack.c.l.s4 1983009808
  %v5895 = vunpack.c.0.s8 %v5894
  %v5896 = vlaneseq
  %v5897 = vshrl.u32 %v5896, 7
  %v5898 = vsub.s32 %v5895, %v5897
  %v5899 = vrot.slane %v5885, %v5898
  %v5900 = vcombine.high %v5892, %v5892
  %v5901 = vcombine.high %v5899, %v5899
  %v5902 = vcombine.high %v5788, %v5788
  %v5904 = vunpack.c.l.s4 1983009808
  %v5905 = vunpack.c.0.s8 %v5904
  %v5906 = vlaneseq
  %v5907 = vshrl.u32 %v5906, 7
  %v5908 = vsub.s32 %v5905, %v5907
  %v5909 = vrot.slane %v5788, %v5908
  %v5911 = vunpack.c.l.s4 1983009808
  %v5912 = vunpack.c.0.s8 %v5911
  %v5913 = vlaneseq
  %v5914 = vshrl.u32 %v5913, 7
  %v5915 = vsub.s32 %v5912, %v5914
  %v5916 = vrot.slane %v5902, %v5915
  %v5917 = vcombine.high %v5909, %v5909
  %v5918 = vcombine.high %v5916, %v5916
  %v5919 = vcombine.high %v5793, %v5793
  %v5921 = vunpack.c.l.s4 1983009808
  %v5922 = vunpack.c.0.s8 %v5921
  %v5923 = vlaneseq
  %v5924 = vshrl.u32 %v5923, 7
  %v5925 = vsub.s32 %v5922, %v5924
  %v5926 = vrot.slane %v5793, %v5925
  %v5928 = vunpack.c.l.s4 1983009808
  %v5929 = vunpack.c.0.s8 %v5928
  %v5930 = vlaneseq
  %v5931 = vshrl.u32 %v5930, 7
  %v5932 = vsub.s32 %v5929, %v5931
  %v5933 = vrot.slane %v5919, %v5932
  %v5934 = vcombine.high %v5926, %v5926
  %v5935 = vcombine.high %v5933, %v5933
  %v5936 = vcombine.high %v5796, %v5796
  %v5938 = vunpack.c.l.s4 1983009808
  %v5939 = vunpack.c.0.s8 %v5938
  %v5940 = vlaneseq
  %v5941 = vshrl.u32 %v5940, 7
  %v5942 = vsub.s32 %v5939, %v5941
  %v5943 = vrot.slane %v5796, %v5942
  %v5945 = vunpack.c.l.s4 1983009808
  %v5946 = vunpack.c.0.s8 %v5945
  %v5947 = vlaneseq
  %v5948 = vshrl.u32 %v5947, 7
  %v5949 = vsub.s32 %v5946, %v5948
  %v5950 = vrot.slane %v5936, %v5949
  %v5951 = vcombine.high %v5943, %v5943
  %v5952 = vcombine.high %v5950, %v5950
  %v5953 = vcombine.high %v5801, %v5801
  %v5955 = vunpack.c.l.s4 1983009808
  %v5956 = vunpack.c.0.s8 %v5955
  %v5957 = vlaneseq
  %v5958 = vshrl.u32 %v5957, 7
  %v5959 = vsub.s32 %v5956, %v5958
  %v5960 = vrot.slane %v5801, %v5959
  %v5962 = vunpack.c.l.s4 1983009808
  %v5963 = vunpack.c.0.s8 %v5962
  %v5964 = vlaneseq
  %v5965 = vshrl.u32 %v5964, 7
  %v5966 = vsub.s32 %v5963, %v5965
  %v5967 = vrot.slane %v5953, %v5966
  %v5968 = vcombine.high %v5960, %v5960
  %v5969 = vcombine.high %v5967, %v5967
  %v5971 = vunpack.c.l.s4 1983009808
  %v5972 = vunpack.c.0.s8 %v5971
  %v5973 = vlaneseq
  %v5974 = vshrl.u32 %v5973, 7
  %v5975 = vsub.s32 %v5972, %v5974
  %v5976 = vrot.slane %v5804, %v5975
  %v5977 = vcombine.high %v5976, %v5976
  %v6016 = vadd.f32 %v5261, %v5824
  %v6017 = vadd.f32 %v5262, %v5832
  %v6018 = vadd.f32 %v5263, %v5831
  %v6019 = vadd.f32 %v5264, %v5833
  %v6020 = vadd.f32 %v5265, %v5841
  %v6021 = vadd.f32 %v5266, %v5849
  %v6022 = vadd.f32 %v5267, %v5848
  %v6023 = vadd.f32 %v5268, %v5850
  %v6024 = vadd.f32 %v5269, %v5858
  %v6025 = vadd.f32 %v5270, %v5866
  %v6026 = vadd.f32 %v5271, %v5865
  %v6027 = vadd.f32 %v5272, %v5867
  %v6028 = vadd.f32 %v5273, %v5875
  %v6029 = vadd.f32 %v5274, %v5883
  %v6030 = vadd.f32 %v5275, %v5882
  %v6031 = vadd.f32 %v5276, %v5884
  %v6032 = vadd.f32 %v5277, %v5892
  %v6033 = vadd.f32 %v5278, %v5900
  %v6034 = vadd.f32 %v5279, %v5899
  %v6035 = vadd.f32 %v5280, %v5901
  %v6036 = vadd.f32 %v5281, %v5909
  %v6037 = vadd.f32 %v5282, %v5917
  %v6038 = vadd.f32 %v5283, %v5916
  %v6039 = vadd.f32 %v5284, %v5918
  %v6040 = vadd.f32 %v5285, %v5926
  %v6041 = vadd.f32 %v5286, %v5934
  %v6042 = vadd.f32 %v5287, %v5933
  %v6043 = vadd.f32 %v5288, %v5935
  %v6044 = vadd.f32 %v5289, %v5943
  %v6045 = vadd.f32 %v5290, %v5951
  %v6046 = vadd.f32 %v5291, %v5950
  %v6047 = vadd.f32 %v5292, %v5952
  %v6048 = vadd.f32 %v5293, %v5960
  %v6049 = vadd.f32 %v5294, %v5968
  %v6050 = vadd.f32 %v5295, %v5967
  %v6051 = vadd.f32 %v5296, %v5969
  %v6052 = vadd.f32 %v5297, %v5976
  %v6053 = vadd.f32 %v5298, %v5977
  %v6054 = vld [vmem:[%s11] sm:$0x1]
  %v6055 = vld [vmem:[%s12] sm:$0x1]
  %v6094 = vcombine.low %v6016, %v6017
  %v6095 = vcombine.low %v6018, %v6019
  %v6097 = vunpack.c.l.s4 1983009808
  %v6098 = vunpack.c.0.s8 %v6097
  %v6099 = vlaneseq
  %v6100 = vshrl.u32 %v6099, 7
  %v6101 = vsub.s32 %v6098, %v6100
  %v6102 = vrot.slane %v6094, %v6101
  %v6104 = vunpack.c.l.s4 1983009808
  %v6105 = vunpack.c.0.s8 %v6104
  %v6106 = vlaneseq
  %v6107 = vshrl.u32 %v6106, 7
  %v6108 = vsub.s32 %v6105, %v6107
  %v6109 = vrot.slane %v6095, %v6108
  %v6110 = vcombine.low %v6102, %v6109
  %v6111 = vcombine.low %v6020, %v6021
  %v6112 = vcombine.low %v6022, %v6023
  %v6114 = vunpack.c.l.s4 1983009808
  %v6115 = vunpack.c.0.s8 %v6114
  %v6116 = vlaneseq
  %v6117 = vshrl.u32 %v6116, 7
  %v6118 = vsub.s32 %v6115, %v6117
  %v6119 = vrot.slane %v6111, %v6118
  %v6121 = vunpack.c.l.s4 1983009808
  %v6122 = vunpack.c.0.s8 %v6121
  %v6123 = vlaneseq
  %v6124 = vshrl.u32 %v6123, 7
  %v6125 = vsub.s32 %v6122, %v6124
  %v6126 = vrot.slane %v6112, %v6125
  %v6127 = vcombine.low %v6119, %v6126
  %v6128 = vcombine.low %v6024, %v6025
  %v6129 = vcombine.low %v6026, %v6027
  %v6131 = vunpack.c.l.s4 1983009808
  %v6132 = vunpack.c.0.s8 %v6131
  %v6133 = vlaneseq
  %v6134 = vshrl.u32 %v6133, 7
  %v6135 = vsub.s32 %v6132, %v6134
  %v6136 = vrot.slane %v6128, %v6135
  %v6138 = vunpack.c.l.s4 1983009808
  %v6139 = vunpack.c.0.s8 %v6138
  %v6140 = vlaneseq
  %v6141 = vshrl.u32 %v6140, 7
  %v6142 = vsub.s32 %v6139, %v6141
  %v6143 = vrot.slane %v6129, %v6142
  %v6144 = vcombine.low %v6136, %v6143
  %v6145 = vcombine.low %v6028, %v6029
  %v6146 = vcombine.low %v6030, %v6031
  %v6148 = vunpack.c.l.s4 1983009808
  %v6149 = vunpack.c.0.s8 %v6148
  %v6150 = vlaneseq
  %v6151 = vshrl.u32 %v6150, 7
  %v6152 = vsub.s32 %v6149, %v6151
  %v6153 = vrot.slane %v6145, %v6152
  %v6155 = vunpack.c.l.s4 1983009808
  %v6156 = vunpack.c.0.s8 %v6155
  %v6157 = vlaneseq
  %v6158 = vshrl.u32 %v6157, 7
  %v6159 = vsub.s32 %v6156, %v6158
  %v6160 = vrot.slane %v6146, %v6159
  %v6161 = vcombine.low %v6153, %v6160
  %v6162 = vcombine.low %v6032, %v6033
  %v6163 = vcombine.low %v6034, %v6035
  %v6165 = vunpack.c.l.s4 1983009808
  %v6166 = vunpack.c.0.s8 %v6165
  %v6167 = vlaneseq
  %v6168 = vshrl.u32 %v6167, 7
  %v6169 = vsub.s32 %v6166, %v6168
  %v6170 = vrot.slane %v6162, %v6169
  %v6172 = vunpack.c.l.s4 1983009808
  %v6173 = vunpack.c.0.s8 %v6172
  %v6174 = vlaneseq
  %v6175 = vshrl.u32 %v6174, 7
  %v6176 = vsub.s32 %v6173, %v6175
  %v6177 = vrot.slane %v6163, %v6176
  %v6178 = vcombine.low %v6170, %v6177
  %v6179 = vcombine.low %v6036, %v6037
  %v6180 = vcombine.low %v6038, %v6039
  %v6182 = vunpack.c.l.s4 1983009808
  %v6183 = vunpack.c.0.s8 %v6182
  %v6184 = vlaneseq
  %v6185 = vshrl.u32 %v6184, 7
  %v6186 = vsub.s32 %v6183, %v6185
  %v6187 = vrot.slane %v6179, %v6186
  %v6189 = vunpack.c.l.s4 1983009808
  %v6190 = vunpack.c.0.s8 %v6189
  %v6191 = vlaneseq
  %v6192 = vshrl.u32 %v6191, 7
  %v6193 = vsub.s32 %v6190, %v6192
  %v6194 = vrot.slane %v6180, %v6193
  %v6195 = vcombine.low %v6187, %v6194
  %v6196 = vcombine.low %v6040, %v6041
  %v6197 = vcombine.low %v6042, %v6043
  %v6199 = vunpack.c.l.s4 1983009808
  %v6200 = vunpack.c.0.s8 %v6199
  %v6201 = vlaneseq
  %v6202 = vshrl.u32 %v6201, 7
  %v6203 = vsub.s32 %v6200, %v6202
  %v6204 = vrot.slane %v6196, %v6203
  %v6206 = vunpack.c.l.s4 1983009808
  %v6207 = vunpack.c.0.s8 %v6206
  %v6208 = vlaneseq
  %v6209 = vshrl.u32 %v6208, 7
  %v6210 = vsub.s32 %v6207, %v6209
  %v6211 = vrot.slane %v6197, %v6210
  %v6212 = vcombine.low %v6204, %v6211
  %v6213 = vcombine.low %v6044, %v6045
  %v6214 = vcombine.low %v6046, %v6047
  %v6216 = vunpack.c.l.s4 1983009808
  %v6217 = vunpack.c.0.s8 %v6216
  %v6218 = vlaneseq
  %v6219 = vshrl.u32 %v6218, 7
  %v6220 = vsub.s32 %v6217, %v6219
  %v6221 = vrot.slane %v6213, %v6220
  %v6223 = vunpack.c.l.s4 1983009808
  %v6224 = vunpack.c.0.s8 %v6223
  %v6225 = vlaneseq
  %v6226 = vshrl.u32 %v6225, 7
  %v6227 = vsub.s32 %v6224, %v6226
  %v6228 = vrot.slane %v6214, %v6227
  %v6229 = vcombine.low %v6221, %v6228
  %v6230 = vcombine.low %v6048, %v6049
  %v6231 = vcombine.low %v6050, %v6051
  %v6233 = vunpack.c.l.s4 1983009808
  %v6234 = vunpack.c.0.s8 %v6233
  %v6235 = vlaneseq
  %v6236 = vshrl.u32 %v6235, 7
  %v6237 = vsub.s32 %v6234, %v6236
  %v6238 = vrot.slane %v6230, %v6237
  %v6240 = vunpack.c.l.s4 1983009808
  %v6241 = vunpack.c.0.s8 %v6240
  %v6242 = vlaneseq
  %v6243 = vshrl.u32 %v6242, 7
  %v6244 = vsub.s32 %v6241, %v6243
  %v6245 = vrot.slane %v6231, %v6244
  %v6246 = vcombine.low %v6238, %v6245
  %v6247 = vcombine.low %v6052, %v6053
  %v6249 = vunpack.c.l.s4 1983009808
  %v6250 = vunpack.c.0.s8 %v6249
  %v6251 = vlaneseq
  %v6252 = vshrl.u32 %v6251, 7
  %v6253 = vsub.s32 %v6250, %v6252
  %v6254 = vrot.slane %v6247, %v6253
  %v6265 = vsel %vm470, %v6110, 0.0
  %6266 = vadd.xlane.f32.xlu0 %v6265
  %v6267 = vpop.xlane.xlu0 %6266
  %v6268 = vsel %vm470, %v6127, 0.0
  %6269 = vadd.xlane.f32.xlu0 %v6268
  %v6270 = vpop.xlane.xlu0 %6269
  %v6271 = vsel %vm470, %v6144, 0.0
  %6272 = vadd.xlane.f32.xlu0 %v6271
  %v6273 = vpop.xlane.xlu0 %6272
  %v6274 = vsel %vm470, %v6161, 0.0
  %6275 = vadd.xlane.f32.xlu0 %v6274
  %v6276 = vpop.xlane.xlu0 %6275
  %v6277 = vsel %vm470, %v6178, 0.0
  %6278 = vadd.xlane.f32.xlu0 %v6277
  %v6279 = vpop.xlane.xlu0 %6278
  %v6280 = vsel %vm470, %v6195, 0.0
  %6281 = vadd.xlane.f32.xlu0 %v6280
  %v6282 = vpop.xlane.xlu0 %6281
  %v6283 = vsel %vm470, %v6212, 0.0
  %6284 = vadd.xlane.f32.xlu0 %v6283
  %v6285 = vpop.xlane.xlu0 %6284
  %v6286 = vsel %vm470, %v6229, 0.0
  %6287 = vadd.xlane.f32.xlu0 %v6286
  %v6288 = vpop.xlane.xlu0 %6287
  %v6289 = vsel %vm470, %v6246, 0.0
  %6290 = vadd.xlane.f32.xlu0 %v6289
  %v6291 = vpop.xlane.xlu0 %6290
  %v6292 = vsel %vm4145, %v6254, 0.0
  %6293 = vadd.xlane.f32.xlu0 %v6292
  %v6294 = vpop.xlane.xlu0 %6293
  %v6295 = vmul.f32 %v6267, %v4149
  %v6296 = vmul.f32 %v6270, %v4149
  %v6297 = vmul.f32 %v6273, %v4149
  %v6298 = vmul.f32 %v6276, %v4149
  %v6299 = vmul.f32 %v6279, %v4149
  %v6300 = vmul.f32 %v6282, %v4149
  %v6301 = vmul.f32 %v6285, %v4149
  %v6302 = vmul.f32 %v6288, %v4149
  %v6303 = vmul.f32 %v6291, %v4149
  %v6304 = vmul.f32 %v6294, %v4149
  %v6316 = vunpack.c.l.s4 269488144
  %v6317 = vunpack.c.0.s8 %v6316
  %v6318 = vlaneseq
  %v6319 = vshrl.u32 %v6318, 7
  %v6320 = vsub.s32 %v6317, %v6319
  %v6321 = vrot.slane %v6295, %v6320
  %v6323 = vunpack.c.l.s4 842150450
  %v6324 = vunpack.c.0.s8 %v6323
  %v6325 = vlaneseq
  %v6326 = vshrl.u32 %v6325, 7
  %v6327 = vsub.s32 %v6324, %v6326
  %v6328 = vrot.slane %v6295, %v6327
  %v6330 = vunpack.c.l.s4 1414812756
  %v6331 = vunpack.c.0.s8 %v6330
  %v6332 = vlaneseq
  %v6333 = vshrl.u32 %v6332, 7
  %v6334 = vsub.s32 %v6331, %v6333
  %v6335 = vrot.slane %v6295, %v6334
  %v6337 = vunpack.c.l.s4 1987475062
  %v6338 = vunpack.c.0.s8 %v6337
  %v6339 = vlaneseq
  %v6340 = vshrl.u32 %v6339, 7
  %v6341 = vsub.s32 %v6338, %v6340
  %v6342 = vrot.slane %v6295, %v6341
  %v6344 = vunpack.c.l.s4 269488144
  %v6345 = vunpack.c.0.s8 %v6344
  %v6346 = vlaneseq
  %v6347 = vshrl.u32 %v6346, 7
  %v6348 = vsub.s32 %v6345, %v6347
  %v6349 = vrot.slane %v6296, %v6348
  %v6351 = vunpack.c.l.s4 842150450
  %v6352 = vunpack.c.0.s8 %v6351
  %v6353 = vlaneseq
  %v6354 = vshrl.u32 %v6353, 7
  %v6355 = vsub.s32 %v6352, %v6354
  %v6356 = vrot.slane %v6296, %v6355
  %v6358 = vunpack.c.l.s4 1414812756
  %v6359 = vunpack.c.0.s8 %v6358
  %v6360 = vlaneseq
  %v6361 = vshrl.u32 %v6360, 7
  %v6362 = vsub.s32 %v6359, %v6361
  %v6363 = vrot.slane %v6296, %v6362
  %v6365 = vunpack.c.l.s4 1987475062
  %v6366 = vunpack.c.0.s8 %v6365
  %v6367 = vlaneseq
  %v6368 = vshrl.u32 %v6367, 7
  %v6369 = vsub.s32 %v6366, %v6368
  %v6370 = vrot.slane %v6296, %v6369
  %v6372 = vunpack.c.l.s4 269488144
  %v6373 = vunpack.c.0.s8 %v6372
  %v6374 = vlaneseq
  %v6375 = vshrl.u32 %v6374, 7
  %v6376 = vsub.s32 %v6373, %v6375
  %v6377 = vrot.slane %v6297, %v6376
  %v6379 = vunpack.c.l.s4 842150450
  %v6380 = vunpack.c.0.s8 %v6379
  %v6381 = vlaneseq
  %v6382 = vshrl.u32 %v6381, 7
  %v6383 = vsub.s32 %v6380, %v6382
  %v6384 = vrot.slane %v6297, %v6383
  %v6386 = vunpack.c.l.s4 1414812756
  %v6387 = vunpack.c.0.s8 %v6386
  %v6388 = vlaneseq
  %v6389 = vshrl.u32 %v6388, 7
  %v6390 = vsub.s32 %v6387, %v6389
  %v6391 = vrot.slane %v6297, %v6390
  %v6393 = vunpack.c.l.s4 1987475062
  %v6394 = vunpack.c.0.s8 %v6393
  %v6395 = vlaneseq
  %v6396 = vshrl.u32 %v6395, 7
  %v6397 = vsub.s32 %v6394, %v6396
  %v6398 = vrot.slane %v6297, %v6397
  %v6400 = vunpack.c.l.s4 269488144
  %v6401 = vunpack.c.0.s8 %v6400
  %v6402 = vlaneseq
  %v6403 = vshrl.u32 %v6402, 7
  %v6404 = vsub.s32 %v6401, %v6403
  %v6405 = vrot.slane %v6298, %v6404
  %v6407 = vunpack.c.l.s4 842150450
  %v6408 = vunpack.c.0.s8 %v6407
  %v6409 = vlaneseq
  %v6410 = vshrl.u32 %v6409, 7
  %v6411 = vsub.s32 %v6408, %v6410
  %v6412 = vrot.slane %v6298, %v6411
  %v6414 = vunpack.c.l.s4 1414812756
  %v6415 = vunpack.c.0.s8 %v6414
  %v6416 = vlaneseq
  %v6417 = vshrl.u32 %v6416, 7
  %v6418 = vsub.s32 %v6415, %v6417
  %v6419 = vrot.slane %v6298, %v6418
  %v6421 = vunpack.c.l.s4 1987475062
  %v6422 = vunpack.c.0.s8 %v6421
  %v6423 = vlaneseq
  %v6424 = vshrl.u32 %v6423, 7
  %v6425 = vsub.s32 %v6422, %v6424
  %v6426 = vrot.slane %v6298, %v6425
  %v6428 = vunpack.c.l.s4 269488144
  %v6429 = vunpack.c.0.s8 %v6428
  %v6430 = vlaneseq
  %v6431 = vshrl.u32 %v6430, 7
  %v6432 = vsub.s32 %v6429, %v6431
  %v6433 = vrot.slane %v6299, %v6432
  %v6435 = vunpack.c.l.s4 842150450
  %v6436 = vunpack.c.0.s8 %v6435
  %v6437 = vlaneseq
  %v6438 = vshrl.u32 %v6437, 7
  %v6439 = vsub.s32 %v6436, %v6438
  %v6440 = vrot.slane %v6299, %v6439
  %v6442 = vunpack.c.l.s4 1414812756
  %v6443 = vunpack.c.0.s8 %v6442
  %v6444 = vlaneseq
  %v6445 = vshrl.u32 %v6444, 7
  %v6446 = vsub.s32 %v6443, %v6445
  %v6447 = vrot.slane %v6299, %v6446
  %v6449 = vunpack.c.l.s4 1987475062
  %v6450 = vunpack.c.0.s8 %v6449
  %v6451 = vlaneseq
  %v6452 = vshrl.u32 %v6451, 7
  %v6453 = vsub.s32 %v6450, %v6452
  %v6454 = vrot.slane %v6299, %v6453
  %v6456 = vunpack.c.l.s4 269488144
  %v6457 = vunpack.c.0.s8 %v6456
  %v6458 = vlaneseq
  %v6459 = vshrl.u32 %v6458, 7
  %v6460 = vsub.s32 %v6457, %v6459
  %v6461 = vrot.slane %v6300, %v6460
  %v6463 = vunpack.c.l.s4 842150450
  %v6464 = vunpack.c.0.s8 %v6463
  %v6465 = vlaneseq
  %v6466 = vshrl.u32 %v6465, 7
  %v6467 = vsub.s32 %v6464, %v6466
  %v6468 = vrot.slane %v6300, %v6467
  %v6470 = vunpack.c.l.s4 1414812756
  %v6471 = vunpack.c.0.s8 %v6470
  %v6472 = vlaneseq
  %v6473 = vshrl.u32 %v6472, 7
  %v6474 = vsub.s32 %v6471, %v6473
  %v6475 = vrot.slane %v6300, %v6474
  %v6477 = vunpack.c.l.s4 1987475062
  %v6478 = vunpack.c.0.s8 %v6477
  %v6479 = vlaneseq
  %v6480 = vshrl.u32 %v6479, 7
  %v6481 = vsub.s32 %v6478, %v6480
  %v6482 = vrot.slane %v6300, %v6481
  %v6484 = vunpack.c.l.s4 269488144
  %v6485 = vunpack.c.0.s8 %v6484
  %v6486 = vlaneseq
  %v6487 = vshrl.u32 %v6486, 7
  %v6488 = vsub.s32 %v6485, %v6487
  %v6489 = vrot.slane %v6301, %v6488
  %v6491 = vunpack.c.l.s4 842150450
  %v6492 = vunpack.c.0.s8 %v6491
  %v6493 = vlaneseq
  %v6494 = vshrl.u32 %v6493, 7
  %v6495 = vsub.s32 %v6492, %v6494
  %v6496 = vrot.slane %v6301, %v6495
  %v6498 = vunpack.c.l.s4 1414812756
  %v6499 = vunpack.c.0.s8 %v6498
  %v6500 = vlaneseq
  %v6501 = vshrl.u32 %v6500, 7
  %v6502 = vsub.s32 %v6499, %v6501
  %v6503 = vrot.slane %v6301, %v6502
  %v6505 = vunpack.c.l.s4 1987475062
  %v6506 = vunpack.c.0.s8 %v6505
  %v6507 = vlaneseq
  %v6508 = vshrl.u32 %v6507, 7
  %v6509 = vsub.s32 %v6506, %v6508
  %v6510 = vrot.slane %v6301, %v6509
  %v6512 = vunpack.c.l.s4 269488144
  %v6513 = vunpack.c.0.s8 %v6512
  %v6514 = vlaneseq
  %v6515 = vshrl.u32 %v6514, 7
  %v6516 = vsub.s32 %v6513, %v6515
  %v6517 = vrot.slane %v6302, %v6516
  %v6519 = vunpack.c.l.s4 842150450
  %v6520 = vunpack.c.0.s8 %v6519
  %v6521 = vlaneseq
  %v6522 = vshrl.u32 %v6521, 7
  %v6523 = vsub.s32 %v6520, %v6522
  %v6524 = vrot.slane %v6302, %v6523
  %v6526 = vunpack.c.l.s4 1414812756
  %v6527 = vunpack.c.0.s8 %v6526
  %v6528 = vlaneseq
  %v6529 = vshrl.u32 %v6528, 7
  %v6530 = vsub.s32 %v6527, %v6529
  %v6531 = vrot.slane %v6302, %v6530
  %v6533 = vunpack.c.l.s4 1987475062
  %v6534 = vunpack.c.0.s8 %v6533
  %v6535 = vlaneseq
  %v6536 = vshrl.u32 %v6535, 7
  %v6537 = vsub.s32 %v6534, %v6536
  %v6538 = vrot.slane %v6302, %v6537
  %v6540 = vunpack.c.l.s4 269488144
  %v6541 = vunpack.c.0.s8 %v6540
  %v6542 = vlaneseq
  %v6543 = vshrl.u32 %v6542, 7
  %v6544 = vsub.s32 %v6541, %v6543
  %v6545 = vrot.slane %v6303, %v6544
  %v6547 = vunpack.c.l.s4 842150450
  %v6548 = vunpack.c.0.s8 %v6547
  %v6549 = vlaneseq
  %v6550 = vshrl.u32 %v6549, 7
  %v6551 = vsub.s32 %v6548, %v6550
  %v6552 = vrot.slane %v6303, %v6551
  %v6554 = vunpack.c.l.s4 1414812756
  %v6555 = vunpack.c.0.s8 %v6554
  %v6556 = vlaneseq
  %v6557 = vshrl.u32 %v6556, 7
  %v6558 = vsub.s32 %v6555, %v6557
  %v6559 = vrot.slane %v6303, %v6558
  %v6561 = vunpack.c.l.s4 1987475062
  %v6562 = vunpack.c.0.s8 %v6561
  %v6563 = vlaneseq
  %v6564 = vshrl.u32 %v6563, 7
  %v6565 = vsub.s32 %v6562, %v6564
  %v6566 = vrot.slane %v6303, %v6565
  %v6568 = vunpack.c.l.s4 269488144
  %v6569 = vunpack.c.0.s8 %v6568
  %v6570 = vlaneseq
  %v6571 = vshrl.u32 %v6570, 7
  %v6572 = vsub.s32 %v6569, %v6571
  %v6573 = vrot.slane %v6304, %v6572
  %v6575 = vunpack.c.l.s4 842150450
  %v6576 = vunpack.c.0.s8 %v6575
  %v6577 = vlaneseq
  %v6578 = vshrl.u32 %v6577, 7
  %v6579 = vsub.s32 %v6576, %v6578
  %v6580 = vrot.slane %v6304, %v6579
  %v6619 = vsub.f32 %v6016, %v6321
  %v6620 = vsub.f32 %v6017, %v6328
  %v6621 = vsub.f32 %v6018, %v6335
  %v6622 = vsub.f32 %v6019, %v6342
  %v6623 = vsub.f32 %v6020, %v6349
  %v6624 = vsub.f32 %v6021, %v6356
  %v6625 = vsub.f32 %v6022, %v6363
  %v6626 = vsub.f32 %v6023, %v6370
  %v6627 = vsub.f32 %v6024, %v6377
  %v6628 = vsub.f32 %v6025, %v6384
  %v6629 = vsub.f32 %v6026, %v6391
  %v6630 = vsub.f32 %v6027, %v6398
  %v6631 = vsub.f32 %v6028, %v6405
  %v6632 = vsub.f32 %v6029, %v6412
  %v6633 = vsub.f32 %v6030, %v6419
  %v6634 = vsub.f32 %v6031, %v6426
  %v6635 = vsub.f32 %v6032, %v6433
  %v6636 = vsub.f32 %v6033, %v6440
  %v6637 = vsub.f32 %v6034, %v6447
  %v6638 = vsub.f32 %v6035, %v6454
  %v6639 = vsub.f32 %v6036, %v6461
  %v6640 = vsub.f32 %v6037, %v6468
  %v6641 = vsub.f32 %v6038, %v6475
  %v6642 = vsub.f32 %v6039, %v6482
  %v6643 = vsub.f32 %v6040, %v6489
  %v6644 = vsub.f32 %v6041, %v6496
  %v6645 = vsub.f32 %v6042, %v6503
  %v6646 = vsub.f32 %v6043, %v6510
  %v6647 = vsub.f32 %v6044, %v6517
  %v6648 = vsub.f32 %v6045, %v6524
  %v6649 = vsub.f32 %v6046, %v6531
  %v6650 = vsub.f32 %v6047, %v6538
  %v6651 = vsub.f32 %v6048, %v6545
  %v6652 = vsub.f32 %v6049, %v6552
  %v6653 = vsub.f32 %v6050, %v6559
  %v6654 = vsub.f32 %v6051, %v6566
  %v6655 = vsub.f32 %v6052, %v6573
  %v6656 = vsub.f32 %v6053, %v6580
  %v6657 = vmul.f32 %v6619, %v6619
  %v6658 = vmul.f32 %v6620, %v6620
  %v6659 = vmul.f32 %v6621, %v6621
  %v6660 = vmul.f32 %v6622, %v6622
  %v6661 = vmul.f32 %v6623, %v6623
  %v6662 = vmul.f32 %v6624, %v6624
  %v6663 = vmul.f32 %v6625, %v6625
  %v6664 = vmul.f32 %v6626, %v6626
  %v6665 = vmul.f32 %v6627, %v6627
  %v6666 = vmul.f32 %v6628, %v6628
  %v6667 = vmul.f32 %v6629, %v6629
  %v6668 = vmul.f32 %v6630, %v6630
  %v6669 = vmul.f32 %v6631, %v6631
  %v6670 = vmul.f32 %v6632, %v6632
  %v6671 = vmul.f32 %v6633, %v6633
  %v6672 = vmul.f32 %v6634, %v6634
  %v6673 = vmul.f32 %v6635, %v6635
  %v6674 = vmul.f32 %v6636, %v6636
  %v6675 = vmul.f32 %v6637, %v6637
  %v6676 = vmul.f32 %v6638, %v6638
  %v6677 = vmul.f32 %v6639, %v6639
  %v6678 = vmul.f32 %v6640, %v6640
  %v6679 = vmul.f32 %v6641, %v6641
  %v6680 = vmul.f32 %v6642, %v6642
  %v6681 = vmul.f32 %v6643, %v6643
  %v6682 = vmul.f32 %v6644, %v6644
  %v6683 = vmul.f32 %v6645, %v6645
  %v6684 = vmul.f32 %v6646, %v6646
  %v6685 = vmul.f32 %v6647, %v6647
  %v6686 = vmul.f32 %v6648, %v6648
  %v6687 = vmul.f32 %v6649, %v6649
  %v6688 = vmul.f32 %v6650, %v6650
  %v6689 = vmul.f32 %v6651, %v6651
  %v6690 = vmul.f32 %v6652, %v6652
  %v6691 = vmul.f32 %v6653, %v6653
  %v6692 = vmul.f32 %v6654, %v6654
  %v6693 = vmul.f32 %v6655, %v6655
  %v6694 = vmul.f32 %v6656, %v6656
  %v6733 = vcombine.low %v6657, %v6658
  %v6734 = vcombine.low %v6659, %v6660
  %v6736 = vunpack.c.l.s4 1983009808
  %v6737 = vunpack.c.0.s8 %v6736
  %v6738 = vlaneseq
  %v6739 = vshrl.u32 %v6738, 7
  %v6740 = vsub.s32 %v6737, %v6739
  %v6741 = vrot.slane %v6733, %v6740
  %v6743 = vunpack.c.l.s4 1983009808
  %v6744 = vunpack.c.0.s8 %v6743
  %v6745 = vlaneseq
  %v6746 = vshrl.u32 %v6745, 7
  %v6747 = vsub.s32 %v6744, %v6746
  %v6748 = vrot.slane %v6734, %v6747
  %v6749 = vcombine.low %v6741, %v6748
  %v6750 = vcombine.low %v6661, %v6662
  %v6751 = vcombine.low %v6663, %v6664
  %v6753 = vunpack.c.l.s4 1983009808
  %v6754 = vunpack.c.0.s8 %v6753
  %v6755 = vlaneseq
  %v6756 = vshrl.u32 %v6755, 7
  %v6757 = vsub.s32 %v6754, %v6756
  %v6758 = vrot.slane %v6750, %v6757
  %v6760 = vunpack.c.l.s4 1983009808
  %v6761 = vunpack.c.0.s8 %v6760
  %v6762 = vlaneseq
  %v6763 = vshrl.u32 %v6762, 7
  %v6764 = vsub.s32 %v6761, %v6763
  %v6765 = vrot.slane %v6751, %v6764
  %v6766 = vcombine.low %v6758, %v6765
  %v6767 = vcombine.low %v6665, %v6666
  %v6768 = vcombine.low %v6667, %v6668
  %v6770 = vunpack.c.l.s4 1983009808
  %v6771 = vunpack.c.0.s8 %v6770
  %v6772 = vlaneseq
  %v6773 = vshrl.u32 %v6772, 7
  %v6774 = vsub.s32 %v6771, %v6773
  %v6775 = vrot.slane %v6767, %v6774
  %v6777 = vunpack.c.l.s4 1983009808
  %v6778 = vunpack.c.0.s8 %v6777
  %v6779 = vlaneseq
  %v6780 = vshrl.u32 %v6779, 7
  %v6781 = vsub.s32 %v6778, %v6780
  %v6782 = vrot.slane %v6768, %v6781
  %v6783 = vcombine.low %v6775, %v6782
  %v6784 = vcombine.low %v6669, %v6670
  %v6785 = vcombine.low %v6671, %v6672
  %v6787 = vunpack.c.l.s4 1983009808
  %v6788 = vunpack.c.0.s8 %v6787
  %v6789 = vlaneseq
  %v6790 = vshrl.u32 %v6789, 7
  %v6791 = vsub.s32 %v6788, %v6790
  %v6792 = vrot.slane %v6784, %v6791
  %v6794 = vunpack.c.l.s4 1983009808
  %v6795 = vunpack.c.0.s8 %v6794
  %v6796 = vlaneseq
  %v6797 = vshrl.u32 %v6796, 7
  %v6798 = vsub.s32 %v6795, %v6797
  %v6799 = vrot.slane %v6785, %v6798
  %v6800 = vcombine.low %v6792, %v6799
  %v6801 = vcombine.low %v6673, %v6674
  %v6802 = vcombine.low %v6675, %v6676
  %v6804 = vunpack.c.l.s4 1983009808
  %v6805 = vunpack.c.0.s8 %v6804
  %v6806 = vlaneseq
  %v6807 = vshrl.u32 %v6806, 7
  %v6808 = vsub.s32 %v6805, %v6807
  %v6809 = vrot.slane %v6801, %v6808
  %v6811 = vunpack.c.l.s4 1983009808
  %v6812 = vunpack.c.0.s8 %v6811
  %v6813 = vlaneseq
  %v6814 = vshrl.u32 %v6813, 7
  %v6815 = vsub.s32 %v6812, %v6814
  %v6816 = vrot.slane %v6802, %v6815
  %v6817 = vcombine.low %v6809, %v6816
  %v6818 = vcombine.low %v6677, %v6678
  %v6819 = vcombine.low %v6679, %v6680
  %v6821 = vunpack.c.l.s4 1983009808
  %v6822 = vunpack.c.0.s8 %v6821
  %v6823 = vlaneseq
  %v6824 = vshrl.u32 %v6823, 7
  %v6825 = vsub.s32 %v6822, %v6824
  %v6826 = vrot.slane %v6818, %v6825
  %v6828 = vunpack.c.l.s4 1983009808
  %v6829 = vunpack.c.0.s8 %v6828
  %v6830 = vlaneseq
  %v6831 = vshrl.u32 %v6830, 7
  %v6832 = vsub.s32 %v6829, %v6831
  %v6833 = vrot.slane %v6819, %v6832
  %v6834 = vcombine.low %v6826, %v6833
  %v6835 = vcombine.low %v6681, %v6682
  %v6836 = vcombine.low %v6683, %v6684
  %v6838 = vunpack.c.l.s4 1983009808
  %v6839 = vunpack.c.0.s8 %v6838
  %v6840 = vlaneseq
  %v6841 = vshrl.u32 %v6840, 7
  %v6842 = vsub.s32 %v6839, %v6841
  %v6843 = vrot.slane %v6835, %v6842
  %v6845 = vunpack.c.l.s4 1983009808
  %v6846 = vunpack.c.0.s8 %v6845
  %v6847 = vlaneseq
  %v6848 = vshrl.u32 %v6847, 7
  %v6849 = vsub.s32 %v6846, %v6848
  %v6850 = vrot.slane %v6836, %v6849
  %v6851 = vcombine.low %v6843, %v6850
  %v6852 = vcombine.low %v6685, %v6686
  %v6853 = vcombine.low %v6687, %v6688
  %v6855 = vunpack.c.l.s4 1983009808
  %v6856 = vunpack.c.0.s8 %v6855
  %v6857 = vlaneseq
  %v6858 = vshrl.u32 %v6857, 7
  %v6859 = vsub.s32 %v6856, %v6858
  %v6860 = vrot.slane %v6852, %v6859
  %v6862 = vunpack.c.l.s4 1983009808
  %v6863 = vunpack.c.0.s8 %v6862
  %v6864 = vlaneseq
  %v6865 = vshrl.u32 %v6864, 7
  %v6866 = vsub.s32 %v6863, %v6865
  %v6867 = vrot.slane %v6853, %v6866
  %v6868 = vcombine.low %v6860, %v6867
  %v6869 = vcombine.low %v6689, %v6690
  %v6870 = vcombine.low %v6691, %v6692
  %v6872 = vunpack.c.l.s4 1983009808
  %v6873 = vunpack.c.0.s8 %v6872
  %v6874 = vlaneseq
  %v6875 = vshrl.u32 %v6874, 7
  %v6876 = vsub.s32 %v6873, %v6875
  %v6877 = vrot.slane %v6869, %v6876
  %v6879 = vunpack.c.l.s4 1983009808
  %v6880 = vunpack.c.0.s8 %v6879
  %v6881 = vlaneseq
  %v6882 = vshrl.u32 %v6881, 7
  %v6883 = vsub.s32 %v6880, %v6882
  %v6884 = vrot.slane %v6870, %v6883
  %v6885 = vcombine.low %v6877, %v6884
  %v6886 = vcombine.low %v6693, %v6694
  %v6888 = vunpack.c.l.s4 1983009808
  %v6889 = vunpack.c.0.s8 %v6888
  %v6890 = vlaneseq
  %v6891 = vshrl.u32 %v6890, 7
  %v6892 = vsub.s32 %v6889, %v6891
  %v6893 = vrot.slane %v6886, %v6892
  %v6904 = vsel %vm470, %v6749, 0.0
  %6905 = vadd.xlane.f32.xlu0 %v6904
  %v6906 = vpop.xlane.xlu0 %6905
  %v6907 = vsel %vm470, %v6766, 0.0
  %6908 = vadd.xlane.f32.xlu0 %v6907
  %v6909 = vpop.xlane.xlu0 %6908
  %v6910 = vsel %vm470, %v6783, 0.0
  %6911 = vadd.xlane.f32.xlu0 %v6910
  %v6912 = vpop.xlane.xlu0 %6911
  %v6913 = vsel %vm470, %v6800, 0.0
  %6914 = vadd.xlane.f32.xlu0 %v6913
  %v6915 = vpop.xlane.xlu0 %6914
  %v6916 = vsel %vm470, %v6817, 0.0
  %6917 = vadd.xlane.f32.xlu0 %v6916
  %v6918 = vpop.xlane.xlu0 %6917
  %v6919 = vsel %vm470, %v6834, 0.0
  %6920 = vadd.xlane.f32.xlu0 %v6919
  %v6921 = vpop.xlane.xlu0 %6920
  %v6922 = vsel %vm470, %v6851, 0.0
  %6923 = vadd.xlane.f32.xlu0 %v6922
  %v6924 = vpop.xlane.xlu0 %6923
  %v6925 = vsel %vm470, %v6868, 0.0
  %6926 = vadd.xlane.f32.xlu0 %v6925
  %v6927 = vpop.xlane.xlu0 %6926
  %v6928 = vsel %vm470, %v6885, 0.0
  %6929 = vadd.xlane.f32.xlu0 %v6928
  %v6930 = vpop.xlane.xlu0 %6929
  %v6931 = vsel %vm4145, %v6893, 0.0
  %6932 = vadd.xlane.f32.xlu0 %v6931
  %v6933 = vpop.xlane.xlu0 %6932
  %v6934 = vmul.f32 %v6906, %v4149
  %v6935 = vmul.f32 %v6909, %v4149
  %v6936 = vmul.f32 %v6912, %v4149
  %v6937 = vmul.f32 %v6915, %v4149
  %v6938 = vmul.f32 %v6918, %v4149
  %v6939 = vmul.f32 %v6921, %v4149
  %v6940 = vmul.f32 %v6924, %v4149
  %v6941 = vmul.f32 %v6927, %v4149
  %v6942 = vmul.f32 %v6930, %v4149
  %v6943 = vmul.f32 %v6933, %v4149
  %v6944 = vadd.f32 %v6934, 1e-05
  %v6945 = vadd.f32 %v6935, 1e-05
  %v6946 = vadd.f32 %v6936, 1e-05
  %v6947 = vadd.f32 %v6937, 1e-05
  %v6948 = vadd.f32 %v6938, 1e-05
  %v6949 = vadd.f32 %v6939, 1e-05
  %v6950 = vadd.f32 %v6940, 1e-05
  %v6951 = vadd.f32 %v6941, 1e-05
  %v6952 = vadd.f32 %v6942, 1e-05
  %v6953 = vadd.f32 %v6943, 1e-05
  %v6954 = vrsqrt.pop %v6944
  %v6955 = vrsqrt.pop %v6945
  %v6956 = vrsqrt.pop %v6946
  %v6957 = vrsqrt.pop %v6947
  %v6958 = vrsqrt.pop %v6948
  %v6959 = vrsqrt.pop %v6949
  %v6960 = vrsqrt.pop %v6950
  %v6961 = vrsqrt.pop %v6951
  %v6962 = vrsqrt.pop %v6952
  %v6963 = vrsqrt.pop %v6953
  %v6975 = vunpack.c.l.s4 269488144
  %v6976 = vunpack.c.0.s8 %v6975
  %v6977 = vlaneseq
  %v6978 = vshrl.u32 %v6977, 7
  %v6979 = vsub.s32 %v6976, %v6978
  %v6980 = vrot.slane %v6954, %v6979
  %v6982 = vunpack.c.l.s4 842150450
  %v6983 = vunpack.c.0.s8 %v6982
  %v6984 = vlaneseq
  %v6985 = vshrl.u32 %v6984, 7
  %v6986 = vsub.s32 %v6983, %v6985
  %v6987 = vrot.slane %v6954, %v6986
  %v6989 = vunpack.c.l.s4 1414812756
  %v6990 = vunpack.c.0.s8 %v6989
  %v6991 = vlaneseq
  %v6992 = vshrl.u32 %v6991, 7
  %v6993 = vsub.s32 %v6990, %v6992
  %v6994 = vrot.slane %v6954, %v6993
  %v6996 = vunpack.c.l.s4 1987475062
  %v6997 = vunpack.c.0.s8 %v6996
  %v6998 = vlaneseq
  %v6999 = vshrl.u32 %v6998, 7
  %v7000 = vsub.s32 %v6997, %v6999
  %v7001 = vrot.slane %v6954, %v7000
  %v7003 = vunpack.c.l.s4 269488144
  %v7004 = vunpack.c.0.s8 %v7003
  %v7005 = vlaneseq
  %v7006 = vshrl.u32 %v7005, 7
  %v7007 = vsub.s32 %v7004, %v7006
  %v7008 = vrot.slane %v6955, %v7007
  %v7010 = vunpack.c.l.s4 842150450
  %v7011 = vunpack.c.0.s8 %v7010
  %v7012 = vlaneseq
  %v7013 = vshrl.u32 %v7012, 7
  %v7014 = vsub.s32 %v7011, %v7013
  %v7015 = vrot.slane %v6955, %v7014
  %v7017 = vunpack.c.l.s4 1414812756
  %v7018 = vunpack.c.0.s8 %v7017
  %v7019 = vlaneseq
  %v7020 = vshrl.u32 %v7019, 7
  %v7021 = vsub.s32 %v7018, %v7020
  %v7022 = vrot.slane %v6955, %v7021
  %v7024 = vunpack.c.l.s4 1987475062
  %v7025 = vunpack.c.0.s8 %v7024
  %v7026 = vlaneseq
  %v7027 = vshrl.u32 %v7026, 7
  %v7028 = vsub.s32 %v7025, %v7027
  %v7029 = vrot.slane %v6955, %v7028
  %v7031 = vunpack.c.l.s4 269488144
  %v7032 = vunpack.c.0.s8 %v7031
  %v7033 = vlaneseq
  %v7034 = vshrl.u32 %v7033, 7
  %v7035 = vsub.s32 %v7032, %v7034
  %v7036 = vrot.slane %v6956, %v7035
  %v7038 = vunpack.c.l.s4 842150450
  %v7039 = vunpack.c.0.s8 %v7038
  %v7040 = vlaneseq
  %v7041 = vshrl.u32 %v7040, 7
  %v7042 = vsub.s32 %v7039, %v7041
  %v7043 = vrot.slane %v6956, %v7042
  %v7045 = vunpack.c.l.s4 1414812756
  %v7046 = vunpack.c.0.s8 %v7045
  %v7047 = vlaneseq
  %v7048 = vshrl.u32 %v7047, 7
  %v7049 = vsub.s32 %v7046, %v7048
  %v7050 = vrot.slane %v6956, %v7049
  %v7052 = vunpack.c.l.s4 1987475062
  %v7053 = vunpack.c.0.s8 %v7052
  %v7054 = vlaneseq
  %v7055 = vshrl.u32 %v7054, 7
  %v7056 = vsub.s32 %v7053, %v7055
  %v7057 = vrot.slane %v6956, %v7056
  %v7059 = vunpack.c.l.s4 269488144
  %v7060 = vunpack.c.0.s8 %v7059
  %v7061 = vlaneseq
  %v7062 = vshrl.u32 %v7061, 7
  %v7063 = vsub.s32 %v7060, %v7062
  %v7064 = vrot.slane %v6957, %v7063
  %v7066 = vunpack.c.l.s4 842150450
  %v7067 = vunpack.c.0.s8 %v7066
  %v7068 = vlaneseq
  %v7069 = vshrl.u32 %v7068, 7
  %v7070 = vsub.s32 %v7067, %v7069
  %v7071 = vrot.slane %v6957, %v7070
  %v7073 = vunpack.c.l.s4 1414812756
  %v7074 = vunpack.c.0.s8 %v7073
  %v7075 = vlaneseq
  %v7076 = vshrl.u32 %v7075, 7
  %v7077 = vsub.s32 %v7074, %v7076
  %v7078 = vrot.slane %v6957, %v7077
  %v7080 = vunpack.c.l.s4 1987475062
  %v7081 = vunpack.c.0.s8 %v7080
  %v7082 = vlaneseq
  %v7083 = vshrl.u32 %v7082, 7
  %v7084 = vsub.s32 %v7081, %v7083
  %v7085 = vrot.slane %v6957, %v7084
  %v7087 = vunpack.c.l.s4 269488144
  %v7088 = vunpack.c.0.s8 %v7087
  %v7089 = vlaneseq
  %v7090 = vshrl.u32 %v7089, 7
  %v7091 = vsub.s32 %v7088, %v7090
  %v7092 = vrot.slane %v6958, %v7091
  %v7094 = vunpack.c.l.s4 842150450
  %v7095 = vunpack.c.0.s8 %v7094
  %v7096 = vlaneseq
  %v7097 = vshrl.u32 %v7096, 7
  %v7098 = vsub.s32 %v7095, %v7097
  %v7099 = vrot.slane %v6958, %v7098
  %v7101 = vunpack.c.l.s4 1414812756
  %v7102 = vunpack.c.0.s8 %v7101
  %v7103 = vlaneseq
  %v7104 = vshrl.u32 %v7103, 7
  %v7105 = vsub.s32 %v7102, %v7104
  %v7106 = vrot.slane %v6958, %v7105
  %v7108 = vunpack.c.l.s4 1987475062
  %v7109 = vunpack.c.0.s8 %v7108
  %v7110 = vlaneseq
  %v7111 = vshrl.u32 %v7110, 7
  %v7112 = vsub.s32 %v7109, %v7111
  %v7113 = vrot.slane %v6958, %v7112
  %v7115 = vunpack.c.l.s4 269488144
  %v7116 = vunpack.c.0.s8 %v7115
  %v7117 = vlaneseq
  %v7118 = vshrl.u32 %v7117, 7
  %v7119 = vsub.s32 %v7116, %v7118
  %v7120 = vrot.slane %v6959, %v7119
  %v7122 = vunpack.c.l.s4 842150450
  %v7123 = vunpack.c.0.s8 %v7122
  %v7124 = vlaneseq
  %v7125 = vshrl.u32 %v7124, 7
  %v7126 = vsub.s32 %v7123, %v7125
  %v7127 = vrot.slane %v6959, %v7126
  %v7129 = vunpack.c.l.s4 1414812756
  %v7130 = vunpack.c.0.s8 %v7129
  %v7131 = vlaneseq
  %v7132 = vshrl.u32 %v7131, 7
  %v7133 = vsub.s32 %v7130, %v7132
  %v7134 = vrot.slane %v6959, %v7133
  %v7136 = vunpack.c.l.s4 1987475062
  %v7137 = vunpack.c.0.s8 %v7136
  %v7138 = vlaneseq
  %v7139 = vshrl.u32 %v7138, 7
  %v7140 = vsub.s32 %v7137, %v7139
  %v7141 = vrot.slane %v6959, %v7140
  %v7143 = vunpack.c.l.s4 269488144
  %v7144 = vunpack.c.0.s8 %v7143
  %v7145 = vlaneseq
  %v7146 = vshrl.u32 %v7145, 7
  %v7147 = vsub.s32 %v7144, %v7146
  %v7148 = vrot.slane %v6960, %v7147
  %v7150 = vunpack.c.l.s4 842150450
  %v7151 = vunpack.c.0.s8 %v7150
  %v7152 = vlaneseq
  %v7153 = vshrl.u32 %v7152, 7
  %v7154 = vsub.s32 %v7151, %v7153
  %v7155 = vrot.slane %v6960, %v7154
  %v7157 = vunpack.c.l.s4 1414812756
  %v7158 = vunpack.c.0.s8 %v7157
  %v7159 = vlaneseq
  %v7160 = vshrl.u32 %v7159, 7
  %v7161 = vsub.s32 %v7158, %v7160
  %v7162 = vrot.slane %v6960, %v7161
  %v7164 = vunpack.c.l.s4 1987475062
  %v7165 = vunpack.c.0.s8 %v7164
  %v7166 = vlaneseq
  %v7167 = vshrl.u32 %v7166, 7
  %v7168 = vsub.s32 %v7165, %v7167
  %v7169 = vrot.slane %v6960, %v7168
  %v7171 = vunpack.c.l.s4 269488144
  %v7172 = vunpack.c.0.s8 %v7171
  %v7173 = vlaneseq
  %v7174 = vshrl.u32 %v7173, 7
  %v7175 = vsub.s32 %v7172, %v7174
  %v7176 = vrot.slane %v6961, %v7175
  %v7178 = vunpack.c.l.s4 842150450
  %v7179 = vunpack.c.0.s8 %v7178
  %v7180 = vlaneseq
  %v7181 = vshrl.u32 %v7180, 7
  %v7182 = vsub.s32 %v7179, %v7181
  %v7183 = vrot.slane %v6961, %v7182
  %v7185 = vunpack.c.l.s4 1414812756
  %v7186 = vunpack.c.0.s8 %v7185
  %v7187 = vlaneseq
  %v7188 = vshrl.u32 %v7187, 7
  %v7189 = vsub.s32 %v7186, %v7188
  %v7190 = vrot.slane %v6961, %v7189
  %v7192 = vunpack.c.l.s4 1987475062
  %v7193 = vunpack.c.0.s8 %v7192
  %v7194 = vlaneseq
  %v7195 = vshrl.u32 %v7194, 7
  %v7196 = vsub.s32 %v7193, %v7195
  %v7197 = vrot.slane %v6961, %v7196
  %v7199 = vunpack.c.l.s4 269488144
  %v7200 = vunpack.c.0.s8 %v7199
  %v7201 = vlaneseq
  %v7202 = vshrl.u32 %v7201, 7
  %v7203 = vsub.s32 %v7200, %v7202
  %v7204 = vrot.slane %v6962, %v7203
  %v7206 = vunpack.c.l.s4 842150450
  %v7207 = vunpack.c.0.s8 %v7206
  %v7208 = vlaneseq
  %v7209 = vshrl.u32 %v7208, 7
  %v7210 = vsub.s32 %v7207, %v7209
  %v7211 = vrot.slane %v6962, %v7210
  %v7213 = vunpack.c.l.s4 1414812756
  %v7214 = vunpack.c.0.s8 %v7213
  %v7215 = vlaneseq
  %v7216 = vshrl.u32 %v7215, 7
  %v7217 = vsub.s32 %v7214, %v7216
  %v7218 = vrot.slane %v6962, %v7217
  %v7220 = vunpack.c.l.s4 1987475062
  %v7221 = vunpack.c.0.s8 %v7220
  %v7222 = vlaneseq
  %v7223 = vshrl.u32 %v7222, 7
  %v7224 = vsub.s32 %v7221, %v7223
  %v7225 = vrot.slane %v6962, %v7224
  %v7227 = vunpack.c.l.s4 269488144
  %v7228 = vunpack.c.0.s8 %v7227
  %v7229 = vlaneseq
  %v7230 = vshrl.u32 %v7229, 7
  %v7231 = vsub.s32 %v7228, %v7230
  %v7232 = vrot.slane %v6963, %v7231
  %v7234 = vunpack.c.l.s4 842150450
  %v7235 = vunpack.c.0.s8 %v7234
  %v7236 = vlaneseq
  %v7237 = vshrl.u32 %v7236, 7
  %v7238 = vsub.s32 %v7235, %v7237
  %v7239 = vrot.slane %v6963, %v7238
  %v7278 = vmul.f32 %v6619, %v6980
  %v7279 = vmul.f32 %v6620, %v6987
  %v7280 = vmul.f32 %v6621, %v6994
  %v7281 = vmul.f32 %v6622, %v7001
  %v7282 = vmul.f32 %v6623, %v7008
  %v7283 = vmul.f32 %v6624, %v7015
  %v7284 = vmul.f32 %v6625, %v7022
  %v7285 = vmul.f32 %v6626, %v7029
  %v7286 = vmul.f32 %v6627, %v7036
  %v7287 = vmul.f32 %v6628, %v7043
  %v7288 = vmul.f32 %v6629, %v7050
  %v7289 = vmul.f32 %v6630, %v7057
  %v7290 = vmul.f32 %v6631, %v7064
  %v7291 = vmul.f32 %v6632, %v7071
  %v7292 = vmul.f32 %v6633, %v7078
  %v7293 = vmul.f32 %v6634, %v7085
  %v7294 = vmul.f32 %v6635, %v7092
  %v7295 = vmul.f32 %v6636, %v7099
  %v7296 = vmul.f32 %v6637, %v7106
  %v7297 = vmul.f32 %v6638, %v7113
  %v7298 = vmul.f32 %v6639, %v7120
  %v7299 = vmul.f32 %v6640, %v7127
  %v7300 = vmul.f32 %v6641, %v7134
  %v7301 = vmul.f32 %v6642, %v7141
  %v7302 = vmul.f32 %v6643, %v7148
  %v7303 = vmul.f32 %v6644, %v7155
  %v7304 = vmul.f32 %v6645, %v7162
  %v7305 = vmul.f32 %v6646, %v7169
  %v7306 = vmul.f32 %v6647, %v7176
  %v7307 = vmul.f32 %v6648, %v7183
  %v7308 = vmul.f32 %v6649, %v7190
  %v7309 = vmul.f32 %v6650, %v7197
  %v7310 = vmul.f32 %v6651, %v7204
  %v7311 = vmul.f32 %v6652, %v7211
  %v7312 = vmul.f32 %v6653, %v7218
  %v7313 = vmul.f32 %v6654, %v7225
  %v7314 = vmul.f32 %v6655, %v7232
  %v7315 = vmul.f32 %v6656, %v7239
  %v7317 = vlaneseq
  %v7318 = vshrl.u32 %v7317, 7
  %v7319 = vsub.s32 0, %v7318
  %v7320 = vrot.slane %v6054, %v7319
  %v7321 = vcombine.high %v7320, %v7320
  %v7323 = vunpack.c.l.s4 1983009808
  %v7324 = vunpack.c.0.s8 %v7323
  %v7325 = vlaneseq
  %v7326 = vshrl.u32 %v7325, 7
  %v7327 = vsub.s32 %v7324, %v7326
  %v7328 = vrot.slane %v7320, %v7327
  %v7330 = vunpack.c.l.s4 1983009808
  %v7331 = vunpack.c.0.s8 %v7330
  %v7332 = vlaneseq
  %v7333 = vshrl.u32 %v7332, 7
  %v7334 = vsub.s32 %v7331, %v7333
  %v7335 = vrot.slane %v7321, %v7334
  %v7336 = vcombine.high %v7328, %v7328
  %v7337 = vcombine.high %v7335, %v7335
  %v7342 = vmul.f32 %v7278, %v7328
  %v7343 = vmul.f32 %v7279, %v7336
  %v7344 = vmul.f32 %v7280, %v7335
  %v7345 = vmul.f32 %v7281, %v7337
  %v7346 = vmul.f32 %v7282, %v7328
  %v7347 = vmul.f32 %v7283, %v7336
  %v7348 = vmul.f32 %v7284, %v7335
  %v7349 = vmul.f32 %v7285, %v7337
  %v7350 = vmul.f32 %v7286, %v7328
  %v7351 = vmul.f32 %v7287, %v7336
  %v7352 = vmul.f32 %v7288, %v7335
  %v7353 = vmul.f32 %v7289, %v7337
  %v7354 = vmul.f32 %v7290, %v7328
  %v7355 = vmul.f32 %v7291, %v7336
  %v7356 = vmul.f32 %v7292, %v7335
  %v7357 = vmul.f32 %v7293, %v7337
  %v7358 = vmul.f32 %v7294, %v7328
  %v7359 = vmul.f32 %v7295, %v7336
  %v7360 = vmul.f32 %v7296, %v7335
  %v7361 = vmul.f32 %v7297, %v7337
  %v7362 = vmul.f32 %v7298, %v7328
  %v7363 = vmul.f32 %v7299, %v7336
  %v7364 = vmul.f32 %v7300, %v7335
  %v7365 = vmul.f32 %v7301, %v7337
  %v7366 = vmul.f32 %v7302, %v7328
  %v7367 = vmul.f32 %v7303, %v7336
  %v7368 = vmul.f32 %v7304, %v7335
  %v7369 = vmul.f32 %v7305, %v7337
  %v7370 = vmul.f32 %v7306, %v7328
  %v7371 = vmul.f32 %v7307, %v7336
  %v7372 = vmul.f32 %v7308, %v7335
  %v7373 = vmul.f32 %v7309, %v7337
  %v7374 = vmul.f32 %v7310, %v7328
  %v7375 = vmul.f32 %v7311, %v7336
  %v7376 = vmul.f32 %v7312, %v7335
  %v7377 = vmul.f32 %v7313, %v7337
  %v7378 = vmul.f32 %v7314, %v7328
  %v7379 = vmul.f32 %v7315, %v7336
  %v7381 = vlaneseq
  %v7382 = vshrl.u32 %v7381, 7
  %v7383 = vsub.s32 0, %v7382
  %v7384 = vrot.slane %v6055, %v7383
  %v7385 = vcombine.high %v7384, %v7384
  %v7387 = vunpack.c.l.s4 1983009808
  %v7388 = vunpack.c.0.s8 %v7387
  %v7389 = vlaneseq
  %v7390 = vshrl.u32 %v7389, 7
  %v7391 = vsub.s32 %v7388, %v7390
  %v7392 = vrot.slane %v7384, %v7391
  %v7394 = vunpack.c.l.s4 1983009808
  %v7395 = vunpack.c.0.s8 %v7394
  %v7396 = vlaneseq
  %v7397 = vshrl.u32 %v7396, 7
  %v7398 = vsub.s32 %v7395, %v7397
  %v7399 = vrot.slane %v7385, %v7398
  %v7400 = vcombine.high %v7392, %v7392
  %v7401 = vcombine.high %v7399, %v7399
  %v7406 = vadd.f32 %v7342, %v7392
  %v7407 = vadd.f32 %v7343, %v7400
  %v7408 = vadd.f32 %v7344, %v7399
  %v7409 = vadd.f32 %v7345, %v7401
  %v7410 = vadd.f32 %v7346, %v7392
  %v7411 = vadd.f32 %v7347, %v7400
  %v7412 = vadd.f32 %v7348, %v7399
  %v7413 = vadd.f32 %v7349, %v7401
  %v7414 = vadd.f32 %v7350, %v7392
  %v7415 = vadd.f32 %v7351, %v7400
  %v7416 = vadd.f32 %v7352, %v7399
  %v7417 = vadd.f32 %v7353, %v7401
  %v7418 = vadd.f32 %v7354, %v7392
  %v7419 = vadd.f32 %v7355, %v7400
  %v7420 = vadd.f32 %v7356, %v7399
  %v7421 = vadd.f32 %v7357, %v7401
  %v7422 = vadd.f32 %v7358, %v7392
  %v7423 = vadd.f32 %v7359, %v7400
  %v7424 = vadd.f32 %v7360, %v7399
  %v7425 = vadd.f32 %v7361, %v7401
  %v7426 = vadd.f32 %v7362, %v7392
  %v7427 = vadd.f32 %v7363, %v7400
  %v7428 = vadd.f32 %v7364, %v7399
  %v7429 = vadd.f32 %v7365, %v7401
  %v7430 = vadd.f32 %v7366, %v7392
  %v7431 = vadd.f32 %v7367, %v7400
  %v7432 = vadd.f32 %v7368, %v7399
  %v7433 = vadd.f32 %v7369, %v7401
  %v7434 = vadd.f32 %v7370, %v7392
  %v7435 = vadd.f32 %v7371, %v7400
  %v7436 = vadd.f32 %v7372, %v7399
  %v7437 = vadd.f32 %v7373, %v7401
  %v7438 = vadd.f32 %v7374, %v7392
  %v7439 = vadd.f32 %v7375, %v7400
  %v7440 = vadd.f32 %v7376, %v7399
  %v7441 = vadd.f32 %v7377, %v7401
  %v7442 = vadd.f32 %v7378, %v7392
  %v7443 = vadd.f32 %v7379, %v7400
  %v7482 = vcombine.low %v7406, %v7407
  %v7483 = vcombine.low %v7408, %v7409
  %v7485 = vunpack.c.l.s4 1983009808
  %v7486 = vunpack.c.0.s8 %v7485
  %v7487 = vlaneseq
  %v7488 = vshrl.u32 %v7487, 7
  %v7489 = vsub.s32 %v7486, %v7488
  %v7490 = vrot.slane %v7482, %v7489
  %v7492 = vunpack.c.l.s4 1983009808
  %v7493 = vunpack.c.0.s8 %v7492
  %v7494 = vlaneseq
  %v7495 = vshrl.u32 %v7494, 7
  %v7496 = vsub.s32 %v7493, %v7495
  %v7497 = vrot.slane %v7483, %v7496
  %v7498 = vcombine.low %v7490, %v7497
  %v7499 = vcombine.low %v7410, %v7411
  %v7500 = vcombine.low %v7412, %v7413
  %v7502 = vunpack.c.l.s4 1983009808
  %v7503 = vunpack.c.0.s8 %v7502
  %v7504 = vlaneseq
  %v7505 = vshrl.u32 %v7504, 7
  %v7506 = vsub.s32 %v7503, %v7505
  %v7507 = vrot.slane %v7499, %v7506
  %v7509 = vunpack.c.l.s4 1983009808
  %v7510 = vunpack.c.0.s8 %v7509
  %v7511 = vlaneseq
  %v7512 = vshrl.u32 %v7511, 7
  %v7513 = vsub.s32 %v7510, %v7512
  %v7514 = vrot.slane %v7500, %v7513
  %v7515 = vcombine.low %v7507, %v7514
  %v7516 = vcombine.low %v7414, %v7415
  %v7517 = vcombine.low %v7416, %v7417
  %v7519 = vunpack.c.l.s4 1983009808
  %v7520 = vunpack.c.0.s8 %v7519
  %v7521 = vlaneseq
  %v7522 = vshrl.u32 %v7521, 7
  %v7523 = vsub.s32 %v7520, %v7522
  %v7524 = vrot.slane %v7516, %v7523
  %v7526 = vunpack.c.l.s4 1983009808
  %v7527 = vunpack.c.0.s8 %v7526
  %v7528 = vlaneseq
  %v7529 = vshrl.u32 %v7528, 7
  %v7530 = vsub.s32 %v7527, %v7529
  %v7531 = vrot.slane %v7517, %v7530
  %v7532 = vcombine.low %v7524, %v7531
  %v7533 = vcombine.low %v7418, %v7419
  %v7534 = vcombine.low %v7420, %v7421
  %v7536 = vunpack.c.l.s4 1983009808
  %v7537 = vunpack.c.0.s8 %v7536
  %v7538 = vlaneseq
  %v7539 = vshrl.u32 %v7538, 7
  %v7540 = vsub.s32 %v7537, %v7539
  %v7541 = vrot.slane %v7533, %v7540
  %v7543 = vunpack.c.l.s4 1983009808
  %v7544 = vunpack.c.0.s8 %v7543
  %v7545 = vlaneseq
  %v7546 = vshrl.u32 %v7545, 7
  %v7547 = vsub.s32 %v7544, %v7546
  %v7548 = vrot.slane %v7534, %v7547
  %v7549 = vcombine.low %v7541, %v7548
  %v7550 = vcombine.low %v7422, %v7423
  %v7552 = vunpack.c.l.s4 1983009808
  %v7553 = vunpack.c.0.s8 %v7552
  %v7554 = vlaneseq
  %v7555 = vshrl.u32 %v7554, 7
  %v7556 = vsub.s32 %v7553, %v7555
  %v7557 = vrot.slane %v7550, %v7556
  %v7559 = vunpack.c.l.s4 1983009808
  %v7560 = vunpack.c.0.s8 %v7559
  %v7561 = vlaneseq
  %v7562 = vshrl.u32 %v7561, 7
  %v7563 = vsub.s32 %v7560, %v7562
  %v7564 = vrot.slane %v7424, %v7563
  %v7565 = vcombine.low %v7557, %v7564
  %v7566 = vcombine.low %v7425, %v7426
  %v7567 = vcombine.low %v7427, %v7428
  %v7569 = vunpack.c.l.s4 1983009808
  %v7570 = vunpack.c.0.s8 %v7569
  %v7571 = vlaneseq
  %v7572 = vshrl.u32 %v7571, 7
  %v7573 = vsub.s32 %v7570, %v7572
  %v7574 = vrot.slane %v7566, %v7573
  %v7576 = vunpack.c.l.s4 1983009808
  %v7577 = vunpack.c.0.s8 %v7576
  %v7578 = vlaneseq
  %v7579 = vshrl.u32 %v7578, 7
  %v7580 = vsub.s32 %v7577, %v7579
  %v7581 = vrot.slane %v7567, %v7580
  %v7582 = vcombine.low %v7574, %v7581
  %v7583 = vcombine.low %v7429, %v7430
  %v7584 = vcombine.low %v7431, %v7432
  %v7586 = vunpack.c.l.s4 1983009808
  %v7587 = vunpack.c.0.s8 %v7586
  %v7588 = vlaneseq
  %v7589 = vshrl.u32 %v7588, 7
  %v7590 = vsub.s32 %v7587, %v7589
  %v7591 = vrot.slane %v7583, %v7590
  %v7593 = vunpack.c.l.s4 1983009808
  %v7594 = vunpack.c.0.s8 %v7593
  %v7595 = vlaneseq
  %v7596 = vshrl.u32 %v7595, 7
  %v7597 = vsub.s32 %v7594, %v7596
  %v7598 = vrot.slane %v7584, %v7597
  %v7599 = vcombine.low %v7591, %v7598
  %v7600 = vcombine.low %v7433, %v7434
  %v7601 = vcombine.low %v7435, %v7436
  %v7603 = vunpack.c.l.s4 1983009808
  %v7604 = vunpack.c.0.s8 %v7603
  %v7605 = vlaneseq
  %v7606 = vshrl.u32 %v7605, 7
  %v7607 = vsub.s32 %v7604, %v7606
  %v7608 = vrot.slane %v7600, %v7607
  %v7610 = vunpack.c.l.s4 1983009808
  %v7611 = vunpack.c.0.s8 %v7610
  %v7612 = vlaneseq
  %v7613 = vshrl.u32 %v7612, 7
  %v7614 = vsub.s32 %v7611, %v7613
  %v7615 = vrot.slane %v7601, %v7614
  %v7616 = vcombine.low %v7608, %v7615
  %v7617 = vcombine.low %v7437, %v7438
  %v7618 = vcombine.low %v7439, %v7440
  %v7620 = vunpack.c.l.s4 1983009808
  %v7621 = vunpack.c.0.s8 %v7620
  %v7622 = vlaneseq
  %v7623 = vshrl.u32 %v7622, 7
  %v7624 = vsub.s32 %v7621, %v7623
  %v7625 = vrot.slane %v7617, %v7624
  %v7627 = vunpack.c.l.s4 1983009808
  %v7628 = vunpack.c.0.s8 %v7627
  %v7629 = vlaneseq
  %v7630 = vshrl.u32 %v7629, 7
  %v7631 = vsub.s32 %v7628, %v7630
  %v7632 = vrot.slane %v7618, %v7631
  %v7633 = vcombine.low %v7625, %v7632
  %v7634 = vcombine.low %v7441, %v7442
  %v7636 = vunpack.c.l.s4 1983009808
  %v7637 = vunpack.c.0.s8 %v7636
  %v7638 = vlaneseq
  %v7639 = vshrl.u32 %v7638, 7
  %v7640 = vsub.s32 %v7637, %v7639
  %v7641 = vrot.slane %v7634, %v7640
  %v7643 = vunpack.c.l.s4 1983009808
  %v7644 = vunpack.c.0.s8 %v7643
  %v7645 = vlaneseq
  %v7646 = vshrl.u32 %v7645, 7
  %v7647 = vsub.s32 %v7644, %v7646
  %v7648 = vrot.slane %v7443, %v7647
  %v7649 = vcombine.low %v7641, %v7648
  %7660 = vst.msk [vmem:[%s13] sm:$0xff] %vm470, %v7498
  %7661 = vst.msk [vmem:[%s13 + $0x8] sm:$0xff] %vm470, %v7515
  %7662 = vst.msk [vmem:[%s13 + $0x10] sm:$0xff] %vm470, %v7532
  %7663 = vst.msk [vmem:[%s13 + $0x18] sm:$0xff] %vm470, %v7549
  %vm7664 = vcmask 259072
  %7665 = vst.msk [vmem:[%s13 + $0x20] sm:$0x3f] %vm7664, %v7565
  %7666 = vst.msk [vmem:[%s13 + $0x28] sm:$0xff] %vm470, %v7582
  %7667 = vst.msk [vmem:[%s13 + $0x30] sm:$0xff] %vm470, %v7599
  %7668 = vst.msk [vmem:[%s13 + $0x38] sm:$0xff] %vm470, %v7616
  %7669 = vst.msk [vmem:[%s13 + $0x40] sm:$0xff] %vm470, %v7633
  %7670 = vst.msk [vmem:[%s13 + $0x48] sm:$0x3f] %vm7664, %v7649
  // Predicated region
  $region54: #{closed_call.6} parent=0 // pred_check
    _
  $region55: #{closed_call.6} parent=0 // pred_check_branch
    %7672 = sbr.rel (0) target = $region57
  $region56: #{closed_call.6} parent=0 // pred_region
    _
  $region57: #{closed_call.6} parent=0 // pred_fallthru
    _
  // Predicated region
  $region58: #{closed_call.6} parent=0 // pred_check
    _
  $region59: #{closed_call.6} parent=0 // pred_check_branch
    %7674 = sbr.rel (0) target = $region61
  $region60: #{closed_call.6} parent=0 // pred_region
    _
  $region61: #{closed_call.6} parent=0 // pred_fallthru
    _

</llo_original>
